<compile_context>
chip_gen: v6e
topology: v6e:2x2x1
jax: 0.10.0
libtpu: 0.0.40
codegen_flags: <defaults>
</compile_context>

<pallas_src>
import functools
import math

import jax
import jax.numpy as jnp
from jax.experimental import pallas as pl
from jax.experimental.pallas import tpu as pltpu

PAD_ID = 1
NEG_INF = -1e30  # additive stand-in for float('-inf'); scores stay f32 so sums never overflow
LN_EPS = 1e-5


# ---------------------------- in-kernel helpers ----------------------------

def _ln(x, g, b, eps):
    """LayerNorm over the last axis in f32. g/b are (1, D) and broadcast."""
    mu = jnp.mean(x, axis=-1, keepdims=True)
    var = jnp.mean((x - mu) ** 2, axis=-1, keepdims=True)
    return (x - mu) * jax.lax.rsqrt(var + eps) * g + b


def _mha_full(q, k, v, wo_bf16, bias, n_head):
    """Multi-head attention over a flattened (B*Sq, D) query slab.

    q: (Mq, D) f32, k/v: (Mk, D) f32, wo_bf16: (D, D) bf16.
    bias: (Mq, Mk) additive f32 mask; it already contains the block-diagonal batch mask
    (plus causal / key-padding), so the full-slab softmax is per-sequence correct.
    The 1/sqrt(Dh) scale is pre-folded into the Q projection weights.
    Head outputs are lane-concatenated and fed to ONE (Mq,D)@(D,D) out-projection.
    """
    D = q.shape[1]
    Dh = D // n_head
    heads = []
    for h in range(n_head):
        sl = slice(h * Dh, (h + 1) * Dh)
        s = jax.lax.dot_general(q[:, sl], k[:, sl], (((1,), (1,)), ((), ())),
                                preferred_element_type=jnp.float32)      # (Mq, Mk) f32
        s = s + bias
        m = jnp.max(s, axis=-1, keepdims=True)
        p = jnp.exp(s - m)
        p = p * pl.reciprocal(jnp.sum(p, axis=-1, keepdims=True), approx=True)
        heads.append(jnp.dot(p.astype(jnp.bfloat16), v[:, sl].astype(jnp.bfloat16),
                             preferred_element_type=jnp.float32))         # (Mq, Dh)
    o = jnp.concatenate(heads, axis=-1)                                   # (Mq, D), lane concat
    return jnp.dot(o.astype(jnp.bfloat16), wo_bf16, preferred_element_type=jnp.float32)


# ---------------------------- fused encoder stack (one pallas_call) ----------------------------

def _encoder_stack_kernel(x_ref, bias_ref,
                          wqkv_ref, bqkv_ref, wo_ref, bo_ref,
                          ln1_g_ref, ln1_b_ref,
                          w1_ref, b1_ref, w2_ref, b2_ref,
                          ln2_g_ref, ln2_b_ref,
                          fng_ref, fnb_ref,
                          o_ref, act_ref, *, n_head):
    l = pl.program_id(0)

    @pl.when(l == 0)
    def _():
        act_ref[...] = x_ref[...]          # seed the layer-carried activation

    x = act_ref[...]                        # (B*S, D) f32
    D = x.shape[1]

    # fused QKV projection on the full (B*S, D) slab: bf16 inputs, f32 accumulation
    qkv = jnp.dot(x.astype(jnp.bfloat16), wqkv_ref[0],
                  preferred_element_type=jnp.float32) + bqkv_ref[0]
    attn = _mha_full(qkv[:, :D], qkv[:, D:2 * D], qkv[:, 2 * D:],
                     wo_ref[0], bias_ref[...], n_head)
    h1 = _ln(x + attn + bo_ref[0], ln1_g_ref[0], ln1_b_ref[0], LN_EPS)

    # FFN (ReLU) + residual + LN
    ff = jnp.dot(h1.astype(jnp.bfloat16), w1_ref[0],
                 preferred_element_type=jnp.float32) + b1_ref[0]
    ff = jnp.maximum(ff, 0.0)
    ff = jnp.dot(ff.astype(jnp.bfloat16), w2_ref[0],
                 preferred_element_type=jnp.float32) + b2_ref[0]
    out = _ln(h1 + ff, ln2_g_ref[0], ln2_b_ref[0], LN_EPS)

    act_ref[...] = out

    @pl.when(l == pl.num_programs(0) - 1)
    def _():  # nn.TransformerEncoder final LayerNorm fused into the last layer step
        o_ref[...] = _ln(out, fng_ref[...], fnb_ref[...], LN_EPS).astype(o_ref.dtype)


def encoder_stack_pallas(x2d, bias, sp, fn_g, fn_b, *, n_head):
    BS, D = x2d.shape
    L = sp['wqkv'].shape[0]

    full = lambda a: pl.BlockSpec(a.shape, lambda l, nd=a.ndim: (0,) * nd)
    perl = lambda a: pl.BlockSpec((1,) + a.shape[1:], lambda l, nd=a.ndim: (l,) + (0,) * (nd - 1))

    weight_keys = ['wqkv', 'bqkv', 'wo', 'bo', 'ln1_g', 'ln1_b',
                   'w1', 'b1', 'w2', 'b2', 'ln2_g', 'ln2_b']
    in_arrays = [x2d, bias] + [sp[k] for k in weight_keys] + [fn_g, fn_b]
    in_specs = [full(x2d), full(bias)] + [perl(sp[k]) for k in weight_keys] + [full(fn_g), full(fn_b)]

    return pl.pallas_call(
        functools.partial(_encoder_stack_kernel, n_head=n_head),
        out_shape=jax.ShapeDtypeStruct((BS, D), jnp.bfloat16),  # memory is only a matmul input downstream
        grid=(L,),
        in_specs=in_specs,
        out_specs=pl.BlockSpec((BS, D), lambda l: (0, 0)),
        scratch_shapes=[pltpu.VMEM((BS, D), jnp.float32)],       # layer-carried activation
        compiler_params=pltpu.CompilerParams(dimension_semantics=("arbitrary",)),
    )(*in_arrays)


# ---------------------------- fused decoder stack (one pallas_call) ----------------------------

def _decoder_stack_kernel(y_ref, mem_ref, self_bias_ref, cross_bias_ref,
                          s_wqkv_ref, s_bqkv_ref, s_wo_ref, s_bo_ref,
                          ln1_g_ref, ln1_b_ref,
                          c_wq_ref, c_bq_ref, c_wkv_ref, c_bkv_ref, c_wo_ref, c_bo_ref,
                          ln2_g_ref, ln2_b_ref,
                          w1_ref, b1_ref, w2_ref, b2_ref,
                          ln3_g_ref, ln3_b_ref,
                          fng_ref, fnb_ref,
                          o_ref, act_ref, *, n_head):
    l = pl.program_id(0)

    @pl.when(l == 0)
    def _():
        act_ref[...] = y_ref[...]

    y = act_ref[...]                        # (B*St, D) f32
    D = y.shape[1]
    mem_bf = mem_ref[...]                   # (B*Ss, D) bf16 (encoder output)

    # --- masked self-attention (causal + tgt key padding + block-diag, precomputed bias) ---
    qkv = jnp.dot(y.astype(jnp.bfloat16), s_wqkv_ref[0],
                  preferred_element_type=jnp.float32) + s_bqkv_ref[0]
    attn = _mha_full(qkv[:, :D], qkv[:, D:2 * D], qkv[:, 2 * D:],
                     s_wo_ref[0], self_bias_ref[...], n_head)
    h1 = _ln(y + attn + s_bo_ref[0], ln1_g_ref[0], ln1_b_ref[0], LN_EPS)

    # --- cross-attention (memory_key_padding_mask=None => only the block-diag batch mask) ---
    q = jnp.dot(h1.astype(jnp.bfloat16), c_wq_ref[0],
                preferred_element_type=jnp.float32) + c_bq_ref[0]
    kv = jnp.dot(mem_bf, c_wkv_ref[0],
                 preferred_element_type=jnp.float32) + c_bkv_ref[0]
    attn_c = _mha_full(q, kv[:, :D], kv[:, D:], c_wo_ref[0], cross_bias_ref[...], n_head)
    h2 = _ln(h1 + attn_c + c_bo_ref[0], ln2_g_ref[0], ln2_b_ref[0], LN_EPS)

    # --- FFN ---
    ff = jnp.dot(h2.astype(jnp.bfloat16), w1_ref[0],
                 preferred_element_type=jnp.float32) + b1_ref[0]
    ff = jnp.maximum(ff, 0.0)
    ff = jnp.dot(ff.astype(jnp.bfloat16), w2_ref[0],
                 preferred_element_type=jnp.float32) + b2_ref[0]
    out = _ln(h2 + ff, ln3_g_ref[0], ln3_b_ref[0], LN_EPS)

    act_ref[...] = out

    @pl.when(l == pl.num_programs(0) - 1)
    def _():  # nn.TransformerDecoder final LayerNorm fused into the last layer step
        o_ref[...] = _ln(out, fng_ref[...], fnb_ref[...], LN_EPS).astype(o_ref.dtype)


def decoder_stack_pallas(y2d, mem2d, self_bias, cross_bias, sp, fn_g, fn_b, *, n_head):
    BSt, D = y2d.shape
    L = sp['s_wqkv'].shape[0]

    full = lambda a: pl.BlockSpec(a.shape, lambda l, nd=a.ndim: (0,) * nd)
    perl = lambda a: pl.BlockSpec((1,) + a.shape[1:], lambda l, nd=a.ndim: (l,) + (0,) * (nd - 1))

    weight_keys = ['s_wqkv', 's_bqkv', 's_wo', 's_bo', 'ln1_g', 'ln1_b',
                   'c_wq', 'c_bq', 'c_wkv', 'c_bkv', 'c_wo', 'c_bo', 'ln2_g', 'ln2_b',
                   'w1', 'b1', 'w2', 'b2', 'ln3_g', 'ln3_b']
    in_arrays = [y2d, mem2d, self_bias, cross_bias] + [sp[k] for k in weight_keys] + [fn_g, fn_b]
    in_specs = ([full(y2d), full(mem2d), full(self_bias), full(cross_bias)]
                + [perl(sp[k]) for k in weight_keys] + [full(fn_g), full(fn_b)])

    return pl.pallas_call(
        functools.partial(_decoder_stack_kernel, n_head=n_head),
        out_shape=jax.ShapeDtypeStruct((BSt, D), jnp.float32),
        grid=(L,),
        in_specs=in_specs,
        out_specs=pl.BlockSpec((BSt, D), lambda l: (0, 0)),
        scratch_shapes=[pltpu.VMEM((BSt, D), jnp.float32)],
        compiler_params=pltpu.CompilerParams(dimension_semantics=("arbitrary",)),
    )(*in_arrays)


# ---------------------------- wrapper-side bias construction ----------------------------

def _block_diag_bias(B, Sq, Sk, key_bias=None, causal=False):
    """Additive (B*Sq, B*Sk) f32 bias: 0 within a sequence, NEG_INF across sequences,
    plus optional causal mask and per-key padding bias.  Tiny (a few KB)."""
    qb = jnp.repeat(jnp.arange(B), Sq)
    kb = jnp.repeat(jnp.arange(B), Sk)
    bias = jnp.where(qb[:, None] == kb[None, :], 0.0, NEG_INF)
    if causal:
        qi = jnp.tile(jnp.arange(Sq), B)[:, None]
        ki = jnp.tile(jnp.arange(Sk), B)[None, :]
        bias = bias + jnp.where(ki > qi, NEG_INF, 0.0)
    if key_bias is not None:  # key_bias: (B, Sk) additive (0 or NEG_INF)
        bias = bias + key_bias.reshape(-1)[None, :]
    return bias.astype(jnp.float32)


# ---------------------------- model forward ----------------------------

def translation_forward(prep, src_tokens, tgt_tokens, *, n_head):
    """TranslationModel.forward: embeddings + PE + nn.Transformer; returns (B, T_tgt, d_model)."""
    B, Ss = src_tokens.shape
    St = tgt_tokens.shape[1]
    pe = prep['pe']
    D = pe.shape[1]

    src_key_bias = jnp.where(src_tokens == PAD_ID, NEG_INF, 0.0).astype(jnp.float32)  # (B, Ss)
    tgt_key_bias = jnp.where(tgt_tokens == PAD_ID, NEG_INF, 0.0).astype(jnp.float32)  # (B, St)

    enc_bias = _block_diag_bias(B, Ss, Ss, key_bias=src_key_bias)                       # (B*Ss, B*Ss)
    dec_self_bias = _block_diag_bias(B, St, St, key_bias=tgt_key_bias, causal=True)     # (B*St, B*St)
    dec_cross_bias = _block_diag_bias(B, St, Ss)                                        # (B*St, B*Ss)

    # embeddings (padding_idx row is zero) + sinusoidal PE; dropout = identity (eval)
    x2d = (prep['src_emb'][src_tokens] + pe[:Ss][None, :, :]).reshape(B * Ss, D)
    y2d = (prep['tgt_emb'][tgt_tokens] + pe[:St][None, :, :]).reshape(B * St, D)

    mem2d = encoder_stack_pallas(x2d, enc_bias, prep['enc'],
                                 prep['enc_norm_g'], prep['enc_norm_b'], n_head=n_head)
    out2d = decoder_stack_pallas(y2d, mem2d, dec_self_bias, dec_cross_bias, prep['dec'],
                                 prep['dec_norm_g'], prep['dec_norm_b'], n_head=n_head)
    return out2d.reshape(B, St, D)


# ---------------------------- params ----------------------------

def make_positional_encoding(max_len, d_model):
    position = jnp.arange(max_len, dtype=jnp.float32)[:, None]
    div_term = jnp.exp(jnp.arange(0, d_model, 2, dtype=jnp.float32)
                       * (-math.log(10000.0) / d_model))
    pe = jnp.zeros((max_len, d_model), dtype=jnp.float32)
    pe = pe.at[:, 0::2].set(jnp.sin(position * div_term))
    pe = pe.at[:, 1::2].set(jnp.cos(position * div_term))
    return pe


def init_params(key, d_model, d_ff, n_head, n_enc, n_dec, src_vocab, tgt_vocab, max_len):
    keys = iter(jax.random.split(key, 1024))

    def w(shape, scale=0.02):
        return (scale * jax.random.normal(next(keys), shape)).astype(jnp.float32)

    def zeros(shape):
        return jnp.zeros(shape, jnp.float32)

    def ones(shape):
        return jnp.ones(shape, jnp.float32)

    def enc_layer():
        return {'wqkv': w((d_model, 3 * d_model)), 'bqkv': zeros((1, 3 * d_model)),
                'wo': w((d_model, d_model)), 'bo': zeros((1, d_model)),
                'ln1_g': ones((1, d_model)), 'ln1_b': zeros((1, d_model)),
                'w1': w((d_model, d_ff)), 'b1': zeros((1, d_ff)),
                'w2': w((d_ff, d_model)), 'b2': zeros((1, d_model)),
                'ln2_g': ones((1, d_model)), 'ln2_b': zeros((1, d_model))}

    def dec_layer():
        return {'s_wqkv': w((d_model, 3 * d_model)), 's_bqkv': zeros((1, 3 * d_model)),
                's_wo': w((d_model, d_model)), 's_bo': zeros((1, d_model)),
                'ln1_g': ones((1, d_model)), 'ln1_b': zeros((1, d_model)),
                'c_wq': w((d_model, d_model)), 'c_bq': zeros((1, d_model)),
                'c_wkv': w((d_model, 2 * d_model)), 'c_bkv': zeros((1, 2 * d_model)),
                'c_wo': w((d_model, d_model)), 'c_bo': zeros((1, d_model)),
                'ln2_g': ones((1, d_model)), 'ln2_b': zeros((1, d_model)),
                'w1': w((d_model, d_ff)), 'b1': zeros((1, d_ff)),
                'w2': w((d_ff, d_model)), 'b2': zeros((1, d_model)),
                'ln3_g': ones((1, d_model)), 'ln3_b': zeros((1, d_model))}

    src_emb = w((src_vocab, d_model), 1.0).at[PAD_ID].set(0.0)  # padding_idx=PAD_ID
    tgt_emb = w((tgt_vocab, d_model), 1.0).at[PAD_ID].set(0.0)

    return {'src_emb': src_emb, 'tgt_emb': tgt_emb,
            'enc_layers': [enc_layer() for _ in range(n_enc)],
            'dec_layers': [dec_layer() for _ in range(n_dec)],
            'enc_norm_g': ones((1, d_model)), 'enc_norm_b': zeros((1, d_model)),
            'dec_norm_g': ones((1, d_model)), 'dec_norm_b': zeros((1, d_model)),
            'pe': make_positional_encoding(max_len, d_model)}


def prepare_model(params, n_head):
    """Offline prep (done ONCE, outside jit): fold 1/sqrt(Dh) into the Q projections, cast weight
    matrices to bf16, and stack per-layer weights along a leading layer axis for the fused calls."""
    D = params['pe'].shape[1]
    scale = 1.0 / math.sqrt(D // n_head)
    bf = lambda a: a.astype(jnp.bfloat16)

    def prep_enc_layer(lp):
        wqkv = lp['wqkv'].at[:, :D].multiply(scale)
        bqkv = lp['bqkv'].at[:, :D].multiply(scale)
        return {'wqkv': bf(wqkv), 'bqkv': bqkv,
                'wo': bf(lp['wo']), 'bo': lp['bo'],
                'ln1_g': lp['ln1_g'], 'ln1_b': lp['ln1_b'],
                'w1': bf(lp['w1']), 'b1': lp['b1'],
                'w2': bf(lp['w2']), 'b2': lp['b2'],
                'ln2_g': lp['ln2_g'], 'ln2_b': lp['ln2_b']}

    def prep_dec_layer(lp):
        s_wqkv = lp['s_wqkv'].at[:, :D].multiply(scale)
        s_bqkv = lp['s_bqkv'].at[:, :D].multiply(scale)
        return {'s_wqkv': bf(s_wqkv), 's_bqkv': s_bqkv,
                's_wo': bf(lp['s_wo']), 's_bo': lp['s_bo'],
                'ln1_g': lp['ln1_g'], 'ln1_b': lp['ln1_b'],
                'c_wq': bf(lp['c_wq'] * scale), 'c_bq': lp['c_bq'] * scale,
                'c_wkv': bf(lp['c_wkv']), 'c_bkv': lp['c_bkv'],
                'c_wo': bf(lp['c_wo']), 'c_bo': lp['c_bo'],
                'ln2_g': lp['ln2_g'], 'ln2_b': lp['ln2_b'],
                'w1': bf(lp['w1']), 'b1': lp['b1'],
                'w2': bf(lp['w2']), 'b2': lp['b2'],
                'ln3_g': lp['ln3_g'], 'ln3_b': lp['ln3_b']}

    enc_layers = [prep_enc_layer(lp) for lp in params['enc_layers']]
    dec_layers = [prep_dec_layer(lp) for lp in params['dec_layers']]
    enc = {k: jnp.stack([lp[k] for lp in enc_layers], axis=0) for k in enc_layers[0]}
    dec = {k: jnp.stack([lp[k] for lp in dec_layers], axis=0) for k in dec_layers[0]}
    return {'src_emb': params['src_emb'], 'tgt_emb': params['tgt_emb'], 'pe': params['pe'],
            'enc': enc, 'dec': dec,
            'enc_norm_g': params['enc_norm_g'], 'enc_norm_b': params['enc_norm_b'],
            'dec_norm_g': params['dec_norm_g'], 'dec_norm_b': params['dec_norm_b']}


# ---------------------------- main ----------------------------

if __name__ == "__main__":
    D_MODEL, D_FF, N_HEAD = 128, 256, 4       # module-level constants in training.py
    ENC_LAYERS, DEC_LAYERS = 4, 4
    SRC_VOCAB, TGT_VOCAB = 32, 32             # small synthetic vocabularies
    MAX_LEN = 200
    B, SRC_LEN, TGT_LEN = 2, 10, 8

    key = jax.random.PRNGKey(0)
    pkey, skey, tkey = jax.random.split(key, 3)
    params = init_params(pkey, D_MODEL, D_FF, N_HEAD, ENC_LAYERS, DEC_LAYERS,
                         SRC_VOCAB, TGT_VOCAB, MAX_LEN)
    prep = prepare_model(params, N_HEAD)      # one-time: fold scale, bf16-cast, stack layers

    src = jax.random.randint(skey, (B, SRC_LEN), 2, SRC_VOCAB, dtype=jnp.int32)
    tgt = jax.random.randint(tkey, (B, TGT_LEN), 2, TGT_VOCAB, dtype=jnp.int32)
    # tail padding so the key-padding masks are exercised
    src = src.at[0, -2:].set(PAD_ID)
    tgt = tgt.at[1, -3:].set(PAD_ID)

    fwd = jax.jit(functools.partial(translation_forward, n_head=N_HEAD))
    out = jax.block_until_ready(fwd(prep, src, tgt))

    assert out.shape == (B, TGT_LEN, D_MODEL), out.shape
    assert bool(jnp.all(jnp.isfinite(out)))
    print("KERNEL_OK")
</pallas_src>

<mosaic_0001>
module attributes {stable_mosaic.version = 11 : i64} {
  func.func @_encoder_stack_kernel(%arg0: i32, %arg1: memref<20x128xf32, #tpu.memory_space<vmem>>, %arg2: memref<20x20xf32, #tpu.memory_space<vmem>>, %arg3: memref<1x128x384xbf16, #tpu.memory_space<vmem>>, %arg4: memref<1x1x384xf32, #tpu.memory_space<vmem>>, %arg5: memref<1x128x128xbf16, #tpu.memory_space<vmem>>, %arg6: memref<1x1x128xf32, #tpu.memory_space<vmem>>, %arg7: memref<1x1x128xf32, #tpu.memory_space<vmem>>, %arg8: memref<1x1x128xf32, #tpu.memory_space<vmem>>, %arg9: memref<1x128x256xbf16, #tpu.memory_space<vmem>>, %arg10: memref<1x1x256xf32, #tpu.memory_space<vmem>>, %arg11: memref<1x256x128xbf16, #tpu.memory_space<vmem>>, %arg12: memref<1x1x128xf32, #tpu.memory_space<vmem>>, %arg13: memref<1x1x128xf32, #tpu.memory_space<vmem>>, %arg14: memref<1x1x128xf32, #tpu.memory_space<vmem>>, %arg15: memref<1x128xf32, #tpu.memory_space<vmem>>, %arg16: memref<1x128xf32, #tpu.memory_space<vmem>>, %arg17: memref<20x128xbf16, #tpu.memory_space<vmem>>, %arg18: memref<20x128xf32, #tpu.memory_space<vmem>>) attributes {dimension_semantics = [#tpu.dimension_semantics<arbitrary>], iteration_bounds = array<i64: 4>, scalar_prefetch = 0 : i64, scratch_operands = 1 : i64, tpu.core_type = #tpu.core_type<tc>, window_params = [{pipeline_mode = #tpu.pipeline_mode<synchronous>, transform_indices = @transform_0, window_bounds = array<i64: 20, 128>}, {pipeline_mode = #tpu.pipeline_mode<synchronous>, transform_indices = @transform_1, window_bounds = array<i64: 20, 20>}, {transform_indices = @transform_2, window_bounds = array<i64: 1, 128, 384>}, {transform_indices = @transform_3, window_bounds = array<i64: 1, 1, 384>}, {transform_indices = @transform_4, window_bounds = array<i64: 1, 128, 128>}, {transform_indices = @transform_5, window_bounds = array<i64: 1, 1, 128>}, {transform_indices = @transform_6, window_bounds = array<i64: 1, 1, 128>}, {transform_indices = @transform_7, window_bounds = array<i64: 1, 1, 128>}, {transform_indices = @transform_8, window_bounds = array<i64: 1, 128, 256>}, {transform_indices = @transform_9, window_bounds = array<i64: 1, 1, 256>}, {transform_indices = @transform_10, window_bounds = array<i64: 1, 256, 128>}, {transform_indices = @transform_11, window_bounds = array<i64: 1, 1, 128>}, {transform_indices = @transform_12, window_bounds = array<i64: 1, 1, 128>}, {transform_indices = @transform_13, window_bounds = array<i64: 1, 1, 128>}, {pipeline_mode = #tpu.pipeline_mode<synchronous>, transform_indices = @transform_14, window_bounds = array<i64: 1, 128>}, {pipeline_mode = #tpu.pipeline_mode<synchronous>, transform_indices = @transform_15, window_bounds = array<i64: 1, 128>}, {pipeline_mode = #tpu.pipeline_mode<synchronous>, transform_indices = @transform_16, window_bounds = array<i64: 20, 128>}]} {
    %c0_i32 = arith.constant 0 : i32
    %0 = arith.cmpi eq, %arg0, %c0_i32 : i32
    %1 = arith.extui %0 : i1 to i32
    %c0_i32_0 = arith.constant 0 : i32
    %2 = arith.cmpi ne, %1, %c0_i32_0 : i32
    scf.if %2 {
      %c0_73 = arith.constant 0 : index
      %c0_74 = arith.constant 0 : index
      %173 = vector.load %arg1[%c0_73, %c0_74] : memref<20x128xf32, #tpu.memory_space<vmem>>, vector<20x128xf32>
      %c0_75 = arith.constant 0 : index
      %c0_76 = arith.constant 0 : index
      %174 = vector.load %arg18[%c0_75, %c0_76] : memref<20x128xf32, #tpu.memory_space<vmem>>, vector<20x128xf32>
      tpu.vector_store %arg18[%c0_75, %c0_76], %173 {strides = array<i32>} : memref<20x128xf32, #tpu.memory_space<vmem>>, vector<20x128xf32>,
    } else {
    }
    %c0 = arith.constant 0 : index
    %c0_1 = arith.constant 0 : index
    %3 = vector.load %arg18[%c0, %c0_1] : memref<20x128xf32, #tpu.memory_space<vmem>>, vector<20x128xf32>
    %4 = arith.truncf %3 : vector<20x128xf32> to vector<20x128xbf16>
    %c0_2 = arith.constant 0 : index
    %c0_3 = arith.constant 0 : index
    %c0_4 = arith.constant 0 : index
    %5 = vector.load %arg3[%c0_2, %c0_3, %c0_4] : memref<1x128x384xbf16, #tpu.memory_space<vmem>>, vector<1x128x384xbf16>
    %6 = vector.shape_cast %5 : vector<1x128x384xbf16> to vector<128x384xbf16>
    %cst = arith.constant dense<0.000000e+00> : vector<20x384xf32>
    %7 = tpu.matmul %4, %6, %cst {dimension_numbers = #tpu.dot_dimension_numbers<[1], [0], [0], [1], [0, 0, 1, 1], [], []>} : vector<20x128xbf16>, vector<128x384xbf16>, vector<20x384xf32> -> vector<20x384xf32>
    %c0_5 = arith.constant 0 : index
    %c0_6 = arith.constant 0 : index
    %c0_7 = arith.constant 0 : index
    %8 = vector.load %arg4[%c0_5, %c0_6, %c0_7] : memref<1x1x384xf32, #tpu.memory_space<vmem>>, vector<1x1x384xf32>
    %9 = vector.shape_cast %8 : vector<1x1x384xf32> to vector<1x384xf32>
    %10 = vector.broadcast %9 : vector<1x384xf32> to vector<20x384xf32>
    %11 = arith.addf %7, %10 : vector<20x384xf32>
    %12 = vector.extract_strided_slice %11 {offsets = [0, 0], sizes = [20, 128], strides = [1, 1]} : vector<20x384xf32> to vector<20x128xf32>
    %13 = vector.extract_strided_slice %11 {offsets = [0, 128], sizes = [20, 128], strides = [1, 1]} : vector<20x384xf32> to vector<20x128xf32>
    %14 = vector.extract_strided_slice %11 {offsets = [0, 256], sizes = [20, 128], strides = [1, 1]} : vector<20x384xf32> to vector<20x128xf32>
    %c0_8 = arith.constant 0 : index
    %c0_9 = arith.constant 0 : index
    %c0_10 = arith.constant 0 : index
    %15 = vector.load %arg5[%c0_8, %c0_9, %c0_10] : memref<1x128x128xbf16, #tpu.memory_space<vmem>>, vector<1x128x128xbf16>
    %16 = vector.shape_cast %15 : vector<1x128x128xbf16> to vector<128x128xbf16>
    %c0_11 = arith.constant 0 : index
    %c0_12 = arith.constant 0 : index
    %17 = vector.load %arg2[%c0_11, %c0_12] : memref<20x20xf32, #tpu.memory_space<vmem>>, vector<20x20xf32>
    %18 = vector.extract_strided_slice %12 {offsets = [0, 0], sizes = [20, 32], strides = [1, 1]} : vector<20x128xf32> to vector<20x32xf32>
    %19 = vector.extract_strided_slice %13 {offsets = [0, 0], sizes = [20, 32], strides = [1, 1]} : vector<20x128xf32> to vector<20x32xf32>
    %cst_13 = arith.constant dense<0.000000e+00> : vector<20x20xf32>
    %20 = tpu.matmul %18, %19, %cst_13 {dimension_numbers = #tpu.dot_dimension_numbers<[1], [1], [0], [0], [0, 0, 1, 0], [], []>} : vector<20x32xf32>, vector<20x32xf32>, vector<20x20xf32> -> vector<20x20xf32>
    %21 = arith.addf %20, %17 : vector<20x20xf32>
    %cst_14 = arith.constant dense<0xFF800000> : vector<20xf32>
    %22 = vector.multi_reduction <maximumf>, %21, %cst_14 [1] : vector<20x20xf32> to vector<20xf32>
    %23 = vector.shape_cast %22 : vector<20xf32> to vector<20x1xf32>
    %24 = vector.broadcast %23 : vector<20x1xf32> to vector<20x20xf32>
    %25 = arith.subf %21, %24 : vector<20x20xf32>
    %26 = math.exp %25 : vector<20x20xf32>
    %cst_15 = arith.constant dense<0.000000e+00> : vector<20xf32>
    %27 = vector.multi_reduction <add>, %26, %cst_15 [1] : vector<20x20xf32> to vector<20xf32>
    %28 = vector.shape_cast %27 : vector<20xf32> to vector<20x1xf32>
    %29 = tpu.reciprocal %28 {approx = true} : vector<20x1xf32> -> vector<20x1xf32>
    %30 = vector.broadcast %29 : vector<20x1xf32> to vector<20x20xf32>
    %31 = arith.mulf %26, %30 : vector<20x20xf32>
    %32 = arith.truncf %31 : vector<20x20xf32> to vector<20x20xbf16>
    %33 = vector.extract_strided_slice %14 {offsets = [0, 0], sizes = [20, 32], strides = [1, 1]} : vector<20x128xf32> to vector<20x32xf32>
    %34 = arith.truncf %33 : vector<20x32xf32> to vector<20x32xbf16>
    %cst_16 = arith.constant dense<0.000000e+00> : vector<20x32xf32>
    %35 = tpu.matmul %32, %34, %cst_16 {dimension_numbers = #tpu.dot_dimension_numbers<[1], [0], [0], [1], [0, 0, 1, 1], [], []>} : vector<20x20xbf16>, vector<20x32xbf16>, vector<20x32xf32> -> vector<20x32xf32>
    %36 = vector.extract_strided_slice %12 {offsets = [0, 32], sizes = [20, 32], strides = [1, 1]} : vector<20x128xf32> to vector<20x32xf32>
    %37 = vector.extract_strided_slice %13 {offsets = [0, 32], sizes = [20, 32], strides = [1, 1]} : vector<20x128xf32> to vector<20x32xf32>
    %cst_17 = arith.constant dense<0.000000e+00> : vector<20x20xf32>
    %38 = tpu.matmul %36, %37, %cst_17 {dimension_numbers = #tpu.dot_dimension_numbers<[1], [1], [0], [0], [0, 0, 1, 0], [], []>} : vector<20x32xf32>, vector<20x32xf32>, vector<20x20xf32> -> vector<20x20xf32>
    %39 = arith.addf %38, %17 : vector<20x20xf32>
    %cst_18 = arith.constant dense<0xFF800000> : vector<20xf32>
    %40 = vector.multi_reduction <maximumf>, %39, %cst_18 [1] : vector<20x20xf32> to vector<20xf32>
    %41 = vector.shape_cast %40 : vector<20xf32> to vector<20x1xf32>
    %42 = vector.broadcast %41 : vector<20x1xf32> to vector<20x20xf32>
    %43 = arith.subf %39, %42 : vector<20x20xf32>
    %44 = math.exp %43 : vector<20x20xf32>
    %cst_19 = arith.constant dense<0.000000e+00> : vector<20xf32>
    %45 = vector.multi_reduction <add>, %44, %cst_19 [1] : vector<20x20xf32> to vector<20xf32>
    %46 = vector.shape_cast %45 : vector<20xf32> to vector<20x1xf32>
    %47 = tpu.reciprocal %46 {approx = true} : vector<20x1xf32> -> vector<20x1xf32>
    %48 = vector.broadcast %47 : vector<20x1xf32> to vector<20x20xf32>
    %49 = arith.mulf %44, %48 : vector<20x20xf32>
    %50 = arith.truncf %49 : vector<20x20xf32> to vector<20x20xbf16>
    %51 = vector.extract_strided_slice %14 {offsets = [0, 32], sizes = [20, 32], strides = [1, 1]} : vector<20x128xf32> to vector<20x32xf32>
    %52 = arith.truncf %51 : vector<20x32xf32> to vector<20x32xbf16>
    %cst_20 = arith.constant dense<0.000000e+00> : vector<20x32xf32>
    %53 = tpu.matmul %50, %52, %cst_20 {dimension_numbers = #tpu.dot_dimension_numbers<[1], [0], [0], [1], [0, 0, 1, 1], [], []>} : vector<20x20xbf16>, vector<20x32xbf16>, vector<20x32xf32> -> vector<20x32xf32>
    %54 = vector.extract_strided_slice %12 {offsets = [0, 64], sizes = [20, 32], strides = [1, 1]} : vector<20x128xf32> to vector<20x32xf32>
    %55 = vector.extract_strided_slice %13 {offsets = [0, 64], sizes = [20, 32], strides = [1, 1]} : vector<20x128xf32> to vector<20x32xf32>
    %cst_21 = arith.constant dense<0.000000e+00> : vector<20x20xf32>
    %56 = tpu.matmul %54, %55, %cst_21 {dimension_numbers = #tpu.dot_dimension_numbers<[1], [1], [0], [0], [0, 0, 1, 0], [], []>} : vector<20x32xf32>, vector<20x32xf32>, vector<20x20xf32> -> vector<20x20xf32>
    %57 = arith.addf %56, %17 : vector<20x20xf32>
    %cst_22 = arith.constant dense<0xFF800000> : vector<20xf32>
    %58 = vector.multi_reduction <maximumf>, %57, %cst_22 [1] : vector<20x20xf32> to vector<20xf32>
    %59 = vector.shape_cast %58 : vector<20xf32> to vector<20x1xf32>
    %60 = vector.broadcast %59 : vector<20x1xf32> to vector<20x20xf32>
    %61 = arith.subf %57, %60 : vector<20x20xf32>
    %62 = math.exp %61 : vector<20x20xf32>
    %cst_23 = arith.constant dense<0.000000e+00> : vector<20xf32>
    %63 = vector.multi_reduction <add>, %62, %cst_23 [1] : vector<20x20xf32> to vector<20xf32>
    %64 = vector.shape_cast %63 : vector<20xf32> to vector<20x1xf32>
    %65 = tpu.reciprocal %64 {approx = true} : vector<20x1xf32> -> vector<20x1xf32>
    %66 = vector.broadcast %65 : vector<20x1xf32> to vector<20x20xf32>
    %67 = arith.mulf %62, %66 : vector<20x20xf32>
    %68 = arith.truncf %67 : vector<20x20xf32> to vector<20x20xbf16>
    %69 = vector.extract_strided_slice %14 {offsets = [0, 64], sizes = [20, 32], strides = [1, 1]} : vector<20x128xf32> to vector<20x32xf32>
    %70 = arith.truncf %69 : vector<20x32xf32> to vector<20x32xbf16>
    %cst_24 = arith.constant dense<0.000000e+00> : vector<20x32xf32>
    %71 = tpu.matmul %68, %70, %cst_24 {dimension_numbers = #tpu.dot_dimension_numbers<[1], [0], [0], [1], [0, 0, 1, 1], [], []>} : vector<20x20xbf16>, vector<20x32xbf16>, vector<20x32xf32> -> vector<20x32xf32>
    %72 = vector.extract_strided_slice %12 {offsets = [0, 96], sizes = [20, 32], strides = [1, 1]} : vector<20x128xf32> to vector<20x32xf32>
    %73 = vector.extract_strided_slice %13 {offsets = [0, 96], sizes = [20, 32], strides = [1, 1]} : vector<20x128xf32> to vector<20x32xf32>
    %cst_25 = arith.constant dense<0.000000e+00> : vector<20x20xf32>
    %74 = tpu.matmul %72, %73, %cst_25 {dimension_numbers = #tpu.dot_dimension_numbers<[1], [1], [0], [0], [0, 0, 1, 0], [], []>} : vector<20x32xf32>, vector<20x32xf32>, vector<20x20xf32> -> vector<20x20xf32>
    %75 = arith.addf %74, %17 : vector<20x20xf32>
    %cst_26 = arith.constant dense<0xFF800000> : vector<20xf32>
    %76 = vector.multi_reduction <maximumf>, %75, %cst_26 [1] : vector<20x20xf32> to vector<20xf32>
    %77 = vector.shape_cast %76 : vector<20xf32> to vector<20x1xf32>
    %78 = vector.broadcast %77 : vector<20x1xf32> to vector<20x20xf32>
    %79 = arith.subf %75, %78 : vector<20x20xf32>
    %80 = math.exp %79 : vector<20x20xf32>
    %cst_27 = arith.constant dense<0.000000e+00> : vector<20xf32>
    %81 = vector.multi_reduction <add>, %80, %cst_27 [1] : vector<20x20xf32> to vector<20xf32>
    %82 = vector.shape_cast %81 : vector<20xf32> to vector<20x1xf32>
    %83 = tpu.reciprocal %82 {approx = true} : vector<20x1xf32> -> vector<20x1xf32>
    %84 = vector.broadcast %83 : vector<20x1xf32> to vector<20x20xf32>
    %85 = arith.mulf %80, %84 : vector<20x20xf32>
    %86 = arith.truncf %85 : vector<20x20xf32> to vector<20x20xbf16>
    %87 = vector.extract_strided_slice %14 {offsets = [0, 96], sizes = [20, 32], strides = [1, 1]} : vector<20x128xf32> to vector<20x32xf32>
    %88 = arith.truncf %87 : vector<20x32xf32> to vector<20x32xbf16>
    %cst_28 = arith.constant dense<0.000000e+00> : vector<20x32xf32>
    %89 = tpu.matmul %86, %88, %cst_28 {dimension_numbers = #tpu.dot_dimension_numbers<[1], [0], [0], [1], [0, 0, 1, 1], [], []>} : vector<20x20xbf16>, vector<20x32xbf16>, vector<20x32xf32> -> vector<20x32xf32>
    %90 = tpu.concatenate %35, %53, %71, %89 in 1 : vector<20x32xf32>, vector<20x32xf32>, vector<20x32xf32>, vector<20x32xf32> -> vector<20x128xf32>
    %91 = arith.truncf %90 : vector<20x128xf32> to vector<20x128xbf16>
    %cst_29 = arith.constant dense<0.000000e+00> : vector<20x128xf32>
    %92 = tpu.matmul %91, %16, %cst_29 {dimension_numbers = #tpu.dot_dimension_numbers<[1], [0], [0], [1], [0, 0, 1, 1], [], []>} : vector<20x128xbf16>, vector<128x128xbf16>, vector<20x128xf32> -> vector<20x128xf32>
    %93 = arith.addf %3, %92 : vector<20x128xf32>
    %c0_30 = arith.constant 0 : index
    %c0_31 = arith.constant 0 : index
    %c0_32 = arith.constant 0 : index
    %94 = vector.load %arg6[%c0_30, %c0_31, %c0_32] : memref<1x1x128xf32, #tpu.memory_space<vmem>>, vector<1x1x128xf32>
    %95 = vector.shape_cast %94 : vector<1x1x128xf32> to vector<1x128xf32>
    %96 = vector.broadcast %95 : vector<1x128xf32> to vector<20x128xf32>
    %97 = arith.addf %93, %96 : vector<20x128xf32>
    %c0_33 = arith.constant 0 : index
    %c0_34 = arith.constant 0 : index
    %c0_35 = arith.constant 0 : index
    %98 = vector.load %arg7[%c0_33, %c0_34, %c0_35] : memref<1x1x128xf32, #tpu.memory_space<vmem>>, vector<1x1x128xf32>
    %99 = vector.shape_cast %98 : vector<1x1x128xf32> to vector<1x128xf32>
    %c0_36 = arith.constant 0 : index
    %c0_37 = arith.constant 0 : index
    %c0_38 = arith.constant 0 : index
    %100 = vector.load %arg8[%c0_36, %c0_37, %c0_38] : memref<1x1x128xf32, #tpu.memory_space<vmem>>, vector<1x1x128xf32>
    %101 = vector.shape_cast %100 : vector<1x1x128xf32> to vector<1x128xf32>
    %cst_39 = arith.constant dense<0.000000e+00> : vector<20xf32>
    %102 = vector.multi_reduction <add>, %97, %cst_39 [1] : vector<20x128xf32> to vector<20xf32>
    %103 = vector.shape_cast %102 : vector<20xf32> to vector<20x1xf32>
    %cst_40 = arith.constant 1.280000e+02 : f32
    %104 = vector.broadcast %cst_40 : f32 to vector<20x1xf32>
    %105 = arith.divf %103, %104 : vector<20x1xf32>
    %106 = vector.broadcast %105 : vector<20x1xf32> to vector<20x128xf32>
    %107 = arith.subf %97, %106 : vector<20x128xf32>
    %108 = arith.mulf %107, %107 : vector<20x128xf32>
    %cst_41 = arith.constant dense<0.000000e+00> : vector<20xf32>
    %109 = vector.multi_reduction <add>, %108, %cst_41 [1] : vector<20x128xf32> to vector<20xf32>
    %110 = vector.shape_cast %109 : vector<20xf32> to vector<20x1xf32>
    %cst_42 = arith.constant 1.280000e+02 : f32
    %111 = vector.broadcast %cst_42 : f32 to vector<20x1xf32>
    %112 = arith.divf %110, %111 : vector<20x1xf32>
    %113 = vector.broadcast %105 : vector<20x1xf32> to vector<20x128xf32>
    %114 = arith.subf %97, %113 : vector<20x128xf32>
    %cst_43 = arith.constant 9.99999974E-6 : f32
    %115 = vector.broadcast %cst_43 : f32 to vector<20x1xf32>
    %116 = arith.addf %112, %115 : vector<20x1xf32>
    %117 = math.rsqrt %116 : vector<20x1xf32>
    %118 = vector.broadcast %117 : vector<20x1xf32> to vector<20x128xf32>
    %119 = arith.mulf %114, %118 : vector<20x128xf32>
    %120 = vector.broadcast %99 : vector<1x128xf32> to vector<20x128xf32>
    %121 = arith.mulf %119, %120 : vector<20x128xf32>
    %122 = vector.broadcast %101 : vector<1x128xf32> to vector<20x128xf32>
    %123 = arith.addf %121, %122 : vector<20x128xf32>
    %124 = arith.truncf %123 : vector<20x128xf32> to vector<20x128xbf16>
    %c0_44 = arith.constant 0 : index
    %c0_45 = arith.constant 0 : index
    %c0_46 = arith.constant 0 : index
    %125 = vector.load %arg9[%c0_44, %c0_45, %c0_46] : memref<1x128x256xbf16, #tpu.memory_space<vmem>>, vector<1x128x256xbf16>
    %126 = vector.shape_cast %125 : vector<1x128x256xbf16> to vector<128x256xbf16>
    %cst_47 = arith.constant dense<0.000000e+00> : vector<20x256xf32>
    %127 = tpu.matmul %124, %126, %cst_47 {dimension_numbers = #tpu.dot_dimension_numbers<[1], [0], [0], [1], [0, 0, 1, 1], [], []>} : vector<20x128xbf16>, vector<128x256xbf16>, vector<20x256xf32> -> vector<20x256xf32>
    %c0_48 = arith.constant 0 : index
    %c0_49 = arith.constant 0 : index
    %c0_50 = arith.constant 0 : index
    %128 = vector.load %arg10[%c0_48, %c0_49, %c0_50] : memref<1x1x256xf32, #tpu.memory_space<vmem>>, vector<1x1x256xf32>
    %129 = vector.shape_cast %128 : vector<1x1x256xf32> to vector<1x256xf32>
    %130 = vector.broadcast %129 : vector<1x256xf32> to vector<20x256xf32>
    %131 = arith.addf %127, %130 : vector<20x256xf32>
    %cst_51 = arith.constant 0.000000e+00 : f32
    %132 = vector.broadcast %cst_51 : f32 to vector<20x256xf32>
    %133 = arith.maximumf %131, %132 : vector<20x256xf32>
    %134 = arith.truncf %133 : vector<20x256xf32> to vector<20x256xbf16>
    %c0_52 = arith.constant 0 : index
    %c0_53 = arith.constant 0 : index
    %c0_54 = arith.constant 0 : index
    %135 = vector.load %arg11[%c0_52, %c0_53, %c0_54] : memref<1x256x128xbf16, #tpu.memory_space<vmem>>, vector<1x256x128xbf16>
    %136 = vector.shape_cast %135 : vector<1x256x128xbf16> to vector<256x128xbf16>
    %cst_55 = arith.constant dense<0.000000e+00> : vector<20x128xf32>
    %137 = tpu.matmul %134, %136, %cst_55 {dimension_numbers = #tpu.dot_dimension_numbers<[1], [0], [0], [1], [0, 0, 1, 1], [], []>} : vector<20x256xbf16>, vector<256x128xbf16>, vector<20x128xf32> -> vector<20x128xf32>
    %c0_56 = arith.constant 0 : index
    %c0_57 = arith.constant 0 : index
    %c0_58 = arith.constant 0 : index
    %138 = vector.load %arg12[%c0_56, %c0_57, %c0_58] : memref<1x1x128xf32, #tpu.memory_space<vmem>>, vector<1x1x128xf32>
    %139 = vector.shape_cast %138 : vector<1x1x128xf32> to vector<1x128xf32>
    %140 = vector.broadcast %139 : vector<1x128xf32> to vector<20x128xf32>
    %141 = arith.addf %137, %140 : vector<20x128xf32>
    %142 = arith.addf %123, %141 : vector<20x128xf32>
    %c0_59 = arith.constant 0 : index
    %c0_60 = arith.constant 0 : index
    %c0_61 = arith.constant 0 : index
    %143 = vector.load %arg13[%c0_59, %c0_60, %c0_61] : memref<1x1x128xf32, #tpu.memory_space<vmem>>, vector<1x1x128xf32>
    %144 = vector.shape_cast %143 : vector<1x1x128xf32> to vector<1x128xf32>
    %c0_62 = arith.constant 0 : index
    %c0_63 = arith.constant 0 : index
    %c0_64 = arith.constant 0 : index
    %145 = vector.load %arg14[%c0_62, %c0_63, %c0_64] : memref<1x1x128xf32, #tpu.memory_space<vmem>>, vector<1x1x128xf32>
    %146 = vector.shape_cast %145 : vector<1x1x128xf32> to vector<1x128xf32>
    %cst_65 = arith.constant dense<0.000000e+00> : vector<20xf32>
    %147 = vector.multi_reduction <add>, %142, %cst_65 [1] : vector<20x128xf32> to vector<20xf32>
    %148 = vector.shape_cast %147 : vector<20xf32> to vector<20x1xf32>
    %cst_66 = arith.constant 1.280000e+02 : f32
    %149 = vector.broadcast %cst_66 : f32 to vector<20x1xf32>
    %150 = arith.divf %148, %149 : vector<20x1xf32>
    %151 = vector.broadcast %150 : vector<20x1xf32> to vector<20x128xf32>
    %152 = arith.subf %142, %151 : vector<20x128xf32>
    %153 = arith.mulf %152, %152 : vector<20x128xf32>
    %cst_67 = arith.constant dense<0.000000e+00> : vector<20xf32>
    %154 = vector.multi_reduction <add>, %153, %cst_67 [1] : vector<20x128xf32> to vector<20xf32>
    %155 = vector.shape_cast %154 : vector<20xf32> to vector<20x1xf32>
    %cst_68 = arith.constant 1.280000e+02 : f32
    %156 = vector.broadcast %cst_68 : f32 to vector<20x1xf32>
    %157 = arith.divf %155, %156 : vector<20x1xf32>
    %158 = vector.broadcast %150 : vector<20x1xf32> to vector<20x128xf32>
    %159 = arith.subf %142, %158 : vector<20x128xf32>
    %cst_69 = arith.constant 9.99999974E-6 : f32
    %160 = vector.broadcast %cst_69 : f32 to vector<20x1xf32>
    %161 = arith.addf %157, %160 : vector<20x1xf32>
    %162 = math.rsqrt %161 : vector<20x1xf32>
    %163 = vector.broadcast %162 : vector<20x1xf32> to vector<20x128xf32>
    %164 = arith.mulf %159, %163 : vector<20x128xf32>
    %165 = vector.broadcast %144 : vector<1x128xf32> to vector<20x128xf32>
    %166 = arith.mulf %164, %165 : vector<20x128xf32>
    %167 = vector.broadcast %146 : vector<1x128xf32> to vector<20x128xf32>
    %168 = arith.addf %166, %167 : vector<20x128xf32>
    %c0_70 = arith.constant 0 : index
    %c0_71 = arith.constant 0 : index
    %169 = vector.load %arg18[%c0_70, %c0_71] : memref<20x128xf32, #tpu.memory_space<vmem>>, vector<20x128xf32>
    tpu.vector_store %arg18[%c0_70, %c0_71], %168 {strides = array<i32>} : memref<20x128xf32, #tpu.memory_space<vmem>>, vector<20x128xf32>,
    %c3_i32 = arith.constant 3 : i32
    %170 = arith.cmpi eq, %arg0, %c3_i32 : i32
    %171 = arith.extui %170 : i1 to i32
    %c0_i32_72 = arith.constant 0 : i32
    %172 = arith.cmpi ne, %171, %c0_i32_72 : i32
    scf.if %172 {
      %c0_73 = arith.constant 0 : index
      %c0_74 = arith.constant 0 : index
      %173 = vector.load %arg15[%c0_73, %c0_74] : memref<1x128xf32, #tpu.memory_space<vmem>>, vector<1x128xf32>
      %c0_75 = arith.constant 0 : index
      %c0_76 = arith.constant 0 : index
      %174 = vector.load %arg16[%c0_75, %c0_76] : memref<1x128xf32, #tpu.memory_space<vmem>>, vector<1x128xf32>
      %cst_77 = arith.constant dense<0.000000e+00> : vector<20xf32>
      %175 = vector.multi_reduction <add>, %168, %cst_77 [1] : vector<20x128xf32> to vector<20xf32>
      %176 = vector.shape_cast %175 : vector<20xf32> to vector<20x1xf32>
      %cst_78 = arith.constant 1.280000e+02 : f32
      %177 = vector.broadcast %cst_78 : f32 to vector<20x1xf32>
      %178 = arith.divf %176, %177 : vector<20x1xf32>
      %179 = vector.broadcast %178 : vector<20x1xf32> to vector<20x128xf32>
      %180 = arith.subf %168, %179 : vector<20x128xf32>
      %181 = arith.mulf %180, %180 : vector<20x128xf32>
      %cst_79 = arith.constant dense<0.000000e+00> : vector<20xf32>
      %182 = vector.multi_reduction <add>, %181, %cst_79 [1] : vector<20x128xf32> to vector<20xf32>
      %183 = vector.shape_cast %182 : vector<20xf32> to vector<20x1xf32>
      %cst_80 = arith.constant 1.280000e+02 : f32
      %184 = vector.broadcast %cst_80 : f32 to vector<20x1xf32>
      %185 = arith.divf %183, %184 : vector<20x1xf32>
      %186 = vector.broadcast %178 : vector<20x1xf32> to vector<20x128xf32>
      %187 = arith.subf %168, %186 : vector<20x128xf32>
      %cst_81 = arith.constant 9.99999974E-6 : f32
      %188 = vector.broadcast %cst_81 : f32 to vector<20x1xf32>
      %189 = arith.addf %185, %188 : vector<20x1xf32>
      %190 = math.rsqrt %189 : vector<20x1xf32>
      %191 = vector.broadcast %190 : vector<20x1xf32> to vector<20x128xf32>
      %192 = arith.mulf %187, %191 : vector<20x128xf32>
      %193 = vector.broadcast %173 : vector<1x128xf32> to vector<20x128xf32>
      %194 = arith.mulf %192, %193 : vector<20x128xf32>
      %195 = vector.broadcast %174 : vector<1x128xf32> to vector<20x128xf32>
      %196 = arith.addf %194, %195 : vector<20x128xf32>
      %197 = arith.truncf %196 : vector<20x128xf32> to vector<20x128xbf16>
      %c0_82 = arith.constant 0 : index
      %c0_83 = arith.constant 0 : index
      %198 = vector.load %arg17[%c0_82, %c0_83] : memref<20x128xbf16, #tpu.memory_space<vmem>>, vector<20x128xbf16>
      tpu.vector_store %arg17[%c0_82, %c0_83], %197 {strides = array<i32>} : memref<20x128xbf16, #tpu.memory_space<vmem>>, vector<20x128xbf16>,
    } else {
    }
    return
  }
  func.func @transform_0(%arg0: i32) -> (i32, i32) {
    %c0_i32 = arith.constant 0 : i32
    %c0_i32_0 = arith.constant 0 : i32
    %c0_i32_1 = arith.constant 0 : i32
    return %c0_i32, %c0_i32_0 : i32, i32
  }
  func.func @transform_1(%arg0: i32) -> (i32, i32) {
    %c0_i32 = arith.constant 0 : i32
    %c0_i32_0 = arith.constant 0 : i32
    %c0_i32_1 = arith.constant 0 : i32
    return %c0_i32, %c0_i32_0 : i32, i32
  }
  func.func @transform_2(%arg0: i32) -> (i32, i32, i32) {
    %c0_i32 = arith.constant 0 : i32
    %c0_i32_0 = arith.constant 0 : i32
    %c0_i32_1 = arith.constant 0 : i32
    return %arg0, %c0_i32, %c0_i32_0 : i32, i32, i32
  }
  func.func @transform_3(%arg0: i32) -> (i32, i32, i32) {
    %c0_i32 = arith.constant 0 : i32
    %c0_i32_0 = arith.constant 0 : i32
    %c0_i32_1 = arith.constant 0 : i32
    return %arg0, %c0_i32, %c0_i32_0 : i32, i32, i32
  }
  func.func @transform_4(%arg0: i32) -> (i32, i32, i32) {
    %c0_i32 = arith.constant 0 : i32
    %c0_i32_0 = arith.constant 0 : i32
    %c0_i32_1 = arith.constant 0 : i32
    return %arg0, %c0_i32, %c0_i32_0 : i32, i32, i32
  }
  func.func @transform_5(%arg0: i32) -> (i32, i32, i32) {
    %c0_i32 = arith.constant 0 : i32
    %c0_i32_0 = arith.constant 0 : i32
    %c0_i32_1 = arith.constant 0 : i32
    return %arg0, %c0_i32, %c0_i32_0 : i32, i32, i32
  }
  func.func @transform_6(%arg0: i32) -> (i32, i32, i32) {
    %c0_i32 = arith.constant 0 : i32
    %c0_i32_0 = arith.constant 0 : i32
    %c0_i32_1 = arith.constant 0 : i32
    return %arg0, %c0_i32, %c0_i32_0 : i32, i32, i32
  }
  func.func @transform_7(%arg0: i32) -> (i32, i32, i32) {
    %c0_i32 = arith.constant 0 : i32
    %c0_i32_0 = arith.constant 0 : i32
    %c0_i32_1 = arith.constant 0 : i32
    return %arg0, %c0_i32, %c0_i32_0 : i32, i32, i32
  }
  func.func @transform_8(%arg0: i32) -> (i32, i32, i32) {
    %c0_i32 = arith.constant 0 : i32
    %c0_i32_0 = arith.constant 0 : i32
    %c0_i32_1 = arith.constant 0 : i32
    return %arg0, %c0_i32, %c0_i32_0 : i32, i32, i32
  }
  func.func @transform_9(%arg0: i32) -> (i32, i32, i32) {
    %c0_i32 = arith.constant 0 : i32
    %c0_i32_0 = arith.constant 0 : i32
    %c0_i32_1 = arith.constant 0 : i32
    return %arg0, %c0_i32, %c0_i32_0 : i32, i32, i32
  }
  func.func @transform_10(%arg0: i32) -> (i32, i32, i32) {
    %c0_i32 = arith.constant 0 : i32
    %c0_i32_0 = arith.constant 0 : i32
    %c0_i32_1 = arith.constant 0 : i32
    return %arg0, %c0_i32, %c0_i32_0 : i32, i32, i32
  }
  func.func @transform_11(%arg0: i32) -> (i32, i32, i32) {
    %c0_i32 = arith.constant 0 : i32
    %c0_i32_0 = arith.constant 0 : i32
    %c0_i32_1 = arith.constant 0 : i32
    return %arg0, %c0_i32, %c0_i32_0 : i32, i32, i32
  }
  func.func @transform_12(%arg0: i32) -> (i32, i32, i32) {
    %c0_i32 = arith.constant 0 : i32
    %c0_i32_0 = arith.constant 0 : i32
    %c0_i32_1 = arith.constant 0 : i32
    return %arg0, %c0_i32, %c0_i32_0 : i32, i32, i32
  }
  func.func @transform_13(%arg0: i32) -> (i32, i32, i32) {
    %c0_i32 = arith.constant 0 : i32
    %c0_i32_0 = arith.constant 0 : i32
    %c0_i32_1 = arith.constant 0 : i32
    return %arg0, %c0_i32, %c0_i32_0 : i32, i32, i32
  }
  func.func @transform_14(%arg0: i32) -> (i32, i32) {
    %c0_i32 = arith.constant 0 : i32
    %c0_i32_0 = arith.constant 0 : i32
    %c0_i32_1 = arith.constant 0 : i32
    return %c0_i32, %c0_i32_0 : i32, i32
  }
  func.func @transform_15(%arg0: i32) -> (i32, i32) {
    %c0_i32 = arith.constant 0 : i32
    %c0_i32_0 = arith.constant 0 : i32
    %c0_i32_1 = arith.constant 0 : i32
    return %c0_i32, %c0_i32_0 : i32, i32
  }
  func.func @transform_16(%arg0: i32) -> (i32, i32) {
    %c0_i32 = arith.constant 0 : i32
    %c0_i32_0 = arith.constant 0 : i32
    %c0_i32_1 = arith.constant 0 : i32
    return %c0_i32, %c0_i32_0 : i32, i32
  }
}

module attributes {stable_mosaic.version = 11 : i64} {
  func.func @_decoder_stack_kernel(%arg0: i32, %arg1: memref<16x128xf32, #tpu.memory_space<vmem>>, %arg2: memref<20x128xbf16, #tpu.memory_space<vmem>>, %arg3: memref<16x16xf32, #tpu.memory_space<vmem>>, %arg4: memref<16x20xf32, #tpu.memory_space<vmem>>, %arg5: memref<1x128x384xbf16, #tpu.memory_space<vmem>>, %arg6: memref<1x1x384xf32, #tpu.memory_space<vmem>>, %arg7: memref<1x128x128xbf16, #tpu.memory_space<vmem>>, %arg8: memref<1x1x128xf32, #tpu.memory_space<vmem>>, %arg9: memref<1x1x128xf32, #tpu.memory_space<vmem>>, %arg10: memref<1x1x128xf32, #tpu.memory_space<vmem>>, %arg11: memref<1x128x128xbf16, #tpu.memory_space<vmem>>, %arg12: memref<1x1x128xf32, #tpu.memory_space<vmem>>, %arg13: memref<1x128x256xbf16, #tpu.memory_space<vmem>>, %arg14: memref<1x1x256xf32, #tpu.memory_space<vmem>>, %arg15: memref<1x128x128xbf16, #tpu.memory_space<vmem>>, %arg16: memref<1x1x128xf32, #tpu.memory_space<vmem>>, %arg17: memref<1x1x128xf32, #tpu.memory_space<vmem>>, %arg18: memref<1x1x128xf32, #tpu.memory_space<vmem>>, %arg19: memref<1x128x256xbf16, #tpu.memory_space<vmem>>, %arg20: memref<1x1x256xf32, #tpu.memory_space<vmem>>, %arg21: memref<1x256x128xbf16, #tpu.memory_space<vmem>>, %arg22: memref<1x1x128xf32, #tpu.memory_space<vmem>>, %arg23: memref<1x1x128xf32, #tpu.memory_space<vmem>>, %arg24: memref<1x1x128xf32, #tpu.memory_space<vmem>>, %arg25: memref<1x128xf32, #tpu.memory_space<vmem>>, %arg26: memref<1x128xf32, #tpu.memory_space<vmem>>, %arg27: memref<16x128xf32, #tpu.memory_space<vmem>>, %arg28: memref<16x128xf32, #tpu.memory_space<vmem>>) attributes {dimension_semantics = [#tpu.dimension_semantics<arbitrary>], iteration_bounds = array<i64: 4>, scalar_prefetch = 0 : i64, scratch_operands = 1 : i64, tpu.core_type = #tpu.core_type<tc>, window_params = [{pipeline_mode = #tpu.pipeline_mode<synchronous>, transform_indices = @transform_0, window_bounds = array<i64: 16, 128>}, {pipeline_mode = #tpu.pipeline_mode<synchronous>, transform_indices = @transform_1, window_bounds = array<i64: 20, 128>}, {pipeline_mode = #tpu.pipeline_mode<synchronous>, transform_indices = @transform_2, window_bounds = array<i64: 16, 16>}, {pipeline_mode = #tpu.pipeline_mode<synchronous>, transform_indices = @transform_3, window_bounds = array<i64: 16, 20>}, {transform_indices = @transform_4, window_bounds = array<i64: 1, 128, 384>}, {transform_indices = @transform_5, window_bounds = array<i64: 1, 1, 384>}, {transform_indices = @transform_6, window_bounds = array<i64: 1, 128, 128>}, {transform_indices = @transform_7, window_bounds = array<i64: 1, 1, 128>}, {transform_indices = @transform_8, window_bounds = array<i64: 1, 1, 128>}, {transform_indices = @transform_9, window_bounds = array<i64: 1, 1, 128>}, {transform_indices = @transform_10, window_bounds = array<i64: 1, 128, 128>}, {transform_indices = @transform_11, window_bounds = array<i64: 1, 1, 128>}, {transform_indices = @transform_12, window_bounds = array<i64: 1, 128, 256>}, {transform_indices = @transform_13, window_bounds = array<i64: 1, 1, 256>}, {transform_indices = @transform_14, window_bounds = array<i64: 1, 128, 128>}, {transform_indices = @transform_15, window_bounds = array<i64: 1, 1, 128>}, {transform_indices = @transform_16, window_bounds = array<i64: 1, 1, 128>}, {transform_indices = @transform_17, window_bounds = array<i64: 1, 1, 128>}, {transform_indices = @transform_18, window_bounds = array<i64: 1, 128, 256>}, {transform_indices = @transform_19, window_bounds = array<i64: 1, 1, 256>}, {transform_indices = @transform_20, window_bounds = array<i64: 1, 256, 128>}, {transform_indices = @transform_21, window_bounds = array<i64: 1, 1, 128>}, {transform_indices = @transform_22, window_bounds = array<i64: 1, 1, 128>}, {transform_indices = @transform_23, window_bounds = array<i64: 1, 1, 128>}, {pipeline_mode = #tpu.pipeline_mode<synchronous>, transform_indices = @transform_24, window_bounds = array<i64: 1, 128>}, {pipeline_mode = #tpu.pipeline_mode<synchronous>, transform_indices = @transform_25, window_bounds = array<i64: 1, 128>}, {pipeline_mode = #tpu.pipeline_mode<synchronous>, transform_indices = @transform_26, window_bounds = array<i64: 16, 128>}]} {
    %c0_i32 = arith.constant 0 : i32
    %0 = arith.cmpi eq, %arg0, %c0_i32 : i32
    %1 = arith.extui %0 : i1 to i32
    %c0_i32_0 = arith.constant 0 : i32
    %2 = arith.cmpi ne, %1, %c0_i32_0 : i32
    scf.if %2 {
      %c0_125 = arith.constant 0 : index
      %c0_126 = arith.constant 0 : index
      %300 = vector.load %arg1[%c0_125, %c0_126] : memref<16x128xf32, #tpu.memory_space<vmem>>, vector<16x128xf32>
      %c0_127 = arith.constant 0 : index
      %c0_128 = arith.constant 0 : index
      %301 = vector.load %arg28[%c0_127, %c0_128] : memref<16x128xf32, #tpu.memory_space<vmem>>, vector<16x128xf32>
      tpu.vector_store %arg28[%c0_127, %c0_128], %300 {strides = array<i32>} : memref<16x128xf32, #tpu.memory_space<vmem>>, vector<16x128xf32>,
    } else {
    }
    %c0 = arith.constant 0 : index
    %c0_1 = arith.constant 0 : index
    %3 = vector.load %arg28[%c0, %c0_1] : memref<16x128xf32, #tpu.memory_space<vmem>>, vector<16x128xf32>
    %c0_2 = arith.constant 0 : index
    %c0_3 = arith.constant 0 : index
    %4 = vector.load %arg2[%c0_2, %c0_3] : memref<20x128xbf16, #tpu.memory_space<vmem>>, vector<20x128xbf16>
    %5 = arith.truncf %3 : vector<16x128xf32> to vector<16x128xbf16>
    %c0_4 = arith.constant 0 : index
    %c0_5 = arith.constant 0 : index
    %c0_6 = arith.constant 0 : index
    %6 = vector.load %arg5[%c0_4, %c0_5, %c0_6] : memref<1x128x384xbf16, #tpu.memory_space<vmem>>, vector<1x128x384xbf16>
    %7 = vector.shape_cast %6 : vector<1x128x384xbf16> to vector<128x384xbf16>
    %cst = arith.constant dense<0.000000e+00> : vector<16x384xf32>
    %8 = tpu.matmul %5, %7, %cst {dimension_numbers = #tpu.dot_dimension_numbers<[1], [0], [0], [1], [0, 0, 1, 1], [], []>} : vector<16x128xbf16>, vector<128x384xbf16>, vector<16x384xf32> -> vector<16x384xf32>
    %c0_7 = arith.constant 0 : index
    %c0_8 = arith.constant 0 : index
    %c0_9 = arith.constant 0 : index
    %9 = vector.load %arg6[%c0_7, %c0_8, %c0_9] : memref<1x1x384xf32, #tpu.memory_space<vmem>>, vector<1x1x384xf32>
    %10 = vector.shape_cast %9 : vector<1x1x384xf32> to vector<1x384xf32>
    %11 = vector.broadcast %10 : vector<1x384xf32> to vector<16x384xf32>
    %12 = arith.addf %8, %11 : vector<16x384xf32>
    %13 = vector.extract_strided_slice %12 {offsets = [0, 0], sizes = [16, 128], strides = [1, 1]} : vector<16x384xf32> to vector<16x128xf32>
    %14 = vector.extract_strided_slice %12 {offsets = [0, 128], sizes = [16, 128], strides = [1, 1]} : vector<16x384xf32> to vector<16x128xf32>
    %15 = vector.extract_strided_slice %12 {offsets = [0, 256], sizes = [16, 128], strides = [1, 1]} : vector<16x384xf32> to vector<16x128xf32>
    %c0_10 = arith.constant 0 : index
    %c0_11 = arith.constant 0 : index
    %c0_12 = arith.constant 0 : index
    %16 = vector.load %arg7[%c0_10, %c0_11, %c0_12] : memref<1x128x128xbf16, #tpu.memory_space<vmem>>, vector<1x128x128xbf16>
    %17 = vector.shape_cast %16 : vector<1x128x128xbf16> to vector<128x128xbf16>
    %c0_13 = arith.constant 0 : index
    %c0_14 = arith.constant 0 : index
    %18 = vector.load %arg3[%c0_13, %c0_14] : memref<16x16xf32, #tpu.memory_space<vmem>>, vector<16x16xf32>
    %19 = vector.extract_strided_slice %13 {offsets = [0, 0], sizes = [16, 32], strides = [1, 1]} : vector<16x128xf32> to vector<16x32xf32>
    %20 = vector.extract_strided_slice %14 {offsets = [0, 0], sizes = [16, 32], strides = [1, 1]} : vector<16x128xf32> to vector<16x32xf32>
    %cst_15 = arith.constant dense<0.000000e+00> : vector<16x16xf32>
    %21 = tpu.matmul %19, %20, %cst_15 {dimension_numbers = #tpu.dot_dimension_numbers<[1], [1], [0], [0], [0, 0, 1, 0], [], []>} : vector<16x32xf32>, vector<16x32xf32>, vector<16x16xf32> -> vector<16x16xf32>
    %22 = arith.addf %21, %18 : vector<16x16xf32>
    %cst_16 = arith.constant dense<0xFF800000> : vector<16xf32>
    %23 = vector.multi_reduction <maximumf>, %22, %cst_16 [1] : vector<16x16xf32> to vector<16xf32>
    %24 = vector.shape_cast %23 : vector<16xf32> to vector<16x1xf32>
    %25 = vector.broadcast %24 : vector<16x1xf32> to vector<16x16xf32>
    %26 = arith.subf %22, %25 : vector<16x16xf32>
    %27 = math.exp %26 : vector<16x16xf32>
    %cst_17 = arith.constant dense<0.000000e+00> : vector<16xf32>
    %28 = vector.multi_reduction <add>, %27, %cst_17 [1] : vector<16x16xf32> to vector<16xf32>
    %29 = vector.shape_cast %28 : vector<16xf32> to vector<16x1xf32>
    %30 = tpu.reciprocal %29 {approx = true} : vector<16x1xf32> -> vector<16x1xf32>
    %31 = vector.broadcast %30 : vector<16x1xf32> to vector<16x16xf32>
    %32 = arith.mulf %27, %31 : vector<16x16xf32>
    %33 = arith.truncf %32 : vector<16x16xf32> to vector<16x16xbf16>
    %34 = vector.extract_strided_slice %15 {offsets = [0, 0], sizes = [16, 32], strides = [1, 1]} : vector<16x128xf32> to vector<16x32xf32>
    %35 = arith.truncf %34 : vector<16x32xf32> to vector<16x32xbf16>
    %cst_18 = arith.constant dense<0.000000e+00> : vector<16x32xf32>
    %36 = tpu.matmul %33, %35, %cst_18 {dimension_numbers = #tpu.dot_dimension_numbers<[1], [0], [0], [1], [0, 0, 1, 1], [], []>} : vector<16x16xbf16>, vector<16x32xbf16>, vector<16x32xf32> -> vector<16x32xf32>
    %37 = vector.extract_strided_slice %13 {offsets = [0, 32], sizes = [16, 32], strides = [1, 1]} : vector<16x128xf32> to vector<16x32xf32>
    %38 = vector.extract_strided_slice %14 {offsets = [0, 32], sizes = [16, 32], strides = [1, 1]} : vector<16x128xf32> to vector<16x32xf32>
    %cst_19 = arith.constant dense<0.000000e+00> : vector<16x16xf32>
    %39 = tpu.matmul %37, %38, %cst_19 {dimension_numbers = #tpu.dot_dimension_numbers<[1], [1], [0], [0], [0, 0, 1, 0], [], []>} : vector<16x32xf32>, vector<16x32xf32>, vector<16x16xf32> -> vector<16x16xf32>
    %40 = arith.addf %39, %18 : vector<16x16xf32>
    %cst_20 = arith.constant dense<0xFF800000> : vector<16xf32>
    %41 = vector.multi_reduction <maximumf>, %40, %cst_20 [1] : vector<16x16xf32> to vector<16xf32>
    %42 = vector.shape_cast %41 : vector<16xf32> to vector<16x1xf32>
    %43 = vector.broadcast %42 : vector<16x1xf32> to vector<16x16xf32>
    %44 = arith.subf %40, %43 : vector<16x16xf32>
    %45 = math.exp %44 : vector<16x16xf32>
    %cst_21 = arith.constant dense<0.000000e+00> : vector<16xf32>
    %46 = vector.multi_reduction <add>, %45, %cst_21 [1] : vector<16x16xf32> to vector<16xf32>
    %47 = vector.shape_cast %46 : vector<16xf32> to vector<16x1xf32>
    %48 = tpu.reciprocal %47 {approx = true} : vector<16x1xf32> -> vector<16x1xf32>
    %49 = vector.broadcast %48 : vector<16x1xf32> to vector<16x16xf32>
    %50 = arith.mulf %45, %49 : vector<16x16xf32>
    %51 = arith.truncf %50 : vector<16x16xf32> to vector<16x16xbf16>
    %52 = vector.extract_strided_slice %15 {offsets = [0, 32], sizes = [16, 32], strides = [1, 1]} : vector<16x128xf32> to vector<16x32xf32>
    %53 = arith.truncf %52 : vector<16x32xf32> to vector<16x32xbf16>
    %cst_22 = arith.constant dense<0.000000e+00> : vector<16x32xf32>
    %54 = tpu.matmul %51, %53, %cst_22 {dimension_numbers = #tpu.dot_dimension_numbers<[1], [0], [0], [1], [0, 0, 1, 1], [], []>} : vector<16x16xbf16>, vector<16x32xbf16>, vector<16x32xf32> -> vector<16x32xf32>
    %55 = vector.extract_strided_slice %13 {offsets = [0, 64], sizes = [16, 32], strides = [1, 1]} : vector<16x128xf32> to vector<16x32xf32>
    %56 = vector.extract_strided_slice %14 {offsets = [0, 64], sizes = [16, 32], strides = [1, 1]} : vector<16x128xf32> to vector<16x32xf32>
    %cst_23 = arith.constant dense<0.000000e+00> : vector<16x16xf32>
    %57 = tpu.matmul %55, %56, %cst_23 {dimension_numbers = #tpu.dot_dimension_numbers<[1], [1], [0], [0], [0, 0, 1, 0], [], []>} : vector<16x32xf32>, vector<16x32xf32>, vector<16x16xf32> -> vector<16x16xf32>
    %58 = arith.addf %57, %18 : vector<16x16xf32>
    %cst_24 = arith.constant dense<0xFF800000> : vector<16xf32>
    %59 = vector.multi_reduction <maximumf>, %58, %cst_24 [1] : vector<16x16xf32> to vector<16xf32>
    %60 = vector.shape_cast %59 : vector<16xf32> to vector<16x1xf32>
    %61 = vector.broadcast %60 : vector<16x1xf32> to vector<16x16xf32>
    %62 = arith.subf %58, %61 : vector<16x16xf32>
    %63 = math.exp %62 : vector<16x16xf32>
    %cst_25 = arith.constant dense<0.000000e+00> : vector<16xf32>
    %64 = vector.multi_reduction <add>, %63, %cst_25 [1] : vector<16x16xf32> to vector<16xf32>
    %65 = vector.shape_cast %64 : vector<16xf32> to vector<16x1xf32>
    %66 = tpu.reciprocal %65 {approx = true} : vector<16x1xf32> -> vector<16x1xf32>
    %67 = vector.broadcast %66 : vector<16x1xf32> to vector<16x16xf32>
    %68 = arith.mulf %63, %67 : vector<16x16xf32>
    %69 = arith.truncf %68 : vector<16x16xf32> to vector<16x16xbf16>
    %70 = vector.extract_strided_slice %15 {offsets = [0, 64], sizes = [16, 32], strides = [1, 1]} : vector<16x128xf32> to vector<16x32xf32>
    %71 = arith.truncf %70 : vector<16x32xf32> to vector<16x32xbf16>
    %cst_26 = arith.constant dense<0.000000e+00> : vector<16x32xf32>
    %72 = tpu.matmul %69, %71, %cst_26 {dimension_numbers = #tpu.dot_dimension_numbers<[1], [0], [0], [1], [0, 0, 1, 1], [], []>} : vector<16x16xbf16>, vector<16x32xbf16>, vector<16x32xf32> -> vector<16x32xf32>
    %73 = vector.extract_strided_slice %13 {offsets = [0, 96], sizes = [16, 32], strides = [1, 1]} : vector<16x128xf32> to vector<16x32xf32>
    %74 = vector.extract_strided_slice %14 {offsets = [0, 96], sizes = [16, 32], strides = [1, 1]} : vector<16x128xf32> to vector<16x32xf32>
    %cst_27 = arith.constant dense<0.000000e+00> : vector<16x16xf32>
    %75 = tpu.matmul %73, %74, %cst_27 {dimension_numbers = #tpu.dot_dimension_numbers<[1], [1], [0], [0], [0, 0, 1, 0], [], []>} : vector<16x32xf32>, vector<16x32xf32>, vector<16x16xf32> -> vector<16x16xf32>
    %76 = arith.addf %75, %18 : vector<16x16xf32>
    %cst_28 = arith.constant dense<0xFF800000> : vector<16xf32>
    %77 = vector.multi_reduction <maximumf>, %76, %cst_28 [1] : vector<16x16xf32> to vector<16xf32>
    %78 = vector.shape_cast %77 : vector<16xf32> to vector<16x1xf32>
    %79 = vector.broadcast %78 : vector<16x1xf32> to vector<16x16xf32>
    %80 = arith.subf %76, %79 : vector<16x16xf32>
    %81 = math.exp %80 : vector<16x16xf32>
    %cst_29 = arith.constant dense<0.000000e+00> : vector<16xf32>
    %82 = vector.multi_reduction <add>, %81, %cst_29 [1] : vector<16x16xf32> to vector<16xf32>
    %83 = vector.shape_cast %82 : vector<16xf32> to vector<16x1xf32>
    %84 = tpu.reciprocal %83 {approx = true} : vector<16x1xf32> -> vector<16x1xf32>
    %85 = vector.broadcast %84 : vector<16x1xf32> to vector<16x16xf32>
    %86 = arith.mulf %81, %85 : vector<16x16xf32>
    %87 = arith.truncf %86 : vector<16x16xf32> to vector<16x16xbf16>
    %88 = vector.extract_strided_slice %15 {offsets = [0, 96], sizes = [16, 32], strides = [1, 1]} : vector<16x128xf32> to vector<16x32xf32>
    %89 = arith.truncf %88 : vector<16x32xf32> to vector<16x32xbf16>
    %cst_30 = arith.constant dense<0.000000e+00> : vector<16x32xf32>
    %90 = tpu.matmul %87, %89, %cst_30 {dimension_numbers = #tpu.dot_dimension_numbers<[1], [0], [0], [1], [0, 0, 1, 1], [], []>} : vector<16x16xbf16>, vector<16x32xbf16>, vector<16x32xf32> -> vector<16x32xf32>
    %91 = tpu.concatenate %36, %54, %72, %90 in 1 : vector<16x32xf32>, vector<16x32xf32>, vector<16x32xf32>, vector<16x32xf32> -> vector<16x128xf32>
    %92 = arith.truncf %91 : vector<16x128xf32> to vector<16x128xbf16>
    %cst_31 = arith.constant dense<0.000000e+00> : vector<16x128xf32>
    %93 = tpu.matmul %92, %17, %cst_31 {dimension_numbers = #tpu.dot_dimension_numbers<[1], [0], [0], [1], [0, 0, 1, 1], [], []>} : vector<16x128xbf16>, vector<128x128xbf16>, vector<16x128xf32> -> vector<16x128xf32>
    %94 = arith.addf %3, %93 : vector<16x128xf32>
    %c0_32 = arith.constant 0 : index
    %c0_33 = arith.constant 0 : index
    %c0_34 = arith.constant 0 : index
    %95 = vector.load %arg8[%c0_32, %c0_33, %c0_34] : memref<1x1x128xf32, #tpu.memory_space<vmem>>, vector<1x1x128xf32>
    %96 = vector.shape_cast %95 : vector<1x1x128xf32> to vector<1x128xf32>
    %97 = vector.broadcast %96 : vector<1x128xf32> to vector<16x128xf32>
    %98 = arith.addf %94, %97 : vector<16x128xf32>
    %c0_35 = arith.constant 0 : index
    %c0_36 = arith.constant 0 : index
    %c0_37 = arith.constant 0 : index
    %99 = vector.load %arg9[%c0_35, %c0_36, %c0_37] : memref<1x1x128xf32, #tpu.memory_space<vmem>>, vector<1x1x128xf32>
    %100 = vector.shape_cast %99 : vector<1x1x128xf32> to vector<1x128xf32>
    %c0_38 = arith.constant 0 : index
    %c0_39 = arith.constant 0 : index
    %c0_40 = arith.constant 0 : index
    %101 = vector.load %arg10[%c0_38, %c0_39, %c0_40] : memref<1x1x128xf32, #tpu.memory_space<vmem>>, vector<1x1x128xf32>
    %102 = vector.shape_cast %101 : vector<1x1x128xf32> to vector<1x128xf32>
    %cst_41 = arith.constant dense<0.000000e+00> : vector<16xf32>
    %103 = vector.multi_reduction <add>, %98, %cst_41 [1] : vector<16x128xf32> to vector<16xf32>
    %104 = vector.shape_cast %103 : vector<16xf32> to vector<16x1xf32>
    %cst_42 = arith.constant 1.280000e+02 : f32
    %105 = vector.broadcast %cst_42 : f32 to vector<16x1xf32>
    %106 = arith.divf %104, %105 : vector<16x1xf32>
    %107 = vector.broadcast %106 : vector<16x1xf32> to vector<16x128xf32>
    %108 = arith.subf %98, %107 : vector<16x128xf32>
    %109 = arith.mulf %108, %108 : vector<16x128xf32>
    %cst_43 = arith.constant dense<0.000000e+00> : vector<16xf32>
    %110 = vector.multi_reduction <add>, %109, %cst_43 [1] : vector<16x128xf32> to vector<16xf32>
    %111 = vector.shape_cast %110 : vector<16xf32> to vector<16x1xf32>
    %cst_44 = arith.constant 1.280000e+02 : f32
    %112 = vector.broadcast %cst_44 : f32 to vector<16x1xf32>
    %113 = arith.divf %111, %112 : vector<16x1xf32>
    %114 = vector.broadcast %106 : vector<16x1xf32> to vector<16x128xf32>
    %115 = arith.subf %98, %114 : vector<16x128xf32>
    %cst_45 = arith.constant 9.99999974E-6 : f32
    %116 = vector.broadcast %cst_45 : f32 to vector<16x1xf32>
    %117 = arith.addf %113, %116 : vector<16x1xf32>
    %118 = math.rsqrt %117 : vector<16x1xf32>
    %119 = vector.broadcast %118 : vector<16x1xf32> to vector<16x128xf32>
    %120 = arith.mulf %115, %119 : vector<16x128xf32>
    %121 = vector.broadcast %100 : vector<1x128xf32> to vector<16x128xf32>
    %122 = arith.mulf %120, %121 : vector<16x128xf32>
    %123 = vector.broadcast %102 : vector<1x128xf32> to vector<16x128xf32>
    %124 = arith.addf %122, %123 : vector<16x128xf32>
    %125 = arith.truncf %124 : vector<16x128xf32> to vector<16x128xbf16>
    %c0_46 = arith.constant 0 : index
    %c0_47 = arith.constant 0 : index
    %c0_48 = arith.constant 0 : index
    %126 = vector.load %arg11[%c0_46, %c0_47, %c0_48] : memref<1x128x128xbf16, #tpu.memory_space<vmem>>, vector<1x128x128xbf16>
    %127 = vector.shape_cast %126 : vector<1x128x128xbf16> to vector<128x128xbf16>
    %cst_49 = arith.constant dense<0.000000e+00> : vector<16x128xf32>
    %128 = tpu.matmul %125, %127, %cst_49 {dimension_numbers = #tpu.dot_dimension_numbers<[1], [0], [0], [1], [0, 0, 1, 1], [], []>} : vector<16x128xbf16>, vector<128x128xbf16>, vector<16x128xf32> -> vector<16x128xf32>
    %c0_50 = arith.constant 0 : index
    %c0_51 = arith.constant 0 : index
    %c0_52 = arith.constant 0 : index
    %129 = vector.load %arg12[%c0_50, %c0_51, %c0_52] : memref<1x1x128xf32, #tpu.memory_space<vmem>>, vector<1x1x128xf32>
    %130 = vector.shape_cast %129 : vector<1x1x128xf32> to vector<1x128xf32>
    %131 = vector.broadcast %130 : vector<1x128xf32> to vector<16x128xf32>
    %132 = arith.addf %128, %131 : vector<16x128xf32>
    %c0_53 = arith.constant 0 : index
    %c0_54 = arith.constant 0 : index
    %c0_55 = arith.constant 0 : index
    %133 = vector.load %arg13[%c0_53, %c0_54, %c0_55] : memref<1x128x256xbf16, #tpu.memory_space<vmem>>, vector<1x128x256xbf16>
    %134 = vector.shape_cast %133 : vector<1x128x256xbf16> to vector<128x256xbf16>
    %cst_56 = arith.constant dense<0.000000e+00> : vector<20x256xf32>
    %135 = tpu.matmul %4, %134, %cst_56 {dimension_numbers = #tpu.dot_dimension_numbers<[1], [0], [0], [1], [0, 0, 1, 1], [], []>} : vector<20x128xbf16>, vector<128x256xbf16>, vector<20x256xf32> -> vector<20x256xf32>
    %c0_57 = arith.constant 0 : index
    %c0_58 = arith.constant 0 : index
    %c0_59 = arith.constant 0 : index
    %136 = vector.load %arg14[%c0_57, %c0_58, %c0_59] : memref<1x1x256xf32, #tpu.memory_space<vmem>>, vector<1x1x256xf32>
    %137 = vector.shape_cast %136 : vector<1x1x256xf32> to vector<1x256xf32>
    %138 = vector.broadcast %137 : vector<1x256xf32> to vector<20x256xf32>
    %139 = arith.addf %135, %138 : vector<20x256xf32>
    %140 = vector.extract_strided_slice %139 {offsets = [0, 0], sizes = [20, 128], strides = [1, 1]} : vector<20x256xf32> to vector<20x128xf32>
    %141 = vector.extract_strided_slice %139 {offsets = [0, 128], sizes = [20, 128], strides = [1, 1]} : vector<20x256xf32> to vector<20x128xf32>
    %c0_60 = arith.constant 0 : index
    %c0_61 = arith.constant 0 : index
    %c0_62 = arith.constant 0 : index
    %142 = vector.load %arg15[%c0_60, %c0_61, %c0_62] : memref<1x128x128xbf16, #tpu.memory_space<vmem>>, vector<1x128x128xbf16>
    %143 = vector.shape_cast %142 : vector<1x128x128xbf16> to vector<128x128xbf16>
    %c0_63 = arith.constant 0 : index
    %c0_64 = arith.constant 0 : index
    %144 = vector.load %arg4[%c0_63, %c0_64] : memref<16x20xf32, #tpu.memory_space<vmem>>, vector<16x20xf32>
    %145 = vector.extract_strided_slice %132 {offsets = [0, 0], sizes = [16, 32], strides = [1, 1]} : vector<16x128xf32> to vector<16x32xf32>
    %146 = vector.extract_strided_slice %140 {offsets = [0, 0], sizes = [20, 32], strides = [1, 1]} : vector<20x128xf32> to vector<20x32xf32>
    %cst_65 = arith.constant dense<0.000000e+00> : vector<16x20xf32>
    %147 = tpu.matmul %145, %146, %cst_65 {dimension_numbers = #tpu.dot_dimension_numbers<[1], [1], [0], [0], [0, 0, 1, 0], [], []>} : vector<16x32xf32>, vector<20x32xf32>, vector<16x20xf32> -> vector<16x20xf32>
    %148 = arith.addf %147, %144 : vector<16x20xf32>
    %cst_66 = arith.constant dense<0xFF800000> : vector<16xf32>
    %149 = vector.multi_reduction <maximumf>, %148, %cst_66 [1] : vector<16x20xf32> to vector<16xf32>
    %150 = vector.shape_cast %149 : vector<16xf32> to vector<16x1xf32>
    %151 = vector.broadcast %150 : vector<16x1xf32> to vector<16x20xf32>
    %152 = arith.subf %148, %151 : vector<16x20xf32>
    %153 = math.exp %152 : vector<16x20xf32>
    %cst_67 = arith.constant dense<0.000000e+00> : vector<16xf32>
    %154 = vector.multi_reduction <add>, %153, %cst_67 [1] : vector<16x20xf32> to vector<16xf32>
    %155 = vector.shape_cast %154 : vector<16xf32> to vector<16x1xf32>
    %156 = tpu.reciprocal %155 {approx = true} : vector<16x1xf32> -> vector<16x1xf32>
    %157 = vector.broadcast %156 : vector<16x1xf32> to vector<16x20xf32>
    %158 = arith.mulf %153, %157 : vector<16x20xf32>
    %159 = arith.truncf %158 : vector<16x20xf32> to vector<16x20xbf16>
    %160 = vector.extract_strided_slice %141 {offsets = [0, 0], sizes = [20, 32], strides = [1, 1]} : vector<20x128xf32> to vector<20x32xf32>
    %161 = arith.truncf %160 : vector<20x32xf32> to vector<20x32xbf16>
    %cst_68 = arith.constant dense<0.000000e+00> : vector<16x32xf32>
    %162 = tpu.matmul %159, %161, %cst_68 {dimension_numbers = #tpu.dot_dimension_numbers<[1], [0], [0], [1], [0, 0, 1, 1], [], []>} : vector<16x20xbf16>, vector<20x32xbf16>, vector<16x32xf32> -> vector<16x32xf32>
    %163 = vector.extract_strided_slice %132 {offsets = [0, 32], sizes = [16, 32], strides = [1, 1]} : vector<16x128xf32> to vector<16x32xf32>
    %164 = vector.extract_strided_slice %140 {offsets = [0, 32], sizes = [20, 32], strides = [1, 1]} : vector<20x128xf32> to vector<20x32xf32>
    %cst_69 = arith.constant dense<0.000000e+00> : vector<16x20xf32>
    %165 = tpu.matmul %163, %164, %cst_69 {dimension_numbers = #tpu.dot_dimension_numbers<[1], [1], [0], [0], [0, 0, 1, 0], [], []>} : vector<16x32xf32>, vector<20x32xf32>, vector<16x20xf32> -> vector<16x20xf32>
    %166 = arith.addf %165, %144 : vector<16x20xf32>
    %cst_70 = arith.constant dense<0xFF800000> : vector<16xf32>
    %167 = vector.multi_reduction <maximumf>, %166, %cst_70 [1] : vector<16x20xf32> to vector<16xf32>
    %168 = vector.shape_cast %167 : vector<16xf32> to vector<16x1xf32>
    %169 = vector.broadcast %168 : vector<16x1xf32> to vector<16x20xf32>
    %170 = arith.subf %166, %169 : vector<16x20xf32>
    %171 = math.exp %170 : vector<16x20xf32>
    %cst_71 = arith.constant dense<0.000000e+00> : vector<16xf32>
    %172 = vector.multi_reduction <add>, %171, %cst_71 [1] : vector<16x20xf32> to vector<16xf32>
    %173 = vector.shape_cast %172 : vector<16xf32> to vector<16x1xf32>
    %174 = tpu.reciprocal %173 {approx = true} : vector<16x1xf32> -> vector<16x1xf32>
    %175 = vector.broadcast %174 : vector<16x1xf32> to vector<16x20xf32>
    %176 = arith.mulf %171, %175 : vector<16x20xf32>
    %177 = arith.truncf %176 : vector<16x20xf32> to vector<16x20xbf16>
    %178 = vector.extract_strided_slice %141 {offsets = [0, 32], sizes = [20, 32], strides = [1, 1]} : vector<20x128xf32> to vector<20x32xf32>
    %179 = arith.truncf %178 : vector<20x32xf32> to vector<20x32xbf16>
    %cst_72 = arith.constant dense<0.000000e+00> : vector<16x32xf32>
    %180 = tpu.matmul %177, %179, %cst_72 {dimension_numbers = #tpu.dot_dimension_numbers<[1], [0], [0], [1], [0, 0, 1, 1], [], []>} : vector<16x20xbf16>, vector<20x32xbf16>, vector<16x32xf32> -> vector<16x32xf32>
    %181 = vector.extract_strided_slice %132 {offsets = [0, 64], sizes = [16, 32], strides = [1, 1]} : vector<16x128xf32> to vector<16x32xf32>
    %182 = vector.extract_strided_slice %140 {offsets = [0, 64], sizes = [20, 32], strides = [1, 1]} : vector<20x128xf32> to vector<20x32xf32>
    %cst_73 = arith.constant dense<0.000000e+00> : vector<16x20xf32>
    %183 = tpu.matmul %181, %182, %cst_73 {dimension_numbers = #tpu.dot_dimension_numbers<[1], [1], [0], [0], [0, 0, 1, 0], [], []>} : vector<16x32xf32>, vector<20x32xf32>, vector<16x20xf32> -> vector<16x20xf32>
    %184 = arith.addf %183, %144 : vector<16x20xf32>
    %cst_74 = arith.constant dense<0xFF800000> : vector<16xf32>
    %185 = vector.multi_reduction <maximumf>, %184, %cst_74 [1] : vector<16x20xf32> to vector<16xf32>
    %186 = vector.shape_cast %185 : vector<16xf32> to vector<16x1xf32>
    %187 = vector.broadcast %186 : vector<16x1xf32> to vector<16x20xf32>
    %188 = arith.subf %184, %187 : vector<16x20xf32>
    %189 = math.exp %188 : vector<16x20xf32>
    %cst_75 = arith.constant dense<0.000000e+00> : vector<16xf32>
    %190 = vector.multi_reduction <add>, %189, %cst_75 [1] : vector<16x20xf32> to vector<16xf32>
    %191 = vector.shape_cast %190 : vector<16xf32> to vector<16x1xf32>
    %192 = tpu.reciprocal %191 {approx = true} : vector<16x1xf32> -> vector<16x1xf32>
    %193 = vector.broadcast %192 : vector<16x1xf32> to vector<16x20xf32>
    %194 = arith.mulf %189, %193 : vector<16x20xf32>
    %195 = arith.truncf %194 : vector<16x20xf32> to vector<16x20xbf16>
    %196 = vector.extract_strided_slice %141 {offsets = [0, 64], sizes = [20, 32], strides = [1, 1]} : vector<20x128xf32> to vector<20x32xf32>
    %197 = arith.truncf %196 : vector<20x32xf32> to vector<20x32xbf16>
    %cst_76 = arith.constant dense<0.000000e+00> : vector<16x32xf32>
    %198 = tpu.matmul %195, %197, %cst_76 {dimension_numbers = #tpu.dot_dimension_numbers<[1], [0], [0], [1], [0, 0, 1, 1], [], []>} : vector<16x20xbf16>, vector<20x32xbf16>, vector<16x32xf32> -> vector<16x32xf32>
    %199 = vector.extract_strided_slice %132 {offsets = [0, 96], sizes = [16, 32], strides = [1, 1]} : vector<16x128xf32> to vector<16x32xf32>
    %200 = vector.extract_strided_slice %140 {offsets = [0, 96], sizes = [20, 32], strides = [1, 1]} : vector<20x128xf32> to vector<20x32xf32>
    %cst_77 = arith.constant dense<0.000000e+00> : vector<16x20xf32>
    %201 = tpu.matmul %199, %200, %cst_77 {dimension_numbers = #tpu.dot_dimension_numbers<[1], [1], [0], [0], [0, 0, 1, 0], [], []>} : vector<16x32xf32>, vector<20x32xf32>, vector<16x20xf32> -> vector<16x20xf32>
    %202 = arith.addf %201, %144 : vector<16x20xf32>
    %cst_78 = arith.constant dense<0xFF800000> : vector<16xf32>
    %203 = vector.multi_reduction <maximumf>, %202, %cst_78 [1] : vector<16x20xf32> to vector<16xf32>
    %204 = vector.shape_cast %203 : vector<16xf32> to vector<16x1xf32>
    %205 = vector.broadcast %204 : vector<16x1xf32> to vector<16x20xf32>
    %206 = arith.subf %202, %205 : vector<16x20xf32>
    %207 = math.exp %206 : vector<16x20xf32>
    %cst_79 = arith.constant dense<0.000000e+00> : vector<16xf32>
    %208 = vector.multi_reduction <add>, %207, %cst_79 [1] : vector<16x20xf32> to vector<16xf32>
    %209 = vector.shape_cast %208 : vector<16xf32> to vector<16x1xf32>
    %210 = tpu.reciprocal %209 {approx = true} : vector<16x1xf32> -> vector<16x1xf32>
    %211 = vector.broadcast %210 : vector<16x1xf32> to vector<16x20xf32>
    %212 = arith.mulf %207, %211 : vector<16x20xf32>
    %213 = arith.truncf %212 : vector<16x20xf32> to vector<16x20xbf16>
    %214 = vector.extract_strided_slice %141 {offsets = [0, 96], sizes = [20, 32], strides = [1, 1]} : vector<20x128xf32> to vector<20x32xf32>
    %215 = arith.truncf %214 : vector<20x32xf32> to vector<20x32xbf16>
    %cst_80 = arith.constant dense<0.000000e+00> : vector<16x32xf32>
    %216 = tpu.matmul %213, %215, %cst_80 {dimension_numbers = #tpu.dot_dimension_numbers<[1], [0], [0], [1], [0, 0, 1, 1], [], []>} : vector<16x20xbf16>, vector<20x32xbf16>, vector<16x32xf32> -> vector<16x32xf32>
    %217 = tpu.concatenate %162, %180, %198, %216 in 1 : vector<16x32xf32>, vector<16x32xf32>, vector<16x32xf32>, vector<16x32xf32> -> vector<16x128xf32>
    %218 = arith.truncf %217 : vector<16x128xf32> to vector<16x128xbf16>
    %cst_81 = arith.constant dense<0.000000e+00> : vector<16x128xf32>
    %219 = tpu.matmul %218, %143, %cst_81 {dimension_numbers = #tpu.dot_dimension_numbers<[1], [0], [0], [1], [0, 0, 1, 1], [], []>} : vector<16x128xbf16>, vector<128x128xbf16>, vector<16x128xf32> -> vector<16x128xf32>
    %220 = arith.addf %124, %219 : vector<16x128xf32>
    %c0_82 = arith.constant 0 : index
    %c0_83 = arith.constant 0 : index
    %c0_84 = arith.constant 0 : index
    %221 = vector.load %arg16[%c0_82, %c0_83, %c0_84] : memref<1x1x128xf32, #tpu.memory_space<vmem>>, vector<1x1x128xf32>
    %222 = vector.shape_cast %221 : vector<1x1x128xf32> to vector<1x128xf32>
    %223 = vector.broadcast %222 : vector<1x128xf32> to vector<16x128xf32>
    %224 = arith.addf %220, %223 : vector<16x128xf32>
    %c0_85 = arith.constant 0 : index
    %c0_86 = arith.constant 0 : index
    %c0_87 = arith.constant 0 : index
    %225 = vector.load %arg17[%c0_85, %c0_86, %c0_87] : memref<1x1x128xf32, #tpu.memory_space<vmem>>, vector<1x1x128xf32>
    %226 = vector.shape_cast %225 : vector<1x1x128xf32> to vector<1x128xf32>
    %c0_88 = arith.constant 0 : index
    %c0_89 = arith.constant 0 : index
    %c0_90 = arith.constant 0 : index
    %227 = vector.load %arg18[%c0_88, %c0_89, %c0_90] : memref<1x1x128xf32, #tpu.memory_space<vmem>>, vector<1x1x128xf32>
    %228 = vector.shape_cast %227 : vector<1x1x128xf32> to vector<1x128xf32>
    %cst_91 = arith.constant dense<0.000000e+00> : vector<16xf32>
    %229 = vector.multi_reduction <add>, %224, %cst_91 [1] : vector<16x128xf32> to vector<16xf32>
    %230 = vector.shape_cast %229 : vector<16xf32> to vector<16x1xf32>
    %cst_92 = arith.constant 1.280000e+02 : f32
    %231 = vector.broadcast %cst_92 : f32 to vector<16x1xf32>
    %232 = arith.divf %230, %231 : vector<16x1xf32>
    %233 = vector.broadcast %232 : vector<16x1xf32> to vector<16x128xf32>
    %234 = arith.subf %224, %233 : vector<16x128xf32>
    %235 = arith.mulf %234, %234 : vector<16x128xf32>
    %cst_93 = arith.constant dense<0.000000e+00> : vector<16xf32>
    %236 = vector.multi_reduction <add>, %235, %cst_93 [1] : vector<16x128xf32> to vector<16xf32>
    %237 = vector.shape_cast %236 : vector<16xf32> to vector<16x1xf32>
    %cst_94 = arith.constant 1.280000e+02 : f32
    %238 = vector.broadcast %cst_94 : f32 to vector<16x1xf32>
    %239 = arith.divf %237, %238 : vector<16x1xf32>
    %240 = vector.broadcast %232 : vector<16x1xf32> to vector<16x128xf32>
    %241 = arith.subf %224, %240 : vector<16x128xf32>
    %cst_95 = arith.constant 9.99999974E-6 : f32
    %242 = vector.broadcast %cst_95 : f32 to vector<16x1xf32>
    %243 = arith.addf %239, %242 : vector<16x1xf32>
    %244 = math.rsqrt %243 : vector<16x1xf32>
    %245 = vector.broadcast %244 : vector<16x1xf32> to vector<16x128xf32>
    %246 = arith.mulf %241, %245 : vector<16x128xf32>
    %247 = vector.broadcast %226 : vector<1x128xf32> to vector<16x128xf32>
    %248 = arith.mulf %246, %247 : vector<16x128xf32>
    %249 = vector.broadcast %228 : vector<1x128xf32> to vector<16x128xf32>
    %250 = arith.addf %248, %249 : vector<16x128xf32>
    %251 = arith.truncf %250 : vector<16x128xf32> to vector<16x128xbf16>
    %c0_96 = arith.constant 0 : index
    %c0_97 = arith.constant 0 : index
    %c0_98 = arith.constant 0 : index
    %252 = vector.load %arg19[%c0_96, %c0_97, %c0_98] : memref<1x128x256xbf16, #tpu.memory_space<vmem>>, vector<1x128x256xbf16>
    %253 = vector.shape_cast %252 : vector<1x128x256xbf16> to vector<128x256xbf16>
    %cst_99 = arith.constant dense<0.000000e+00> : vector<16x256xf32>
    %254 = tpu.matmul %251, %253, %cst_99 {dimension_numbers = #tpu.dot_dimension_numbers<[1], [0], [0], [1], [0, 0, 1, 1], [], []>} : vector<16x128xbf16>, vector<128x256xbf16>, vector<16x256xf32> -> vector<16x256xf32>
    %c0_100 = arith.constant 0 : index
    %c0_101 = arith.constant 0 : index
    %c0_102 = arith.constant 0 : index
    %255 = vector.load %arg20[%c0_100, %c0_101, %c0_102] : memref<1x1x256xf32, #tpu.memory_space<vmem>>, vector<1x1x256xf32>
    %256 = vector.shape_cast %255 : vector<1x1x256xf32> to vector<1x256xf32>
    %257 = vector.broadcast %256 : vector<1x256xf32> to vector<16x256xf32>
    %258 = arith.addf %254, %257 : vector<16x256xf32>
    %cst_103 = arith.constant 0.000000e+00 : f32
    %259 = vector.broadcast %cst_103 : f32 to vector<16x256xf32>
    %260 = arith.maximumf %258, %259 : vector<16x256xf32>
    %261 = arith.truncf %260 : vector<16x256xf32> to vector<16x256xbf16>
    %c0_104 = arith.constant 0 : index
    %c0_105 = arith.constant 0 : index
    %c0_106 = arith.constant 0 : index
    %262 = vector.load %arg21[%c0_104, %c0_105, %c0_106] : memref<1x256x128xbf16, #tpu.memory_space<vmem>>, vector<1x256x128xbf16>
    %263 = vector.shape_cast %262 : vector<1x256x128xbf16> to vector<256x128xbf16>
    %cst_107 = arith.constant dense<0.000000e+00> : vector<16x128xf32>
    %264 = tpu.matmul %261, %263, %cst_107 {dimension_numbers = #tpu.dot_dimension_numbers<[1], [0], [0], [1], [0, 0, 1, 1], [], []>} : vector<16x256xbf16>, vector<256x128xbf16>, vector<16x128xf32> -> vector<16x128xf32>
    %c0_108 = arith.constant 0 : index
    %c0_109 = arith.constant 0 : index
    %c0_110 = arith.constant 0 : index
    %265 = vector.load %arg22[%c0_108, %c0_109, %c0_110] : memref<1x1x128xf32, #tpu.memory_space<vmem>>, vector<1x1x128xf32>
    %266 = vector.shape_cast %265 : vector<1x1x128xf32> to vector<1x128xf32>
    %267 = vector.broadcast %266 : vector<1x128xf32> to vector<16x128xf32>
    %268 = arith.addf %264, %267 : vector<16x128xf32>
    %269 = arith.addf %250, %268 : vector<16x128xf32>
    %c0_111 = arith.constant 0 : index
    %c0_112 = arith.constant 0 : index
    %c0_113 = arith.constant 0 : index
    %270 = vector.load %arg23[%c0_111, %c0_112, %c0_113] : memref<1x1x128xf32, #tpu.memory_space<vmem>>, vector<1x1x128xf32>
    %271 = vector.shape_cast %270 : vector<1x1x128xf32> to vector<1x128xf32>
    %c0_114 = arith.constant 0 : index
    %c0_115 = arith.constant 0 : index
    %c0_116 = arith.constant 0 : index
    %272 = vector.load %arg24[%c0_114, %c0_115, %c0_116] : memref<1x1x128xf32, #tpu.memory_space<vmem>>, vector<1x1x128xf32>
    %273 = vector.shape_cast %272 : vector<1x1x128xf32> to vector<1x128xf32>
    %cst_117 = arith.constant dense<0.000000e+00> : vector<16xf32>
    %274 = vector.multi_reduction <add>, %269, %cst_117 [1] : vector<16x128xf32> to vector<16xf32>
    %275 = vector.shape_cast %274 : vector<16xf32> to vector<16x1xf32>
    %cst_118 = arith.constant 1.280000e+02 : f32
    %276 = vector.broadcast %cst_118 : f32 to vector<16x1xf32>
    %277 = arith.divf %275, %276 : vector<16x1xf32>
    %278 = vector.broadcast %277 : vector<16x1xf32> to vector<16x128xf32>
    %279 = arith.subf %269, %278 : vector<16x128xf32>
    %280 = arith.mulf %279, %279 : vector<16x128xf32>
    %cst_119 = arith.constant dense<0.000000e+00> : vector<16xf32>
    %281 = vector.multi_reduction <add>, %280, %cst_119 [1] : vector<16x128xf32> to vector<16xf32>
    %282 = vector.shape_cast %281 : vector<16xf32> to vector<16x1xf32>
    %cst_120 = arith.constant 1.280000e+02 : f32
    %283 = vector.broadcast %cst_120 : f32 to vector<16x1xf32>
    %284 = arith.divf %282, %283 : vector<16x1xf32>
    %285 = vector.broadcast %277 : vector<16x1xf32> to vector<16x128xf32>
    %286 = arith.subf %269, %285 : vector<16x128xf32>
    %cst_121 = arith.constant 9.99999974E-6 : f32
    %287 = vector.broadcast %cst_121 : f32 to vector<16x1xf32>
    %288 = arith.addf %284, %287 : vector<16x1xf32>
    %289 = math.rsqrt %288 : vector<16x1xf32>
    %290 = vector.broadcast %289 : vector<16x1xf32> to vector<16x128xf32>
    %291 = arith.mulf %286, %290 : vector<16x128xf32>
    %292 = vector.broadcast %271 : vector<1x128xf32> to vector<16x128xf32>
    %293 = arith.mulf %291, %292 : vector<16x128xf32>
    %294 = vector.broadcast %273 : vector<1x128xf32> to vector<16x128xf32>
    %295 = arith.addf %293, %294 : vector<16x128xf32>
    %c0_122 = arith.constant 0 : index
    %c0_123 = arith.constant 0 : index
    %296 = vector.load %arg28[%c0_122, %c0_123] : memref<16x128xf32, #tpu.memory_space<vmem>>, vector<16x128xf32>
    tpu.vector_store %arg28[%c0_122, %c0_123], %295 {strides = array<i32>} : memref<16x128xf32, #tpu.memory_space<vmem>>, vector<16x128xf32>,
    %c3_i32 = arith.constant 3 : i32
    %297 = arith.cmpi eq, %arg0, %c3_i32 : i32
    %298 = arith.extui %297 : i1 to i32
    %c0_i32_124 = arith.constant 0 : i32
    %299 = arith.cmpi ne, %298, %c0_i32_124 : i32
    scf.if %299 {
      %c0_125 = arith.constant 0 : index
      %c0_126 = arith.constant 0 : index
      %300 = vector.load %arg25[%c0_125, %c0_126] : memref<1x128xf32, #tpu.memory_space<vmem>>, vector<1x128xf32>
      %c0_127 = arith.constant 0 : index
      %c0_128 = arith.constant 0 : index
      %301 = vector.load %arg26[%c0_127, %c0_128] : memref<1x128xf32, #tpu.memory_space<vmem>>, vector<1x128xf32>
      %cst_129 = arith.constant dense<0.000000e+00> : vector<16xf32>
      %302 = vector.multi_reduction <add>, %295, %cst_129 [1] : vector<16x128xf32> to vector<16xf32>
      %303 = vector.shape_cast %302 : vector<16xf32> to vector<16x1xf32>
      %cst_130 = arith.constant 1.280000e+02 : f32
      %304 = vector.broadcast %cst_130 : f32 to vector<16x1xf32>
      %305 = arith.divf %303, %304 : vector<16x1xf32>
      %306 = vector.broadcast %305 : vector<16x1xf32> to vector<16x128xf32>
      %307 = arith.subf %295, %306 : vector<16x128xf32>
      %308 = arith.mulf %307, %307 : vector<16x128xf32>
      %cst_131 = arith.constant dense<0.000000e+00> : vector<16xf32>
      %309 = vector.multi_reduction <add>, %308, %cst_131 [1] : vector<16x128xf32> to vector<16xf32>
      %310 = vector.shape_cast %309 : vector<16xf32> to vector<16x1xf32>
      %cst_132 = arith.constant 1.280000e+02 : f32
      %311 = vector.broadcast %cst_132 : f32 to vector<16x1xf32>
      %312 = arith.divf %310, %311 : vector<16x1xf32>
      %313 = vector.broadcast %305 : vector<16x1xf32> to vector<16x128xf32>
      %314 = arith.subf %295, %313 : vector<16x128xf32>
      %cst_133 = arith.constant 9.99999974E-6 : f32
      %315 = vector.broadcast %cst_133 : f32 to vector<16x1xf32>
      %316 = arith.addf %312, %315 : vector<16x1xf32>
      %317 = math.rsqrt %316 : vector<16x1xf32>
      %318 = vector.broadcast %317 : vector<16x1xf32> to vector<16x128xf32>
      %319 = arith.mulf %314, %318 : vector<16x128xf32>
      %320 = vector.broadcast %300 : vector<1x128xf32> to vector<16x128xf32>
      %321 = arith.mulf %319, %320 : vector<16x128xf32>
      %322 = vector.broadcast %301 : vector<1x128xf32> to vector<16x128xf32>
      %323 = arith.addf %321, %322 : vector<16x128xf32>
      %c0_134 = arith.constant 0 : index
      %c0_135 = arith.constant 0 : index
      %324 = vector.load %arg27[%c0_134, %c0_135] : memref<16x128xf32, #tpu.memory_space<vmem>>, vector<16x128xf32>
      tpu.vector_store %arg27[%c0_134, %c0_135], %323 {strides = array<i32>} : memref<16x128xf32, #tpu.memory_space<vmem>>, vector<16x128xf32>,
    } else {
    }
    return
  }
  func.func @transform_0(%arg0: i32) -> (i32, i32) {
    %c0_i32 = arith.constant 0 : i32
    %c0_i32_0 = arith.constant 0 : i32
    %c0_i32_1 = arith.constant 0 : i32
    return %c0_i32, %c0_i32_0 : i32, i32
  }
  func.func @transform_1(%arg0: i32) -> (i32, i32) {
    %c0_i32 = arith.constant 0 : i32
    %c0_i32_0 = arith.constant 0 : i32
    %c0_i32_1 = arith.constant 0 : i32
    return %c0_i32, %c0_i32_0 : i32, i32
  }
  func.func @transform_2(%arg0: i32) -> (i32, i32) {
    %c0_i32 = arith.constant 0 : i32
    %c0_i32_0 = arith.constant 0 : i32
    %c0_i32_1 = arith.constant 0 : i32
    return %c0_i32, %c0_i32_0 : i32, i32
  }
  func.func @transform_3(%arg0: i32) -> (i32, i32) {
    %c0_i32 = arith.constant 0 : i32
    %c0_i32_0 = arith.constant 0 : i32
    %c0_i32_1 = arith.constant 0 : i32
    return %c0_i32, %c0_i32_0 : i32, i32
  }
  func.func @transform_4(%arg0: i32) -> (i32, i32, i32) {
    %c0_i32 = arith.constant 0 : i32
    %c0_i32_0 = arith.constant 0 : i32
    %c0_i32_1 = arith.constant 0 : i32
    return %arg0, %c0_i32, %c0_i32_0 : i32, i32, i32
  }
  func.func @transform_5(%arg0: i32) -> (i32, i32, i32) {
    %c0_i32 = arith.constant 0 : i32
    %c0_i32_0 = arith.constant 0 : i32
    %c0_i32_1 = arith.constant 0 : i32
    return %arg0, %c0_i32, %c0_i32_0 : i32, i32, i32
  }
  func.func @transform_6(%arg0: i32) -> (i32, i32, i32) {
    %c0_i32 = arith.constant 0 : i32
    %c0_i32_0 = arith.constant 0 : i32
    %c0_i32_1 = arith.constant 0 : i32
    return %arg0, %c0_i32, %c0_i32_0 : i32, i32, i32
  }
  func.func @transform_7(%arg0: i32) -> (i32, i32, i32) {
    %c0_i32 = arith.constant 0 : i32
    %c0_i32_0 = arith.constant 0 : i32
    %c0_i32_1 = arith.constant 0 : i32
    return %arg0, %c0_i32, %c0_i32_0 : i32, i32, i32
  }
  func.func @transform_8(%arg0: i32) -> (i32, i32, i32) {
    %c0_i32 = arith.constant 0 : i32
    %c0_i32_0 = arith.constant 0 : i32
    %c0_i32_1 = arith.constant 0 : i32
    return %arg0, %c0_i32, %c0_i32_0 : i32, i32, i32
  }
  func.func @transform_9(%arg0: i32) -> (i32, i32, i32) {
    %c0_i32 = arith.constant 0 : i32
    %c0_i32_0 = arith.constant 0 : i32
    %c0_i32_1 = arith.constant 0 : i32
    return %arg0, %c0_i32, %c0_i32_0 : i32, i32, i32
  }
  func.func @transform_10(%arg0: i32) -> (i32, i32, i32) {
    %c0_i32 = arith.constant 0 : i32
    %c0_i32_0 = arith.constant 0 : i32
    %c0_i32_1 = arith.constant 0 : i32
    return %arg0, %c0_i32, %c0_i32_0 : i32, i32, i32
  }
  func.func @transform_11(%arg0: i32) -> (i32, i32, i32) {
    %c0_i32 = arith.constant 0 : i32
    %c0_i32_0 = arith.constant 0 : i32
    %c0_i32_1 = arith.constant 0 : i32
    return %arg0, %c0_i32, %c0_i32_0 : i32, i32, i32
  }
  func.func @transform_12(%arg0: i32) -> (i32, i32, i32) {
    %c0_i32 = arith.constant 0 : i32
    %c0_i32_0 = arith.constant 0 : i32
    %c0_i32_1 = arith.constant 0 : i32
    return %arg0, %c0_i32, %c0_i32_0 : i32, i32, i32
  }
  func.func @transform_13(%arg0: i32) -> (i32, i32, i32) {
    %c0_i32 = arith.constant 0 : i32
    %c0_i32_0 = arith.constant 0 : i32
    %c0_i32_1 = arith.constant 0 : i32
    return %arg0, %c0_i32, %c0_i32_0 : i32, i32, i32
  }
  func.func @transform_14(%arg0: i32) -> (i32, i32, i32) {
    %c0_i32 = arith.constant 0 : i32
    %c0_i32_0 = arith.constant 0 : i32
    %c0_i32_1 = arith.constant 0 : i32
    return %arg0, %c0_i32, %c0_i32_0 : i32, i32, i32
  }
  func.func @transform_15(%arg0: i32) -> (i32, i32, i32) {
    %c0_i32 = arith.constant 0 : i32
    %c0_i32_0 = arith.constant 0 : i32
    %c0_i32_1 = arith.constant 0 : i32
    return %arg0, %c0_i32, %c0_i32_0 : i32, i32, i32
  }
  func.func @transform_16(%arg0: i32) -> (i32, i32, i32) {
    %c0_i32 = arith.constant 0 : i32
    %c0_i32_0 = arith.constant 0 : i32
    %c0_i32_1 = arith.constant 0 : i32
    return %arg0, %c0_i32, %c0_i32_0 : i32, i32, i32
  }
  func.func @transform_17(%arg0: i32) -> (i32, i32, i32) {
    %c0_i32 = arith.constant 0 : i32
    %c0_i32_0 = arith.constant 0 : i32
    %c0_i32_1 = arith.constant 0 : i32
    return %arg0, %c0_i32, %c0_i32_0 : i32, i32, i32
  }
  func.func @transform_18(%arg0: i32) -> (i32, i32, i32) {
    %c0_i32 = arith.constant 0 : i32
    %c0_i32_0 = arith.constant 0 : i32
    %c0_i32_1 = arith.constant 0 : i32
    return %arg0, %c0_i32, %c0_i32_0 : i32, i32, i32
  }
  func.func @transform_19(%arg0: i32) -> (i32, i32, i32) {
    %c0_i32 = arith.constant 0 : i32
    %c0_i32_0 = arith.constant 0 : i32
    %c0_i32_1 = arith.constant 0 : i32
    return %arg0, %c0_i32, %c0_i32_0 : i32, i32, i32
  }
  func.func @transform_20(%arg0: i32) -> (i32, i32, i32) {
    %c0_i32 = arith.constant 0 : i32
    %c0_i32_0 = arith.constant 0 : i32
    %c0_i32_1 = arith.constant 0 : i32
    return %arg0, %c0_i32, %c0_i32_0 : i32, i32, i32
  }
  func.func @transform_21(%arg0: i32) -> (i32, i32, i32) {
    %c0_i32 = arith.constant 0 : i32
    %c0_i32_0 = arith.constant 0 : i32
    %c0_i32_1 = arith.constant 0 : i32
    return %arg0, %c0_i32, %c0_i32_0 : i32, i32, i32
  }
  func.func @transform_22(%arg0: i32) -> (i32, i32, i32) {
    %c0_i32 = arith.constant 0 : i32
    %c0_i32_0 = arith.constant 0 : i32
    %c0_i32_1 = arith.constant 0 : i32
    return %arg0, %c0_i32, %c0_i32_0 : i32, i32, i32
  }
  func.func @transform_23(%arg0: i32) -> (i32, i32, i32) {
    %c0_i32 = arith.constant 0 : i32
    %c0_i32_0 = arith.constant 0 : i32
    %c0_i32_1 = arith.constant 0 : i32
    return %arg0, %c0_i32, %c0_i32_0 : i32, i32, i32
  }
  func.func @transform_24(%arg0: i32) -> (i32, i32) {
    %c0_i32 = arith.constant 0 : i32
    %c0_i32_0 = arith.constant 0 : i32
    %c0_i32_1 = arith.constant 0 : i32
    return %c0_i32, %c0_i32_0 : i32, i32
  }
  func.func @transform_25(%arg0: i32) -> (i32, i32) {
    %c0_i32 = arith.constant 0 : i32
    %c0_i32_0 = arith.constant 0 : i32
    %c0_i32_1 = arith.constant 0 : i32
    return %c0_i32, %c0_i32_0 : i32, i32
  }
  func.func @transform_26(%arg0: i32) -> (i32, i32) {
    %c0_i32 = arith.constant 0 : i32
    %c0_i32_0 = arith.constant 0 : i32
    %c0_i32_1 = arith.constant 0 : i32
    return %c0_i32, %c0_i32_0 : i32, i32
  }
}

</mosaic_0001>

<llo_original>
// kernel: translation_forward.2
$region0: #{translation_forward.2}
  #allocation0 [shape = 'u32[]', space=smem, size = 0x4, offset = 0x4, fixed_abs, tag = 'smem constant byte address 0x4 - core index']
  #allocation1 [shape = 'u32[144,128]{1,0:T(1,128)}', space=vmem, size = 0x12000, scoped, tag = 'internal scratch']
  #allocation2 [shape = 'f32[20,128]{1,0:T(8,128)}', space=vmem, size = 0x3000, scoped, tag = 'scratch operand']
  %s0 = inlined_call_operand.vmem [shape: f32[20,128], index: 0, kind: input, shape index: {}]
  %s1 = inlined_call_operand.vmem [shape: f32[20,20], index: 1, kind: input, shape index: {}]
  %s2 = inlined_call_operand.vmem [shape: bf16[4,128,384], index: 2, kind: input, shape index: {}]
  %s3 = inlined_call_operand.vmem [shape: f32[4,1,384], index: 3, kind: input, shape index: {}]
  %s4 = inlined_call_operand.hbm [shape: bf16[4,128,128], index: 4, kind: input, shape index: {}]
  %s5 = inlined_call_operand.vmem [shape: f32[4,1,128], index: 5, kind: input, shape index: {}]
  %s6 = inlined_call_operand.hbm [shape: f32[4,1,128], index: 6, kind: input, shape index: {}]
  %s7 = inlined_call_operand.hbm [shape: f32[4,1,128], index: 7, kind: input, shape index: {}]
  %s8 = inlined_call_operand.hbm [shape: bf16[4,128,256], index: 8, kind: input, shape index: {}]
  %s9 = inlined_call_operand.vmem [shape: f32[4,1,256], index: 9, kind: input, shape index: {}]
  %s10 = inlined_call_operand.hbm [shape: bf16[4,256,128], index: 10, kind: input, shape index: {}]
  %s11 = inlined_call_operand.hbm [shape: f32[4,1,128], index: 11, kind: input, shape index: {}]
  %s12 = inlined_call_operand.hbm [shape: f32[4,1,128], index: 12, kind: input, shape index: {}]
  %s13 = inlined_call_operand.hbm [shape: f32[4,1,128], index: 13, kind: input, shape index: {}]
  %s14 = inlined_call_operand.hbm [shape: f32[1,128], index: 14, kind: input, shape index: {}]
  %s15 = inlined_call_operand.hbm [shape: f32[1,128], index: 15, kind: input, shape index: {}]
  %s16 = inlined_call_operand.vmem [shape: bf16[20,128], index: 16, kind: output, shape index: {}]
  %s17 = sld [smem:[#allocation0]]
  $region145: #{translation_forward.2} parent=0
    _
  %s19 = ssub.s32 1, %s17
  %s20 = scalar_select 0, %s19, %s17
  $region1: #{translation_forward.2} parent=0
    #allocation3 [shape = 'u8[65536]{0}', space=vmem, size = 0x10000, scoped, tag = 'input window, operand 4']
    #allocation4 [shape = 's32[2]{0}', space=sflag, size = 0x8, scoped, tag = 'scoped memory for translation_forward.2']
    #allocation5 [shape = 'u8[1024]{0}', space=vmem, size = 0x400, scoped, tag = 'input window, operand 6']
    #allocation6 [shape = 's32[2]{0}', space=sflag, size = 0x8, scoped, tag = 'scoped memory for translation_forward.2']
    #allocation7 [shape = 'u8[1024]{0}', space=vmem, size = 0x400, scoped, tag = 'input window, operand 7']
    #allocation8 [shape = 'u8[131072]{0}', space=vmem, size = 0x20000, scoped, tag = 'input window, operand 8']
    #allocation9 [shape = 's32[2]{0}', space=sflag, size = 0x8, scoped, tag = 'scoped memory for translation_forward.2']
    #allocation10 [shape = 'u8[131072]{0}', space=vmem, size = 0x20000, scoped, tag = 'input window, operand 10']
    #allocation11 [shape = 'u8[1024]{0}', space=vmem, size = 0x400, scoped, tag = 'input window, operand 11']
    #allocation12 [shape = 's32[2]{0}', space=sflag, size = 0x8, scoped, tag = 'scoped memory for translation_forward.2']
    #allocation13 [shape = 'u8[1024]{0}', space=vmem, size = 0x400, scoped, tag = 'input window, operand 12']
    #allocation14 [shape = 'u8[1024]{0}', space=vmem, size = 0x400, scoped, tag = 'input window, operand 13']
    #allocation15 [shape = 's32[2]{0}', space=sflag, size = 0x8, scoped, tag = 'scoped memory for translation_forward.2']
    #allocation16 [shape = 'u8[512]{0}', space=vmem, size = 0x400, scoped, tag = 'input window, operand 14, single buffered']
    #allocation17 [shape = 'u8[512]{0}', space=vmem, size = 0x400, scoped, tag = 'input window, operand 15, single buffered']
    #allocation18 [shape = 's32[1]{0}', space=sflag, size = 0x4, scoped, tag = 'scoped memory for translation_forward.2']
    %21 = vsyncpa [#allocation4], 0
    %s22 = scalar_lea.sflag [#allocation4], 1
    %23 = vsyncpa %s22, 0
    %24 = vsyncpa [#allocation6], 0
    %s25 = scalar_lea.sflag [#allocation6], 1
    %26 = vsyncpa %s25, 0
    %27 = vsyncpa [#allocation9], 0
    %s28 = scalar_lea.sflag [#allocation9], 1
    %29 = vsyncpa %s28, 0
    %30 = vsyncpa [#allocation12], 0
    %s31 = scalar_lea.sflag [#allocation12], 1
    %32 = vsyncpa %s31, 0
    %33 = vsyncpa [#allocation15], 0
    %s34 = scalar_lea.sflag [#allocation15], 1
    %35 = vsyncpa %s34, 0
    %36 = vsyncpa [#allocation18], 0
    loop: start=0, step=1, limit=6
    $region2: #{translation_forward.2} parent=1 // loop_pre_header
      _
    $region3: #{translation_forward.2} parent=1 // loop_header
      %s38 = sphi 0, %s42
      %p39 = scmp.ge.s32.totalorder %s38, 6
      %s46 = sphi 0, %s46
      %s48 = sphi 0, %s46
      %s49 = sphi 0, %s48
      %s63 = sphi 0, %s49
      %s67 = sphi 0, %s67
      %s69 = sphi 0, %s67
      %s70 = sphi 0, %s69
      %s84 = sphi 0, %s70
      %s90 = sphi 0, %s92
      %s93 = sphi 0, %s90
      %s94 = sphi 0, %s93
      %s110 = sphi 0, %s94
      %s116 = sphi 0, %s118
      %s119 = sphi 0, %s116
      %s120 = sphi 0, %s119
      %s136 = sphi 0, %s120
      %s142 = sphi 0, %s144
      %s145 = sphi 0, %s142
      %s146 = sphi 0, %s145
      %s162 = sphi 0, %s146
      %s168 = sphi 0, %s170
      %s171 = sphi 0, %s168
      %s172 = sphi 0, %s171
      %s188 = sphi 0, %s172
      %s194 = sphi 0, %s196
      %s197 = sphi 0, %s194
      %s198 = sphi 0, %s197
      %s214 = sphi 0, %s198
      %s220 = sphi 0, %s222
      %s223 = sphi 0, %s220
      %s224 = sphi 0, %s223
      %s240 = sphi 0, %s224
      %s246 = sphi 0, %s248
      %s249 = sphi 0, %s246
      %s250 = sphi 0, %s249
      %s266 = sphi 0, %s250
      %s272 = sphi 0, %s274
      %s275 = sphi 0, %s272
      %s276 = sphi 0, %s275
      %s292 = sphi 0, %s276
      %s298 = sphi 0, %s300
      %s301 = sphi 0, %s298
      %s302 = sphi 0, %s301
      %s318 = sphi 0, %s302
      %s324 = sphi 0, %s326
      %s327 = sphi 0, %s324
      %s328 = sphi 0, %s327
      %s344 = sphi 0, %s328
      %s350 = sphi 0, %s352
      %s353 = sphi 0, %s350
      %s354 = sphi 0, %s353
      %s370 = sphi 0, %s354
      %s376 = sphi 0, %s378
      %s379 = sphi 0, %s376
      %s380 = sphi 0, %s379
      %s396 = sphi 0, %s380
      %s400 = sphi 0, %s400
      %s402 = sphi 0, %s400
      %s403 = sphi 0, %s402
      %s417 = sphi 0, %s403
      %s421 = sphi 0, %s421
      %s423 = sphi 0, %s421
      %s424 = sphi 0, %s423
      %s438 = sphi 0, %s424
      %s442 = sphi 0, %s442
      %s444 = sphi 0, %s442
      %s445 = sphi 0, %s444
      %s459 = sphi 0, %s445
    $region4: #{translation_forward.2} parent=1 // loop_header_branch
      %41 = sbr.rel (%p39) target = $region8
    $region5: #{translation_forward.2} parent=1 // loop_body
      %s43 = ssub.s32 %s38, 1
      %s44 = ssub.s32 %s38, 2
      %s45 = sadd.s32 %s38, 1
      %s47 = sadd.s32 %s46, 1
      %p50 = scmp.eq.s32.totalorder %s38, 3
      %p51 = scmp.ne.s32.totalorder %s46, %s48
      %p52 = scmp.eq.s32.totalorder %s38, 0
      %p53 = por %p51, %p52
      %p54 = scmp.ne.s32.totalorder %s46, %s48
      %p55 = scmp.eq.s32.totalorder %s43, 3
      %p56 = por %p54, %p55
      %p57 = scmp.ne.s32.totalorder %s48, %s49
      %p58 = scmp.eq.s32.totalorder %s43, 0
      %p59 = por %p57, %p58
      %p60 = scmp.ne.s32.totalorder %s48, %s49
      %p61 = scmp.eq.s32.totalorder %s44, 3
      %p62 = por %p60, %p61
      %p64 = scmp.ne.s32.totalorder %s49, %s63
      %p65 = scmp.eq.s32.totalorder %s44, 0
      %p66 = por %p64, %p65
      %s68 = sadd.s32 %s67, 1
      %p71 = scmp.eq.s32.totalorder %s38, 3
      %p72 = scmp.ne.s32.totalorder %s67, %s69
      %p73 = scmp.eq.s32.totalorder %s38, 0
      %p74 = por %p72, %p73
      %p75 = scmp.ne.s32.totalorder %s67, %s69
      %p76 = scmp.eq.s32.totalorder %s43, 3
      %p77 = por %p75, %p76
      %p78 = scmp.ne.s32.totalorder %s69, %s70
      %p79 = scmp.eq.s32.totalorder %s43, 0
      %p80 = por %p78, %p79
      %p81 = scmp.ne.s32.totalorder %s69, %s70
      %p82 = scmp.eq.s32.totalorder %s44, 3
      %p83 = por %p81, %p82
      %p85 = scmp.ne.s32.totalorder %s70, %s84
      %p86 = scmp.eq.s32.totalorder %s44, 0
      %p87 = por %p85, %p86
      %s88 = ssub.s32 %s38, %s45
      %p89 = scmp.eq.s32.totalorder %s88, 0
      %s91 = sadd.s32 %s90, 1
      %s92 = scalar_select %p89, %s90, %s91
      %p95 = pneg %p89
      %p96 = scmp.eq.s32.totalorder %s38, 3
      %p97 = por %p95, %p96
      %p98 = scmp.ne.s32.totalorder %s90, %s93
      %p99 = scmp.eq.s32.totalorder %s38, 0
      %p100 = por %p98, %p99
      %p101 = scmp.ne.s32.totalorder %s90, %s93
      %p102 = scmp.eq.s32.totalorder %s43, 3
      %p103 = por %p101, %p102
      %p104 = scmp.ne.s32.totalorder %s93, %s94
      %p105 = scmp.eq.s32.totalorder %s43, 0
      %p106 = por %p104, %p105
      %p107 = scmp.ne.s32.totalorder %s93, %s94
      %p108 = scmp.eq.s32.totalorder %s44, 3
      %p109 = por %p107, %p108
      %p111 = scmp.ne.s32.totalorder %s94, %s110
      %p112 = scmp.eq.s32.totalorder %s44, 0
      %p113 = por %p111, %p112
      %s114 = ssub.s32 %s38, %s45
      %p115 = scmp.eq.s32.totalorder %s114, 0
      %s117 = sadd.s32 %s116, 1
      %s118 = scalar_select %p115, %s116, %s117
      %p121 = pneg %p115
      %p122 = scmp.eq.s32.totalorder %s38, 3
      %p123 = por %p121, %p122
      %p124 = scmp.ne.s32.totalorder %s116, %s119
      %p125 = scmp.eq.s32.totalorder %s38, 0
      %p126 = por %p124, %p125
      %p127 = scmp.ne.s32.totalorder %s116, %s119
      %p128 = scmp.eq.s32.totalorder %s43, 3
      %p129 = por %p127, %p128
      %p130 = scmp.ne.s32.totalorder %s119, %s120
      %p131 = scmp.eq.s32.totalorder %s43, 0
      %p132 = por %p130, %p131
      %p133 = scmp.ne.s32.totalorder %s119, %s120
      %p134 = scmp.eq.s32.totalorder %s44, 3
      %p135 = por %p133, %p134
      %p137 = scmp.ne.s32.totalorder %s120, %s136
      %p138 = scmp.eq.s32.totalorder %s44, 0
      %p139 = por %p137, %p138
      %s140 = ssub.s32 %s38, %s45
      %p141 = scmp.eq.s32.totalorder %s140, 0
      %s143 = sadd.s32 %s142, 1
      %s144 = scalar_select %p141, %s142, %s143
      %p147 = pneg %p141
      %p148 = scmp.eq.s32.totalorder %s38, 3
      %p149 = por %p147, %p148
      %p150 = scmp.ne.s32.totalorder %s142, %s145
      %p151 = scmp.eq.s32.totalorder %s38, 0
      %p152 = por %p150, %p151
      %p153 = scmp.ne.s32.totalorder %s142, %s145
      %p154 = scmp.eq.s32.totalorder %s43, 3
      %p155 = por %p153, %p154
      %p156 = scmp.ne.s32.totalorder %s145, %s146
      %p157 = scmp.eq.s32.totalorder %s43, 0
      %p158 = por %p156, %p157
      %p159 = scmp.ne.s32.totalorder %s145, %s146
      %p160 = scmp.eq.s32.totalorder %s44, 3
      %p161 = por %p159, %p160
      %p163 = scmp.ne.s32.totalorder %s146, %s162
      %p164 = scmp.eq.s32.totalorder %s44, 0
      %p165 = por %p163, %p164
      %s166 = ssub.s32 %s38, %s45
      %p167 = scmp.eq.s32.totalorder %s166, 0
      %s169 = sadd.s32 %s168, 1
      %s170 = scalar_select %p167, %s168, %s169
      %p173 = pneg %p167
      %p174 = scmp.eq.s32.totalorder %s38, 3
      %p175 = por %p173, %p174
      %p176 = scmp.ne.s32.totalorder %s168, %s171
      %p177 = scmp.eq.s32.totalorder %s38, 0
      %p178 = por %p176, %p177
      %p179 = scmp.ne.s32.totalorder %s168, %s171
      %p180 = scmp.eq.s32.totalorder %s43, 3
      %p181 = por %p179, %p180
      %p182 = scmp.ne.s32.totalorder %s171, %s172
      %p183 = scmp.eq.s32.totalorder %s43, 0
      %p184 = por %p182, %p183
      %p185 = scmp.ne.s32.totalorder %s171, %s172
      %p186 = scmp.eq.s32.totalorder %s44, 3
      %p187 = por %p185, %p186
      %p189 = scmp.ne.s32.totalorder %s172, %s188
      %p190 = scmp.eq.s32.totalorder %s44, 0
      %p191 = por %p189, %p190
      %s192 = ssub.s32 %s38, %s45
      %p193 = scmp.eq.s32.totalorder %s192, 0
      %s195 = sadd.s32 %s194, 1
      %s196 = scalar_select %p193, %s194, %s195
      %p199 = pneg %p193
      %p200 = scmp.eq.s32.totalorder %s38, 3
      %p201 = por %p199, %p200
      %p202 = scmp.ne.s32.totalorder %s194, %s197
      %p203 = scmp.eq.s32.totalorder %s38, 0
      %p204 = por %p202, %p203
      %p205 = scmp.ne.s32.totalorder %s194, %s197
      %p206 = scmp.eq.s32.totalorder %s43, 3
      %p207 = por %p205, %p206
      %p208 = scmp.ne.s32.totalorder %s197, %s198
      %p209 = scmp.eq.s32.totalorder %s43, 0
      %p210 = por %p208, %p209
      %p211 = scmp.ne.s32.totalorder %s197, %s198
      %p212 = scmp.eq.s32.totalorder %s44, 3
      %p213 = por %p211, %p212
      %p215 = scmp.ne.s32.totalorder %s198, %s214
      %p216 = scmp.eq.s32.totalorder %s44, 0
      %p217 = por %p215, %p216
      %s218 = ssub.s32 %s38, %s45
      %p219 = scmp.eq.s32.totalorder %s218, 0
      %s221 = sadd.s32 %s220, 1
      %s222 = scalar_select %p219, %s220, %s221
      %p225 = pneg %p219
      %p226 = scmp.eq.s32.totalorder %s38, 3
      %p227 = por %p225, %p226
      %p228 = scmp.ne.s32.totalorder %s220, %s223
      %p229 = scmp.eq.s32.totalorder %s38, 0
      %p230 = por %p228, %p229
      %p231 = scmp.ne.s32.totalorder %s220, %s223
      %p232 = scmp.eq.s32.totalorder %s43, 3
      %p233 = por %p231, %p232
      %p234 = scmp.ne.s32.totalorder %s223, %s224
      %p235 = scmp.eq.s32.totalorder %s43, 0
      %p236 = por %p234, %p235
      %p237 = scmp.ne.s32.totalorder %s223, %s224
      %p238 = scmp.eq.s32.totalorder %s44, 3
      %p239 = por %p237, %p238
      %p241 = scmp.ne.s32.totalorder %s224, %s240
      %p242 = scmp.eq.s32.totalorder %s44, 0
      %p243 = por %p241, %p242
      %s244 = ssub.s32 %s38, %s45
      %p245 = scmp.eq.s32.totalorder %s244, 0
      %s247 = sadd.s32 %s246, 1
      %s248 = scalar_select %p245, %s246, %s247
      %p251 = pneg %p245
      %p252 = scmp.eq.s32.totalorder %s38, 3
      %p253 = por %p251, %p252
      %p254 = scmp.ne.s32.totalorder %s246, %s249
      %p255 = scmp.eq.s32.totalorder %s38, 0
      %p256 = por %p254, %p255
      %p257 = scmp.ne.s32.totalorder %s246, %s249
      %p258 = scmp.eq.s32.totalorder %s43, 3
      %p259 = por %p257, %p258
      %p260 = scmp.ne.s32.totalorder %s249, %s250
      %p261 = scmp.eq.s32.totalorder %s43, 0
      %p262 = por %p260, %p261
      %p263 = scmp.ne.s32.totalorder %s249, %s250
      %p264 = scmp.eq.s32.totalorder %s44, 3
      %p265 = por %p263, %p264
      %p267 = scmp.ne.s32.totalorder %s250, %s266
      %p268 = scmp.eq.s32.totalorder %s44, 0
      %p269 = por %p267, %p268
      %s270 = ssub.s32 %s38, %s45
      %p271 = scmp.eq.s32.totalorder %s270, 0
      %s273 = sadd.s32 %s272, 1
      %s274 = scalar_select %p271, %s272, %s273
      %p277 = pneg %p271
      %p278 = scmp.eq.s32.totalorder %s38, 3
      %p279 = por %p277, %p278
      %p280 = scmp.ne.s32.totalorder %s272, %s275
      %p281 = scmp.eq.s32.totalorder %s38, 0
      %p282 = por %p280, %p281
      %p283 = scmp.ne.s32.totalorder %s272, %s275
      %p284 = scmp.eq.s32.totalorder %s43, 3
      %p285 = por %p283, %p284
      %p286 = scmp.ne.s32.totalorder %s275, %s276
      %p287 = scmp.eq.s32.totalorder %s43, 0
      %p288 = por %p286, %p287
      %p289 = scmp.ne.s32.totalorder %s275, %s276
      %p290 = scmp.eq.s32.totalorder %s44, 3
      %p291 = por %p289, %p290
      %p293 = scmp.ne.s32.totalorder %s276, %s292
      %p294 = scmp.eq.s32.totalorder %s44, 0
      %p295 = por %p293, %p294
      %s296 = ssub.s32 %s38, %s45
      %p297 = scmp.eq.s32.totalorder %s296, 0
      %s299 = sadd.s32 %s298, 1
      %s300 = scalar_select %p297, %s298, %s299
      %p303 = pneg %p297
      %p304 = scmp.eq.s32.totalorder %s38, 3
      %p305 = por %p303, %p304
      %p306 = scmp.ne.s32.totalorder %s298, %s301
      %p307 = scmp.eq.s32.totalorder %s38, 0
      %p308 = por %p306, %p307
      %p309 = scmp.ne.s32.totalorder %s298, %s301
      %p310 = scmp.eq.s32.totalorder %s43, 3
      %p311 = por %p309, %p310
      %p312 = scmp.ne.s32.totalorder %s301, %s302
      %p313 = scmp.eq.s32.totalorder %s43, 0
      %p314 = por %p312, %p313
      %p315 = scmp.ne.s32.totalorder %s301, %s302
      %p316 = scmp.eq.s32.totalorder %s44, 3
      %p317 = por %p315, %p316
      %p319 = scmp.ne.s32.totalorder %s302, %s318
      %p320 = scmp.eq.s32.totalorder %s44, 0
      %p321 = por %p319, %p320
      %s322 = ssub.s32 %s38, %s45
      %p323 = scmp.eq.s32.totalorder %s322, 0
      %s325 = sadd.s32 %s324, 1
      %s326 = scalar_select %p323, %s324, %s325
      %p329 = pneg %p323
      %p330 = scmp.eq.s32.totalorder %s38, 3
      %p331 = por %p329, %p330
      %p332 = scmp.ne.s32.totalorder %s324, %s327
      %p333 = scmp.eq.s32.totalorder %s38, 0
      %p334 = por %p332, %p333
      %p335 = scmp.ne.s32.totalorder %s324, %s327
      %p336 = scmp.eq.s32.totalorder %s43, 3
      %p337 = por %p335, %p336
      %p338 = scmp.ne.s32.totalorder %s327, %s328
      %p339 = scmp.eq.s32.totalorder %s43, 0
      %p340 = por %p338, %p339
      %p341 = scmp.ne.s32.totalorder %s327, %s328
      %p342 = scmp.eq.s32.totalorder %s44, 3
      %p343 = por %p341, %p342
      %p345 = scmp.ne.s32.totalorder %s328, %s344
      %p346 = scmp.eq.s32.totalorder %s44, 0
      %p347 = por %p345, %p346
      %s348 = ssub.s32 %s38, %s45
      %p349 = scmp.eq.s32.totalorder %s348, 0
      %s351 = sadd.s32 %s350, 1
      %s352 = scalar_select %p349, %s350, %s351
      %p355 = pneg %p349
      %p356 = scmp.eq.s32.totalorder %s38, 3
      %p357 = por %p355, %p356
      %p358 = scmp.ne.s32.totalorder %s350, %s353
      %p359 = scmp.eq.s32.totalorder %s38, 0
      %p360 = por %p358, %p359
      %p361 = scmp.ne.s32.totalorder %s350, %s353
      %p362 = scmp.eq.s32.totalorder %s43, 3
      %p363 = por %p361, %p362
      %p364 = scmp.ne.s32.totalorder %s353, %s354
      %p365 = scmp.eq.s32.totalorder %s43, 0
      %p366 = por %p364, %p365
      %p367 = scmp.ne.s32.totalorder %s353, %s354
      %p368 = scmp.eq.s32.totalorder %s44, 3
      %p369 = por %p367, %p368
      %p371 = scmp.ne.s32.totalorder %s354, %s370
      %p372 = scmp.eq.s32.totalorder %s44, 0
      %p373 = por %p371, %p372
      %s374 = ssub.s32 %s38, %s45
      %p375 = scmp.eq.s32.totalorder %s374, 0
      %s377 = sadd.s32 %s376, 1
      %s378 = scalar_select %p375, %s376, %s377
      %p381 = pneg %p375
      %p382 = scmp.eq.s32.totalorder %s38, 3
      %p383 = por %p381, %p382
      %p384 = scmp.ne.s32.totalorder %s376, %s379
      %p385 = scmp.eq.s32.totalorder %s38, 0
      %p386 = por %p384, %p385
      %p387 = scmp.ne.s32.totalorder %s376, %s379
      %p388 = scmp.eq.s32.totalorder %s43, 3
      %p389 = por %p387, %p388
      %p390 = scmp.ne.s32.totalorder %s379, %s380
      %p391 = scmp.eq.s32.totalorder %s43, 0
      %p392 = por %p390, %p391
      %p393 = scmp.ne.s32.totalorder %s379, %s380
      %p394 = scmp.eq.s32.totalorder %s44, 3
      %p395 = por %p393, %p394
      %p397 = scmp.ne.s32.totalorder %s380, %s396
      %p398 = scmp.eq.s32.totalorder %s44, 0
      %p399 = por %p397, %p398
      %s401 = sadd.s32 %s400, 1
      %p404 = scmp.eq.s32.totalorder %s38, 3
      %p405 = scmp.ne.s32.totalorder %s400, %s402
      %p406 = scmp.eq.s32.totalorder %s38, 0
      %p407 = por %p405, %p406
      %p408 = scmp.ne.s32.totalorder %s400, %s402
      %p409 = scmp.eq.s32.totalorder %s43, 3
      %p410 = por %p408, %p409
      %p411 = scmp.ne.s32.totalorder %s402, %s403
      %p412 = scmp.eq.s32.totalorder %s43, 0
      %p413 = por %p411, %p412
      %p414 = scmp.ne.s32.totalorder %s402, %s403
      %p415 = scmp.eq.s32.totalorder %s44, 3
      %p416 = por %p414, %p415
      %p418 = scmp.ne.s32.totalorder %s403, %s417
      %p419 = scmp.eq.s32.totalorder %s44, 0
      %p420 = por %p418, %p419
      %s422 = sadd.s32 %s421, 1
      %p425 = scmp.eq.s32.totalorder %s38, 3
      %p426 = scmp.ne.s32.totalorder %s421, %s423
      %p427 = scmp.eq.s32.totalorder %s38, 0
      %p428 = por %p426, %p427
      %p429 = scmp.ne.s32.totalorder %s421, %s423
      %p430 = scmp.eq.s32.totalorder %s43, 3
      %p431 = por %p429, %p430
      %p432 = scmp.ne.s32.totalorder %s423, %s424
      %p433 = scmp.eq.s32.totalorder %s43, 0
      %p434 = por %p432, %p433
      %p435 = scmp.ne.s32.totalorder %s423, %s424
      %p436 = scmp.eq.s32.totalorder %s44, 3
      %p437 = por %p435, %p436
      %p439 = scmp.ne.s32.totalorder %s424, %s438
      %p440 = scmp.eq.s32.totalorder %s44, 0
      %p441 = por %p439, %p440
      %s443 = sadd.s32 %s442, 1
      %p446 = scmp.eq.s32.totalorder %s38, 3
      %p447 = scmp.ne.s32.totalorder %s442, %s444
      %p448 = scmp.eq.s32.totalorder %s38, 0
      %p449 = por %p447, %p448
      %p450 = scmp.ne.s32.totalorder %s442, %s444
      %p451 = scmp.eq.s32.totalorder %s43, 3
      %p452 = por %p450, %p451
      %p453 = scmp.ne.s32.totalorder %s444, %s445
      %p454 = scmp.eq.s32.totalorder %s43, 0
      %p455 = por %p453, %p454
      %p456 = scmp.ne.s32.totalorder %s444, %s445
      %p457 = scmp.eq.s32.totalorder %s44, 3
      %p458 = por %p456, %p457
      %p460 = scmp.ne.s32.totalorder %s445, %s459
      %p461 = scmp.eq.s32.totalorder %s44, 0
      %p462 = por %p460, %p461
      %p463 = scmp.le.s32.totalorder 1, %s38
      %p464 = scmp.lt.s32.totalorder %s38, 5
      %p465 = pnand %p463, %p464
      %p466 = pneg %p465
      // Predicated region
      $region9: #{translation_forward.2} parent=5 // pred_check
        _
      $region10: #{translation_forward.2} parent=5 // pred_check_branch
        %468 = sbr.rel (%p465) target = $region12
      $region11: #{translation_forward.2} parent=5 // pred_region
        %s469 = ssub.s32 %s38, 1
        // Predicated region
        $region13: #{translation_forward.2} parent=11 // pred_check
          %p470 = pneg %p59
        $region14: #{translation_forward.2} parent=11 // pred_check_branch
          %472 = sbr.rel (%p470) target = $region16
        $region15: #{translation_forward.2} parent=11 // pred_region
          _
        $region16: #{translation_forward.2} parent=11 // pred_fallthru
          _
        // Predicated region
        $region17: #{translation_forward.2} parent=11 // pred_check
          %p473 = pneg %p80
        $region18: #{translation_forward.2} parent=11 // pred_check_branch
          %475 = sbr.rel (%p473) target = $region20
        $region19: #{translation_forward.2} parent=11 // pred_region
          _
        $region20: #{translation_forward.2} parent=11 // pred_fallthru
          _
        // Predicated region
        $region21: #{translation_forward.2} parent=11 // pred_check
          %p476 = pneg %p413
        $region22: #{translation_forward.2} parent=11 // pred_check_branch
          %478 = sbr.rel (%p476) target = $region24
        $region23: #{translation_forward.2} parent=11 // pred_region
          %s480 = ssub.s32 16, 16
          %481 = vsyncadd [#allocation15], %s480
          %s483 = sshll.u32 [#allocation16], 4
          %s484 = int_to_ptr.vmem [resolvable:$true] %s483
          %486 = dma.hbm_to_vmem [thread:$0]  %s14, 16, %s484, [#allocation15]
        $region24: #{translation_forward.2} parent=11 // pred_fallthru
          _
        // Predicated region
        $region25: #{translation_forward.2} parent=11 // pred_check
          %p487 = pneg %p434
        $region26: #{translation_forward.2} parent=11 // pred_check_branch
          %489 = sbr.rel (%p487) target = $region28
        $region27: #{translation_forward.2} parent=11 // pred_region
          %s491 = ssub.s32 16, 16
          %492 = vsyncadd [#allocation18], %s491
          %s494 = sshll.u32 [#allocation17], 4
          %s495 = int_to_ptr.vmem [resolvable:$true] %s494
          %497 = dma.hbm_to_vmem [thread:$0]  %s15, 16, %s495, [#allocation18]
        $region28: #{translation_forward.2} parent=11 // pred_fallthru
          _
      $region12: #{translation_forward.2} parent=5 // pred_fallthru
        _
      %p498 = scmp.lt.s32.totalorder %s38, 4
      // Predicated region
      $region29: #{translation_forward.2} parent=5 // pred_check
        %p499 = pneg %p498
      $region30: #{translation_forward.2} parent=5 // pred_check_branch
        %501 = sbr.rel (%p499) target = $region32
      $region31: #{translation_forward.2} parent=5 // pred_region
        // Predicated region
        $region33: #{translation_forward.2} parent=31 // pred_check
          %p502 = pneg %p100
        $region34: #{translation_forward.2} parent=31 // pred_check_branch
          %504 = sbr.rel (%p502) target = $region36
        $region35: #{translation_forward.2} parent=31 // pred_region
          %p505 = scmp.lt.s32.totalorder %s38, 3
          %s506 = scalar_select %p505, %s38, 3
          %s507 = smul.addr %s506, 48
          %s508 = smul.addr %s507, 4
          %s509 = scalar_lea.vmem %s2, %s508
        $region36: #{translation_forward.2} parent=31 // pred_fallthru
          _
        // Predicated region
        $region37: #{translation_forward.2} parent=31 // pred_check
          %p510 = pneg %p126
        $region38: #{translation_forward.2} parent=31 // pred_check_branch
          %512 = sbr.rel (%p510) target = $region40
        $region39: #{translation_forward.2} parent=31 // pred_region
          %p513 = scmp.lt.s32.totalorder %s38, 3
          %s514 = scalar_select %p513, %s38, 3
          %s515 = smul.addr %s514, 3
          %s516 = scalar_lea.vmem %s3, %s515
        $region40: #{translation_forward.2} parent=31 // pred_fallthru
          _
        // Predicated region
        $region41: #{translation_forward.2} parent=31 // pred_check
          %p517 = pneg %p152
        $region42: #{translation_forward.2} parent=31 // pred_check_branch
          %519 = sbr.rel (%p517) target = $region44
        $region43: #{translation_forward.2} parent=31 // pred_region
          %s520 = sand.u32 %s142, 1
          %s521 = scalar_lea.sflag [#allocation4], %s520
          %s522 = sand.u32 %s142, 1
          %s523 = smul.addr %s522, 64
          %s524 = scalar_lea.vmem [#allocation3], %s523
          %s526 = ssub.s32 1024, 1024
          %527 = vsyncadd %s521, %s526
          %s528 = smul.addr %s38, 16
          %s529 = smul.addr %s528, 64
          %s530 = scalar_lea.hbm %s4, %s529
          %s531 = sshll.u32 %s524, 4
          %s532 = int_to_ptr.vmem [resolvable:$true] %s531
          %537 = dma.hbm_to_vmem [thread:$0]  %s530, 1024, %s532, %s521, 64, 64, 4
        $region44: #{translation_forward.2} parent=31 // pred_fallthru
          _
        // Predicated region
        $region45: #{translation_forward.2} parent=31 // pred_check
          %p538 = pneg %p178
        $region46: #{translation_forward.2} parent=31 // pred_check_branch
          %540 = sbr.rel (%p538) target = $region48
        $region47: #{translation_forward.2} parent=31 // pred_region
          %p541 = scmp.lt.s32.totalorder %s38, 3
          %s542 = scalar_select %p541, %s38, 3
          %s543 = scalar_lea.vmem %s5, %s542
        $region48: #{translation_forward.2} parent=31 // pred_fallthru
          _
        // Predicated region
        $region49: #{translation_forward.2} parent=31 // pred_check
          %p544 = pneg %p204
        $region50: #{translation_forward.2} parent=31 // pred_check_branch
          %546 = sbr.rel (%p544) target = $region52
        $region51: #{translation_forward.2} parent=31 // pred_region
          %s547 = sand.u32 %s38, 1
          %s548 = scalar_lea.sflag [#allocation6], %s547
          %s549 = sand.u32 %s194, 1
          %s550 = scalar_lea.vmem [#allocation5], %s549
          %s552 = ssub.s32 16, 16
          %553 = vsyncadd %s548, %s552
          %s554 = smul.addr %s38, 16
          %s555 = scalar_lea.hbm %s6, %s554
          %s557 = sshll.u32 %s550, 4
          %s558 = int_to_ptr.vmem [resolvable:$true] %s557
          %560 = dma.hbm_to_vmem [thread:$0]  %s555, 16, %s558, %s548
        $region52: #{translation_forward.2} parent=31 // pred_fallthru
          _
        // Predicated region
        $region53: #{translation_forward.2} parent=31 // pred_check
          %p561 = pneg %p230
        $region54: #{translation_forward.2} parent=31 // pred_check_branch
          %563 = sbr.rel (%p561) target = $region56
        $region55: #{translation_forward.2} parent=31 // pred_region
          %s564 = sand.u32 %s38, 1
          %s565 = scalar_lea.sflag [#allocation6], %s564
          %s566 = sand.u32 %s220, 1
          %s567 = scalar_lea.vmem [#allocation7], %s566
          %s569 = ssub.s32 16, 16
          %570 = vsyncadd %s565, %s569
          %s571 = smul.addr %s38, 16
          %s572 = scalar_lea.hbm %s7, %s571
          %s574 = sshll.u32 %s567, 4
          %s575 = int_to_ptr.vmem [resolvable:$true] %s574
          %577 = dma.hbm_to_vmem [thread:$0]  %s572, 16, %s575, %s565
        $region56: #{translation_forward.2} parent=31 // pred_fallthru
          _
        // Predicated region
        $region57: #{translation_forward.2} parent=31 // pred_check
          %p578 = pneg %p256
        $region58: #{translation_forward.2} parent=31 // pred_check_branch
          %580 = sbr.rel (%p578) target = $region60
        $region59: #{translation_forward.2} parent=31 // pred_region
          %s581 = sand.u32 %s38, 1
          %s582 = scalar_lea.sflag [#allocation9], %s581
          %s583 = sand.u32 %s246, 1
          %s584 = smul.addr %s583, 128
          %s585 = scalar_lea.vmem [#allocation8], %s584
          %s587 = ssub.s32 2048, 2048
          %588 = vsyncadd %s582, %s587
          %s589 = smul.addr %s38, 32
          %s590 = smul.addr %s589, 64
          %s591 = scalar_lea.hbm %s8, %s590
          %s592 = sshll.u32 %s585, 4
          %s593 = int_to_ptr.vmem [resolvable:$true] %s592
          %598 = dma.hbm_to_vmem [thread:$0]  %s591, 2048, %s593, %s582, 128, 128, 8
        $region60: #{translation_forward.2} parent=31 // pred_fallthru
          _
        // Predicated region
        $region61: #{translation_forward.2} parent=31 // pred_check
          %p599 = pneg %p282
        $region62: #{translation_forward.2} parent=31 // pred_check_branch
          %601 = sbr.rel (%p599) target = $region64
        $region63: #{translation_forward.2} parent=31 // pred_region
          %p602 = scmp.lt.s32.totalorder %s38, 3
          %s603 = scalar_select %p602, %s38, 3
          %s604 = smul.addr %s603, 2
          %s605 = scalar_lea.vmem %s9, %s604
        $region64: #{translation_forward.2} parent=31 // pred_fallthru
          _
        // Predicated region
        $region65: #{translation_forward.2} parent=31 // pred_check
          %p606 = pneg %p308
        $region66: #{translation_forward.2} parent=31 // pred_check_branch
          %608 = sbr.rel (%p606) target = $region68
        $region67: #{translation_forward.2} parent=31 // pred_region
          %s609 = sand.u32 %s38, 1
          %s610 = scalar_lea.sflag [#allocation9], %s609
          %s611 = sand.u32 %s298, 1
          %s612 = smul.addr %s611, 128
          %s613 = scalar_lea.vmem [#allocation10], %s612
          %s615 = ssub.s32 2048, 2048
          %616 = vsyncadd %s610, %s615
          %s617 = smul.addr %s38, 32
          %s618 = smul.addr %s617, 64
          %s619 = scalar_lea.hbm %s10, %s618
          %s620 = sshll.u32 %s613, 4
          %s621 = int_to_ptr.vmem [resolvable:$true] %s620
          %626 = dma.hbm_to_vmem [thread:$0]  %s619, 2048, %s621, %s610, 64, 64, 4
        $region68: #{translation_forward.2} parent=31 // pred_fallthru
          _
        // Predicated region
        $region69: #{translation_forward.2} parent=31 // pred_check
          %p627 = pneg %p334
        $region70: #{translation_forward.2} parent=31 // pred_check_branch
          %629 = sbr.rel (%p627) target = $region72
        $region71: #{translation_forward.2} parent=31 // pred_region
          %s630 = sand.u32 %s38, 1
          %s631 = scalar_lea.sflag [#allocation12], %s630
          %s632 = sand.u32 %s324, 1
          %s633 = scalar_lea.vmem [#allocation11], %s632
          %s635 = ssub.s32 16, 16
          %636 = vsyncadd %s631, %s635
          %s637 = smul.addr %s38, 16
          %s638 = scalar_lea.hbm %s11, %s637
          %s640 = sshll.u32 %s633, 4
          %s641 = int_to_ptr.vmem [resolvable:$true] %s640
          %643 = dma.hbm_to_vmem [thread:$0]  %s638, 16, %s641, %s631
        $region72: #{translation_forward.2} parent=31 // pred_fallthru
          _
        // Predicated region
        $region73: #{translation_forward.2} parent=31 // pred_check
          %p644 = pneg %p360
        $region74: #{translation_forward.2} parent=31 // pred_check_branch
          %646 = sbr.rel (%p644) target = $region76
        $region75: #{translation_forward.2} parent=31 // pred_region
          %s647 = sand.u32 %s38, 1
          %s648 = scalar_lea.sflag [#allocation12], %s647
          %s649 = sand.u32 %s350, 1
          %s650 = scalar_lea.vmem [#allocation13], %s649
          %s652 = ssub.s32 16, 16
          %653 = vsyncadd %s648, %s652
          %s654 = smul.addr %s38, 16
          %s655 = scalar_lea.hbm %s12, %s654
          %s657 = sshll.u32 %s650, 4
          %s658 = int_to_ptr.vmem [resolvable:$true] %s657
          %660 = dma.hbm_to_vmem [thread:$0]  %s655, 16, %s658, %s648
        $region76: #{translation_forward.2} parent=31 // pred_fallthru
          _
        // Predicated region
        $region77: #{translation_forward.2} parent=31 // pred_check
          %p661 = pneg %p386
        $region78: #{translation_forward.2} parent=31 // pred_check_branch
          %663 = sbr.rel (%p661) target = $region80
        $region79: #{translation_forward.2} parent=31 // pred_region
          %s664 = sand.u32 %s38, 1
          %s665 = scalar_lea.sflag [#allocation15], %s664
          %s666 = sand.u32 %s376, 1
          %s667 = scalar_lea.vmem [#allocation14], %s666
          %s669 = ssub.s32 16, 16
          %670 = vsyncadd %s665, %s669
          %s671 = smul.addr %s38, 16
          %s672 = scalar_lea.hbm %s13, %s671
          %s674 = sshll.u32 %s667, 4
          %s675 = int_to_ptr.vmem [resolvable:$true] %s674
          %677 = dma.hbm_to_vmem [thread:$0]  %s672, 16, %s675, %s665
        $region80: #{translation_forward.2} parent=31 // pred_fallthru
          _
      $region32: #{translation_forward.2} parent=5 // pred_fallthru
        _
      %p678 = scmp.le.s32.totalorder 1, %s38
      %p679 = scmp.lt.s32.totalorder %s38, 5
      %p680 = pnand %p678, %p679
      %p681 = pneg %p680
      // Predicated region
      $region81: #{translation_forward.2} parent=5 // pred_check
        _
      $region82: #{translation_forward.2} parent=5 // pred_check_branch
        %683 = sbr.rel (%p680) target = $region84
      $region83: #{translation_forward.2} parent=5 // pred_region
        %s684 = ssub.s32 %s38, 1
        %s685 = sand.u32 %s145, 1
        %s686 = scalar_lea.sflag [#allocation4], %s685
        %s687 = sand.u32 %s145, 1
        %s688 = smul.addr %s687, 64
        %s689 = scalar_lea.vmem [#allocation3], %s688
        // Predicated region
        $region85: #{translation_forward.2} parent=83 // pred_check
          %p690 = pneg %p158
        $region86: #{translation_forward.2} parent=83 // pred_check_branch
          %692 = sbr.rel (%p690) target = $region88
        $region87: #{translation_forward.2} parent=83 // pred_region
          %693 = dma.done %s686, 1024
        $region88: #{translation_forward.2} parent=83 // pred_fallthru
          _
        %s694 = sand.u32 %s43, 1
        %s695 = scalar_lea.sflag [#allocation6], %s694
        %s696 = sand.u32 %s197, 1
        %s697 = scalar_lea.vmem [#allocation5], %s696
        // Predicated region
        $region89: #{translation_forward.2} parent=83 // pred_check
          %p698 = pneg %p210
        $region90: #{translation_forward.2} parent=83 // pred_check_branch
          %700 = sbr.rel (%p698) target = $region92
        $region91: #{translation_forward.2} parent=83 // pred_region
          %701 = dma.done %s695, 16
        $region92: #{translation_forward.2} parent=83 // pred_fallthru
          _
        %s702 = sand.u32 %s43, 1
        %s703 = scalar_lea.sflag [#allocation6], %s702
        %s704 = sand.u32 %s223, 1
        %s705 = scalar_lea.vmem [#allocation7], %s704
        // Predicated region
        $region93: #{translation_forward.2} parent=83 // pred_check
          %p706 = pneg %p236
        $region94: #{translation_forward.2} parent=83 // pred_check_branch
          %708 = sbr.rel (%p706) target = $region96
        $region95: #{translation_forward.2} parent=83 // pred_region
          %709 = dma.done %s703, 16
        $region96: #{translation_forward.2} parent=83 // pred_fallthru
          _
        %s710 = sand.u32 %s43, 1
        %s711 = scalar_lea.sflag [#allocation9], %s710
        %s712 = sand.u32 %s249, 1
        %s713 = smul.addr %s712, 128
        %s714 = scalar_lea.vmem [#allocation8], %s713
        // Predicated region
        $region97: #{translation_forward.2} parent=83 // pred_check
          %p715 = pneg %p262
        $region98: #{translation_forward.2} parent=83 // pred_check_branch
          %717 = sbr.rel (%p715) target = $region100
        $region99: #{translation_forward.2} parent=83 // pred_region
          %718 = dma.done %s711, 2048
        $region100: #{translation_forward.2} parent=83 // pred_fallthru
          _
        %s719 = sand.u32 %s43, 1
        %s720 = scalar_lea.sflag [#allocation9], %s719
        %s721 = sand.u32 %s301, 1
        %s722 = smul.addr %s721, 128
        %s723 = scalar_lea.vmem [#allocation10], %s722
        // Predicated region
        $region101: #{translation_forward.2} parent=83 // pred_check
          %p724 = pneg %p314
        $region102: #{translation_forward.2} parent=83 // pred_check_branch
          %726 = sbr.rel (%p724) target = $region104
        $region103: #{translation_forward.2} parent=83 // pred_region
          %727 = dma.done %s720, 2048
        $region104: #{translation_forward.2} parent=83 // pred_fallthru
          _
        %s728 = sand.u32 %s43, 1
        %s729 = scalar_lea.sflag [#allocation12], %s728
        %s730 = sand.u32 %s327, 1
        %s731 = scalar_lea.vmem [#allocation11], %s730
        // Predicated region
        $region105: #{translation_forward.2} parent=83 // pred_check
          %p732 = pneg %p340
        $region106: #{translation_forward.2} parent=83 // pred_check_branch
          %734 = sbr.rel (%p732) target = $region108
        $region107: #{translation_forward.2} parent=83 // pred_region
          %735 = dma.done %s729, 16
        $region108: #{translation_forward.2} parent=83 // pred_fallthru
          _
        %s736 = sand.u32 %s43, 1
        %s737 = scalar_lea.sflag [#allocation12], %s736
        %s738 = sand.u32 %s353, 1
        %s739 = scalar_lea.vmem [#allocation13], %s738
        // Predicated region
        $region109: #{translation_forward.2} parent=83 // pred_check
          %p740 = pneg %p366
        $region110: #{translation_forward.2} parent=83 // pred_check_branch
          %742 = sbr.rel (%p740) target = $region112
        $region111: #{translation_forward.2} parent=83 // pred_region
          %743 = dma.done %s737, 16
        $region112: #{translation_forward.2} parent=83 // pred_fallthru
          _
        %s744 = sand.u32 %s43, 1
        %s745 = scalar_lea.sflag [#allocation15], %s744
        %s746 = sand.u32 %s379, 1
        %s747 = scalar_lea.vmem [#allocation14], %s746
        // Predicated region
        $region113: #{translation_forward.2} parent=83 // pred_check
          %p748 = pneg %p392
        $region114: #{translation_forward.2} parent=83 // pred_check_branch
          %750 = sbr.rel (%p748) target = $region116
        $region115: #{translation_forward.2} parent=83 // pred_region
          %751 = dma.done %s745, 16
        $region116: #{translation_forward.2} parent=83 // pred_fallthru
          _
        // Predicated region
        $region117: #{translation_forward.2} parent=83 // pred_check
          %p752 = pneg %p413
        $region118: #{translation_forward.2} parent=83 // pred_check_branch
          %754 = sbr.rel (%p752) target = $region120
        $region119: #{translation_forward.2} parent=83 // pred_region
          %755 = dma.done [#allocation15], 16
        $region120: #{translation_forward.2} parent=83 // pred_fallthru
          _
        // Predicated region
        $region121: #{translation_forward.2} parent=83 // pred_check
          %p756 = pneg %p434
        $region122: #{translation_forward.2} parent=83 // pred_check_branch
          %758 = sbr.rel (%p756) target = $region124
        $region123: #{translation_forward.2} parent=83 // pred_region
          %759 = dma.done [#allocation18], 16
        $region124: #{translation_forward.2} parent=83 // pred_fallthru
          _
        %p760 = pneg %p59
        %p761 = pneg %p56
        %p762 = pneg %p80
        %p763 = pneg %p77
        %p764 = scmp.lt.s32.totalorder %s43, 3
        %s765 = scalar_select %p764, %s43, 3
        %s766 = smul.addr %s765, 48
        %s767 = smul.addr %s766, 4
        %s768 = scalar_lea.vmem %s2, %s767
        %p769 = pneg %p106
        %p770 = pneg %p103
        %p771 = scmp.lt.s32.totalorder %s43, 3
        %s772 = scalar_select %p771, %s43, 3
        %s773 = smul.addr %s772, 3
        %s774 = scalar_lea.vmem %s3, %s773
        %p775 = pneg %p132
        %p776 = pneg %p129
        %s777 = sand.u32 %s145, 1
        %s778 = scalar_lea.sflag [#allocation4], %s777
        %s779 = sand.u32 %s145, 1
        %s780 = smul.addr %s779, 64
        %s781 = scalar_lea.vmem [#allocation3], %s780
        %p782 = pneg %p158
        %p783 = pneg %p155
        %p784 = scmp.lt.s32.totalorder %s43, 3
        %s785 = scalar_select %p784, %s43, 3
        %s786 = scalar_lea.vmem %s5, %s785
        %p787 = pneg %p184
        %p788 = pneg %p181
        %s789 = sand.u32 %s43, 1
        %s790 = scalar_lea.sflag [#allocation6], %s789
        %s791 = sand.u32 %s197, 1
        %s792 = scalar_lea.vmem [#allocation5], %s791
        %p793 = pneg %p210
        %p794 = pneg %p207
        %s795 = sand.u32 %s43, 1
        %s796 = scalar_lea.sflag [#allocation6], %s795
        %s797 = sand.u32 %s223, 1
        %s798 = scalar_lea.vmem [#allocation7], %s797
        %p799 = pneg %p236
        %p800 = pneg %p233
        %s801 = sand.u32 %s43, 1
        %s802 = scalar_lea.sflag [#allocation9], %s801
        %s803 = sand.u32 %s249, 1
        %s804 = smul.addr %s803, 128
        %s805 = scalar_lea.vmem [#allocation8], %s804
        %p806 = pneg %p262
        %p807 = pneg %p259
        %p808 = scmp.lt.s32.totalorder %s43, 3
        %s809 = scalar_select %p808, %s43, 3
        %s810 = smul.addr %s809, 2
        %s811 = scalar_lea.vmem %s9, %s810
        %p812 = pneg %p288
        %p813 = pneg %p285
        %s814 = sand.u32 %s43, 1
        %s815 = scalar_lea.sflag [#allocation9], %s814
        %s816 = sand.u32 %s301, 1
        %s817 = smul.addr %s816, 128
        %s818 = scalar_lea.vmem [#allocation10], %s817
        %p819 = pneg %p314
        %p820 = pneg %p311
        %s821 = sand.u32 %s43, 1
        %s822 = scalar_lea.sflag [#allocation12], %s821
        %s823 = sand.u32 %s327, 1
        %s824 = scalar_lea.vmem [#allocation11], %s823
        %p825 = pneg %p340
        %p826 = pneg %p337
        %s827 = sand.u32 %s43, 1
        %s828 = scalar_lea.sflag [#allocation12], %s827
        %s829 = sand.u32 %s353, 1
        %s830 = scalar_lea.vmem [#allocation13], %s829
        %p831 = pneg %p366
        %p832 = pneg %p363
        %s833 = sand.u32 %s43, 1
        %s834 = scalar_lea.sflag [#allocation15], %s833
        %s835 = sand.u32 %s379, 1
        %s836 = scalar_lea.vmem [#allocation14], %s835
        %p837 = pneg %p392
        %p838 = pneg %p389
        %p839 = pneg %p413
        %p840 = pneg %p410
        %p841 = pneg %p434
        %p842 = pneg %p431
        %p843 = pneg %p455
        %p844 = pneg %p452
        %p845 = scmp.lt.s32.totalorder %s43, 3
        %s846 = scalar_select %p845, %s43, 3
        %s847 = smul.addr %s846, 48
        %s848 = smul.addr %s847, 4
        %s849 = scalar_lea.vmem %s2, %s848
        %p850 = scmp.lt.s32.totalorder %s43, 3
        %s851 = scalar_select %p850, %s43, 3
        %s852 = smul.addr %s851, 3
        %s853 = scalar_lea.vmem %s3, %s852
        %p854 = scmp.lt.s32.totalorder %s43, 3
        %s855 = scalar_select %p854, %s43, 3
        %s856 = scalar_lea.vmem %s5, %s855
        %p857 = scmp.lt.s32.totalorder %s43, 3
        %s858 = scalar_select %p857, %s43, 3
        %s859 = smul.addr %s858, 2
        %s860 = scalar_lea.vmem %s9, %s859
        %p862 = scmp.eq.s32.totalorder %s43, 0
        // Predicated region
        $region125: #{translation_forward.2} parent=83 // pred_check
          %p863 = pneg %p862
        $region126: #{translation_forward.2} parent=83 // pred_check_branch
          %865 = sbr.rel (%p863) target = $region128
        $region127: #{translation_forward.2} parent=83 // pred_region
          %v866 = vld [vmem:[%s0] sm:$0xff]
          %v867 = vld [vmem:[%s0 + $0x8] sm:$0xff]
          %v868 = vld [vmem:[%s0 + $0x10] sm:$0xf]
          %869 = vst [vmem:[#allocation2] sm:$0xff] %v866
          %870 = vst [vmem:[#allocation2 + $0x8] sm:$0xff] %v867
          %871 = vst [vmem:[#allocation2 + $0x10] sm:$0xf] %v868
        $region128: #{translation_forward.2} parent=83 // pred_fallthru
          _
        %v872 = vld [vmem:[#allocation2] sm:$0xff]
        %v873 = vld [vmem:[#allocation2 + $0x8] sm:$0xff]
        %v874 = vld [vmem:[#allocation2 + $0x10] sm:$0xf]
        %v875 = vpack.c.bf16 %v873, %v872
        %v876 = vpack.c.bf16 %v874, %v874
        %v877 = vld [vmem:[%s849] sm:$0xff]
        %v878 = vld [vmem:[%s849 + $0x8] sm:$0xf]
        %v879 = vld [vmem:[%s849 + $0xc] sm:$0xff]
        %v880 = vld [vmem:[%s849 + $0x14] sm:$0xf]
        %v881 = vld [vmem:[%s849 + $0x18] sm:$0xff]
        %v882 = vld [vmem:[%s849 + $0x20] sm:$0xf]
        %v883 = vld [vmem:[%s849 + $0x24] sm:$0xff]
        %v884 = vld [vmem:[%s849 + $0x2c] sm:$0xf]
        %v885 = vld [vmem:[%s849 + $0x30] sm:$0xff]
        %v886 = vld [vmem:[%s849 + $0x38] sm:$0xf]
        %v887 = vld [vmem:[%s849 + $0x3c] sm:$0xff]
        %v888 = vld [vmem:[%s849 + $0x44] sm:$0xf]
        %v889 = vld [vmem:[%s849 + $0x48] sm:$0xff]
        %v890 = vld [vmem:[%s849 + $0x50] sm:$0xf]
        %v891 = vld [vmem:[%s849 + $0x54] sm:$0xff]
        %v892 = vld [vmem:[%s849 + $0x5c] sm:$0xf]
        %v893 = vld [vmem:[%s849 + $0x60] sm:$0xff]
        %v894 = vld [vmem:[%s849 + $0x68] sm:$0xf]
        %v895 = vld [vmem:[%s849 + $0x6c] sm:$0xff]
        %v896 = vld [vmem:[%s849 + $0x74] sm:$0xf]
        %v897 = vld [vmem:[%s849 + $0x78] sm:$0xff]
        %v898 = vld [vmem:[%s849 + $0x80] sm:$0xf]
        %v899 = vld [vmem:[%s849 + $0x84] sm:$0xff]
        %v900 = vld [vmem:[%s849 + $0x8c] sm:$0xf]
        %v901 = vld [vmem:[%s849 + $0x90] sm:$0xff]
        %v902 = vld [vmem:[%s849 + $0x98] sm:$0xf]
        %v903 = vld [vmem:[%s849 + $0x9c] sm:$0xff]
        %v904 = vld [vmem:[%s849 + $0xa4] sm:$0xf]
        %v905 = vld [vmem:[%s849 + $0xa8] sm:$0xff]
        %v906 = vld [vmem:[%s849 + $0xb0] sm:$0xf]
        %v907 = vld [vmem:[%s849 + $0xb4] sm:$0xff]
        %v908 = vld [vmem:[%s849 + $0xbc] sm:$0xf]
        %v909 = vld [vmem:[%s853] sm:$0x7]
        %v911 = vlaneseq
        %v912 = vshrl.u32 %v911, 7
        %v913 = vsub.s32 0, %v912
        %v914 = vrot.slane %v909, %v913
        %v915 = vlaneseq
        %v916 = vshrl.u32 %v915, 7
        %v917 = vsub.s32 1, %v916
        %v918 = vrot.slane %v909, %v917
        %v919 = vlaneseq
        %v920 = vshrl.u32 %v919, 7
        %v921 = vsub.s32 2, %v920
        %v922 = vrot.slane %v909, %v921
        %v958 = vunpack.c.l.b16 %v877
        %v959 = vunpack.c.h.b16 %v877
        %v960 = vunpack.c.l.b16 %v878
        %v961 = vunpack.c.l.b16 %v879
        %v962 = vunpack.c.h.b16 %v879
        %v963 = vunpack.c.l.b16 %v880
        %v964 = vunpack.c.l.b16 %v881
        %v965 = vunpack.c.h.b16 %v881
        %v966 = vunpack.c.l.b16 %v882
        %v967 = vunpack.c.l.b16 %v883
        %v968 = vunpack.c.h.b16 %v883
        %v969 = vunpack.c.l.b16 %v884
        %v970 = vunpack.c.l.b16 %v885
        %v971 = vunpack.c.h.b16 %v885
        %v972 = vunpack.c.l.b16 %v886
        %v973 = vunpack.c.l.b16 %v887
        %v974 = vunpack.c.h.b16 %v887
        %v975 = vunpack.c.l.b16 %v888
        %v976 = vunpack.c.l.b16 %v889
        %v977 = vunpack.c.h.b16 %v889
        %v978 = vunpack.c.l.b16 %v890
        %v979 = vunpack.c.l.b16 %v891
        %v980 = vunpack.c.h.b16 %v891
        %v981 = vunpack.c.l.b16 %v892
        %v982 = vunpack.c.l.b16 %v893
        %v983 = vunpack.c.h.b16 %v893
        %v984 = vunpack.c.l.b16 %v894
        %v985 = vunpack.c.l.b16 %v895
        %v986 = vunpack.c.h.b16 %v895
        %v987 = vunpack.c.l.b16 %v896
        %v988 = vunpack.c.l.b16 %v897
        %v989 = vunpack.c.h.b16 %v897
        %v990 = vunpack.c.l.b16 %v898
        %v991 = vunpack.c.l.b16 %v899
        %v992 = vunpack.c.h.b16 %v899
        %v993 = vunpack.c.l.b16 %v900
        %v994 = vunpack.c.l.b16 %v901
        %v995 = vunpack.c.h.b16 %v901
        %v996 = vunpack.c.l.b16 %v902
        %v997 = vunpack.c.l.b16 %v903
        %v998 = vunpack.c.h.b16 %v903
        %v999 = vunpack.c.l.b16 %v904
        %v1000 = vunpack.c.l.b16 %v905
        %v1001 = vunpack.c.h.b16 %v905
        %v1002 = vunpack.c.l.b16 %v906
        %v1003 = vunpack.c.l.b16 %v907
        %v1004 = vunpack.c.h.b16 %v907
        %v1005 = vunpack.c.l.b16 %v908
        %v1006 = vpack.c.b16 %v961, %v958
        %v1007 = vpack.c.b16 %v962, %v959
        %v1008 = vpack.c.b16 %v963, %v960
        %v1009 = vpack.c.b16 %v967, %v964
        %v1010 = vpack.c.b16 %v968, %v965
        %v1011 = vpack.c.b16 %v969, %v966
        %v1012 = vpack.c.b16 %v973, %v970
        %v1013 = vpack.c.b16 %v974, %v971
        %v1014 = vpack.c.b16 %v975, %v972
        %v1015 = vpack.c.b16 %v979, %v976
        %v1016 = vpack.c.b16 %v980, %v977
        %v1017 = vpack.c.b16 %v981, %v978
        %v1018 = vpack.c.b16 %v985, %v982
        %v1019 = vpack.c.b16 %v986, %v983
        %v1020 = vpack.c.b16 %v987, %v984
        %v1021 = vpack.c.b16 %v991, %v988
        %v1022 = vpack.c.b16 %v992, %v989
        %v1023 = vpack.c.b16 %v993, %v990
        %v1024 = vpack.c.b16 %v997, %v994
        %v1025 = vpack.c.b16 %v998, %v995
        %v1026 = vpack.c.b16 %v999, %v996
        %v1027 = vpack.c.b16 %v1003, %v1000
        %v1028 = vpack.c.b16 %v1004, %v1001
        %v1029 = vpack.c.b16 %v1005, %v1002
        %1054 = vmatprep.subr.bf16.mxu0 %v1028
        %1055 = vmatpush1.bf16.msra.mxu0 %v1027
        %1056 = vmatprep.subr.bf16.mxu0 %v1025
        %1057 = vmatpush1.bf16.msra.mxu0 %v1024
        %1058 = vmatprep.subr.bf16.mxu0 %v1022
        %1059 = vmatpush1.bf16.msra.mxu0 %v1021
        %1060 = vmatprep.subr.bf16.mxu0 %v1019
        %1061 = vmatpush1.bf16.msra.mxu0 %v1018
        %1062 = vmatprep.subr.bf16.mxu0 %v1016
        %1063 = vmatpush1.bf16.msra.mxu0 %v1015
        %1064 = vmatprep.subr.bf16.mxu0 %v1013
        %1065 = vmatpush1.bf16.msra.mxu0 %v1012
        %1066 = vmatprep.subr.bf16.mxu0 %v1010
        %1067 = vmatpush1.bf16.msra.mxu0 %v1009
        %1068 = vmatprep.subr.bf16.mxu0 %v1007
        %1069 = vmatpush1.bf16.msra.mxu0 %v1006
        %1070 = vmatprep.subr.bf16.mxu0 0
        %1071 = vmatpush2.bf16.msra.mxu0 0
        %1072 = vmatprep.subr.bf16.mxu0 0
        %1073 = vmatpush2.bf16.msra.mxu0 0
        %1074 = vmatprep.subr.bf16.mxu0 0
        %1075 = vmatpush2.bf16.msra.mxu0 0
        %1076 = vmatprep.subr.bf16.mxu0 0
        %1077 = vmatpush2.bf16.msra.mxu0 0
        %1078 = vmatprep.subr.bf16.mxu0 0
        %1079 = vmatpush2.bf16.msra.mxu0 0
        %1080 = vmatprep.subr.bf16.mxu0 0
        %1081 = vmatpush2.bf16.msra.mxu0 0
        %1082 = vmatprep.subr.bf16.mxu0 0
        %1083 = vmatpush2.bf16.msra.mxu0 0
        %1084 = vmatprep.subr.bf16.mxu0 0
        %1085 = vmatpush2.bf16.msra.mxu0 0
        %1086 = vmatprep.mubr.bf16.mxu0 0
        %1087 = vmatmul.mubr.bf16.gmra.mxu0 %v875
        %v1088 = vpop.f32.mrf.mxu0
        %v1089 = vadd.f32 %v914, %v1088
        %v1090 = vpop.f32.mrf.mxu0
        %v1091 = vadd.f32 %v918, %v1090
        %v1092 = vpop.f32.mrf.mxu0
        %v1093 = vadd.f32 %v914, %v1092
        %v1094 = vpop.f32.mrf.mxu0
        %v1095 = vadd.f32 %v918, %v1094
        %1096 = vmatprep.mubr.bf16.mxu0 0
        %1097 = vmatmul.mubr.bf16.gmra.mxu0 %v876
        %v1098 = vpop.f32.mrf.mxu0
        %v1099 = vadd.f32 %v914, %v1098
        %v1100 = vpop.f32.mrf.mxu0
        %v1101 = vadd.f32 %v918, %v1100
        %v1102 = vpop.f32.mrf.mxu0
        %v1103 = vpop.f32.mrf.mxu0
        %1104 = vdwg.mxu0
        %1105 = vmatprep.subr.bf16.mxu0 0
        %1106 = vmatpush1.bf16.msra.mxu0 %v1029
        %1107 = vmatprep.subr.bf16.mxu0 0
        %1108 = vmatpush1.bf16.msra.mxu0 %v1026
        %1109 = vmatprep.subr.bf16.mxu0 0
        %1110 = vmatpush1.bf16.msra.mxu0 %v1023
        %1111 = vmatprep.subr.bf16.mxu0 0
        %1112 = vmatpush1.bf16.msra.mxu0 %v1020
        %1113 = vmatprep.subr.bf16.mxu0 0
        %1114 = vmatpush1.bf16.msra.mxu0 %v1017
        %1115 = vmatprep.subr.bf16.mxu0 0
        %1116 = vmatpush1.bf16.msra.mxu0 %v1014
        %1117 = vmatprep.subr.bf16.mxu0 0
        %1118 = vmatpush1.bf16.msra.mxu0 %v1011
        %1119 = vmatprep.subr.bf16.mxu0 0
        %1120 = vmatpush1.bf16.msra.mxu0 %v1008
        %1121 = vmatprep.subr.bf16.mxu0 0
        %1122 = vmatpush2.bf16.msra.mxu0 0
        %1123 = vmatprep.subr.bf16.mxu0 0
        %1124 = vmatpush2.bf16.msra.mxu0 0
        %1125 = vmatprep.subr.bf16.mxu0 0
        %1126 = vmatpush2.bf16.msra.mxu0 0
        %1127 = vmatprep.subr.bf16.mxu0 0
        %1128 = vmatpush2.bf16.msra.mxu0 0
        %1129 = vmatprep.subr.bf16.mxu0 0
        %1130 = vmatpush2.bf16.msra.mxu0 0
        %1131 = vmatprep.subr.bf16.mxu0 0
        %1132 = vmatpush2.bf16.msra.mxu0 0
        %1133 = vmatprep.subr.bf16.mxu0 0
        %1134 = vmatpush2.bf16.msra.mxu0 0
        %1135 = vmatprep.subr.bf16.mxu0 0
        %1136 = vmatpush2.bf16.msra.mxu0 0
        %1137 = vmatprep.mubr.bf16.mxu0 0
        %1138 = vmatmul.mubr.bf16.gmra.mxu0 %v875
        %v1139 = vpop.f32.mrf.mxu0
        %v1140 = vadd.f32 %v922, %v1139
        %v1141 = vpop.f32.mrf.mxu0
        %v1142 = vpop.f32.mrf.mxu0
        %v1143 = vadd.f32 %v922, %v1142
        %v1144 = vpop.f32.mrf.mxu0
        %1145 = vmatprep.mubr.bf16.mxu0 0
        %1146 = vmatmul.mubr.bf16.gmra.mxu0 %v876
        %v1147 = vpop.f32.mrf.mxu0
        %v1148 = vadd.f32 %v922, %v1147
        %v1149 = vpop.f32.mrf.mxu0
        %v1150 = vpop.f32.mrf.mxu0
        %v1151 = vpop.f32.mrf.mxu0
        %1152 = vdwg.mxu0
        %v1153 = vld [vmem:[%s689] sm:$0xf]
        %v1154 = vld [vmem:[%s689 + $0x4] sm:$0xf]
        %v1155 = vld [vmem:[%s689 + $0x8] sm:$0xf]
        %v1156 = vld [vmem:[%s689 + $0xc] sm:$0xf]
        %v1157 = vld [vmem:[%s689 + $0x10] sm:$0xf]
        %v1158 = vld [vmem:[%s689 + $0x14] sm:$0xf]
        %v1159 = vld [vmem:[%s689 + $0x18] sm:$0xf]
        %v1160 = vld [vmem:[%s689 + $0x1c] sm:$0xf]
        %v1161 = vld [vmem:[%s689 + $0x20] sm:$0xf]
        %v1162 = vld [vmem:[%s689 + $0x24] sm:$0xf]
        %v1163 = vld [vmem:[%s689 + $0x28] sm:$0xf]
        %v1164 = vld [vmem:[%s689 + $0x2c] sm:$0xf]
        %v1165 = vld [vmem:[%s689 + $0x30] sm:$0xf]
        %v1166 = vld [vmem:[%s689 + $0x34] sm:$0xf]
        %v1167 = vld [vmem:[%s689 + $0x38] sm:$0xf]
        %v1168 = vld [vmem:[%s689 + $0x3c] sm:$0xf]
        %v1169 = vld [vmem:[%s1] sm:$0xff]
        %v1170 = vld [vmem:[%s1 + $0x8] sm:$0xff]
        %v1171 = vld [vmem:[%s1 + $0x10] sm:$0xf]
        %vm1172 = vcmask 261120
        %v1174 = vsel %vm1172, %v1089, 0
        %v1177 = vsel %vm1172, %v1093, 0
        %v1180 = vsel %vm1172, %v1099, 0
        %v1183 = vsel %vm1172, %v1091, 0
        %v1186 = vsel %vm1172, %v1095, 0
        %v1189 = vsel %vm1172, %v1101, 0
        %1191 = vmatprep.subr.mxu0 0.0
        %1192 = vmatpush1.xpose.msra.mxu0 0.0
        %1193 = vmatprep.subr.mxu0 0.0
        %1194 = vmatpush1.xpose.msra.mxu0 0.0
        %1195 = vmatprep.subr.mxu0 0.0
        %1196 = vmatpush1.xpose.msra.mxu0 0.0
        %1197 = vmatprep.subr.mxu0 0.0
        %1198 = vmatpush1.xpose.msra.mxu0 0.0
        %1199 = vmatprep.subr.mxu0 0.0
        %1200 = vmatpush1.xpose.msra.mxu0 0.0
        %1201 = vmatprep.subr.mxu0 0.0
        %1202 = vmatpush1.xpose.msra.mxu0 0.0
        %1203 = vmatprep.subr.mxu0 0.0
        %1204 = vmatpush1.xpose.msra.mxu0 0.0
        %1205 = vmatprep.subr.mxu0 0.0
        %1206 = vmatpush1.xpose.msra.mxu0 0.0
        %1207 = vmatprep.subr.mxu0 0.0
        %1208 = vmatpush1.xpose.msra.mxu0 0.0
        %1209 = vmatprep.subr.mxu0 0.0
        %1210 = vmatpush1.xpose.msra.mxu0 0.0
        %1211 = vmatprep.subr.mxu0 0.0
        %1212 = vmatpush1.xpose.msra.mxu0 0.0
        %1213 = vmatprep.subr.mxu0 0.0
        %1214 = vmatpush1.xpose.msra.mxu0 0.0
        %1215 = vmatprep.subr.mxu0 0.0
        %1216 = vmatpush1.xpose.msra.mxu0 0.0
        %1217 = vmatprep.subr.mxu0 0.0
        %1218 = vmatpush1.xpose.msra.mxu0 %v1189
        %1219 = vmatprep.subr.mxu0 0.0
        %1220 = vmatpush1.xpose.msra.mxu0 %v1186
        %1221 = vmatprep.subr.mxu0 0.0
        %1222 = vmatpush1.xpose.msra.mxu0 %v1183
        %1223 = vmatprep.subr.mxu0 0.0
        %1224 = vmatpush2.xpose.msra.mxu0 0.0
        %1225 = vmatprep.subr.mxu0 0.0
        %1226 = vmatpush2.xpose.msra.mxu0 0.0
        %1227 = vmatprep.subr.mxu0 0.0
        %1228 = vmatpush2.xpose.msra.mxu0 0.0
        %1229 = vmatprep.subr.mxu0 0.0
        %1230 = vmatpush2.xpose.msra.mxu0 0.0
        %1231 = vmatprep.subr.mxu0 0.0
        %1232 = vmatpush2.xpose.msra.mxu0 0.0
        %1233 = vmatprep.subr.mxu0 0.0
        %1234 = vmatpush2.xpose.msra.mxu0 0.0
        %1235 = vmatprep.subr.mxu0 0.0
        %1236 = vmatpush2.xpose.msra.mxu0 0.0
        %1237 = vmatprep.subr.mxu0 0.0
        %1238 = vmatpush2.xpose.msra.mxu0 0.0
        %1239 = vmatprep.subr.mxu0 0.0
        %1240 = vmatpush2.xpose.msra.mxu0 0.0
        %1241 = vmatprep.subr.mxu0 0.0
        %1242 = vmatpush2.xpose.msra.mxu0 0.0
        %1243 = vmatprep.subr.mxu0 0.0
        %1244 = vmatpush2.xpose.msra.mxu0 0.0
        %1245 = vmatprep.subr.mxu0 0.0
        %1246 = vmatpush2.xpose.msra.mxu0 0.0
        %1247 = vmatprep.subr.mxu0 0.0
        %1248 = vmatpush2.xpose.msra.mxu0 0.0
        %1249 = vmatprep.subr.mxu0 0.0
        %1250 = vmatpush2.xpose.msra.mxu0 0.0
        %1251 = vmatprep.subr.mxu0 0.0
        %1252 = vmatpush2.xpose.msra.mxu0 0.0
        %1253 = vmatprep.subr.mxu0 0.0
        %1254 = vmatpush2.xpose.msra.mxu0 0.0
        %1255 = vmatprep.mubr.f32.mxu0 0.0
        %1256 = vmatmul.mubr.f32.gmra.mxu0 %v1174
        %v1257 = vpop.f32.mrf.mxu0
        %v1258 = vadd.f32 %v1169, %v1257
        %v1259 = vpop.f32.mrf.mxu0
        %1260 = vmatprep.mubr.f32.mxu0 0.0
        %1261 = vmatmul.mubr.f32.gmra.mxu0 %v1177
        %v1262 = vpop.f32.mrf.mxu0
        %v1263 = vadd.f32 %v1170, %v1262
        %v1264 = vpop.f32.mrf.mxu0
        %1265 = vmatprep.mubr.f32.mxu0 0.0
        %1266 = vmatmul.mubr.f32.gmra.mxu0 %v1180
        %v1267 = vpop.f32.mrf.mxu0
        %v1268 = vadd.f32 %v1171, %v1267
        %v1269 = vpop.f32.mrf.mxu0
        %1270 = vdwg.mxu0
        %vm1271 = vcmask 162816
        %v1272 = vsel %vm1271, %v1258, -inf
        %1273 = vmax.xlane.f32.xlu0 %v1272
        %v1274 = vpop.xlane.xlu0 %1273
        %v1275 = vsel %vm1271, %v1263, -inf
        %1276 = vmax.xlane.f32.xlu0 %v1275
        %v1277 = vpop.xlane.xlu0 %1276
        %vm1278 = vcmask 158720
        %v1279 = vsel %vm1278, %v1268, -inf
        %1280 = vmax.xlane.f32.xlu0 %v1279
        %v1281 = vpop.xlane.xlu0 %1280
        %v1282 = vsub.f32 %v1258, %v1274
        %v1283 = vsub.f32 %v1263, %v1277
        %v1284 = vsub.f32 %v1268, %v1281
        %v1285 = vmul.f32 %v1282, 1.442695
        %v1286 = vpow.pop %v1285
        %v1287 = vmul.f32 %v1283, 1.442695
        %v1288 = vpow.pop %v1287
        %v1289 = vmul.f32 %v1284, 1.442695
        %v1290 = vpow.pop %v1289
        %v1291 = vsel %vm1271, %v1286, 0.0
        %1292 = vadd.xlane.f32.xlu0 %v1291
        %v1293 = vpop.xlane.xlu0 %1292
        %v1294 = vsel %vm1271, %v1288, 0.0
        %1295 = vadd.xlane.f32.xlu0 %v1294
        %v1296 = vpop.xlane.xlu0 %1295
        %v1297 = vsel %vm1278, %v1290, 0.0
        %1298 = vadd.xlane.f32.xlu0 %v1297
        %v1299 = vpop.xlane.xlu0 %1298
        %v1300 = vrcp.pop %v1293
        %v1301 = vrcp.pop %v1296
        %v1302 = vrcp.pop %v1299
        %v1303 = vmul.f32 %v1286, %v1300
        %v1304 = vmul.f32 %v1288, %v1301
        %v1305 = vmul.f32 %v1290, %v1302
        %v1306 = vpack.c.bf16 %v1304, %v1303
        %v1307 = vpack.c.bf16 %v1305, %v1305
        %v1308 = vpack.c.bf16 %v1143, %v1140
        %v1309 = vpack.c.bf16 %v1148, %v1148
        %v1311 = vsel %vm1271, %v1306, 0
        %v1314 = vsel %vm1271, %v1307, 0
        %vm1316 = vcmask 1041408
        %v1318 = vsel %vm1316, %v1309, 0
        %1320 = vmatprep.subr.bf16.mxu0 0
        %1321 = vmatpush1.bf16.msra.mxu0 0
        %1322 = vmatprep.subr.bf16.mxu0 0
        %1323 = vmatpush1.bf16.msra.mxu0 0
        %1324 = vmatprep.subr.bf16.mxu0 0
        %1325 = vmatpush1.bf16.msra.mxu0 0
        %1326 = vmatprep.subr.bf16.mxu0 0
        %1327 = vmatpush1.bf16.msra.mxu0 0
        %1328 = vmatprep.subr.bf16.mxu0 0
        %1329 = vmatpush1.bf16.msra.mxu0 0
        %1330 = vmatprep.subr.bf16.mxu0 0
        %1331 = vmatpush1.bf16.msra.mxu0 0
        %1332 = vmatprep.subr.bf16.mxu0 0
        %1333 = vmatpush1.bf16.msra.mxu0 %v1318
        %1334 = vmatprep.subr.bf16.mxu0 0
        %1335 = vmatpush1.bf16.msra.mxu0 %v1308
        %1336 = vmatprep.subr.bf16.mxu0 0
        %1337 = vmatpush2.bf16.msra.mxu0 0
        %1338 = vmatprep.subr.bf16.mxu0 0
        %1339 = vmatpush2.bf16.msra.mxu0 0
        %1340 = vmatprep.subr.bf16.mxu0 0
        %1341 = vmatpush2.bf16.msra.mxu0 0
        %1342 = vmatprep.subr.bf16.mxu0 0
        %1343 = vmatpush2.bf16.msra.mxu0 0
        %1344 = vmatprep.subr.bf16.mxu0 0
        %1345 = vmatpush2.bf16.msra.mxu0 0
        %1346 = vmatprep.subr.bf16.mxu0 0
        %1347 = vmatpush2.bf16.msra.mxu0 0
        %1348 = vmatprep.subr.bf16.mxu0 0
        %1349 = vmatpush2.bf16.msra.mxu0 0
        %1350 = vmatprep.subr.bf16.mxu0 0
        %1351 = vmatpush2.bf16.msra.mxu0 0
        %1352 = vmatprep.mubr.bf16.mxu0 0
        %1353 = vmatmul.mubr.bf16.gmra.mxu0 %v1311
        %v1354 = vpop.f32.mrf.mxu0
        %v1355 = vadd.f32 0.0, %v1354
        %v1356 = vpop.f32.mrf.mxu0
        %v1357 = vpop.f32.mrf.mxu0
        %v1358 = vadd.f32 0.0, %v1357
        %v1359 = vpop.f32.mrf.mxu0
        %1360 = vmatprep.mubr.bf16.mxu0 0
        %1361 = vmatmul.mubr.bf16.gmra.mxu0 %v1314
        %v1362 = vpop.f32.mrf.mxu0
        %v1363 = vadd.f32 0.0, %v1362
        %v1364 = vpop.f32.mrf.mxu0
        %v1365 = vpop.f32.mrf.mxu0
        %v1366 = vpop.f32.mrf.mxu0
        %1367 = vdwg.mxu0
        %1368 = vrot.lane.b32.xlu0 %v1089, 96
        %v1369 = vpop.permute.xlu0 %1368
        %1370 = vrot.lane.b32.xlu0 %v1093, 96
        %v1371 = vpop.permute.xlu0 %1370
        %1372 = vrot.lane.b32.xlu0 %v1099, 96
        %v1373 = vpop.permute.xlu0 %1372
        %1374 = vrot.lane.b32.xlu0 %v1091, 96
        %v1375 = vpop.permute.xlu0 %1374
        %1376 = vrot.lane.b32.xlu0 %v1095, 96
        %v1377 = vpop.permute.xlu0 %1376
        %1378 = vrot.lane.b32.xlu0 %v1101, 96
        %v1379 = vpop.permute.xlu0 %1378
        %v1380 = vsel %vm1172, %v1369, 0
        %v1382 = vsel %vm1172, %v1371, 0
        %v1384 = vsel %vm1172, %v1373, 0
        %v1386 = vsel %vm1172, %v1375, 0
        %v1388 = vsel %vm1172, %v1377, 0
        %v1390 = vsel %vm1172, %v1379, 0
        %1392 = vmatprep.subr.mxu0 0.0
        %1393 = vmatpush1.xpose.msra.mxu0 0.0
        %1394 = vmatprep.subr.mxu0 0.0
        %1395 = vmatpush1.xpose.msra.mxu0 0.0
        %1396 = vmatprep.subr.mxu0 0.0
        %1397 = vmatpush1.xpose.msra.mxu0 0.0
        %1398 = vmatprep.subr.mxu0 0.0
        %1399 = vmatpush1.xpose.msra.mxu0 0.0
        %1400 = vmatprep.subr.mxu0 0.0
        %1401 = vmatpush1.xpose.msra.mxu0 0.0
        %1402 = vmatprep.subr.mxu0 0.0
        %1403 = vmatpush1.xpose.msra.mxu0 0.0
        %1404 = vmatprep.subr.mxu0 0.0
        %1405 = vmatpush1.xpose.msra.mxu0 0.0
        %1406 = vmatprep.subr.mxu0 0.0
        %1407 = vmatpush1.xpose.msra.mxu0 0.0
        %1408 = vmatprep.subr.mxu0 0.0
        %1409 = vmatpush1.xpose.msra.mxu0 0.0
        %1410 = vmatprep.subr.mxu0 0.0
        %1411 = vmatpush1.xpose.msra.mxu0 0.0
        %1412 = vmatprep.subr.mxu0 0.0
        %1413 = vmatpush1.xpose.msra.mxu0 0.0
        %1414 = vmatprep.subr.mxu0 0.0
        %1415 = vmatpush1.xpose.msra.mxu0 0.0
        %1416 = vmatprep.subr.mxu0 0.0
        %1417 = vmatpush1.xpose.msra.mxu0 0.0
        %1418 = vmatprep.subr.mxu0 0.0
        %1419 = vmatpush1.xpose.msra.mxu0 %v1390
        %1420 = vmatprep.subr.mxu0 0.0
        %1421 = vmatpush1.xpose.msra.mxu0 %v1388
        %1422 = vmatprep.subr.mxu0 0.0
        %1423 = vmatpush1.xpose.msra.mxu0 %v1386
        %1424 = vmatprep.subr.mxu0 0.0
        %1425 = vmatpush2.xpose.msra.mxu0 0.0
        %1426 = vmatprep.subr.mxu0 0.0
        %1427 = vmatpush2.xpose.msra.mxu0 0.0
        %1428 = vmatprep.subr.mxu0 0.0
        %1429 = vmatpush2.xpose.msra.mxu0 0.0
        %1430 = vmatprep.subr.mxu0 0.0
        %1431 = vmatpush2.xpose.msra.mxu0 0.0
        %1432 = vmatprep.subr.mxu0 0.0
        %1433 = vmatpush2.xpose.msra.mxu0 0.0
        %1434 = vmatprep.subr.mxu0 0.0
        %1435 = vmatpush2.xpose.msra.mxu0 0.0
        %1436 = vmatprep.subr.mxu0 0.0
        %1437 = vmatpush2.xpose.msra.mxu0 0.0
        %1438 = vmatprep.subr.mxu0 0.0
        %1439 = vmatpush2.xpose.msra.mxu0 0.0
        %1440 = vmatprep.subr.mxu0 0.0
        %1441 = vmatpush2.xpose.msra.mxu0 0.0
        %1442 = vmatprep.subr.mxu0 0.0
        %1443 = vmatpush2.xpose.msra.mxu0 0.0
        %1444 = vmatprep.subr.mxu0 0.0
        %1445 = vmatpush2.xpose.msra.mxu0 0.0
        %1446 = vmatprep.subr.mxu0 0.0
        %1447 = vmatpush2.xpose.msra.mxu0 0.0
        %1448 = vmatprep.subr.mxu0 0.0
        %1449 = vmatpush2.xpose.msra.mxu0 0.0
        %1450 = vmatprep.subr.mxu0 0.0
        %1451 = vmatpush2.xpose.msra.mxu0 0.0
        %1452 = vmatprep.subr.mxu0 0.0
        %1453 = vmatpush2.xpose.msra.mxu0 0.0
        %1454 = vmatprep.subr.mxu0 0.0
        %1455 = vmatpush2.xpose.msra.mxu0 0.0
        %1456 = vmatprep.mubr.f32.mxu0 0.0
        %1457 = vmatmul.mubr.f32.gmra.mxu0 %v1380
        %v1458 = vpop.f32.mrf.mxu0
        %v1459 = vadd.f32 %v1169, %v1458
        %v1460 = vpop.f32.mrf.mxu0
        %1461 = vmatprep.mubr.f32.mxu0 0.0
        %1462 = vmatmul.mubr.f32.gmra.mxu0 %v1382
        %v1463 = vpop.f32.mrf.mxu0
        %v1464 = vadd.f32 %v1170, %v1463
        %v1465 = vpop.f32.mrf.mxu0
        %1466 = vmatprep.mubr.f32.mxu0 0.0
        %1467 = vmatmul.mubr.f32.gmra.mxu0 %v1384
        %v1468 = vpop.f32.mrf.mxu0
        %v1469 = vadd.f32 %v1171, %v1468
        %v1470 = vpop.f32.mrf.mxu0
        %1471 = vdwg.mxu0
        %v1472 = vsel %vm1271, %v1459, -inf
        %1473 = vmax.xlane.f32.xlu0 %v1472
        %v1474 = vpop.xlane.xlu0 %1473
        %v1475 = vsel %vm1271, %v1464, -inf
        %1476 = vmax.xlane.f32.xlu0 %v1475
        %v1477 = vpop.xlane.xlu0 %1476
        %v1478 = vsel %vm1278, %v1469, -inf
        %1479 = vmax.xlane.f32.xlu0 %v1478
        %v1480 = vpop.xlane.xlu0 %1479
        %v1481 = vsub.f32 %v1459, %v1474
        %v1482 = vsub.f32 %v1464, %v1477
        %v1483 = vsub.f32 %v1469, %v1480
        %v1484 = vmul.f32 %v1481, 1.442695
        %v1485 = vpow.pop %v1484
        %v1486 = vmul.f32 %v1482, 1.442695
        %v1487 = vpow.pop %v1486
        %v1488 = vmul.f32 %v1483, 1.442695
        %v1489 = vpow.pop %v1488
        %v1490 = vsel %vm1271, %v1485, 0.0
        %1491 = vadd.xlane.f32.xlu0 %v1490
        %v1492 = vpop.xlane.xlu0 %1491
        %v1493 = vsel %vm1271, %v1487, 0.0
        %1494 = vadd.xlane.f32.xlu0 %v1493
        %v1495 = vpop.xlane.xlu0 %1494
        %v1496 = vsel %vm1278, %v1489, 0.0
        %1497 = vadd.xlane.f32.xlu0 %v1496
        %v1498 = vpop.xlane.xlu0 %1497
        %v1499 = vrcp.pop %v1492
        %v1500 = vrcp.pop %v1495
        %v1501 = vrcp.pop %v1498
        %v1502 = vmul.f32 %v1485, %v1499
        %v1503 = vmul.f32 %v1487, %v1500
        %v1504 = vmul.f32 %v1489, %v1501
        %v1505 = vpack.c.bf16 %v1503, %v1502
        %v1506 = vpack.c.bf16 %v1504, %v1504
        %1509 = vrot.lane.b32.xlu0 %v1308, 96
        %v1510 = vpop.permute.xlu0 %1509
        %1511 = vrot.lane.b32.xlu0 %v1309, 96
        %v1512 = vpop.permute.xlu0 %1511
        %v1515 = vsel %vm1271, %v1505, 0
        %v1518 = vsel %vm1271, %v1506, 0
        %v1521 = vsel %vm1316, %v1512, 0
        %1523 = vmatprep.subr.bf16.mxu0 0
        %1524 = vmatpush1.bf16.msra.mxu0 0
        %1525 = vmatprep.subr.bf16.mxu0 0
        %1526 = vmatpush1.bf16.msra.mxu0 0
        %1527 = vmatprep.subr.bf16.mxu0 0
        %1528 = vmatpush1.bf16.msra.mxu0 0
        %1529 = vmatprep.subr.bf16.mxu0 0
        %1530 = vmatpush1.bf16.msra.mxu0 0
        %1531 = vmatprep.subr.bf16.mxu0 0
        %1532 = vmatpush1.bf16.msra.mxu0 0
        %1533 = vmatprep.subr.bf16.mxu0 0
        %1534 = vmatpush1.bf16.msra.mxu0 0
        %1535 = vmatprep.subr.bf16.mxu0 0
        %1536 = vmatpush1.bf16.msra.mxu0 %v1521
        %1537 = vmatprep.subr.bf16.mxu0 0
        %1538 = vmatpush1.bf16.msra.mxu0 %v1510
        %1539 = vmatprep.subr.bf16.mxu0 0
        %1540 = vmatpush2.bf16.msra.mxu0 0
        %1541 = vmatprep.subr.bf16.mxu0 0
        %1542 = vmatpush2.bf16.msra.mxu0 0
        %1543 = vmatprep.subr.bf16.mxu0 0
        %1544 = vmatpush2.bf16.msra.mxu0 0
        %1545 = vmatprep.subr.bf16.mxu0 0
        %1546 = vmatpush2.bf16.msra.mxu0 0
        %1547 = vmatprep.subr.bf16.mxu0 0
        %1548 = vmatpush2.bf16.msra.mxu0 0
        %1549 = vmatprep.subr.bf16.mxu0 0
        %1550 = vmatpush2.bf16.msra.mxu0 0
        %1551 = vmatprep.subr.bf16.mxu0 0
        %1552 = vmatpush2.bf16.msra.mxu0 0
        %1553 = vmatprep.subr.bf16.mxu0 0
        %1554 = vmatpush2.bf16.msra.mxu0 0
        %1555 = vmatprep.mubr.bf16.mxu0 0
        %1556 = vmatmul.mubr.bf16.gmra.mxu0 %v1515
        %v1557 = vpop.f32.mrf.mxu0
        %v1558 = vadd.f32 0.0, %v1557
        %v1559 = vpop.f32.mrf.mxu0
        %v1560 = vpop.f32.mrf.mxu0
        %v1561 = vadd.f32 0.0, %v1560
        %v1562 = vpop.f32.mrf.mxu0
        %1563 = vmatprep.mubr.bf16.mxu0 0
        %1564 = vmatmul.mubr.bf16.gmra.mxu0 %v1518
        %v1565 = vpop.f32.mrf.mxu0
        %v1566 = vadd.f32 0.0, %v1565
        %v1567 = vpop.f32.mrf.mxu0
        %v1568 = vpop.f32.mrf.mxu0
        %v1569 = vpop.f32.mrf.mxu0
        %1570 = vdwg.mxu0
        %1571 = vrot.lane.b32.xlu0 %v1089, 64
        %v1572 = vpop.permute.xlu0 %1571
        %1573 = vrot.lane.b32.xlu0 %v1093, 64
        %v1574 = vpop.permute.xlu0 %1573
        %1575 = vrot.lane.b32.xlu0 %v1099, 64
        %v1576 = vpop.permute.xlu0 %1575
        %1577 = vrot.lane.b32.xlu0 %v1091, 64
        %v1578 = vpop.permute.xlu0 %1577
        %1579 = vrot.lane.b32.xlu0 %v1095, 64
        %v1580 = vpop.permute.xlu0 %1579
        %1581 = vrot.lane.b32.xlu0 %v1101, 64
        %v1582 = vpop.permute.xlu0 %1581
        %v1583 = vsel %vm1172, %v1572, 0
        %v1585 = vsel %vm1172, %v1574, 0
        %v1587 = vsel %vm1172, %v1576, 0
        %v1589 = vsel %vm1172, %v1578, 0
        %v1591 = vsel %vm1172, %v1580, 0
        %v1593 = vsel %vm1172, %v1582, 0
        %1595 = vmatprep.subr.mxu0 0.0
        %1596 = vmatpush1.xpose.msra.mxu0 0.0
        %1597 = vmatprep.subr.mxu0 0.0
        %1598 = vmatpush1.xpose.msra.mxu0 0.0
        %1599 = vmatprep.subr.mxu0 0.0
        %1600 = vmatpush1.xpose.msra.mxu0 0.0
        %1601 = vmatprep.subr.mxu0 0.0
        %1602 = vmatpush1.xpose.msra.mxu0 0.0
        %1603 = vmatprep.subr.mxu0 0.0
        %1604 = vmatpush1.xpose.msra.mxu0 0.0
        %1605 = vmatprep.subr.mxu0 0.0
        %1606 = vmatpush1.xpose.msra.mxu0 0.0
        %1607 = vmatprep.subr.mxu0 0.0
        %1608 = vmatpush1.xpose.msra.mxu0 0.0
        %1609 = vmatprep.subr.mxu0 0.0
        %1610 = vmatpush1.xpose.msra.mxu0 0.0
        %1611 = vmatprep.subr.mxu0 0.0
        %1612 = vmatpush1.xpose.msra.mxu0 0.0
        %1613 = vmatprep.subr.mxu0 0.0
        %1614 = vmatpush1.xpose.msra.mxu0 0.0
        %1615 = vmatprep.subr.mxu0 0.0
        %1616 = vmatpush1.xpose.msra.mxu0 0.0
        %1617 = vmatprep.subr.mxu0 0.0
        %1618 = vmatpush1.xpose.msra.mxu0 0.0
        %1619 = vmatprep.subr.mxu0 0.0
        %1620 = vmatpush1.xpose.msra.mxu0 0.0
        %1621 = vmatprep.subr.mxu0 0.0
        %1622 = vmatpush1.xpose.msra.mxu0 %v1593
        %1623 = vmatprep.subr.mxu0 0.0
        %1624 = vmatpush1.xpose.msra.mxu0 %v1591
        %1625 = vmatprep.subr.mxu0 0.0
        %1626 = vmatpush1.xpose.msra.mxu0 %v1589
        %1627 = vmatprep.subr.mxu0 0.0
        %1628 = vmatpush2.xpose.msra.mxu0 0.0
        %1629 = vmatprep.subr.mxu0 0.0
        %1630 = vmatpush2.xpose.msra.mxu0 0.0
        %1631 = vmatprep.subr.mxu0 0.0
        %1632 = vmatpush2.xpose.msra.mxu0 0.0
        %1633 = vmatprep.subr.mxu0 0.0
        %1634 = vmatpush2.xpose.msra.mxu0 0.0
        %1635 = vmatprep.subr.mxu0 0.0
        %1636 = vmatpush2.xpose.msra.mxu0 0.0
        %1637 = vmatprep.subr.mxu0 0.0
        %1638 = vmatpush2.xpose.msra.mxu0 0.0
        %1639 = vmatprep.subr.mxu0 0.0
        %1640 = vmatpush2.xpose.msra.mxu0 0.0
        %1641 = vmatprep.subr.mxu0 0.0
        %1642 = vmatpush2.xpose.msra.mxu0 0.0
        %1643 = vmatprep.subr.mxu0 0.0
        %1644 = vmatpush2.xpose.msra.mxu0 0.0
        %1645 = vmatprep.subr.mxu0 0.0
        %1646 = vmatpush2.xpose.msra.mxu0 0.0
        %1647 = vmatprep.subr.mxu0 0.0
        %1648 = vmatpush2.xpose.msra.mxu0 0.0
        %1649 = vmatprep.subr.mxu0 0.0
        %1650 = vmatpush2.xpose.msra.mxu0 0.0
        %1651 = vmatprep.subr.mxu0 0.0
        %1652 = vmatpush2.xpose.msra.mxu0 0.0
        %1653 = vmatprep.subr.mxu0 0.0
        %1654 = vmatpush2.xpose.msra.mxu0 0.0
        %1655 = vmatprep.subr.mxu0 0.0
        %1656 = vmatpush2.xpose.msra.mxu0 0.0
        %1657 = vmatprep.subr.mxu0 0.0
        %1658 = vmatpush2.xpose.msra.mxu0 0.0
        %1659 = vmatprep.mubr.f32.mxu0 0.0
        %1660 = vmatmul.mubr.f32.gmra.mxu0 %v1583
        %v1661 = vpop.f32.mrf.mxu0
        %v1662 = vadd.f32 %v1169, %v1661
        %v1663 = vpop.f32.mrf.mxu0
        %1664 = vmatprep.mubr.f32.mxu0 0.0
        %1665 = vmatmul.mubr.f32.gmra.mxu0 %v1585
        %v1666 = vpop.f32.mrf.mxu0
        %v1667 = vadd.f32 %v1170, %v1666
        %v1668 = vpop.f32.mrf.mxu0
        %1669 = vmatprep.mubr.f32.mxu0 0.0
        %1670 = vmatmul.mubr.f32.gmra.mxu0 %v1587
        %v1671 = vpop.f32.mrf.mxu0
        %v1672 = vadd.f32 %v1171, %v1671
        %v1673 = vpop.f32.mrf.mxu0
        %1674 = vdwg.mxu0
        %v1675 = vsel %vm1271, %v1662, -inf
        %1676 = vmax.xlane.f32.xlu0 %v1675
        %v1677 = vpop.xlane.xlu0 %1676
        %v1678 = vsel %vm1271, %v1667, -inf
        %1679 = vmax.xlane.f32.xlu0 %v1678
        %v1680 = vpop.xlane.xlu0 %1679
        %v1681 = vsel %vm1278, %v1672, -inf
        %1682 = vmax.xlane.f32.xlu0 %v1681
        %v1683 = vpop.xlane.xlu0 %1682
        %v1684 = vsub.f32 %v1662, %v1677
        %v1685 = vsub.f32 %v1667, %v1680
        %v1686 = vsub.f32 %v1672, %v1683
        %v1687 = vmul.f32 %v1684, 1.442695
        %v1688 = vpow.pop %v1687
        %v1689 = vmul.f32 %v1685, 1.442695
        %v1690 = vpow.pop %v1689
        %v1691 = vmul.f32 %v1686, 1.442695
        %v1692 = vpow.pop %v1691
        %v1693 = vsel %vm1271, %v1688, 0.0
        %1694 = vadd.xlane.f32.xlu0 %v1693
        %v1695 = vpop.xlane.xlu0 %1694
        %v1696 = vsel %vm1271, %v1690, 0.0
        %1697 = vadd.xlane.f32.xlu0 %v1696
        %v1698 = vpop.xlane.xlu0 %1697
        %v1699 = vsel %vm1278, %v1692, 0.0
        %1700 = vadd.xlane.f32.xlu0 %v1699
        %v1701 = vpop.xlane.xlu0 %1700
        %v1702 = vrcp.pop %v1695
        %v1703 = vrcp.pop %v1698
        %v1704 = vrcp.pop %v1701
        %v1705 = vmul.f32 %v1688, %v1702
        %v1706 = vmul.f32 %v1690, %v1703
        %v1707 = vmul.f32 %v1692, %v1704
        %v1708 = vpack.c.bf16 %v1706, %v1705
        %v1709 = vpack.c.bf16 %v1707, %v1707
        %1710 = vrot.lane.b32.xlu0 %v1308, 64
        %v1711 = vpop.permute.xlu0 %1710
        %1712 = vrot.lane.b32.xlu0 %v1309, 64
        %v1713 = vpop.permute.xlu0 %1712
        %v1716 = vsel %vm1271, %v1708, 0
        %v1719 = vsel %vm1271, %v1709, 0
        %v1722 = vsel %vm1316, %v1713, 0
        %1724 = vmatprep.subr.bf16.mxu0 0
        %1725 = vmatpush1.bf16.msra.mxu0 0
        %1726 = vmatprep.subr.bf16.mxu0 0
        %1727 = vmatpush1.bf16.msra.mxu0 0
        %1728 = vmatprep.subr.bf16.mxu0 0
        %1729 = vmatpush1.bf16.msra.mxu0 0
        %1730 = vmatprep.subr.bf16.mxu0 0
        %1731 = vmatpush1.bf16.msra.mxu0 0
        %1732 = vmatprep.subr.bf16.mxu0 0
        %1733 = vmatpush1.bf16.msra.mxu0 0
        %1734 = vmatprep.subr.bf16.mxu0 0
        %1735 = vmatpush1.bf16.msra.mxu0 0
        %1736 = vmatprep.subr.bf16.mxu0 0
        %1737 = vmatpush1.bf16.msra.mxu0 %v1722
        %1738 = vmatprep.subr.bf16.mxu0 0
        %1739 = vmatpush1.bf16.msra.mxu0 %v1711
        %1740 = vmatprep.subr.bf16.mxu0 0
        %1741 = vmatpush2.bf16.msra.mxu0 0
        %1742 = vmatprep.subr.bf16.mxu0 0
        %1743 = vmatpush2.bf16.msra.mxu0 0
        %1744 = vmatprep.subr.bf16.mxu0 0
        %1745 = vmatpush2.bf16.msra.mxu0 0
        %1746 = vmatprep.subr.bf16.mxu0 0
        %1747 = vmatpush2.bf16.msra.mxu0 0
        %1748 = vmatprep.subr.bf16.mxu0 0
        %1749 = vmatpush2.bf16.msra.mxu0 0
        %1750 = vmatprep.subr.bf16.mxu0 0
        %1751 = vmatpush2.bf16.msra.mxu0 0
        %1752 = vmatprep.subr.bf16.mxu0 0
        %1753 = vmatpush2.bf16.msra.mxu0 0
        %1754 = vmatprep.subr.bf16.mxu0 0
        %1755 = vmatpush2.bf16.msra.mxu0 0
        %1756 = vmatprep.mubr.bf16.mxu0 0
        %1757 = vmatmul.mubr.bf16.gmra.mxu0 %v1716
        %v1758 = vpop.f32.mrf.mxu0
        %v1759 = vadd.f32 0.0, %v1758
        %v1760 = vpop.f32.mrf.mxu0
        %v1761 = vpop.f32.mrf.mxu0
        %v1762 = vadd.f32 0.0, %v1761
        %v1763 = vpop.f32.mrf.mxu0
        %1764 = vmatprep.mubr.bf16.mxu0 0
        %1765 = vmatmul.mubr.bf16.gmra.mxu0 %v1719
        %v1766 = vpop.f32.mrf.mxu0
        %v1767 = vadd.f32 0.0, %v1766
        %v1768 = vpop.f32.mrf.mxu0
        %v1769 = vpop.f32.mrf.mxu0
        %v1770 = vpop.f32.mrf.mxu0
        %1771 = vdwg.mxu0
        %1772 = vrot.lane.b32.xlu0 %v1089, 32
        %v1773 = vpop.permute.xlu0 %1772
        %1774 = vrot.lane.b32.xlu0 %v1093, 32
        %v1775 = vpop.permute.xlu0 %1774
        %1776 = vrot.lane.b32.xlu0 %v1099, 32
        %v1777 = vpop.permute.xlu0 %1776
        %1778 = vrot.lane.b32.xlu0 %v1091, 32
        %v1779 = vpop.permute.xlu0 %1778
        %1780 = vrot.lane.b32.xlu0 %v1095, 32
        %v1781 = vpop.permute.xlu0 %1780
        %1782 = vrot.lane.b32.xlu0 %v1101, 32
        %v1783 = vpop.permute.xlu0 %1782
        %v1784 = vsel %vm1172, %v1773, 0
        %v1786 = vsel %vm1172, %v1775, 0
        %v1788 = vsel %vm1172, %v1777, 0
        %v1790 = vsel %vm1172, %v1779, 0
        %v1792 = vsel %vm1172, %v1781, 0
        %v1794 = vsel %vm1172, %v1783, 0
        %1796 = vmatprep.subr.mxu0 0.0
        %1797 = vmatpush1.xpose.msra.mxu0 0.0
        %1798 = vmatprep.subr.mxu0 0.0
        %1799 = vmatpush1.xpose.msra.mxu0 0.0
        %1800 = vmatprep.subr.mxu0 0.0
        %1801 = vmatpush1.xpose.msra.mxu0 0.0
        %1802 = vmatprep.subr.mxu0 0.0
        %1803 = vmatpush1.xpose.msra.mxu0 0.0
        %1804 = vmatprep.subr.mxu0 0.0
        %1805 = vmatpush1.xpose.msra.mxu0 0.0
        %1806 = vmatprep.subr.mxu0 0.0
        %1807 = vmatpush1.xpose.msra.mxu0 0.0
        %1808 = vmatprep.subr.mxu0 0.0
        %1809 = vmatpush1.xpose.msra.mxu0 0.0
        %1810 = vmatprep.subr.mxu0 0.0
        %1811 = vmatpush1.xpose.msra.mxu0 0.0
        %1812 = vmatprep.subr.mxu0 0.0
        %1813 = vmatpush1.xpose.msra.mxu0 0.0
        %1814 = vmatprep.subr.mxu0 0.0
        %1815 = vmatpush1.xpose.msra.mxu0 0.0
        %1816 = vmatprep.subr.mxu0 0.0
        %1817 = vmatpush1.xpose.msra.mxu0 0.0
        %1818 = vmatprep.subr.mxu0 0.0
        %1819 = vmatpush1.xpose.msra.mxu0 0.0
        %1820 = vmatprep.subr.mxu0 0.0
        %1821 = vmatpush1.xpose.msra.mxu0 0.0
        %1822 = vmatprep.subr.mxu0 0.0
        %1823 = vmatpush1.xpose.msra.mxu0 %v1794
        %1824 = vmatprep.subr.mxu0 0.0
        %1825 = vmatpush1.xpose.msra.mxu0 %v1792
        %1826 = vmatprep.subr.mxu0 0.0
        %1827 = vmatpush1.xpose.msra.mxu0 %v1790
        %1828 = vmatprep.subr.mxu0 0.0
        %1829 = vmatpush2.xpose.msra.mxu0 0.0
        %1830 = vmatprep.subr.mxu0 0.0
        %1831 = vmatpush2.xpose.msra.mxu0 0.0
        %1832 = vmatprep.subr.mxu0 0.0
        %1833 = vmatpush2.xpose.msra.mxu0 0.0
        %1834 = vmatprep.subr.mxu0 0.0
        %1835 = vmatpush2.xpose.msra.mxu0 0.0
        %1836 = vmatprep.subr.mxu0 0.0
        %1837 = vmatpush2.xpose.msra.mxu0 0.0
        %1838 = vmatprep.subr.mxu0 0.0
        %1839 = vmatpush2.xpose.msra.mxu0 0.0
        %1840 = vmatprep.subr.mxu0 0.0
        %1841 = vmatpush2.xpose.msra.mxu0 0.0
        %1842 = vmatprep.subr.mxu0 0.0
        %1843 = vmatpush2.xpose.msra.mxu0 0.0
        %1844 = vmatprep.subr.mxu0 0.0
        %1845 = vmatpush2.xpose.msra.mxu0 0.0
        %1846 = vmatprep.subr.mxu0 0.0
        %1847 = vmatpush2.xpose.msra.mxu0 0.0
        %1848 = vmatprep.subr.mxu0 0.0
        %1849 = vmatpush2.xpose.msra.mxu0 0.0
        %1850 = vmatprep.subr.mxu0 0.0
        %1851 = vmatpush2.xpose.msra.mxu0 0.0
        %1852 = vmatprep.subr.mxu0 0.0
        %1853 = vmatpush2.xpose.msra.mxu0 0.0
        %1854 = vmatprep.subr.mxu0 0.0
        %1855 = vmatpush2.xpose.msra.mxu0 0.0
        %1856 = vmatprep.subr.mxu0 0.0
        %1857 = vmatpush2.xpose.msra.mxu0 0.0
        %1858 = vmatprep.subr.mxu0 0.0
        %1859 = vmatpush2.xpose.msra.mxu0 0.0
        %1860 = vmatprep.mubr.f32.mxu0 0.0
        %1861 = vmatmul.mubr.f32.gmra.mxu0 %v1784
        %v1862 = vpop.f32.mrf.mxu0
        %v1863 = vadd.f32 %v1169, %v1862
        %v1864 = vpop.f32.mrf.mxu0
        %1865 = vmatprep.mubr.f32.mxu0 0.0
        %1866 = vmatmul.mubr.f32.gmra.mxu0 %v1786
        %v1867 = vpop.f32.mrf.mxu0
        %v1868 = vadd.f32 %v1170, %v1867
        %v1869 = vpop.f32.mrf.mxu0
        %1870 = vmatprep.mubr.f32.mxu0 0.0
        %1871 = vmatmul.mubr.f32.gmra.mxu0 %v1788
        %v1872 = vpop.f32.mrf.mxu0
        %v1873 = vadd.f32 %v1171, %v1872
        %v1874 = vpop.f32.mrf.mxu0
        %1875 = vdwg.mxu0
        %v1876 = vsel %vm1271, %v1863, -inf
        %1877 = vmax.xlane.f32.xlu0 %v1876
        %v1878 = vpop.xlane.xlu0 %1877
        %v1879 = vsel %vm1271, %v1868, -inf
        %1880 = vmax.xlane.f32.xlu0 %v1879
        %v1881 = vpop.xlane.xlu0 %1880
        %v1882 = vsel %vm1278, %v1873, -inf
        %1883 = vmax.xlane.f32.xlu0 %v1882
        %v1884 = vpop.xlane.xlu0 %1883
        %v1885 = vsub.f32 %v1863, %v1878
        %v1886 = vsub.f32 %v1868, %v1881
        %v1887 = vsub.f32 %v1873, %v1884
        %v1888 = vmul.f32 %v1885, 1.442695
        %v1889 = vpow.pop %v1888
        %v1890 = vmul.f32 %v1886, 1.442695
        %v1891 = vpow.pop %v1890
        %v1892 = vmul.f32 %v1887, 1.442695
        %v1893 = vpow.pop %v1892
        %v1894 = vsel %vm1271, %v1889, 0.0
        %1895 = vadd.xlane.f32.xlu0 %v1894
        %v1896 = vpop.xlane.xlu0 %1895
        %v1897 = vsel %vm1271, %v1891, 0.0
        %1898 = vadd.xlane.f32.xlu0 %v1897
        %v1899 = vpop.xlane.xlu0 %1898
        %v1900 = vsel %vm1278, %v1893, 0.0
        %1901 = vadd.xlane.f32.xlu0 %v1900
        %v1902 = vpop.xlane.xlu0 %1901
        %v1903 = vrcp.pop %v1896
        %v1904 = vrcp.pop %v1899
        %v1905 = vrcp.pop %v1902
        %v1906 = vmul.f32 %v1889, %v1903
        %v1907 = vmul.f32 %v1891, %v1904
        %v1908 = vmul.f32 %v1893, %v1905
        %v1909 = vpack.c.bf16 %v1907, %v1906
        %v1910 = vpack.c.bf16 %v1908, %v1908
        %1911 = vrot.lane.b32.xlu0 %v1308, 32
        %v1912 = vpop.permute.xlu0 %1911
        %1913 = vrot.lane.b32.xlu0 %v1309, 32
        %v1914 = vpop.permute.xlu0 %1913
        %v1917 = vsel %vm1271, %v1909, 0
        %v1920 = vsel %vm1271, %v1910, 0
        %v1923 = vsel %vm1316, %v1914, 0
        %1925 = vmatprep.subr.bf16.mxu0 0
        %1926 = vmatpush1.bf16.msra.mxu0 0
        %1927 = vmatprep.subr.bf16.mxu0 0
        %1928 = vmatpush1.bf16.msra.mxu0 0
        %1929 = vmatprep.subr.bf16.mxu0 0
        %1930 = vmatpush1.bf16.msra.mxu0 0
        %1931 = vmatprep.subr.bf16.mxu0 0
        %1932 = vmatpush1.bf16.msra.mxu0 0
        %1933 = vmatprep.subr.bf16.mxu0 0
        %1934 = vmatpush1.bf16.msra.mxu0 0
        %1935 = vmatprep.subr.bf16.mxu0 0
        %1936 = vmatpush1.bf16.msra.mxu0 0
        %1937 = vmatprep.subr.bf16.mxu0 0
        %1938 = vmatpush1.bf16.msra.mxu0 %v1923
        %1939 = vmatprep.subr.bf16.mxu0 0
        %1940 = vmatpush1.bf16.msra.mxu0 %v1912
        %1941 = vmatprep.subr.bf16.mxu0 0
        %1942 = vmatpush2.bf16.msra.mxu0 0
        %1943 = vmatprep.subr.bf16.mxu0 0
        %1944 = vmatpush2.bf16.msra.mxu0 0
        %1945 = vmatprep.subr.bf16.mxu0 0
        %1946 = vmatpush2.bf16.msra.mxu0 0
        %1947 = vmatprep.subr.bf16.mxu0 0
        %1948 = vmatpush2.bf16.msra.mxu0 0
        %1949 = vmatprep.subr.bf16.mxu0 0
        %1950 = vmatpush2.bf16.msra.mxu0 0
        %1951 = vmatprep.subr.bf16.mxu0 0
        %1952 = vmatpush2.bf16.msra.mxu0 0
        %1953 = vmatprep.subr.bf16.mxu0 0
        %1954 = vmatpush2.bf16.msra.mxu0 0
        %1955 = vmatprep.subr.bf16.mxu0 0
        %1956 = vmatpush2.bf16.msra.mxu0 0
        %1957 = vmatprep.mubr.bf16.mxu0 0
        %1958 = vmatmul.mubr.bf16.gmra.mxu0 %v1917
        %v1959 = vpop.f32.mrf.mxu0
        %v1960 = vadd.f32 0.0, %v1959
        %v1961 = vpop.f32.mrf.mxu0
        %v1962 = vpop.f32.mrf.mxu0
        %v1963 = vadd.f32 0.0, %v1962
        %v1964 = vpop.f32.mrf.mxu0
        %1965 = vmatprep.mubr.bf16.mxu0 0
        %1966 = vmatmul.mubr.bf16.gmra.mxu0 %v1920
        %v1967 = vpop.f32.mrf.mxu0
        %v1968 = vadd.f32 0.0, %v1967
        %v1969 = vpop.f32.mrf.mxu0
        %v1970 = vpop.f32.mrf.mxu0
        %v1971 = vpop.f32.mrf.mxu0
        %1972 = vdwg.mxu0
        %1976 = vrot.lane.b32.xlu0 %v1558, 32
        %v1977 = vpop.permute.xlu0 %1976
        %1978 = vrot.lane.b32.xlu0 %v1561, 32
        %v1979 = vpop.permute.xlu0 %1978
        %1980 = vrot.lane.b32.xlu0 %v1566, 32
        %v1981 = vpop.permute.xlu0 %1980
        %1988 = vrot.lane.b32.xlu0 %v1759, 64
        %v1989 = vpop.permute.xlu0 %1988
        %1990 = vrot.lane.b32.xlu0 %v1762, 64
        %v1991 = vpop.permute.xlu0 %1990
        %1992 = vrot.lane.b32.xlu0 %v1767, 64
        %v1993 = vpop.permute.xlu0 %1992
        %2000 = vrot.lane.b32.xlu0 %v1960, 96
        %v2001 = vpop.permute.xlu0 %2000
        %2002 = vrot.lane.b32.xlu0 %v1963, 96
        %v2003 = vpop.permute.xlu0 %2002
        %2004 = vrot.lane.b32.xlu0 %v1968, 96
        %v2005 = vpop.permute.xlu0 %2004
        %v2009 = vsel %vm1172, %v1355, %v1977
        %v2010 = vsel %vm1172, %v1358, %v1979
        %v2011 = vsel %vm1172, %v1363, %v1981
        %vm2012 = vcmask 523264
        %v2013 = vsel %vm2012, %v2009, %v1989
        %v2014 = vsel %vm2012, %v2010, %v1991
        %v2015 = vsel %vm2012, %v2011, %v1993
        %vm2016 = vcmask 785408
        %v2017 = vsel %vm2016, %v2013, %v2001
        %v2018 = vsel %vm2016, %v2014, %v2003
        %v2019 = vsel %vm2016, %v2015, %v2005
        %v2020 = vpack.c.bf16 %v2018, %v2017
        %v2021 = vpack.c.bf16 %v2019, %v2019
        %v2038 = vunpack.c.l.b16 %v1153
        %v2039 = vunpack.c.l.b16 %v1154
        %v2040 = vunpack.c.l.b16 %v1155
        %v2041 = vunpack.c.l.b16 %v1156
        %v2042 = vunpack.c.l.b16 %v1157
        %v2043 = vunpack.c.l.b16 %v1158
        %v2044 = vunpack.c.l.b16 %v1159
        %v2045 = vunpack.c.l.b16 %v1160
        %v2046 = vunpack.c.l.b16 %v1161
        %v2047 = vunpack.c.l.b16 %v1162
        %v2048 = vunpack.c.l.b16 %v1163
        %v2049 = vunpack.c.l.b16 %v1164
        %v2050 = vunpack.c.l.b16 %v1165
        %v2051 = vunpack.c.l.b16 %v1166
        %v2052 = vunpack.c.l.b16 %v1167
        %v2053 = vunpack.c.l.b16 %v1168
        %v2054 = vpack.c.b16 %v2039, %v2038
        %v2055 = vpack.c.b16 %v2041, %v2040
        %v2056 = vpack.c.b16 %v2043, %v2042
        %v2057 = vpack.c.b16 %v2045, %v2044
        %v2058 = vpack.c.b16 %v2047, %v2046
        %v2059 = vpack.c.b16 %v2049, %v2048
        %v2060 = vpack.c.b16 %v2051, %v2050
        %v2061 = vpack.c.b16 %v2053, %v2052
        %2070 = vmatprep.subr.bf16.mxu0 0
        %2071 = vmatpush1.bf16.msra.mxu0 %v2061
        %2072 = vmatprep.subr.bf16.mxu0 0
        %2073 = vmatpush1.bf16.msra.mxu0 %v2060
        %2074 = vmatprep.subr.bf16.mxu0 0
        %2075 = vmatpush1.bf16.msra.mxu0 %v2059
        %2076 = vmatprep.subr.bf16.mxu0 0
        %2077 = vmatpush1.bf16.msra.mxu0 %v2058
        %2078 = vmatprep.subr.bf16.mxu0 0
        %2079 = vmatpush1.bf16.msra.mxu0 %v2057
        %2080 = vmatprep.subr.bf16.mxu0 0
        %2081 = vmatpush1.bf16.msra.mxu0 %v2056
        %2082 = vmatprep.subr.bf16.mxu0 0
        %2083 = vmatpush1.bf16.msra.mxu0 %v2055
        %2084 = vmatprep.subr.bf16.mxu0 0
        %2085 = vmatpush1.bf16.msra.mxu0 %v2054
        %2086 = vmatprep.subr.bf16.mxu0 0
        %2087 = vmatpush2.bf16.msra.mxu0 0
        %2088 = vmatprep.subr.bf16.mxu0 0
        %2089 = vmatpush2.bf16.msra.mxu0 0
        %2090 = vmatprep.subr.bf16.mxu0 0
        %2091 = vmatpush2.bf16.msra.mxu0 0
        %2092 = vmatprep.subr.bf16.mxu0 0
        %2093 = vmatpush2.bf16.msra.mxu0 0
        %2094 = vmatprep.subr.bf16.mxu0 0
        %2095 = vmatpush2.bf16.msra.mxu0 0
        %2096 = vmatprep.subr.bf16.mxu0 0
        %2097 = vmatpush2.bf16.msra.mxu0 0
        %2098 = vmatprep.subr.bf16.mxu0 0
        %2099 = vmatpush2.bf16.msra.mxu0 0
        %2100 = vmatprep.subr.bf16.mxu0 0
        %2101 = vmatpush2.bf16.msra.mxu0 0
        %2102 = vmatprep.mubr.bf16.mxu0 0
        %2103 = vmatmul.mubr.bf16.gmra.mxu0 %v2020
        %v2104 = vpop.f32.mrf.mxu0
        %v2105 = vadd.f32 0.0, %v2104
        %v2106 = vpop.f32.mrf.mxu0
        %v2107 = vpop.f32.mrf.mxu0
        %v2108 = vadd.f32 0.0, %v2107
        %v2109 = vpop.f32.mrf.mxu0
        %2110 = vmatprep.mubr.bf16.mxu0 0
        %2111 = vmatmul.mubr.bf16.gmra.mxu0 %v2021
        %v2112 = vpop.f32.mrf.mxu0
        %v2113 = vadd.f32 0.0, %v2112
        %v2114 = vpop.f32.mrf.mxu0
        %v2115 = vpop.f32.mrf.mxu0
        %v2116 = vpop.f32.mrf.mxu0
        %2117 = vdwg.mxu0
        %v2118 = vadd.f32 %v872, %v2105
        %v2119 = vadd.f32 %v873, %v2108
        %v2120 = vadd.f32 %v874, %v2113
        %v2121 = vld [vmem:[%s856] sm:$0x1]
        %v2123 = vlaneseq
        %v2124 = vshrl.u32 %v2123, 7
        %v2125 = vsub.s32 0, %v2124
        %v2126 = vrot.slane %v2121, %v2125
        %v2128 = vadd.f32 %v2118, %v2126
        %v2129 = vadd.f32 %v2119, %v2126
        %v2130 = vadd.f32 %v2120, %v2126
        %v2131 = vld [vmem:[%s697] sm:$0x1]
        %v2132 = vld [vmem:[%s705] sm:$0x1]
        %2133 = vadd.xlane.f32.xlu0 %v2128
        %v2134 = vpop.xlane.xlu0 %2133
        %2135 = vadd.xlane.f32.xlu0 %v2129
        %v2136 = vpop.xlane.xlu0 %2135
        %vm2137 = vcmask 1043456
        %v2138 = vsel %vm2137, %v2130, 0.0
        %2139 = vadd.xlane.f32.xlu0 %v2138
        %v2140 = vpop.xlane.xlu0 %2139
        %v2141 = vrcp.pop 128.0
        %v2142 = vmul.f32 %v2134, %v2141
        %v2143 = vmul.f32 %v2136, %v2141
        %v2144 = vmul.f32 %v2140, %v2141
        %v2145 = vsub.f32 %v2128, %v2142
        %v2146 = vsub.f32 %v2129, %v2143
        %v2147 = vsub.f32 %v2130, %v2144
        %v2148 = vmul.f32 %v2145, %v2145
        %v2149 = vmul.f32 %v2146, %v2146
        %v2150 = vmul.f32 %v2147, %v2147
        %2151 = vadd.xlane.f32.xlu0 %v2148
        %v2152 = vpop.xlane.xlu0 %2151
        %2153 = vadd.xlane.f32.xlu0 %v2149
        %v2154 = vpop.xlane.xlu0 %2153
        %v2155 = vsel %vm2137, %v2150, 0.0
        %2156 = vadd.xlane.f32.xlu0 %v2155
        %v2157 = vpop.xlane.xlu0 %2156
        %v2158 = vmul.f32 %v2152, %v2141
        %v2159 = vmul.f32 %v2154, %v2141
        %v2160 = vmul.f32 %v2157, %v2141
        %v2161 = vadd.f32 %v2158, 1e-05
        %v2162 = vadd.f32 %v2159, 1e-05
        %v2163 = vadd.f32 %v2160, 1e-05
        %v2164 = vrsqrt.pop %v2161
        %v2165 = vrsqrt.pop %v2162
        %v2166 = vrsqrt.pop %v2163
        %v2167 = vmul.f32 %v2145, %v2164
        %v2168 = vmul.f32 %v2146, %v2165
        %v2169 = vmul.f32 %v2147, %v2166
        %v2171 = vlaneseq
        %v2172 = vshrl.u32 %v2171, 7
        %v2173 = vsub.s32 0, %v2172
        %v2174 = vrot.slane %v2131, %v2173
        %v2176 = vmul.f32 %v2167, %v2174
        %v2177 = vmul.f32 %v2168, %v2174
        %v2178 = vmul.f32 %v2169, %v2174
        %v2180 = vlaneseq
        %v2181 = vshrl.u32 %v2180, 7
        %v2182 = vsub.s32 0, %v2181
        %v2183 = vrot.slane %v2132, %v2182
        %v2185 = vadd.f32 %v2176, %v2183
        %v2186 = vadd.f32 %v2177, %v2183
        %v2187 = vadd.f32 %v2178, %v2183
        %v2188 = vpack.c.bf16 %v2186, %v2185
        %v2189 = vpack.c.bf16 %v2187, %v2187
        %v2190 = vld [vmem:[%s714] sm:$0xff]
        %v2191 = vld [vmem:[%s714 + $0x8] sm:$0xff]
        %v2192 = vld [vmem:[%s714 + $0x10] sm:$0xff]
        %v2193 = vld [vmem:[%s714 + $0x18] sm:$0xff]
        %v2194 = vld [vmem:[%s714 + $0x20] sm:$0xff]
        %v2195 = vld [vmem:[%s714 + $0x28] sm:$0xff]
        %v2196 = vld [vmem:[%s714 + $0x30] sm:$0xff]
        %v2197 = vld [vmem:[%s714 + $0x38] sm:$0xff]
        %v2198 = vld [vmem:[%s714 + $0x40] sm:$0xff]
        %v2199 = vld [vmem:[%s714 + $0x48] sm:$0xff]
        %v2200 = vld [vmem:[%s714 + $0x50] sm:$0xff]
        %v2201 = vld [vmem:[%s714 + $0x58] sm:$0xff]
        %v2202 = vld [vmem:[%s714 + $0x60] sm:$0xff]
        %v2203 = vld [vmem:[%s714 + $0x68] sm:$0xff]
        %v2204 = vld [vmem:[%s714 + $0x70] sm:$0xff]
        %v2205 = vld [vmem:[%s714 + $0x78] sm:$0xff]
        %v2206 = vld [vmem:[%s860] sm:$0x3]
        %v2208 = vlaneseq
        %v2209 = vshrl.u32 %v2208, 7
        %v2210 = vsub.s32 0, %v2209
        %v2211 = vrot.slane %v2206, %v2210
        %v2212 = vlaneseq
        %v2213 = vshrl.u32 %v2212, 7
        %v2214 = vsub.s32 1, %v2213
        %v2215 = vrot.slane %v2206, %v2214
        %v2234 = vunpack.c.l.b16 %v2190
        %v2235 = vunpack.c.h.b16 %v2190
        %v2236 = vunpack.c.l.b16 %v2191
        %v2237 = vunpack.c.h.b16 %v2191
        %v2238 = vunpack.c.l.b16 %v2192
        %v2239 = vunpack.c.h.b16 %v2192
        %v2240 = vunpack.c.l.b16 %v2193
        %v2241 = vunpack.c.h.b16 %v2193
        %v2242 = vunpack.c.l.b16 %v2194
        %v2243 = vunpack.c.h.b16 %v2194
        %v2244 = vunpack.c.l.b16 %v2195
        %v2245 = vunpack.c.h.b16 %v2195
        %v2246 = vunpack.c.l.b16 %v2196
        %v2247 = vunpack.c.h.b16 %v2196
        %v2248 = vunpack.c.l.b16 %v2197
        %v2249 = vunpack.c.h.b16 %v2197
        %v2250 = vunpack.c.l.b16 %v2198
        %v2251 = vunpack.c.h.b16 %v2198
        %v2252 = vunpack.c.l.b16 %v2199
        %v2253 = vunpack.c.h.b16 %v2199
        %v2254 = vunpack.c.l.b16 %v2200
        %v2255 = vunpack.c.h.b16 %v2200
        %v2256 = vunpack.c.l.b16 %v2201
        %v2257 = vunpack.c.h.b16 %v2201
        %v2258 = vunpack.c.l.b16 %v2202
        %v2259 = vunpack.c.h.b16 %v2202
        %v2260 = vunpack.c.l.b16 %v2203
        %v2261 = vunpack.c.h.b16 %v2203
        %v2262 = vunpack.c.l.b16 %v2204
        %v2263 = vunpack.c.h.b16 %v2204
        %v2264 = vunpack.c.l.b16 %v2205
        %v2265 = vunpack.c.h.b16 %v2205
        %v2266 = vpack.c.b16 %v2236, %v2234
        %v2267 = vpack.c.b16 %v2237, %v2235
        %v2268 = vpack.c.b16 %v2240, %v2238
        %v2269 = vpack.c.b16 %v2241, %v2239
        %v2270 = vpack.c.b16 %v2244, %v2242
        %v2271 = vpack.c.b16 %v2245, %v2243
        %v2272 = vpack.c.b16 %v2248, %v2246
        %v2273 = vpack.c.b16 %v2249, %v2247
        %v2274 = vpack.c.b16 %v2252, %v2250
        %v2275 = vpack.c.b16 %v2253, %v2251
        %v2276 = vpack.c.b16 %v2256, %v2254
        %v2277 = vpack.c.b16 %v2257, %v2255
        %v2278 = vpack.c.b16 %v2260, %v2258
        %v2279 = vpack.c.b16 %v2261, %v2259
        %v2280 = vpack.c.b16 %v2264, %v2262
        %v2281 = vpack.c.b16 %v2265, %v2263
        %2298 = vmatprep.subr.bf16.mxu0 %v2281
        %2299 = vmatpush1.bf16.msra.mxu0 %v2280
        %2300 = vmatprep.subr.bf16.mxu0 %v2279
        %2301 = vmatpush1.bf16.msra.mxu0 %v2278
        %2302 = vmatprep.subr.bf16.mxu0 %v2277
        %2303 = vmatpush1.bf16.msra.mxu0 %v2276
        %2304 = vmatprep.subr.bf16.mxu0 %v2275
        %2305 = vmatpush1.bf16.msra.mxu0 %v2274
        %2306 = vmatprep.subr.bf16.mxu0 %v2273
        %2307 = vmatpush1.bf16.msra.mxu0 %v2272
        %2308 = vmatprep.subr.bf16.mxu0 %v2271
        %2309 = vmatpush1.bf16.msra.mxu0 %v2270
        %2310 = vmatprep.subr.bf16.mxu0 %v2269
        %2311 = vmatpush1.bf16.msra.mxu0 %v2268
        %2312 = vmatprep.subr.bf16.mxu0 %v2267
        %2313 = vmatpush1.bf16.msra.mxu0 %v2266
        %2314 = vmatprep.subr.bf16.mxu0 0
        %2315 = vmatpush2.bf16.msra.mxu0 0
        %2316 = vmatprep.subr.bf16.mxu0 0
        %2317 = vmatpush2.bf16.msra.mxu0 0
        %2318 = vmatprep.subr.bf16.mxu0 0
        %2319 = vmatpush2.bf16.msra.mxu0 0
        %2320 = vmatprep.subr.bf16.mxu0 0
        %2321 = vmatpush2.bf16.msra.mxu0 0
        %2322 = vmatprep.subr.bf16.mxu0 0
        %2323 = vmatpush2.bf16.msra.mxu0 0
        %2324 = vmatprep.subr.bf16.mxu0 0
        %2325 = vmatpush2.bf16.msra.mxu0 0
        %2326 = vmatprep.subr.bf16.mxu0 0
        %2327 = vmatpush2.bf16.msra.mxu0 0
        %2328 = vmatprep.subr.bf16.mxu0 0
        %2329 = vmatpush2.bf16.msra.mxu0 0
        %2330 = vmatprep.mubr.bf16.mxu0 0
        %2331 = vmatmul.mubr.bf16.gmra.mxu0 %v2188
        %v2332 = vpop.f32.mrf.mxu0
        %v2333 = vadd.f32 %v2211, %v2332
        %v2334 = vpop.f32.mrf.mxu0
        %v2335 = vadd.f32 %v2215, %v2334
        %v2336 = vpop.f32.mrf.mxu0
        %v2337 = vadd.f32 %v2211, %v2336
        %v2338 = vpop.f32.mrf.mxu0
        %v2339 = vadd.f32 %v2215, %v2338
        %2340 = vmatprep.mubr.bf16.mxu0 0
        %2341 = vmatmul.mubr.bf16.gmra.mxu0 %v2189
        %v2342 = vpop.f32.mrf.mxu0
        %v2343 = vadd.f32 %v2211, %v2342
        %v2344 = vpop.f32.mrf.mxu0
        %v2345 = vadd.f32 %v2215, %v2344
        %v2346 = vpop.f32.mrf.mxu0
        %v2347 = vpop.f32.mrf.mxu0
        %2348 = vdwg.mxu0
        %v2349 = vmax.f32 %v2333, 0.0
        %v2350 = vmax.f32 %v2335, 0.0
        %v2351 = vmax.f32 %v2337, 0.0
        %v2352 = vmax.f32 %v2339, 0.0
        %v2353 = vmax.f32 %v2343, 0.0
        %v2354 = vmax.f32 %v2345, 0.0
        %v2355 = vpack.c.bf16 %v2351, %v2349
        %v2356 = vpack.c.bf16 %v2352, %v2350
        %v2357 = vpack.c.bf16 %v2353, %v2353
        %v2358 = vpack.c.bf16 %v2354, %v2354
        %v2359 = vld [vmem:[%s723] sm:$0xf]
        %v2360 = vld [vmem:[%s723 + $0x4] sm:$0xf]
        %v2361 = vld [vmem:[%s723 + $0x8] sm:$0xf]
        %v2362 = vld [vmem:[%s723 + $0xc] sm:$0xf]
        %v2363 = vld [vmem:[%s723 + $0x10] sm:$0xf]
        %v2364 = vld [vmem:[%s723 + $0x14] sm:$0xf]
        %v2365 = vld [vmem:[%s723 + $0x18] sm:$0xf]
        %v2366 = vld [vmem:[%s723 + $0x1c] sm:$0xf]
        %v2367 = vld [vmem:[%s723 + $0x20] sm:$0xf]
        %v2368 = vld [vmem:[%s723 + $0x24] sm:$0xf]
        %v2369 = vld [vmem:[%s723 + $0x28] sm:$0xf]
        %v2370 = vld [vmem:[%s723 + $0x2c] sm:$0xf]
        %v2371 = vld [vmem:[%s723 + $0x30] sm:$0xf]
        %v2372 = vld [vmem:[%s723 + $0x34] sm:$0xf]
        %v2373 = vld [vmem:[%s723 + $0x38] sm:$0xf]
        %v2374 = vld [vmem:[%s723 + $0x3c] sm:$0xf]
        %v2375 = vld [vmem:[%s723 + $0x40] sm:$0xf]
        %v2376 = vld [vmem:[%s723 + $0x44] sm:$0xf]
        %v2377 = vld [vmem:[%s723 + $0x48] sm:$0xf]
        %v2378 = vld [vmem:[%s723 + $0x4c] sm:$0xf]
        %v2379 = vld [vmem:[%s723 + $0x50] sm:$0xf]
        %v2380 = vld [vmem:[%s723 + $0x54] sm:$0xf]
        %v2381 = vld [vmem:[%s723 + $0x58] sm:$0xf]
        %v2382 = vld [vmem:[%s723 + $0x5c] sm:$0xf]
        %v2383 = vld [vmem:[%s723 + $0x60] sm:$0xf]
        %v2384 = vld [vmem:[%s723 + $0x64] sm:$0xf]
        %v2385 = vld [vmem:[%s723 + $0x68] sm:$0xf]
        %v2386 = vld [vmem:[%s723 + $0x6c] sm:$0xf]
        %v2387 = vld [vmem:[%s723 + $0x70] sm:$0xf]
        %v2388 = vld [vmem:[%s723 + $0x74] sm:$0xf]
        %v2389 = vld [vmem:[%s723 + $0x78] sm:$0xf]
        %v2390 = vld [vmem:[%s723 + $0x7c] sm:$0xf]
        %v2391 = vld [vmem:[%s731] sm:$0x1]
        %v2393 = vlaneseq
        %v2394 = vshrl.u32 %v2393, 7
        %v2395 = vsub.s32 0, %v2394
        %v2396 = vrot.slane %v2391, %v2395
        %v2430 = vunpack.c.l.b16 %v2359
        %v2431 = vunpack.c.l.b16 %v2360
        %v2432 = vunpack.c.l.b16 %v2361
        %v2433 = vunpack.c.l.b16 %v2362
        %v2434 = vunpack.c.l.b16 %v2363
        %v2435 = vunpack.c.l.b16 %v2364
        %v2436 = vunpack.c.l.b16 %v2365
        %v2437 = vunpack.c.l.b16 %v2366
        %v2438 = vunpack.c.l.b16 %v2367
        %v2439 = vunpack.c.l.b16 %v2368
        %v2440 = vunpack.c.l.b16 %v2369
        %v2441 = vunpack.c.l.b16 %v2370
        %v2442 = vunpack.c.l.b16 %v2371
        %v2443 = vunpack.c.l.b16 %v2372
        %v2444 = vunpack.c.l.b16 %v2373
        %v2445 = vunpack.c.l.b16 %v2374
        %v2446 = vunpack.c.l.b16 %v2375
        %v2447 = vunpack.c.l.b16 %v2376
        %v2448 = vunpack.c.l.b16 %v2377
        %v2449 = vunpack.c.l.b16 %v2378
        %v2450 = vunpack.c.l.b16 %v2379
        %v2451 = vunpack.c.l.b16 %v2380
        %v2452 = vunpack.c.l.b16 %v2381
        %v2453 = vunpack.c.l.b16 %v2382
        %v2454 = vunpack.c.l.b16 %v2383
        %v2455 = vunpack.c.l.b16 %v2384
        %v2456 = vunpack.c.l.b16 %v2385
        %v2457 = vunpack.c.l.b16 %v2386
        %v2458 = vunpack.c.l.b16 %v2387
        %v2459 = vunpack.c.l.b16 %v2388
        %v2460 = vunpack.c.l.b16 %v2389
        %v2461 = vunpack.c.l.b16 %v2390
        %v2462 = vpack.c.b16 %v2431, %v2430
        %v2463 = vpack.c.b16 %v2433, %v2432
        %v2464 = vpack.c.b16 %v2435, %v2434
        %v2465 = vpack.c.b16 %v2437, %v2436
        %v2466 = vpack.c.b16 %v2439, %v2438
        %v2467 = vpack.c.b16 %v2441, %v2440
        %v2468 = vpack.c.b16 %v2443, %v2442
        %v2469 = vpack.c.b16 %v2445, %v2444
        %v2470 = vpack.c.b16 %v2447, %v2446
        %v2471 = vpack.c.b16 %v2449, %v2448
        %v2472 = vpack.c.b16 %v2451, %v2450
        %v2473 = vpack.c.b16 %v2453, %v2452
        %v2474 = vpack.c.b16 %v2455, %v2454
        %v2475 = vpack.c.b16 %v2457, %v2456
        %v2476 = vpack.c.b16 %v2459, %v2458
        %v2477 = vpack.c.b16 %v2461, %v2460
        %2494 = vmatprep.subr.bf16.mxu0 0
        %2495 = vmatpush1.bf16.msra.mxu0 %v2469
        %2496 = vmatprep.subr.bf16.mxu0 0
        %2497 = vmatpush1.bf16.msra.mxu0 %v2468
        %2498 = vmatprep.subr.bf16.mxu0 0
        %2499 = vmatpush1.bf16.msra.mxu0 %v2467
        %2500 = vmatprep.subr.bf16.mxu0 0
        %2501 = vmatpush1.bf16.msra.mxu0 %v2466
        %2502 = vmatprep.subr.bf16.mxu0 0
        %2503 = vmatpush1.bf16.msra.mxu0 %v2465
        %2504 = vmatprep.subr.bf16.mxu0 0
        %2505 = vmatpush1.bf16.msra.mxu0 %v2464
        %2506 = vmatprep.subr.bf16.mxu0 0
        %2507 = vmatpush1.bf16.msra.mxu0 %v2463
        %2508 = vmatprep.subr.bf16.mxu0 0
        %2509 = vmatpush1.bf16.msra.mxu0 %v2462
        %2510 = vmatprep.subr.bf16.mxu0 0
        %2511 = vmatpush2.bf16.msra.mxu0 %v2477
        %2512 = vmatprep.subr.bf16.mxu0 0
        %2513 = vmatpush2.bf16.msra.mxu0 %v2476
        %2514 = vmatprep.subr.bf16.mxu0 0
        %2515 = vmatpush2.bf16.msra.mxu0 %v2475
        %2516 = vmatprep.subr.bf16.mxu0 0
        %2517 = vmatpush2.bf16.msra.mxu0 %v2474
        %2518 = vmatprep.subr.bf16.mxu0 0
        %2519 = vmatpush2.bf16.msra.mxu0 %v2473
        %2520 = vmatprep.subr.bf16.mxu0 0
        %2521 = vmatpush2.bf16.msra.mxu0 %v2472
        %2522 = vmatprep.subr.bf16.mxu0 0
        %2523 = vmatpush2.bf16.msra.mxu0 %v2471
        %2524 = vmatprep.subr.bf16.mxu0 0
        %2525 = vmatpush2.bf16.msra.mxu0 %v2470
        %2526 = vmatprep.mubr.bf16.mxu0 %v2356
        %2527 = vmatmul.mubr.bf16.gmra.mxu0 %v2355
        %v2528 = vpop.f32.mrf.mxu0
        %v2529 = vadd.f32 %v2396, %v2528
        %v2530 = vpop.f32.mrf.mxu0
        %v2531 = vpop.f32.mrf.mxu0
        %v2532 = vadd.f32 %v2396, %v2531
        %v2533 = vpop.f32.mrf.mxu0
        %2534 = vmatprep.mubr.bf16.mxu0 %v2358
        %2535 = vmatmul.mubr.bf16.gmra.mxu0 %v2357
        %v2536 = vpop.f32.mrf.mxu0
        %v2537 = vadd.f32 %v2396, %v2536
        %v2538 = vpop.f32.mrf.mxu0
        %v2539 = vpop.f32.mrf.mxu0
        %v2540 = vpop.f32.mrf.mxu0
        %2541 = vdwg.mxu0
        %v2542 = vadd.f32 %v2185, %v2529
        %v2543 = vadd.f32 %v2186, %v2532
        %v2544 = vadd.f32 %v2187, %v2537
        %v2545 = vld [vmem:[%s739] sm:$0x1]
        %v2546 = vld [vmem:[%s747] sm:$0x1]
        %2547 = vadd.xlane.f32.xlu0 %v2542
        %v2548 = vpop.xlane.xlu0 %2547
        %2549 = vadd.xlane.f32.xlu0 %v2543
        %v2550 = vpop.xlane.xlu0 %2549
        %v2551 = vsel %vm2137, %v2544, 0.0
        %2552 = vadd.xlane.f32.xlu0 %v2551
        %v2553 = vpop.xlane.xlu0 %2552
        %v2554 = vmul.f32 %v2548, %v2141
        %v2555 = vmul.f32 %v2550, %v2141
        %v2556 = vmul.f32 %v2553, %v2141
        %v2557 = vsub.f32 %v2542, %v2554
        %v2558 = vsub.f32 %v2543, %v2555
        %v2559 = vsub.f32 %v2544, %v2556
        %v2560 = vmul.f32 %v2557, %v2557
        %v2561 = vmul.f32 %v2558, %v2558
        %v2562 = vmul.f32 %v2559, %v2559
        %2563 = vadd.xlane.f32.xlu0 %v2560
        %v2564 = vpop.xlane.xlu0 %2563
        %2565 = vadd.xlane.f32.xlu0 %v2561
        %v2566 = vpop.xlane.xlu0 %2565
        %v2567 = vsel %vm2137, %v2562, 0.0
        %2568 = vadd.xlane.f32.xlu0 %v2567
        %v2569 = vpop.xlane.xlu0 %2568
        %v2570 = vmul.f32 %v2564, %v2141
        %v2571 = vmul.f32 %v2566, %v2141
        %v2572 = vmul.f32 %v2569, %v2141
        %v2573 = vadd.f32 %v2570, 1e-05
        %v2574 = vadd.f32 %v2571, 1e-05
        %v2575 = vadd.f32 %v2572, 1e-05
        %v2576 = vrsqrt.pop %v2573
        %v2577 = vrsqrt.pop %v2574
        %v2578 = vrsqrt.pop %v2575
        %v2579 = vmul.f32 %v2557, %v2576
        %v2580 = vmul.f32 %v2558, %v2577
        %v2581 = vmul.f32 %v2559, %v2578
        %v2583 = vlaneseq
        %v2584 = vshrl.u32 %v2583, 7
        %v2585 = vsub.s32 0, %v2584
        %v2586 = vrot.slane %v2545, %v2585
        %v2588 = vmul.f32 %v2579, %v2586
        %v2589 = vmul.f32 %v2580, %v2586
        %v2590 = vmul.f32 %v2581, %v2586
        %v2592 = vlaneseq
        %v2593 = vshrl.u32 %v2592, 7
        %v2594 = vsub.s32 0, %v2593
        %v2595 = vrot.slane %v2546, %v2594
        %v2597 = vadd.f32 %v2588, %v2595
        %v2598 = vadd.f32 %v2589, %v2595
        %v2599 = vadd.f32 %v2590, %v2595
        %2600 = vst [vmem:[#allocation2] sm:$0xff] %v2597
        %2601 = vst [vmem:[#allocation2 + $0x8] sm:$0xff] %v2598
        %2602 = vst [vmem:[#allocation2 + $0x10] sm:$0xf] %v2599
        %p2603 = scmp.eq.s32.totalorder %s43, 3
        // Predicated region
        $region129: #{translation_forward.2} parent=83 // pred_check
          %p2604 = pneg %p2603
        $region130: #{translation_forward.2} parent=83 // pred_check_branch
          %2606 = sbr.rel (%p2604) target = $region132
        $region131: #{translation_forward.2} parent=83 // pred_region
          %v2607 = vld [vmem:[#allocation16] sm:$0x1]
          %v2608 = vld [vmem:[#allocation17] sm:$0x1]
          %2609 = vadd.xlane.f32.xlu0 %v2597
          %v2610 = vpop.xlane.xlu0 %2609
          %2611 = vadd.xlane.f32.xlu0 %v2598
          %v2612 = vpop.xlane.xlu0 %2611
          %v2613 = vsel %vm2137, %v2599, 0.0
          %2614 = vadd.xlane.f32.xlu0 %v2613
          %v2615 = vpop.xlane.xlu0 %2614
          %v2616 = vmul.f32 %v2610, %v2141
          %v2617 = vmul.f32 %v2612, %v2141
          %v2618 = vmul.f32 %v2615, %v2141
          %v2619 = vsub.f32 %v2597, %v2616
          %v2620 = vsub.f32 %v2598, %v2617
          %v2621 = vsub.f32 %v2599, %v2618
          %v2622 = vmul.f32 %v2619, %v2619
          %v2623 = vmul.f32 %v2620, %v2620
          %v2624 = vmul.f32 %v2621, %v2621
          %2625 = vadd.xlane.f32.xlu0 %v2622
          %v2626 = vpop.xlane.xlu0 %2625
          %2627 = vadd.xlane.f32.xlu0 %v2623
          %v2628 = vpop.xlane.xlu0 %2627
          %v2629 = vsel %vm2137, %v2624, 0.0
          %2630 = vadd.xlane.f32.xlu0 %v2629
          %v2631 = vpop.xlane.xlu0 %2630
          %v2632 = vmul.f32 %v2626, %v2141
          %v2633 = vmul.f32 %v2628, %v2141
          %v2634 = vmul.f32 %v2631, %v2141
          %v2635 = vadd.f32 %v2632, 1e-05
          %v2636 = vadd.f32 %v2633, 1e-05
          %v2637 = vadd.f32 %v2634, 1e-05
          %v2638 = vrsqrt.pop %v2635
          %v2639 = vrsqrt.pop %v2636
          %v2640 = vrsqrt.pop %v2637
          %v2641 = vmul.f32 %v2619, %v2638
          %v2642 = vmul.f32 %v2620, %v2639
          %v2643 = vmul.f32 %v2621, %v2640
          %v2645 = vlaneseq
          %v2646 = vshrl.u32 %v2645, 7
          %v2647 = vsub.s32 0, %v2646
          %v2648 = vrot.slane %v2607, %v2647
          %v2650 = vmul.f32 %v2641, %v2648
          %v2651 = vmul.f32 %v2642, %v2648
          %v2652 = vmul.f32 %v2643, %v2648
          %v2654 = vlaneseq
          %v2655 = vshrl.u32 %v2654, 7
          %v2656 = vsub.s32 0, %v2655
          %v2657 = vrot.slane %v2608, %v2656
          %v2659 = vadd.f32 %v2650, %v2657
          %v2660 = vadd.f32 %v2651, %v2657
          %v2661 = vadd.f32 %v2652, %v2657
          %v2662 = vpack.c.bf16 %v2660, %v2659
          %v2663 = vpack.c.bf16 %v2661, %v2661
          %v2666 = vunpack.c.l.b16 %v2662
          %v2667 = vunpack.c.h.b16 %v2662
          %v2668 = vunpack.c.l.b16 %v2663
          %v2669 = vpack.c.b16 %v2666, %v2666
          %v2670 = vpack.c.b16 %v2667, %v2667
          %v2671 = vpack.c.b16 %v2668, %v2668
          %2675 = vst [vmem:[%s16] sm:$0xf] %v2669
          %2676 = vst [vmem:[%s16 + $0x4] sm:$0xf] %v2670
          %2677 = vst [vmem:[%s16 + $0x8] sm:$0x3] %v2671
        $region132: #{translation_forward.2} parent=83 // pred_fallthru
          _
        // Predicated region
        $region133: #{translation_forward.2} parent=83 // pred_check
          %p2678 = pneg %p452
        $region134: #{translation_forward.2} parent=83 // pred_check_branch
          %2680 = sbr.rel (%p2678) target = $region136
        $region135: #{translation_forward.2} parent=83 // pred_region
          _
        $region136: #{translation_forward.2} parent=83 // pred_fallthru
          _
        // Predicated region
        $region137: #{translation_forward.2} parent=83 // pred_check
          %p2681 = pneg %p452
        $region138: #{translation_forward.2} parent=83 // pred_check_branch
          %2683 = sbr.rel (%p2681) target = $region140
        $region139: #{translation_forward.2} parent=83 // pred_region
          _
        $region140: #{translation_forward.2} parent=83 // pred_fallthru
          _
      $region84: #{translation_forward.2} parent=5 // pred_fallthru
        _
      %p2684 = scmp.le.s32.totalorder 2, %s38
      // Predicated region
      $region141: #{translation_forward.2} parent=5 // pred_check
        %p2685 = pneg %p2684
      $region142: #{translation_forward.2} parent=5 // pred_check_branch
        %2687 = sbr.rel (%p2685) target = $region144
      $region143: #{translation_forward.2} parent=5 // pred_region
        %s2688 = ssub.s32 %s38, 2
      $region144: #{translation_forward.2} parent=5 // pred_fallthru
        _
    $region6: #{translation_forward.2} parent=1 // loop_footer
      %s42 = sadd.s32 1, %s38
    $region7: #{translation_forward.2} parent=1 // loop_footer_branch
      %37 = sbr.rel target = $region3
    $region8: #{translation_forward.2} parent=1 // loop_exit
      _
    %2689 = vsyncpa [#allocation4], 1
    %s2690 = scalar_lea.sflag [#allocation4], 1
    %2691 = vsyncpa %s2690, 1
    %2692 = vsyncpa [#allocation6], 1
    %s2693 = scalar_lea.sflag [#allocation6], 1
    %2694 = vsyncpa %s2693, 1
    %2695 = vsyncpa [#allocation9], 1
    %s2696 = scalar_lea.sflag [#allocation9], 1
    %2697 = vsyncpa %s2696, 1
    %2698 = vsyncpa [#allocation12], 1
    %s2699 = scalar_lea.sflag [#allocation12], 1
    %2700 = vsyncpa %s2699, 1
    %2701 = vsyncpa [#allocation15], 1
    %s2702 = scalar_lea.sflag [#allocation15], 1
    %2703 = vsyncpa %s2702, 1
    %2704 = vsyncpa [#allocation18], 1

// kernel: translation_forward.3
$region0: #{translation_forward.3}
  #allocation0 [shape = 'u32[]', space=smem, size = 0x4, offset = 0x4, fixed_abs, tag = 'smem constant byte address 0x4 - core index']
  #allocation1 [shape = 'u32[144,128]{1,0:T(1,128)}', space=vmem, size = 0x12000, scoped, tag = 'internal scratch']
  #allocation2 [shape = 'f32[16,128]{1,0:T(8,128)}', space=vmem, size = 0x2000, scoped, tag = 'scratch operand']
  %s0 = inlined_call_operand.vmem [shape: f32[16,128], index: 0, kind: input, shape index: {}]
  %s1 = inlined_call_operand.vmem [shape: bf16[20,128], index: 1, kind: input, shape index: {}]
  %s2 = inlined_call_operand.vmem [shape: f32[16,16], index: 2, kind: input, shape index: {}]
  %s3 = inlined_call_operand.vmem [shape: f32[16,20], index: 3, kind: input, shape index: {}]
  %s4 = inlined_call_operand.vmem [shape: bf16[4,128,384], index: 4, kind: input, shape index: {}]
  %s5 = inlined_call_operand.vmem [shape: f32[4,1,384], index: 5, kind: input, shape index: {}]
  %s6 = inlined_call_operand.vmem [shape: bf16[4,128,128], index: 6, kind: input, shape index: {}]
  %s7 = inlined_call_operand.vmem [shape: f32[4,1,128], index: 7, kind: input, shape index: {}]
  %s8 = inlined_call_operand.vmem [shape: f32[4,1,128], index: 8, kind: input, shape index: {}]
  %s9 = inlined_call_operand.vmem [shape: f32[4,1,128], index: 9, kind: input, shape index: {}]
  %s10 = inlined_call_operand.hbm [shape: bf16[4,128,128], index: 10, kind: input, shape index: {}]
  %s11 = inlined_call_operand.vmem [shape: f32[4,1,128], index: 11, kind: input, shape index: {}]
  %s12 = inlined_call_operand.vmem [shape: bf16[4,128,256], index: 12, kind: input, shape index: {}]
  %s13 = inlined_call_operand.vmem [shape: f32[4,1,256], index: 13, kind: input, shape index: {}]
  %s14 = inlined_call_operand.hbm [shape: bf16[4,128,128], index: 14, kind: input, shape index: {}]
  %s15 = inlined_call_operand.vmem [shape: f32[4,1,128], index: 15, kind: input, shape index: {}]
  %s16 = inlined_call_operand.vmem [shape: f32[4,1,128], index: 16, kind: input, shape index: {}]
  %s17 = inlined_call_operand.vmem [shape: f32[4,1,128], index: 17, kind: input, shape index: {}]
  %s18 = inlined_call_operand.vmem [shape: bf16[4,128,256], index: 18, kind: input, shape index: {}]
  %s19 = inlined_call_operand.vmem [shape: f32[4,1,256], index: 19, kind: input, shape index: {}]
  %s20 = inlined_call_operand.hbm [shape: bf16[4,256,128], index: 20, kind: input, shape index: {}]
  %s21 = inlined_call_operand.vmem [shape: f32[4,1,128], index: 21, kind: input, shape index: {}]
  %s22 = inlined_call_operand.vmem [shape: f32[4,1,128], index: 22, kind: input, shape index: {}]
  %s23 = inlined_call_operand.vmem [shape: f32[4,1,128], index: 23, kind: input, shape index: {}]
  %s24 = inlined_call_operand.vmem [shape: f32[1,128], index: 24, kind: input, shape index: {}]
  %s25 = inlined_call_operand.vmem [shape: f32[1,128], index: 25, kind: input, shape index: {}]
  %s26 = inlined_call_operand.hbm [shape: f32[16,128], index: 26, kind: output, shape index: {}]
  %s27 = sld [smem:[#allocation0]]
  $region157: #{translation_forward.3} parent=0
    _
  %s29 = ssub.s32 1, %s27
  %s30 = scalar_select 0, %s29, %s27
  $region1: #{translation_forward.3} parent=0
    #allocation3 [shape = 'u8[65536]{0}', space=vmem, size = 0x10000, scoped, tag = 'input window, operand 10']
    #allocation4 [shape = 's32[2]{0}', space=sflag, size = 0x8, scoped, tag = 'scoped memory for translation_forward.3']
    #allocation5 [shape = 's32[2]{0}', space=sflag, size = 0x8, scoped, tag = 'scoped memory for translation_forward.3']
    #allocation6 [shape = 'u8[65536]{0}', space=vmem, size = 0x10000, scoped, tag = 'input window, operand 14']
    #allocation7 [shape = 's32[2]{0}', space=sflag, size = 0x8, scoped, tag = 'scoped memory for translation_forward.3']
    #allocation8 [shape = 'u8[131072]{0}', space=vmem, size = 0x20000, scoped, tag = 'input window, operand 20']
    #allocation9 [shape = 'u8[8192]{0}', space=vmem, size = 0x2000, scoped, tag = 'output window, operand 0, single buffered']
    %31 = vsyncpa [#allocation4], 0
    %s32 = scalar_lea.sflag [#allocation4], 1
    %33 = vsyncpa %s32, 0
    %34 = vsyncpa [#allocation7], 0
    %s35 = scalar_lea.sflag [#allocation7], 1
    %36 = vsyncpa %s35, 0
    %37 = vsyncpa [#allocation5], 0
    loop: start=0, step=1, limit=6
    $region2: #{translation_forward.3} parent=1 // loop_pre_header
      _
    $region3: #{translation_forward.3} parent=1 // loop_header
      %s39 = sphi 0, %s43
      %p40 = scmp.ge.s32.totalorder %s39, 6
      %s47 = sphi 0, %s47
      %s49 = sphi 0, %s47
      %s50 = sphi 0, %s49
      %s64 = sphi 0, %s50
      %s68 = sphi 0, %s68
      %s70 = sphi 0, %s68
      %s71 = sphi 0, %s70
      %s85 = sphi 0, %s71
      %s89 = sphi 0, %s89
      %s91 = sphi 0, %s89
      %s92 = sphi 0, %s91
      %s106 = sphi 0, %s92
      %s110 = sphi 0, %s110
      %s112 = sphi 0, %s110
      %s113 = sphi 0, %s112
      %s127 = sphi 0, %s113
      %s133 = sphi 0, %s135
      %s136 = sphi 0, %s133
      %s137 = sphi 0, %s136
      %s153 = sphi 0, %s137
      %s159 = sphi 0, %s161
      %s162 = sphi 0, %s159
      %s163 = sphi 0, %s162
      %s179 = sphi 0, %s163
      %s185 = sphi 0, %s187
      %s188 = sphi 0, %s185
      %s189 = sphi 0, %s188
      %s205 = sphi 0, %s189
      %s211 = sphi 0, %s213
      %s214 = sphi 0, %s211
      %s215 = sphi 0, %s214
      %s231 = sphi 0, %s215
      %s237 = sphi 0, %s239
      %s240 = sphi 0, %s237
      %s241 = sphi 0, %s240
      %s257 = sphi 0, %s241
      %s263 = sphi 0, %s265
      %s266 = sphi 0, %s263
      %s267 = sphi 0, %s266
      %s283 = sphi 0, %s267
      %s289 = sphi 0, %s291
      %s292 = sphi 0, %s289
      %s293 = sphi 0, %s292
      %s309 = sphi 0, %s293
      %s315 = sphi 0, %s317
      %s318 = sphi 0, %s315
      %s319 = sphi 0, %s318
      %s335 = sphi 0, %s319
      %s341 = sphi 0, %s343
      %s344 = sphi 0, %s341
      %s345 = sphi 0, %s344
      %s361 = sphi 0, %s345
      %s367 = sphi 0, %s369
      %s370 = sphi 0, %s367
      %s371 = sphi 0, %s370
      %s387 = sphi 0, %s371
      %s393 = sphi 0, %s395
      %s396 = sphi 0, %s393
      %s397 = sphi 0, %s396
      %s413 = sphi 0, %s397
      %s419 = sphi 0, %s421
      %s422 = sphi 0, %s419
      %s423 = sphi 0, %s422
      %s439 = sphi 0, %s423
      %s445 = sphi 0, %s447
      %s448 = sphi 0, %s445
      %s449 = sphi 0, %s448
      %s465 = sphi 0, %s449
      %s471 = sphi 0, %s473
      %s474 = sphi 0, %s471
      %s475 = sphi 0, %s474
      %s491 = sphi 0, %s475
      %s497 = sphi 0, %s499
      %s500 = sphi 0, %s497
      %s501 = sphi 0, %s500
      %s517 = sphi 0, %s501
      %s523 = sphi 0, %s525
      %s526 = sphi 0, %s523
      %s527 = sphi 0, %s526
      %s543 = sphi 0, %s527
      %s549 = sphi 0, %s551
      %s552 = sphi 0, %s549
      %s553 = sphi 0, %s552
      %s569 = sphi 0, %s553
      %s575 = sphi 0, %s577
      %s578 = sphi 0, %s575
      %s579 = sphi 0, %s578
      %s595 = sphi 0, %s579
      %s601 = sphi 0, %s603
      %s604 = sphi 0, %s601
      %s605 = sphi 0, %s604
      %s621 = sphi 0, %s605
      %s627 = sphi 0, %s629
      %s630 = sphi 0, %s627
      %s631 = sphi 0, %s630
      %s647 = sphi 0, %s631
      %s651 = sphi 0, %s651
      %s653 = sphi 0, %s651
      %s654 = sphi 0, %s653
      %s668 = sphi 0, %s654
      %s672 = sphi 0, %s672
      %s674 = sphi 0, %s672
      %s675 = sphi 0, %s674
      %s689 = sphi 0, %s675
      %s693 = sphi 0, %s693
      %s695 = sphi 0, %s693
      %s696 = sphi 0, %s695
      %s710 = sphi 0, %s696
    $region4: #{translation_forward.3} parent=1 // loop_header_branch
      %42 = sbr.rel (%p40) target = $region8
    $region5: #{translation_forward.3} parent=1 // loop_body
      %s44 = ssub.s32 %s39, 1
      %s45 = ssub.s32 %s39, 2
      %s46 = sadd.s32 %s39, 1
      %s48 = sadd.s32 %s47, 1
      %p51 = scmp.eq.s32.totalorder %s39, 3
      %p52 = scmp.ne.s32.totalorder %s47, %s49
      %p53 = scmp.eq.s32.totalorder %s39, 0
      %p54 = por %p52, %p53
      %p55 = scmp.ne.s32.totalorder %s47, %s49
      %p56 = scmp.eq.s32.totalorder %s44, 3
      %p57 = por %p55, %p56
      %p58 = scmp.ne.s32.totalorder %s49, %s50
      %p59 = scmp.eq.s32.totalorder %s44, 0
      %p60 = por %p58, %p59
      %p61 = scmp.ne.s32.totalorder %s49, %s50
      %p62 = scmp.eq.s32.totalorder %s45, 3
      %p63 = por %p61, %p62
      %p65 = scmp.ne.s32.totalorder %s50, %s64
      %p66 = scmp.eq.s32.totalorder %s45, 0
      %p67 = por %p65, %p66
      %s69 = sadd.s32 %s68, 1
      %p72 = scmp.eq.s32.totalorder %s39, 3
      %p73 = scmp.ne.s32.totalorder %s68, %s70
      %p74 = scmp.eq.s32.totalorder %s39, 0
      %p75 = por %p73, %p74
      %p76 = scmp.ne.s32.totalorder %s68, %s70
      %p77 = scmp.eq.s32.totalorder %s44, 3
      %p78 = por %p76, %p77
      %p79 = scmp.ne.s32.totalorder %s70, %s71
      %p80 = scmp.eq.s32.totalorder %s44, 0
      %p81 = por %p79, %p80
      %p82 = scmp.ne.s32.totalorder %s70, %s71
      %p83 = scmp.eq.s32.totalorder %s45, 3
      %p84 = por %p82, %p83
      %p86 = scmp.ne.s32.totalorder %s71, %s85
      %p87 = scmp.eq.s32.totalorder %s45, 0
      %p88 = por %p86, %p87
      %s90 = sadd.s32 %s89, 1
      %p93 = scmp.eq.s32.totalorder %s39, 3
      %p94 = scmp.ne.s32.totalorder %s89, %s91
      %p95 = scmp.eq.s32.totalorder %s39, 0
      %p96 = por %p94, %p95
      %p97 = scmp.ne.s32.totalorder %s89, %s91
      %p98 = scmp.eq.s32.totalorder %s44, 3
      %p99 = por %p97, %p98
      %p100 = scmp.ne.s32.totalorder %s91, %s92
      %p101 = scmp.eq.s32.totalorder %s44, 0
      %p102 = por %p100, %p101
      %p103 = scmp.ne.s32.totalorder %s91, %s92
      %p104 = scmp.eq.s32.totalorder %s45, 3
      %p105 = por %p103, %p104
      %p107 = scmp.ne.s32.totalorder %s92, %s106
      %p108 = scmp.eq.s32.totalorder %s45, 0
      %p109 = por %p107, %p108
      %s111 = sadd.s32 %s110, 1
      %p114 = scmp.eq.s32.totalorder %s39, 3
      %p115 = scmp.ne.s32.totalorder %s110, %s112
      %p116 = scmp.eq.s32.totalorder %s39, 0
      %p117 = por %p115, %p116
      %p118 = scmp.ne.s32.totalorder %s110, %s112
      %p119 = scmp.eq.s32.totalorder %s44, 3
      %p120 = por %p118, %p119
      %p121 = scmp.ne.s32.totalorder %s112, %s113
      %p122 = scmp.eq.s32.totalorder %s44, 0
      %p123 = por %p121, %p122
      %p124 = scmp.ne.s32.totalorder %s112, %s113
      %p125 = scmp.eq.s32.totalorder %s45, 3
      %p126 = por %p124, %p125
      %p128 = scmp.ne.s32.totalorder %s113, %s127
      %p129 = scmp.eq.s32.totalorder %s45, 0
      %p130 = por %p128, %p129
      %s131 = ssub.s32 %s39, %s46
      %p132 = scmp.eq.s32.totalorder %s131, 0
      %s134 = sadd.s32 %s133, 1
      %s135 = scalar_select %p132, %s133, %s134
      %p138 = pneg %p132
      %p139 = scmp.eq.s32.totalorder %s39, 3
      %p140 = por %p138, %p139
      %p141 = scmp.ne.s32.totalorder %s133, %s136
      %p142 = scmp.eq.s32.totalorder %s39, 0
      %p143 = por %p141, %p142
      %p144 = scmp.ne.s32.totalorder %s133, %s136
      %p145 = scmp.eq.s32.totalorder %s44, 3
      %p146 = por %p144, %p145
      %p147 = scmp.ne.s32.totalorder %s136, %s137
      %p148 = scmp.eq.s32.totalorder %s44, 0
      %p149 = por %p147, %p148
      %p150 = scmp.ne.s32.totalorder %s136, %s137
      %p151 = scmp.eq.s32.totalorder %s45, 3
      %p152 = por %p150, %p151
      %p154 = scmp.ne.s32.totalorder %s137, %s153
      %p155 = scmp.eq.s32.totalorder %s45, 0
      %p156 = por %p154, %p155
      %s157 = ssub.s32 %s39, %s46
      %p158 = scmp.eq.s32.totalorder %s157, 0
      %s160 = sadd.s32 %s159, 1
      %s161 = scalar_select %p158, %s159, %s160
      %p164 = pneg %p158
      %p165 = scmp.eq.s32.totalorder %s39, 3
      %p166 = por %p164, %p165
      %p167 = scmp.ne.s32.totalorder %s159, %s162
      %p168 = scmp.eq.s32.totalorder %s39, 0
      %p169 = por %p167, %p168
      %p170 = scmp.ne.s32.totalorder %s159, %s162
      %p171 = scmp.eq.s32.totalorder %s44, 3
      %p172 = por %p170, %p171
      %p173 = scmp.ne.s32.totalorder %s162, %s163
      %p174 = scmp.eq.s32.totalorder %s44, 0
      %p175 = por %p173, %p174
      %p176 = scmp.ne.s32.totalorder %s162, %s163
      %p177 = scmp.eq.s32.totalorder %s45, 3
      %p178 = por %p176, %p177
      %p180 = scmp.ne.s32.totalorder %s163, %s179
      %p181 = scmp.eq.s32.totalorder %s45, 0
      %p182 = por %p180, %p181
      %s183 = ssub.s32 %s39, %s46
      %p184 = scmp.eq.s32.totalorder %s183, 0
      %s186 = sadd.s32 %s185, 1
      %s187 = scalar_select %p184, %s185, %s186
      %p190 = pneg %p184
      %p191 = scmp.eq.s32.totalorder %s39, 3
      %p192 = por %p190, %p191
      %p193 = scmp.ne.s32.totalorder %s185, %s188
      %p194 = scmp.eq.s32.totalorder %s39, 0
      %p195 = por %p193, %p194
      %p196 = scmp.ne.s32.totalorder %s185, %s188
      %p197 = scmp.eq.s32.totalorder %s44, 3
      %p198 = por %p196, %p197
      %p199 = scmp.ne.s32.totalorder %s188, %s189
      %p200 = scmp.eq.s32.totalorder %s44, 0
      %p201 = por %p199, %p200
      %p202 = scmp.ne.s32.totalorder %s188, %s189
      %p203 = scmp.eq.s32.totalorder %s45, 3
      %p204 = por %p202, %p203
      %p206 = scmp.ne.s32.totalorder %s189, %s205
      %p207 = scmp.eq.s32.totalorder %s45, 0
      %p208 = por %p206, %p207
      %s209 = ssub.s32 %s39, %s46
      %p210 = scmp.eq.s32.totalorder %s209, 0
      %s212 = sadd.s32 %s211, 1
      %s213 = scalar_select %p210, %s211, %s212
      %p216 = pneg %p210
      %p217 = scmp.eq.s32.totalorder %s39, 3
      %p218 = por %p216, %p217
      %p219 = scmp.ne.s32.totalorder %s211, %s214
      %p220 = scmp.eq.s32.totalorder %s39, 0
      %p221 = por %p219, %p220
      %p222 = scmp.ne.s32.totalorder %s211, %s214
      %p223 = scmp.eq.s32.totalorder %s44, 3
      %p224 = por %p222, %p223
      %p225 = scmp.ne.s32.totalorder %s214, %s215
      %p226 = scmp.eq.s32.totalorder %s44, 0
      %p227 = por %p225, %p226
      %p228 = scmp.ne.s32.totalorder %s214, %s215
      %p229 = scmp.eq.s32.totalorder %s45, 3
      %p230 = por %p228, %p229
      %p232 = scmp.ne.s32.totalorder %s215, %s231
      %p233 = scmp.eq.s32.totalorder %s45, 0
      %p234 = por %p232, %p233
      %s235 = ssub.s32 %s39, %s46
      %p236 = scmp.eq.s32.totalorder %s235, 0
      %s238 = sadd.s32 %s237, 1
      %s239 = scalar_select %p236, %s237, %s238
      %p242 = pneg %p236
      %p243 = scmp.eq.s32.totalorder %s39, 3
      %p244 = por %p242, %p243
      %p245 = scmp.ne.s32.totalorder %s237, %s240
      %p246 = scmp.eq.s32.totalorder %s39, 0
      %p247 = por %p245, %p246
      %p248 = scmp.ne.s32.totalorder %s237, %s240
      %p249 = scmp.eq.s32.totalorder %s44, 3
      %p250 = por %p248, %p249
      %p251 = scmp.ne.s32.totalorder %s240, %s241
      %p252 = scmp.eq.s32.totalorder %s44, 0
      %p253 = por %p251, %p252
      %p254 = scmp.ne.s32.totalorder %s240, %s241
      %p255 = scmp.eq.s32.totalorder %s45, 3
      %p256 = por %p254, %p255
      %p258 = scmp.ne.s32.totalorder %s241, %s257
      %p259 = scmp.eq.s32.totalorder %s45, 0
      %p260 = por %p258, %p259
      %s261 = ssub.s32 %s39, %s46
      %p262 = scmp.eq.s32.totalorder %s261, 0
      %s264 = sadd.s32 %s263, 1
      %s265 = scalar_select %p262, %s263, %s264
      %p268 = pneg %p262
      %p269 = scmp.eq.s32.totalorder %s39, 3
      %p270 = por %p268, %p269
      %p271 = scmp.ne.s32.totalorder %s263, %s266
      %p272 = scmp.eq.s32.totalorder %s39, 0
      %p273 = por %p271, %p272
      %p274 = scmp.ne.s32.totalorder %s263, %s266
      %p275 = scmp.eq.s32.totalorder %s44, 3
      %p276 = por %p274, %p275
      %p277 = scmp.ne.s32.totalorder %s266, %s267
      %p278 = scmp.eq.s32.totalorder %s44, 0
      %p279 = por %p277, %p278
      %p280 = scmp.ne.s32.totalorder %s266, %s267
      %p281 = scmp.eq.s32.totalorder %s45, 3
      %p282 = por %p280, %p281
      %p284 = scmp.ne.s32.totalorder %s267, %s283
      %p285 = scmp.eq.s32.totalorder %s45, 0
      %p286 = por %p284, %p285
      %s287 = ssub.s32 %s39, %s46
      %p288 = scmp.eq.s32.totalorder %s287, 0
      %s290 = sadd.s32 %s289, 1
      %s291 = scalar_select %p288, %s289, %s290
      %p294 = pneg %p288
      %p295 = scmp.eq.s32.totalorder %s39, 3
      %p296 = por %p294, %p295
      %p297 = scmp.ne.s32.totalorder %s289, %s292
      %p298 = scmp.eq.s32.totalorder %s39, 0
      %p299 = por %p297, %p298
      %p300 = scmp.ne.s32.totalorder %s289, %s292
      %p301 = scmp.eq.s32.totalorder %s44, 3
      %p302 = por %p300, %p301
      %p303 = scmp.ne.s32.totalorder %s292, %s293
      %p304 = scmp.eq.s32.totalorder %s44, 0
      %p305 = por %p303, %p304
      %p306 = scmp.ne.s32.totalorder %s292, %s293
      %p307 = scmp.eq.s32.totalorder %s45, 3
      %p308 = por %p306, %p307
      %p310 = scmp.ne.s32.totalorder %s293, %s309
      %p311 = scmp.eq.s32.totalorder %s45, 0
      %p312 = por %p310, %p311
      %s313 = ssub.s32 %s39, %s46
      %p314 = scmp.eq.s32.totalorder %s313, 0
      %s316 = sadd.s32 %s315, 1
      %s317 = scalar_select %p314, %s315, %s316
      %p320 = pneg %p314
      %p321 = scmp.eq.s32.totalorder %s39, 3
      %p322 = por %p320, %p321
      %p323 = scmp.ne.s32.totalorder %s315, %s318
      %p324 = scmp.eq.s32.totalorder %s39, 0
      %p325 = por %p323, %p324
      %p326 = scmp.ne.s32.totalorder %s315, %s318
      %p327 = scmp.eq.s32.totalorder %s44, 3
      %p328 = por %p326, %p327
      %p329 = scmp.ne.s32.totalorder %s318, %s319
      %p330 = scmp.eq.s32.totalorder %s44, 0
      %p331 = por %p329, %p330
      %p332 = scmp.ne.s32.totalorder %s318, %s319
      %p333 = scmp.eq.s32.totalorder %s45, 3
      %p334 = por %p332, %p333
      %p336 = scmp.ne.s32.totalorder %s319, %s335
      %p337 = scmp.eq.s32.totalorder %s45, 0
      %p338 = por %p336, %p337
      %s339 = ssub.s32 %s39, %s46
      %p340 = scmp.eq.s32.totalorder %s339, 0
      %s342 = sadd.s32 %s341, 1
      %s343 = scalar_select %p340, %s341, %s342
      %p346 = pneg %p340
      %p347 = scmp.eq.s32.totalorder %s39, 3
      %p348 = por %p346, %p347
      %p349 = scmp.ne.s32.totalorder %s341, %s344
      %p350 = scmp.eq.s32.totalorder %s39, 0
      %p351 = por %p349, %p350
      %p352 = scmp.ne.s32.totalorder %s341, %s344
      %p353 = scmp.eq.s32.totalorder %s44, 3
      %p354 = por %p352, %p353
      %p355 = scmp.ne.s32.totalorder %s344, %s345
      %p356 = scmp.eq.s32.totalorder %s44, 0
      %p357 = por %p355, %p356
      %p358 = scmp.ne.s32.totalorder %s344, %s345
      %p359 = scmp.eq.s32.totalorder %s45, 3
      %p360 = por %p358, %p359
      %p362 = scmp.ne.s32.totalorder %s345, %s361
      %p363 = scmp.eq.s32.totalorder %s45, 0
      %p364 = por %p362, %p363
      %s365 = ssub.s32 %s39, %s46
      %p366 = scmp.eq.s32.totalorder %s365, 0
      %s368 = sadd.s32 %s367, 1
      %s369 = scalar_select %p366, %s367, %s368
      %p372 = pneg %p366
      %p373 = scmp.eq.s32.totalorder %s39, 3
      %p374 = por %p372, %p373
      %p375 = scmp.ne.s32.totalorder %s367, %s370
      %p376 = scmp.eq.s32.totalorder %s39, 0
      %p377 = por %p375, %p376
      %p378 = scmp.ne.s32.totalorder %s367, %s370
      %p379 = scmp.eq.s32.totalorder %s44, 3
      %p380 = por %p378, %p379
      %p381 = scmp.ne.s32.totalorder %s370, %s371
      %p382 = scmp.eq.s32.totalorder %s44, 0
      %p383 = por %p381, %p382
      %p384 = scmp.ne.s32.totalorder %s370, %s371
      %p385 = scmp.eq.s32.totalorder %s45, 3
      %p386 = por %p384, %p385
      %p388 = scmp.ne.s32.totalorder %s371, %s387
      %p389 = scmp.eq.s32.totalorder %s45, 0
      %p390 = por %p388, %p389
      %s391 = ssub.s32 %s39, %s46
      %p392 = scmp.eq.s32.totalorder %s391, 0
      %s394 = sadd.s32 %s393, 1
      %s395 = scalar_select %p392, %s393, %s394
      %p398 = pneg %p392
      %p399 = scmp.eq.s32.totalorder %s39, 3
      %p400 = por %p398, %p399
      %p401 = scmp.ne.s32.totalorder %s393, %s396
      %p402 = scmp.eq.s32.totalorder %s39, 0
      %p403 = por %p401, %p402
      %p404 = scmp.ne.s32.totalorder %s393, %s396
      %p405 = scmp.eq.s32.totalorder %s44, 3
      %p406 = por %p404, %p405
      %p407 = scmp.ne.s32.totalorder %s396, %s397
      %p408 = scmp.eq.s32.totalorder %s44, 0
      %p409 = por %p407, %p408
      %p410 = scmp.ne.s32.totalorder %s396, %s397
      %p411 = scmp.eq.s32.totalorder %s45, 3
      %p412 = por %p410, %p411
      %p414 = scmp.ne.s32.totalorder %s397, %s413
      %p415 = scmp.eq.s32.totalorder %s45, 0
      %p416 = por %p414, %p415
      %s417 = ssub.s32 %s39, %s46
      %p418 = scmp.eq.s32.totalorder %s417, 0
      %s420 = sadd.s32 %s419, 1
      %s421 = scalar_select %p418, %s419, %s420
      %p424 = pneg %p418
      %p425 = scmp.eq.s32.totalorder %s39, 3
      %p426 = por %p424, %p425
      %p427 = scmp.ne.s32.totalorder %s419, %s422
      %p428 = scmp.eq.s32.totalorder %s39, 0
      %p429 = por %p427, %p428
      %p430 = scmp.ne.s32.totalorder %s419, %s422
      %p431 = scmp.eq.s32.totalorder %s44, 3
      %p432 = por %p430, %p431
      %p433 = scmp.ne.s32.totalorder %s422, %s423
      %p434 = scmp.eq.s32.totalorder %s44, 0
      %p435 = por %p433, %p434
      %p436 = scmp.ne.s32.totalorder %s422, %s423
      %p437 = scmp.eq.s32.totalorder %s45, 3
      %p438 = por %p436, %p437
      %p440 = scmp.ne.s32.totalorder %s423, %s439
      %p441 = scmp.eq.s32.totalorder %s45, 0
      %p442 = por %p440, %p441
      %s443 = ssub.s32 %s39, %s46
      %p444 = scmp.eq.s32.totalorder %s443, 0
      %s446 = sadd.s32 %s445, 1
      %s447 = scalar_select %p444, %s445, %s446
      %p450 = pneg %p444
      %p451 = scmp.eq.s32.totalorder %s39, 3
      %p452 = por %p450, %p451
      %p453 = scmp.ne.s32.totalorder %s445, %s448
      %p454 = scmp.eq.s32.totalorder %s39, 0
      %p455 = por %p453, %p454
      %p456 = scmp.ne.s32.totalorder %s445, %s448
      %p457 = scmp.eq.s32.totalorder %s44, 3
      %p458 = por %p456, %p457
      %p459 = scmp.ne.s32.totalorder %s448, %s449
      %p460 = scmp.eq.s32.totalorder %s44, 0
      %p461 = por %p459, %p460
      %p462 = scmp.ne.s32.totalorder %s448, %s449
      %p463 = scmp.eq.s32.totalorder %s45, 3
      %p464 = por %p462, %p463
      %p466 = scmp.ne.s32.totalorder %s449, %s465
      %p467 = scmp.eq.s32.totalorder %s45, 0
      %p468 = por %p466, %p467
      %s469 = ssub.s32 %s39, %s46
      %p470 = scmp.eq.s32.totalorder %s469, 0
      %s472 = sadd.s32 %s471, 1
      %s473 = scalar_select %p470, %s471, %s472
      %p476 = pneg %p470
      %p477 = scmp.eq.s32.totalorder %s39, 3
      %p478 = por %p476, %p477
      %p479 = scmp.ne.s32.totalorder %s471, %s474
      %p480 = scmp.eq.s32.totalorder %s39, 0
      %p481 = por %p479, %p480
      %p482 = scmp.ne.s32.totalorder %s471, %s474
      %p483 = scmp.eq.s32.totalorder %s44, 3
      %p484 = por %p482, %p483
      %p485 = scmp.ne.s32.totalorder %s474, %s475
      %p486 = scmp.eq.s32.totalorder %s44, 0
      %p487 = por %p485, %p486
      %p488 = scmp.ne.s32.totalorder %s474, %s475
      %p489 = scmp.eq.s32.totalorder %s45, 3
      %p490 = por %p488, %p489
      %p492 = scmp.ne.s32.totalorder %s475, %s491
      %p493 = scmp.eq.s32.totalorder %s45, 0
      %p494 = por %p492, %p493
      %s495 = ssub.s32 %s39, %s46
      %p496 = scmp.eq.s32.totalorder %s495, 0
      %s498 = sadd.s32 %s497, 1
      %s499 = scalar_select %p496, %s497, %s498
      %p502 = pneg %p496
      %p503 = scmp.eq.s32.totalorder %s39, 3
      %p504 = por %p502, %p503
      %p505 = scmp.ne.s32.totalorder %s497, %s500
      %p506 = scmp.eq.s32.totalorder %s39, 0
      %p507 = por %p505, %p506
      %p508 = scmp.ne.s32.totalorder %s497, %s500
      %p509 = scmp.eq.s32.totalorder %s44, 3
      %p510 = por %p508, %p509
      %p511 = scmp.ne.s32.totalorder %s500, %s501
      %p512 = scmp.eq.s32.totalorder %s44, 0
      %p513 = por %p511, %p512
      %p514 = scmp.ne.s32.totalorder %s500, %s501
      %p515 = scmp.eq.s32.totalorder %s45, 3
      %p516 = por %p514, %p515
      %p518 = scmp.ne.s32.totalorder %s501, %s517
      %p519 = scmp.eq.s32.totalorder %s45, 0
      %p520 = por %p518, %p519
      %s521 = ssub.s32 %s39, %s46
      %p522 = scmp.eq.s32.totalorder %s521, 0
      %s524 = sadd.s32 %s523, 1
      %s525 = scalar_select %p522, %s523, %s524
      %p528 = pneg %p522
      %p529 = scmp.eq.s32.totalorder %s39, 3
      %p530 = por %p528, %p529
      %p531 = scmp.ne.s32.totalorder %s523, %s526
      %p532 = scmp.eq.s32.totalorder %s39, 0
      %p533 = por %p531, %p532
      %p534 = scmp.ne.s32.totalorder %s523, %s526
      %p535 = scmp.eq.s32.totalorder %s44, 3
      %p536 = por %p534, %p535
      %p537 = scmp.ne.s32.totalorder %s526, %s527
      %p538 = scmp.eq.s32.totalorder %s44, 0
      %p539 = por %p537, %p538
      %p540 = scmp.ne.s32.totalorder %s526, %s527
      %p541 = scmp.eq.s32.totalorder %s45, 3
      %p542 = por %p540, %p541
      %p544 = scmp.ne.s32.totalorder %s527, %s543
      %p545 = scmp.eq.s32.totalorder %s45, 0
      %p546 = por %p544, %p545
      %s547 = ssub.s32 %s39, %s46
      %p548 = scmp.eq.s32.totalorder %s547, 0
      %s550 = sadd.s32 %s549, 1
      %s551 = scalar_select %p548, %s549, %s550
      %p554 = pneg %p548
      %p555 = scmp.eq.s32.totalorder %s39, 3
      %p556 = por %p554, %p555
      %p557 = scmp.ne.s32.totalorder %s549, %s552
      %p558 = scmp.eq.s32.totalorder %s39, 0
      %p559 = por %p557, %p558
      %p560 = scmp.ne.s32.totalorder %s549, %s552
      %p561 = scmp.eq.s32.totalorder %s44, 3
      %p562 = por %p560, %p561
      %p563 = scmp.ne.s32.totalorder %s552, %s553
      %p564 = scmp.eq.s32.totalorder %s44, 0
      %p565 = por %p563, %p564
      %p566 = scmp.ne.s32.totalorder %s552, %s553
      %p567 = scmp.eq.s32.totalorder %s45, 3
      %p568 = por %p566, %p567
      %p570 = scmp.ne.s32.totalorder %s553, %s569
      %p571 = scmp.eq.s32.totalorder %s45, 0
      %p572 = por %p570, %p571
      %s573 = ssub.s32 %s39, %s46
      %p574 = scmp.eq.s32.totalorder %s573, 0
      %s576 = sadd.s32 %s575, 1
      %s577 = scalar_select %p574, %s575, %s576
      %p580 = pneg %p574
      %p581 = scmp.eq.s32.totalorder %s39, 3
      %p582 = por %p580, %p581
      %p583 = scmp.ne.s32.totalorder %s575, %s578
      %p584 = scmp.eq.s32.totalorder %s39, 0
      %p585 = por %p583, %p584
      %p586 = scmp.ne.s32.totalorder %s575, %s578
      %p587 = scmp.eq.s32.totalorder %s44, 3
      %p588 = por %p586, %p587
      %p589 = scmp.ne.s32.totalorder %s578, %s579
      %p590 = scmp.eq.s32.totalorder %s44, 0
      %p591 = por %p589, %p590
      %p592 = scmp.ne.s32.totalorder %s578, %s579
      %p593 = scmp.eq.s32.totalorder %s45, 3
      %p594 = por %p592, %p593
      %p596 = scmp.ne.s32.totalorder %s579, %s595
      %p597 = scmp.eq.s32.totalorder %s45, 0
      %p598 = por %p596, %p597
      %s599 = ssub.s32 %s39, %s46
      %p600 = scmp.eq.s32.totalorder %s599, 0
      %s602 = sadd.s32 %s601, 1
      %s603 = scalar_select %p600, %s601, %s602
      %p606 = pneg %p600
      %p607 = scmp.eq.s32.totalorder %s39, 3
      %p608 = por %p606, %p607
      %p609 = scmp.ne.s32.totalorder %s601, %s604
      %p610 = scmp.eq.s32.totalorder %s39, 0
      %p611 = por %p609, %p610
      %p612 = scmp.ne.s32.totalorder %s601, %s604
      %p613 = scmp.eq.s32.totalorder %s44, 3
      %p614 = por %p612, %p613
      %p615 = scmp.ne.s32.totalorder %s604, %s605
      %p616 = scmp.eq.s32.totalorder %s44, 0
      %p617 = por %p615, %p616
      %p618 = scmp.ne.s32.totalorder %s604, %s605
      %p619 = scmp.eq.s32.totalorder %s45, 3
      %p620 = por %p618, %p619
      %p622 = scmp.ne.s32.totalorder %s605, %s621
      %p623 = scmp.eq.s32.totalorder %s45, 0
      %p624 = por %p622, %p623
      %s625 = ssub.s32 %s39, %s46
      %p626 = scmp.eq.s32.totalorder %s625, 0
      %s628 = sadd.s32 %s627, 1
      %s629 = scalar_select %p626, %s627, %s628
      %p632 = pneg %p626
      %p633 = scmp.eq.s32.totalorder %s39, 3
      %p634 = por %p632, %p633
      %p635 = scmp.ne.s32.totalorder %s627, %s630
      %p636 = scmp.eq.s32.totalorder %s39, 0
      %p637 = por %p635, %p636
      %p638 = scmp.ne.s32.totalorder %s627, %s630
      %p639 = scmp.eq.s32.totalorder %s44, 3
      %p640 = por %p638, %p639
      %p641 = scmp.ne.s32.totalorder %s630, %s631
      %p642 = scmp.eq.s32.totalorder %s44, 0
      %p643 = por %p641, %p642
      %p644 = scmp.ne.s32.totalorder %s630, %s631
      %p645 = scmp.eq.s32.totalorder %s45, 3
      %p646 = por %p644, %p645
      %p648 = scmp.ne.s32.totalorder %s631, %s647
      %p649 = scmp.eq.s32.totalorder %s45, 0
      %p650 = por %p648, %p649
      %s652 = sadd.s32 %s651, 1
      %p655 = scmp.eq.s32.totalorder %s39, 3
      %p656 = scmp.ne.s32.totalorder %s651, %s653
      %p657 = scmp.eq.s32.totalorder %s39, 0
      %p658 = por %p656, %p657
      %p659 = scmp.ne.s32.totalorder %s651, %s653
      %p660 = scmp.eq.s32.totalorder %s44, 3
      %p661 = por %p659, %p660
      %p662 = scmp.ne.s32.totalorder %s653, %s654
      %p663 = scmp.eq.s32.totalorder %s44, 0
      %p664 = por %p662, %p663
      %p665 = scmp.ne.s32.totalorder %s653, %s654
      %p666 = scmp.eq.s32.totalorder %s45, 3
      %p667 = por %p665, %p666
      %p669 = scmp.ne.s32.totalorder %s654, %s668
      %p670 = scmp.eq.s32.totalorder %s45, 0
      %p671 = por %p669, %p670
      %s673 = sadd.s32 %s672, 1
      %p676 = scmp.eq.s32.totalorder %s39, 3
      %p677 = scmp.ne.s32.totalorder %s672, %s674
      %p678 = scmp.eq.s32.totalorder %s39, 0
      %p679 = por %p677, %p678
      %p680 = scmp.ne.s32.totalorder %s672, %s674
      %p681 = scmp.eq.s32.totalorder %s44, 3
      %p682 = por %p680, %p681
      %p683 = scmp.ne.s32.totalorder %s674, %s675
      %p684 = scmp.eq.s32.totalorder %s44, 0
      %p685 = por %p683, %p684
      %p686 = scmp.ne.s32.totalorder %s674, %s675
      %p687 = scmp.eq.s32.totalorder %s45, 3
      %p688 = por %p686, %p687
      %p690 = scmp.ne.s32.totalorder %s675, %s689
      %p691 = scmp.eq.s32.totalorder %s45, 0
      %p692 = por %p690, %p691
      %s694 = sadd.s32 %s693, 1
      %p697 = scmp.eq.s32.totalorder %s39, 3
      %p698 = scmp.ne.s32.totalorder %s693, %s695
      %p699 = scmp.eq.s32.totalorder %s39, 0
      %p700 = por %p698, %p699
      %p701 = scmp.ne.s32.totalorder %s693, %s695
      %p702 = scmp.eq.s32.totalorder %s44, 3
      %p703 = por %p701, %p702
      %p704 = scmp.ne.s32.totalorder %s695, %s696
      %p705 = scmp.eq.s32.totalorder %s44, 0
      %p706 = por %p704, %p705
      %p707 = scmp.ne.s32.totalorder %s695, %s696
      %p708 = scmp.eq.s32.totalorder %s45, 3
      %p709 = por %p707, %p708
      %p711 = scmp.ne.s32.totalorder %s696, %s710
      %p712 = scmp.eq.s32.totalorder %s45, 0
      %p713 = por %p711, %p712
      %p714 = scmp.le.s32.totalorder 1, %s39
      %p715 = scmp.lt.s32.totalorder %s39, 5
      %p716 = pnand %p714, %p715
      %p717 = pneg %p716
      // Predicated region
      $region9: #{translation_forward.3} parent=5 // pred_check
        _
      $region10: #{translation_forward.3} parent=5 // pred_check_branch
        %719 = sbr.rel (%p716) target = $region12
      $region11: #{translation_forward.3} parent=5 // pred_region
        %s720 = ssub.s32 %s39, 1
        // Predicated region
        $region13: #{translation_forward.3} parent=11 // pred_check
          %p721 = pneg %p60
        $region14: #{translation_forward.3} parent=11 // pred_check_branch
          %723 = sbr.rel (%p721) target = $region16
        $region15: #{translation_forward.3} parent=11 // pred_region
          _
        $region16: #{translation_forward.3} parent=11 // pred_fallthru
          _
        // Predicated region
        $region17: #{translation_forward.3} parent=11 // pred_check
          %p724 = pneg %p81
        $region18: #{translation_forward.3} parent=11 // pred_check_branch
          %726 = sbr.rel (%p724) target = $region20
        $region19: #{translation_forward.3} parent=11 // pred_region
          _
        $region20: #{translation_forward.3} parent=11 // pred_fallthru
          _
        // Predicated region
        $region21: #{translation_forward.3} parent=11 // pred_check
          %p727 = pneg %p102
        $region22: #{translation_forward.3} parent=11 // pred_check_branch
          %729 = sbr.rel (%p727) target = $region24
        $region23: #{translation_forward.3} parent=11 // pred_region
          _
        $region24: #{translation_forward.3} parent=11 // pred_fallthru
          _
        // Predicated region
        $region25: #{translation_forward.3} parent=11 // pred_check
          %p730 = pneg %p123
        $region26: #{translation_forward.3} parent=11 // pred_check_branch
          %732 = sbr.rel (%p730) target = $region28
        $region27: #{translation_forward.3} parent=11 // pred_region
          _
        $region28: #{translation_forward.3} parent=11 // pred_fallthru
          _
        // Predicated region
        $region29: #{translation_forward.3} parent=11 // pred_check
          %p733 = pneg %p664
        $region30: #{translation_forward.3} parent=11 // pred_check_branch
          %735 = sbr.rel (%p733) target = $region32
        $region31: #{translation_forward.3} parent=11 // pred_region
          _
        $region32: #{translation_forward.3} parent=11 // pred_fallthru
          _
        // Predicated region
        $region33: #{translation_forward.3} parent=11 // pred_check
          %p736 = pneg %p685
        $region34: #{translation_forward.3} parent=11 // pred_check_branch
          %738 = sbr.rel (%p736) target = $region36
        $region35: #{translation_forward.3} parent=11 // pred_region
          _
        $region36: #{translation_forward.3} parent=11 // pred_fallthru
          _
      $region12: #{translation_forward.3} parent=5 // pred_fallthru
        _
      %p739 = scmp.lt.s32.totalorder %s39, 4
      // Predicated region
      $region37: #{translation_forward.3} parent=5 // pred_check
        %p740 = pneg %p739
      $region38: #{translation_forward.3} parent=5 // pred_check_branch
        %742 = sbr.rel (%p740) target = $region40
      $region39: #{translation_forward.3} parent=5 // pred_region
        // Predicated region
        $region41: #{translation_forward.3} parent=39 // pred_check
          %p743 = pneg %p143
        $region42: #{translation_forward.3} parent=39 // pred_check_branch
          %745 = sbr.rel (%p743) target = $region44
        $region43: #{translation_forward.3} parent=39 // pred_region
          %p746 = scmp.lt.s32.totalorder %s39, 3
          %s747 = scalar_select %p746, %s39, 3
          %s748 = smul.addr %s747, 48
          %s749 = smul.addr %s748, 4
          %s750 = scalar_lea.vmem %s4, %s749
        $region44: #{translation_forward.3} parent=39 // pred_fallthru
          _
        // Predicated region
        $region45: #{translation_forward.3} parent=39 // pred_check
          %p751 = pneg %p169
        $region46: #{translation_forward.3} parent=39 // pred_check_branch
          %753 = sbr.rel (%p751) target = $region48
        $region47: #{translation_forward.3} parent=39 // pred_region
          %p754 = scmp.lt.s32.totalorder %s39, 3
          %s755 = scalar_select %p754, %s39, 3
          %s756 = smul.addr %s755, 3
          %s757 = scalar_lea.vmem %s5, %s756
        $region48: #{translation_forward.3} parent=39 // pred_fallthru
          _
        // Predicated region
        $region49: #{translation_forward.3} parent=39 // pred_check
          %p758 = pneg %p195
        $region50: #{translation_forward.3} parent=39 // pred_check_branch
          %760 = sbr.rel (%p758) target = $region52
        $region51: #{translation_forward.3} parent=39 // pred_region
          %p761 = scmp.lt.s32.totalorder %s39, 3
          %s762 = scalar_select %p761, %s39, 3
          %s763 = smul.addr %s762, 16
          %s764 = smul.addr %s763, 4
          %s765 = scalar_lea.vmem %s6, %s764
        $region52: #{translation_forward.3} parent=39 // pred_fallthru
          _
        // Predicated region
        $region53: #{translation_forward.3} parent=39 // pred_check
          %p766 = pneg %p221
        $region54: #{translation_forward.3} parent=39 // pred_check_branch
          %768 = sbr.rel (%p766) target = $region56
        $region55: #{translation_forward.3} parent=39 // pred_region
          %p769 = scmp.lt.s32.totalorder %s39, 3
          %s770 = scalar_select %p769, %s39, 3
          %s771 = scalar_lea.vmem %s7, %s770
        $region56: #{translation_forward.3} parent=39 // pred_fallthru
          _
        // Predicated region
        $region57: #{translation_forward.3} parent=39 // pred_check
          %p772 = pneg %p247
        $region58: #{translation_forward.3} parent=39 // pred_check_branch
          %774 = sbr.rel (%p772) target = $region60
        $region59: #{translation_forward.3} parent=39 // pred_region
          %p775 = scmp.lt.s32.totalorder %s39, 3
          %s776 = scalar_select %p775, %s39, 3
          %s777 = scalar_lea.vmem %s8, %s776
        $region60: #{translation_forward.3} parent=39 // pred_fallthru
          _
        // Predicated region
        $region61: #{translation_forward.3} parent=39 // pred_check
          %p778 = pneg %p273
        $region62: #{translation_forward.3} parent=39 // pred_check_branch
          %780 = sbr.rel (%p778) target = $region64
        $region63: #{translation_forward.3} parent=39 // pred_region
          %p781 = scmp.lt.s32.totalorder %s39, 3
          %s782 = scalar_select %p781, %s39, 3
          %s783 = scalar_lea.vmem %s9, %s782
        $region64: #{translation_forward.3} parent=39 // pred_fallthru
          _
        // Predicated region
        $region65: #{translation_forward.3} parent=39 // pred_check
          %p784 = pneg %p299
        $region66: #{translation_forward.3} parent=39 // pred_check_branch
          %786 = sbr.rel (%p784) target = $region68
        $region67: #{translation_forward.3} parent=39 // pred_region
          %s787 = sand.u32 %s289, 1
          %s788 = scalar_lea.sflag [#allocation4], %s787
          %s789 = sand.u32 %s289, 1
          %s790 = smul.addr %s789, 64
          %s791 = scalar_lea.vmem [#allocation3], %s790
          %s793 = ssub.s32 1024, 1024
          %794 = vsyncadd %s788, %s793
          %s795 = smul.addr %s39, 16
          %s796 = smul.addr %s795, 64
          %s797 = scalar_lea.hbm %s10, %s796
          %s798 = sshll.u32 %s791, 4
          %s799 = int_to_ptr.vmem [resolvable:$true] %s798
          %804 = dma.hbm_to_vmem [thread:$0]  %s797, 1024, %s799, %s788, 64, 64, 4
        $region68: #{translation_forward.3} parent=39 // pred_fallthru
          _
        // Predicated region
        $region69: #{translation_forward.3} parent=39 // pred_check
          %p805 = pneg %p325
        $region70: #{translation_forward.3} parent=39 // pred_check_branch
          %807 = sbr.rel (%p805) target = $region72
        $region71: #{translation_forward.3} parent=39 // pred_region
          %p808 = scmp.lt.s32.totalorder %s39, 3
          %s809 = scalar_select %p808, %s39, 3
          %s810 = scalar_lea.vmem %s11, %s809
        $region72: #{translation_forward.3} parent=39 // pred_fallthru
          _
        // Predicated region
        $region73: #{translation_forward.3} parent=39 // pred_check
          %p811 = pneg %p351
        $region74: #{translation_forward.3} parent=39 // pred_check_branch
          %813 = sbr.rel (%p811) target = $region76
        $region75: #{translation_forward.3} parent=39 // pred_region
          %p814 = scmp.lt.s32.totalorder %s39, 3
          %s815 = scalar_select %p814, %s39, 3
          %s816 = smul.addr %s815, 32
          %s817 = smul.addr %s816, 4
          %s818 = scalar_lea.vmem %s12, %s817
        $region76: #{translation_forward.3} parent=39 // pred_fallthru
          _
        // Predicated region
        $region77: #{translation_forward.3} parent=39 // pred_check
          %p819 = pneg %p377
        $region78: #{translation_forward.3} parent=39 // pred_check_branch
          %821 = sbr.rel (%p819) target = $region80
        $region79: #{translation_forward.3} parent=39 // pred_region
          %p822 = scmp.lt.s32.totalorder %s39, 3
          %s823 = scalar_select %p822, %s39, 3
          %s824 = smul.addr %s823, 2
          %s825 = scalar_lea.vmem %s13, %s824
        $region80: #{translation_forward.3} parent=39 // pred_fallthru
          _
        // Predicated region
        $region81: #{translation_forward.3} parent=39 // pred_check
          %p826 = pneg %p403
        $region82: #{translation_forward.3} parent=39 // pred_check_branch
          %828 = sbr.rel (%p826) target = $region84
        $region83: #{translation_forward.3} parent=39 // pred_region
          %s829 = sand.u32 %s39, 1
          %s830 = scalar_lea.sflag [#allocation7], %s829
          %s831 = sand.u32 %s393, 1
          %s832 = smul.addr %s831, 64
          %s833 = scalar_lea.vmem [#allocation6], %s832
          %s835 = ssub.s32 1024, 1024
          %836 = vsyncadd %s830, %s835
          %s837 = smul.addr %s39, 16
          %s838 = smul.addr %s837, 64
          %s839 = scalar_lea.hbm %s14, %s838
          %s840 = sshll.u32 %s833, 4
          %s841 = int_to_ptr.vmem [resolvable:$true] %s840
          %846 = dma.hbm_to_vmem [thread:$0]  %s839, 1024, %s841, %s830, 64, 64, 4
        $region84: #{translation_forward.3} parent=39 // pred_fallthru
          _
        // Predicated region
        $region85: #{translation_forward.3} parent=39 // pred_check
          %p847 = pneg %p429
        $region86: #{translation_forward.3} parent=39 // pred_check_branch
          %849 = sbr.rel (%p847) target = $region88
        $region87: #{translation_forward.3} parent=39 // pred_region
          %p850 = scmp.lt.s32.totalorder %s39, 3
          %s851 = scalar_select %p850, %s39, 3
          %s852 = scalar_lea.vmem %s15, %s851
        $region88: #{translation_forward.3} parent=39 // pred_fallthru
          _
        // Predicated region
        $region89: #{translation_forward.3} parent=39 // pred_check
          %p853 = pneg %p455
        $region90: #{translation_forward.3} parent=39 // pred_check_branch
          %855 = sbr.rel (%p853) target = $region92
        $region91: #{translation_forward.3} parent=39 // pred_region
          %p856 = scmp.lt.s32.totalorder %s39, 3
          %s857 = scalar_select %p856, %s39, 3
          %s858 = scalar_lea.vmem %s16, %s857
        $region92: #{translation_forward.3} parent=39 // pred_fallthru
          _
        // Predicated region
        $region93: #{translation_forward.3} parent=39 // pred_check
          %p859 = pneg %p481
        $region94: #{translation_forward.3} parent=39 // pred_check_branch
          %861 = sbr.rel (%p859) target = $region96
        $region95: #{translation_forward.3} parent=39 // pred_region
          %p862 = scmp.lt.s32.totalorder %s39, 3
          %s863 = scalar_select %p862, %s39, 3
          %s864 = scalar_lea.vmem %s17, %s863
        $region96: #{translation_forward.3} parent=39 // pred_fallthru
          _
        // Predicated region
        $region97: #{translation_forward.3} parent=39 // pred_check
          %p865 = pneg %p507
        $region98: #{translation_forward.3} parent=39 // pred_check_branch
          %867 = sbr.rel (%p865) target = $region100
        $region99: #{translation_forward.3} parent=39 // pred_region
          %p868 = scmp.lt.s32.totalorder %s39, 3
          %s869 = scalar_select %p868, %s39, 3
          %s870 = smul.addr %s869, 32
          %s871 = smul.addr %s870, 4
          %s872 = scalar_lea.vmem %s18, %s871
        $region100: #{translation_forward.3} parent=39 // pred_fallthru
          _
        // Predicated region
        $region101: #{translation_forward.3} parent=39 // pred_check
          %p873 = pneg %p533
        $region102: #{translation_forward.3} parent=39 // pred_check_branch
          %875 = sbr.rel (%p873) target = $region104
        $region103: #{translation_forward.3} parent=39 // pred_region
          %p876 = scmp.lt.s32.totalorder %s39, 3
          %s877 = scalar_select %p876, %s39, 3
          %s878 = smul.addr %s877, 2
          %s879 = scalar_lea.vmem %s19, %s878
        $region104: #{translation_forward.3} parent=39 // pred_fallthru
          _
        // Predicated region
        $region105: #{translation_forward.3} parent=39 // pred_check
          %p880 = pneg %p559
        $region106: #{translation_forward.3} parent=39 // pred_check_branch
          %882 = sbr.rel (%p880) target = $region108
        $region107: #{translation_forward.3} parent=39 // pred_region
          %s883 = sand.u32 %s39, 1
          %s884 = scalar_lea.sflag [#allocation7], %s883
          %s885 = sand.u32 %s549, 1
          %s886 = smul.addr %s885, 128
          %s887 = scalar_lea.vmem [#allocation8], %s886
          %s889 = ssub.s32 2048, 2048
          %890 = vsyncadd %s884, %s889
          %s891 = smul.addr %s39, 32
          %s892 = smul.addr %s891, 64
          %s893 = scalar_lea.hbm %s20, %s892
          %s894 = sshll.u32 %s887, 4
          %s895 = int_to_ptr.vmem [resolvable:$true] %s894
          %900 = dma.hbm_to_vmem [thread:$0]  %s893, 2048, %s895, %s884, 64, 64, 4
        $region108: #{translation_forward.3} parent=39 // pred_fallthru
          _
        // Predicated region
        $region109: #{translation_forward.3} parent=39 // pred_check
          %p901 = pneg %p585
        $region110: #{translation_forward.3} parent=39 // pred_check_branch
          %903 = sbr.rel (%p901) target = $region112
        $region111: #{translation_forward.3} parent=39 // pred_region
          %p904 = scmp.lt.s32.totalorder %s39, 3
          %s905 = scalar_select %p904, %s39, 3
          %s906 = scalar_lea.vmem %s21, %s905
        $region112: #{translation_forward.3} parent=39 // pred_fallthru
          _
        // Predicated region
        $region113: #{translation_forward.3} parent=39 // pred_check
          %p907 = pneg %p611
        $region114: #{translation_forward.3} parent=39 // pred_check_branch
          %909 = sbr.rel (%p907) target = $region116
        $region115: #{translation_forward.3} parent=39 // pred_region
          %p910 = scmp.lt.s32.totalorder %s39, 3
          %s911 = scalar_select %p910, %s39, 3
          %s912 = scalar_lea.vmem %s22, %s911
        $region116: #{translation_forward.3} parent=39 // pred_fallthru
          _
        // Predicated region
        $region117: #{translation_forward.3} parent=39 // pred_check
          %p913 = pneg %p637
        $region118: #{translation_forward.3} parent=39 // pred_check_branch
          %915 = sbr.rel (%p913) target = $region120
        $region119: #{translation_forward.3} parent=39 // pred_region
          %p916 = scmp.lt.s32.totalorder %s39, 3
          %s917 = scalar_select %p916, %s39, 3
          %s918 = scalar_lea.vmem %s23, %s917
        $region120: #{translation_forward.3} parent=39 // pred_fallthru
          _
      $region40: #{translation_forward.3} parent=5 // pred_fallthru
        _
      %p919 = scmp.le.s32.totalorder 1, %s39
      %p920 = scmp.lt.s32.totalorder %s39, 5
      %p921 = pnand %p919, %p920
      %p922 = pneg %p921
      // Predicated region
      $region121: #{translation_forward.3} parent=5 // pred_check
        _
      $region122: #{translation_forward.3} parent=5 // pred_check_branch
        %924 = sbr.rel (%p921) target = $region124
      $region123: #{translation_forward.3} parent=5 // pred_region
        %s925 = ssub.s32 %s39, 1
        %s926 = sand.u32 %s292, 1
        %s927 = scalar_lea.sflag [#allocation4], %s926
        %s928 = sand.u32 %s292, 1
        %s929 = smul.addr %s928, 64
        %s930 = scalar_lea.vmem [#allocation3], %s929
        // Predicated region
        $region125: #{translation_forward.3} parent=123 // pred_check
          %p931 = pneg %p305
        $region126: #{translation_forward.3} parent=123 // pred_check_branch
          %933 = sbr.rel (%p931) target = $region128
        $region127: #{translation_forward.3} parent=123 // pred_region
          %934 = dma.done %s927, 1024
        $region128: #{translation_forward.3} parent=123 // pred_fallthru
          _
        %s935 = sand.u32 %s44, 1
        %s936 = scalar_lea.sflag [#allocation7], %s935
        %s937 = sand.u32 %s396, 1
        %s938 = smul.addr %s937, 64
        %s939 = scalar_lea.vmem [#allocation6], %s938
        // Predicated region
        $region129: #{translation_forward.3} parent=123 // pred_check
          %p940 = pneg %p409
        $region130: #{translation_forward.3} parent=123 // pred_check_branch
          %942 = sbr.rel (%p940) target = $region132
        $region131: #{translation_forward.3} parent=123 // pred_region
          %943 = dma.done %s936, 1024
        $region132: #{translation_forward.3} parent=123 // pred_fallthru
          _
        %s944 = sand.u32 %s44, 1
        %s945 = scalar_lea.sflag [#allocation7], %s944
        %s946 = sand.u32 %s552, 1
        %s947 = smul.addr %s946, 128
        %s948 = scalar_lea.vmem [#allocation8], %s947
        // Predicated region
        $region133: #{translation_forward.3} parent=123 // pred_check
          %p949 = pneg %p565
        $region134: #{translation_forward.3} parent=123 // pred_check_branch
          %951 = sbr.rel (%p949) target = $region136
        $region135: #{translation_forward.3} parent=123 // pred_region
          %952 = dma.done %s945, 2048
        $region136: #{translation_forward.3} parent=123 // pred_fallthru
          _
        %p953 = pneg %p60
        %p954 = pneg %p57
        %p955 = pneg %p81
        %p956 = pneg %p78
        %p957 = pneg %p102
        %p958 = pneg %p99
        %p959 = pneg %p123
        %p960 = pneg %p120
        %p961 = scmp.lt.s32.totalorder %s44, 3
        %s962 = scalar_select %p961, %s44, 3
        %s963 = smul.addr %s962, 48
        %s964 = smul.addr %s963, 4
        %s965 = scalar_lea.vmem %s4, %s964
        %p966 = pneg %p149
        %p967 = pneg %p146
        %p968 = scmp.lt.s32.totalorder %s44, 3
        %s969 = scalar_select %p968, %s44, 3
        %s970 = smul.addr %s969, 3
        %s971 = scalar_lea.vmem %s5, %s970
        %p972 = pneg %p175
        %p973 = pneg %p172
        %p974 = scmp.lt.s32.totalorder %s44, 3
        %s975 = scalar_select %p974, %s44, 3
        %s976 = smul.addr %s975, 16
        %s977 = smul.addr %s976, 4
        %s978 = scalar_lea.vmem %s6, %s977
        %p979 = pneg %p201
        %p980 = pneg %p198
        %p981 = scmp.lt.s32.totalorder %s44, 3
        %s982 = scalar_select %p981, %s44, 3
        %s983 = scalar_lea.vmem %s7, %s982
        %p984 = pneg %p227
        %p985 = pneg %p224
        %p986 = scmp.lt.s32.totalorder %s44, 3
        %s987 = scalar_select %p986, %s44, 3
        %s988 = scalar_lea.vmem %s8, %s987
        %p989 = pneg %p253
        %p990 = pneg %p250
        %p991 = scmp.lt.s32.totalorder %s44, 3
        %s992 = scalar_select %p991, %s44, 3
        %s993 = scalar_lea.vmem %s9, %s992
        %p994 = pneg %p279
        %p995 = pneg %p276
        %s996 = sand.u32 %s292, 1
        %s997 = scalar_lea.sflag [#allocation4], %s996
        %s998 = sand.u32 %s292, 1
        %s999 = smul.addr %s998, 64
        %s1000 = scalar_lea.vmem [#allocation3], %s999
        %p1001 = pneg %p305
        %p1002 = pneg %p302
        %p1003 = scmp.lt.s32.totalorder %s44, 3
        %s1004 = scalar_select %p1003, %s44, 3
        %s1005 = scalar_lea.vmem %s11, %s1004
        %p1006 = pneg %p331
        %p1007 = pneg %p328
        %p1008 = scmp.lt.s32.totalorder %s44, 3
        %s1009 = scalar_select %p1008, %s44, 3
        %s1010 = smul.addr %s1009, 32
        %s1011 = smul.addr %s1010, 4
        %s1012 = scalar_lea.vmem %s12, %s1011
        %p1013 = pneg %p357
        %p1014 = pneg %p354
        %p1015 = scmp.lt.s32.totalorder %s44, 3
        %s1016 = scalar_select %p1015, %s44, 3
        %s1017 = smul.addr %s1016, 2
        %s1018 = scalar_lea.vmem %s13, %s1017
        %p1019 = pneg %p383
        %p1020 = pneg %p380
        %s1021 = sand.u32 %s44, 1
        %s1022 = scalar_lea.sflag [#allocation7], %s1021
        %s1023 = sand.u32 %s396, 1
        %s1024 = smul.addr %s1023, 64
        %s1025 = scalar_lea.vmem [#allocation6], %s1024
        %p1026 = pneg %p409
        %p1027 = pneg %p406
        %p1028 = scmp.lt.s32.totalorder %s44, 3
        %s1029 = scalar_select %p1028, %s44, 3
        %s1030 = scalar_lea.vmem %s15, %s1029
        %p1031 = pneg %p435
        %p1032 = pneg %p432
        %p1033 = scmp.lt.s32.totalorder %s44, 3
        %s1034 = scalar_select %p1033, %s44, 3
        %s1035 = scalar_lea.vmem %s16, %s1034
        %p1036 = pneg %p461
        %p1037 = pneg %p458
        %p1038 = scmp.lt.s32.totalorder %s44, 3
        %s1039 = scalar_select %p1038, %s44, 3
        %s1040 = scalar_lea.vmem %s17, %s1039
        %p1041 = pneg %p487
        %p1042 = pneg %p484
        %p1043 = scmp.lt.s32.totalorder %s44, 3
        %s1044 = scalar_select %p1043, %s44, 3
        %s1045 = smul.addr %s1044, 32
        %s1046 = smul.addr %s1045, 4
        %s1047 = scalar_lea.vmem %s18, %s1046
        %p1048 = pneg %p513
        %p1049 = pneg %p510
        %p1050 = scmp.lt.s32.totalorder %s44, 3
        %s1051 = scalar_select %p1050, %s44, 3
        %s1052 = smul.addr %s1051, 2
        %s1053 = scalar_lea.vmem %s19, %s1052
        %p1054 = pneg %p539
        %p1055 = pneg %p536
        %s1056 = sand.u32 %s44, 1
        %s1057 = scalar_lea.sflag [#allocation7], %s1056
        %s1058 = sand.u32 %s552, 1
        %s1059 = smul.addr %s1058, 128
        %s1060 = scalar_lea.vmem [#allocation8], %s1059
        %p1061 = pneg %p565
        %p1062 = pneg %p562
        %p1063 = scmp.lt.s32.totalorder %s44, 3
        %s1064 = scalar_select %p1063, %s44, 3
        %s1065 = scalar_lea.vmem %s21, %s1064
        %p1066 = pneg %p591
        %p1067 = pneg %p588
        %p1068 = scmp.lt.s32.totalorder %s44, 3
        %s1069 = scalar_select %p1068, %s44, 3
        %s1070 = scalar_lea.vmem %s22, %s1069
        %p1071 = pneg %p617
        %p1072 = pneg %p614
        %p1073 = scmp.lt.s32.totalorder %s44, 3
        %s1074 = scalar_select %p1073, %s44, 3
        %s1075 = scalar_lea.vmem %s23, %s1074
        %p1076 = pneg %p643
        %p1077 = pneg %p640
        %p1078 = pneg %p664
        %p1079 = pneg %p661
        %p1080 = pneg %p685
        %p1081 = pneg %p682
        %p1082 = pneg %p706
        %p1083 = pneg %p703
        %p1084 = scmp.lt.s32.totalorder %s44, 3
        %s1085 = scalar_select %p1084, %s44, 3
        %s1086 = smul.addr %s1085, 48
        %s1087 = smul.addr %s1086, 4
        %s1088 = scalar_lea.vmem %s4, %s1087
        %p1089 = scmp.lt.s32.totalorder %s44, 3
        %s1090 = scalar_select %p1089, %s44, 3
        %s1091 = smul.addr %s1090, 3
        %s1092 = scalar_lea.vmem %s5, %s1091
        %p1093 = scmp.lt.s32.totalorder %s44, 3
        %s1094 = scalar_select %p1093, %s44, 3
        %s1095 = smul.addr %s1094, 16
        %s1096 = smul.addr %s1095, 4
        %s1097 = scalar_lea.vmem %s6, %s1096
        %p1098 = scmp.lt.s32.totalorder %s44, 3
        %s1099 = scalar_select %p1098, %s44, 3
        %s1100 = scalar_lea.vmem %s7, %s1099
        %p1101 = scmp.lt.s32.totalorder %s44, 3
        %s1102 = scalar_select %p1101, %s44, 3
        %s1103 = scalar_lea.vmem %s8, %s1102
        %p1104 = scmp.lt.s32.totalorder %s44, 3
        %s1105 = scalar_select %p1104, %s44, 3
        %s1106 = scalar_lea.vmem %s9, %s1105
        %p1107 = scmp.lt.s32.totalorder %s44, 3
        %s1108 = scalar_select %p1107, %s44, 3
        %s1109 = scalar_lea.vmem %s11, %s1108
        %p1110 = scmp.lt.s32.totalorder %s44, 3
        %s1111 = scalar_select %p1110, %s44, 3
        %s1112 = smul.addr %s1111, 32
        %s1113 = smul.addr %s1112, 4
        %s1114 = scalar_lea.vmem %s12, %s1113
        %p1115 = scmp.lt.s32.totalorder %s44, 3
        %s1116 = scalar_select %p1115, %s44, 3
        %s1117 = smul.addr %s1116, 2
        %s1118 = scalar_lea.vmem %s13, %s1117
        %p1119 = scmp.lt.s32.totalorder %s44, 3
        %s1120 = scalar_select %p1119, %s44, 3
        %s1121 = scalar_lea.vmem %s15, %s1120
        %p1122 = scmp.lt.s32.totalorder %s44, 3
        %s1123 = scalar_select %p1122, %s44, 3
        %s1124 = scalar_lea.vmem %s16, %s1123
        %p1125 = scmp.lt.s32.totalorder %s44, 3
        %s1126 = scalar_select %p1125, %s44, 3
        %s1127 = scalar_lea.vmem %s17, %s1126
        %p1128 = scmp.lt.s32.totalorder %s44, 3
        %s1129 = scalar_select %p1128, %s44, 3
        %s1130 = smul.addr %s1129, 32
        %s1131 = smul.addr %s1130, 4
        %s1132 = scalar_lea.vmem %s18, %s1131
        %p1133 = scmp.lt.s32.totalorder %s44, 3
        %s1134 = scalar_select %p1133, %s44, 3
        %s1135 = smul.addr %s1134, 2
        %s1136 = scalar_lea.vmem %s19, %s1135
        %p1137 = scmp.lt.s32.totalorder %s44, 3
        %s1138 = scalar_select %p1137, %s44, 3
        %s1139 = scalar_lea.vmem %s21, %s1138
        %p1140 = scmp.lt.s32.totalorder %s44, 3
        %s1141 = scalar_select %p1140, %s44, 3
        %s1142 = scalar_lea.vmem %s22, %s1141
        %p1143 = scmp.lt.s32.totalorder %s44, 3
        %s1144 = scalar_select %p1143, %s44, 3
        %s1145 = scalar_lea.vmem %s23, %s1144
        %p1147 = scmp.eq.s32.totalorder %s44, 0
        // Predicated region
        $region137: #{translation_forward.3} parent=123 // pred_check
          %p1148 = pneg %p1147
        $region138: #{translation_forward.3} parent=123 // pred_check_branch
          %1150 = sbr.rel (%p1148) target = $region140
        $region139: #{translation_forward.3} parent=123 // pred_region
          %v1151 = vld [vmem:[%s0] sm:$0xff]
          %v1152 = vld [vmem:[%s0 + $0x8] sm:$0xff]
          %1153 = vst [vmem:[#allocation2] sm:$0xff] %v1151
          %1154 = vst [vmem:[#allocation2 + $0x8] sm:$0xff] %v1152
        $region140: #{translation_forward.3} parent=123 // pred_fallthru
          _
        %v1155 = vld [vmem:[#allocation2] sm:$0xff]
        %v1156 = vld [vmem:[#allocation2 + $0x8] sm:$0xff]
        %v1157 = vld [vmem:[%s1] sm:$0xf]
        %v1158 = vld [vmem:[%s1 + $0x4] sm:$0xf]
        %v1159 = vld [vmem:[%s1 + $0x8] sm:$0x3]
        %v1160 = vpack.c.bf16 %v1156, %v1155
        %v1161 = vld [vmem:[%s1088] sm:$0xff]
        %v1162 = vld [vmem:[%s1088 + $0x8] sm:$0xf]
        %v1163 = vld [vmem:[%s1088 + $0xc] sm:$0xff]
        %v1164 = vld [vmem:[%s1088 + $0x14] sm:$0xf]
        %v1165 = vld [vmem:[%s1088 + $0x18] sm:$0xff]
        %v1166 = vld [vmem:[%s1088 + $0x20] sm:$0xf]
        %v1167 = vld [vmem:[%s1088 + $0x24] sm:$0xff]
        %v1168 = vld [vmem:[%s1088 + $0x2c] sm:$0xf]
        %v1169 = vld [vmem:[%s1088 + $0x30] sm:$0xff]
        %v1170 = vld [vmem:[%s1088 + $0x38] sm:$0xf]
        %v1171 = vld [vmem:[%s1088 + $0x3c] sm:$0xff]
        %v1172 = vld [vmem:[%s1088 + $0x44] sm:$0xf]
        %v1173 = vld [vmem:[%s1088 + $0x48] sm:$0xff]
        %v1174 = vld [vmem:[%s1088 + $0x50] sm:$0xf]
        %v1175 = vld [vmem:[%s1088 + $0x54] sm:$0xff]
        %v1176 = vld [vmem:[%s1088 + $0x5c] sm:$0xf]
        %v1177 = vld [vmem:[%s1088 + $0x60] sm:$0xff]
        %v1178 = vld [vmem:[%s1088 + $0x68] sm:$0xf]
        %v1179 = vld [vmem:[%s1088 + $0x6c] sm:$0xff]
        %v1180 = vld [vmem:[%s1088 + $0x74] sm:$0xf]
        %v1181 = vld [vmem:[%s1088 + $0x78] sm:$0xff]
        %v1182 = vld [vmem:[%s1088 + $0x80] sm:$0xf]
        %v1183 = vld [vmem:[%s1088 + $0x84] sm:$0xff]
        %v1184 = vld [vmem:[%s1088 + $0x8c] sm:$0xf]
        %v1185 = vld [vmem:[%s1088 + $0x90] sm:$0xff]
        %v1186 = vld [vmem:[%s1088 + $0x98] sm:$0xf]
        %v1187 = vld [vmem:[%s1088 + $0x9c] sm:$0xff]
        %v1188 = vld [vmem:[%s1088 + $0xa4] sm:$0xf]
        %v1189 = vld [vmem:[%s1088 + $0xa8] sm:$0xff]
        %v1190 = vld [vmem:[%s1088 + $0xb0] sm:$0xf]
        %v1191 = vld [vmem:[%s1088 + $0xb4] sm:$0xff]
        %v1192 = vld [vmem:[%s1088 + $0xbc] sm:$0xf]
        %v1193 = vld [vmem:[%s1092] sm:$0x7]
        %v1195 = vlaneseq
        %v1196 = vshrl.u32 %v1195, 7
        %v1197 = vsub.s32 0, %v1196
        %v1198 = vrot.slane %v1193, %v1197
        %v1199 = vlaneseq
        %v1200 = vshrl.u32 %v1199, 7
        %v1201 = vsub.s32 1, %v1200
        %v1202 = vrot.slane %v1193, %v1201
        %v1203 = vlaneseq
        %v1204 = vshrl.u32 %v1203, 7
        %v1205 = vsub.s32 2, %v1204
        %v1206 = vrot.slane %v1193, %v1205
        %v1242 = vunpack.c.l.b16 %v1161
        %v1243 = vunpack.c.h.b16 %v1161
        %v1244 = vunpack.c.l.b16 %v1162
        %v1245 = vunpack.c.l.b16 %v1163
        %v1246 = vunpack.c.h.b16 %v1163
        %v1247 = vunpack.c.l.b16 %v1164
        %v1248 = vunpack.c.l.b16 %v1165
        %v1249 = vunpack.c.h.b16 %v1165
        %v1250 = vunpack.c.l.b16 %v1166
        %v1251 = vunpack.c.l.b16 %v1167
        %v1252 = vunpack.c.h.b16 %v1167
        %v1253 = vunpack.c.l.b16 %v1168
        %v1254 = vunpack.c.l.b16 %v1169
        %v1255 = vunpack.c.h.b16 %v1169
        %v1256 = vunpack.c.l.b16 %v1170
        %v1257 = vunpack.c.l.b16 %v1171
        %v1258 = vunpack.c.h.b16 %v1171
        %v1259 = vunpack.c.l.b16 %v1172
        %v1260 = vunpack.c.l.b16 %v1173
        %v1261 = vunpack.c.h.b16 %v1173
        %v1262 = vunpack.c.l.b16 %v1174
        %v1263 = vunpack.c.l.b16 %v1175
        %v1264 = vunpack.c.h.b16 %v1175
        %v1265 = vunpack.c.l.b16 %v1176
        %v1266 = vunpack.c.l.b16 %v1177
        %v1267 = vunpack.c.h.b16 %v1177
        %v1268 = vunpack.c.l.b16 %v1178
        %v1269 = vunpack.c.l.b16 %v1179
        %v1270 = vunpack.c.h.b16 %v1179
        %v1271 = vunpack.c.l.b16 %v1180
        %v1272 = vunpack.c.l.b16 %v1181
        %v1273 = vunpack.c.h.b16 %v1181
        %v1274 = vunpack.c.l.b16 %v1182
        %v1275 = vunpack.c.l.b16 %v1183
        %v1276 = vunpack.c.h.b16 %v1183
        %v1277 = vunpack.c.l.b16 %v1184
        %v1278 = vunpack.c.l.b16 %v1185
        %v1279 = vunpack.c.h.b16 %v1185
        %v1280 = vunpack.c.l.b16 %v1186
        %v1281 = vunpack.c.l.b16 %v1187
        %v1282 = vunpack.c.h.b16 %v1187
        %v1283 = vunpack.c.l.b16 %v1188
        %v1284 = vunpack.c.l.b16 %v1189
        %v1285 = vunpack.c.h.b16 %v1189
        %v1286 = vunpack.c.l.b16 %v1190
        %v1287 = vunpack.c.l.b16 %v1191
        %v1288 = vunpack.c.h.b16 %v1191
        %v1289 = vunpack.c.l.b16 %v1192
        %v1290 = vpack.c.b16 %v1245, %v1242
        %v1291 = vpack.c.b16 %v1246, %v1243
        %v1292 = vpack.c.b16 %v1247, %v1244
        %v1293 = vpack.c.b16 %v1251, %v1248
        %v1294 = vpack.c.b16 %v1252, %v1249
        %v1295 = vpack.c.b16 %v1253, %v1250
        %v1296 = vpack.c.b16 %v1257, %v1254
        %v1297 = vpack.c.b16 %v1258, %v1255
        %v1298 = vpack.c.b16 %v1259, %v1256
        %v1299 = vpack.c.b16 %v1263, %v1260
        %v1300 = vpack.c.b16 %v1264, %v1261
        %v1301 = vpack.c.b16 %v1265, %v1262
        %v1302 = vpack.c.b16 %v1269, %v1266
        %v1303 = vpack.c.b16 %v1270, %v1267
        %v1304 = vpack.c.b16 %v1271, %v1268
        %v1305 = vpack.c.b16 %v1275, %v1272
        %v1306 = vpack.c.b16 %v1276, %v1273
        %v1307 = vpack.c.b16 %v1277, %v1274
        %v1308 = vpack.c.b16 %v1281, %v1278
        %v1309 = vpack.c.b16 %v1282, %v1279
        %v1310 = vpack.c.b16 %v1283, %v1280
        %v1311 = vpack.c.b16 %v1287, %v1284
        %v1312 = vpack.c.b16 %v1288, %v1285
        %v1313 = vpack.c.b16 %v1289, %v1286
        %1338 = vmatprep.subr.bf16.mxu0 %v1312
        %1339 = vmatpush1.bf16.msra.mxu0 %v1311
        %1340 = vmatprep.subr.bf16.mxu0 %v1309
        %1341 = vmatpush1.bf16.msra.mxu0 %v1308
        %1342 = vmatprep.subr.bf16.mxu0 %v1306
        %1343 = vmatpush1.bf16.msra.mxu0 %v1305
        %1344 = vmatprep.subr.bf16.mxu0 %v1303
        %1345 = vmatpush1.bf16.msra.mxu0 %v1302
        %1346 = vmatprep.subr.bf16.mxu0 %v1300
        %1347 = vmatpush1.bf16.msra.mxu0 %v1299
        %1348 = vmatprep.subr.bf16.mxu0 %v1297
        %1349 = vmatpush1.bf16.msra.mxu0 %v1296
        %1350 = vmatprep.subr.bf16.mxu0 %v1294
        %1351 = vmatpush1.bf16.msra.mxu0 %v1293
        %1352 = vmatprep.subr.bf16.mxu0 %v1291
        %1353 = vmatpush1.bf16.msra.mxu0 %v1290
        %1354 = vmatprep.subr.bf16.mxu0 0
        %1355 = vmatpush2.bf16.msra.mxu0 0
        %1356 = vmatprep.subr.bf16.mxu0 0
        %1357 = vmatpush2.bf16.msra.mxu0 0
        %1358 = vmatprep.subr.bf16.mxu0 0
        %1359 = vmatpush2.bf16.msra.mxu0 0
        %1360 = vmatprep.subr.bf16.mxu0 0
        %1361 = vmatpush2.bf16.msra.mxu0 0
        %1362 = vmatprep.subr.bf16.mxu0 0
        %1363 = vmatpush2.bf16.msra.mxu0 0
        %1364 = vmatprep.subr.bf16.mxu0 0
        %1365 = vmatpush2.bf16.msra.mxu0 0
        %1366 = vmatprep.subr.bf16.mxu0 0
        %1367 = vmatpush2.bf16.msra.mxu0 0
        %1368 = vmatprep.subr.bf16.mxu0 0
        %1369 = vmatpush2.bf16.msra.mxu0 0
        %1370 = vmatprep.mubr.bf16.mxu0 0
        %1371 = vmatmul.mubr.bf16.gmra.mxu0 %v1160
        %v1372 = vpop.f32.mrf.mxu0
        %v1373 = vadd.f32 %v1198, %v1372
        %v1374 = vpop.f32.mrf.mxu0
        %v1375 = vadd.f32 %v1202, %v1374
        %v1376 = vpop.f32.mrf.mxu0
        %v1377 = vadd.f32 %v1198, %v1376
        %v1378 = vpop.f32.mrf.mxu0
        %v1379 = vadd.f32 %v1202, %v1378
        %1380 = vdwg.mxu0
        %1381 = vmatprep.subr.bf16.mxu0 0
        %1382 = vmatpush1.bf16.msra.mxu0 %v1313
        %1383 = vmatprep.subr.bf16.mxu0 0
        %1384 = vmatpush1.bf16.msra.mxu0 %v1310
        %1385 = vmatprep.subr.bf16.mxu0 0
        %1386 = vmatpush1.bf16.msra.mxu0 %v1307
        %1387 = vmatprep.subr.bf16.mxu0 0
        %1388 = vmatpush1.bf16.msra.mxu0 %v1304
        %1389 = vmatprep.subr.bf16.mxu0 0
        %1390 = vmatpush1.bf16.msra.mxu0 %v1301
        %1391 = vmatprep.subr.bf16.mxu0 0
        %1392 = vmatpush1.bf16.msra.mxu0 %v1298
        %1393 = vmatprep.subr.bf16.mxu0 0
        %1394 = vmatpush1.bf16.msra.mxu0 %v1295
        %1395 = vmatprep.subr.bf16.mxu0 0
        %1396 = vmatpush1.bf16.msra.mxu0 %v1292
        %1397 = vmatprep.subr.bf16.mxu0 0
        %1398 = vmatpush2.bf16.msra.mxu0 0
        %1399 = vmatprep.subr.bf16.mxu0 0
        %1400 = vmatpush2.bf16.msra.mxu0 0
        %1401 = vmatprep.subr.bf16.mxu0 0
        %1402 = vmatpush2.bf16.msra.mxu0 0
        %1403 = vmatprep.subr.bf16.mxu0 0
        %1404 = vmatpush2.bf16.msra.mxu0 0
        %1405 = vmatprep.subr.bf16.mxu0 0
        %1406 = vmatpush2.bf16.msra.mxu0 0
        %1407 = vmatprep.subr.bf16.mxu0 0
        %1408 = vmatpush2.bf16.msra.mxu0 0
        %1409 = vmatprep.subr.bf16.mxu0 0
        %1410 = vmatpush2.bf16.msra.mxu0 0
        %1411 = vmatprep.subr.bf16.mxu0 0
        %1412 = vmatpush2.bf16.msra.mxu0 0
        %1413 = vmatprep.mubr.bf16.mxu0 0
        %1414 = vmatmul.mubr.bf16.gmra.mxu0 %v1160
        %v1415 = vpop.f32.mrf.mxu0
        %v1416 = vadd.f32 %v1206, %v1415
        %v1417 = vpop.f32.mrf.mxu0
        %v1418 = vpop.f32.mrf.mxu0
        %v1419 = vadd.f32 %v1206, %v1418
        %v1420 = vpop.f32.mrf.mxu0
        %1421 = vdwg.mxu0
        %v1422 = vld [vmem:[%s1097] sm:$0xf]
        %v1423 = vld [vmem:[%s1097 + $0x4] sm:$0xf]
        %v1424 = vld [vmem:[%s1097 + $0x8] sm:$0xf]
        %v1425 = vld [vmem:[%s1097 + $0xc] sm:$0xf]
        %v1426 = vld [vmem:[%s1097 + $0x10] sm:$0xf]
        %v1427 = vld [vmem:[%s1097 + $0x14] sm:$0xf]
        %v1428 = vld [vmem:[%s1097 + $0x18] sm:$0xf]
        %v1429 = vld [vmem:[%s1097 + $0x1c] sm:$0xf]
        %v1430 = vld [vmem:[%s1097 + $0x20] sm:$0xf]
        %v1431 = vld [vmem:[%s1097 + $0x24] sm:$0xf]
        %v1432 = vld [vmem:[%s1097 + $0x28] sm:$0xf]
        %v1433 = vld [vmem:[%s1097 + $0x2c] sm:$0xf]
        %v1434 = vld [vmem:[%s1097 + $0x30] sm:$0xf]
        %v1435 = vld [vmem:[%s1097 + $0x34] sm:$0xf]
        %v1436 = vld [vmem:[%s1097 + $0x38] sm:$0xf]
        %v1437 = vld [vmem:[%s1097 + $0x3c] sm:$0xf]
        %v1438 = vld [vmem:[%s2] sm:$0xff]
        %v1439 = vld [vmem:[%s2 + $0x8] sm:$0xff]
        %vm1440 = vcmask 261120
        %v1442 = vsel %vm1440, %v1373, 0
        %v1445 = vsel %vm1440, %v1377, 0
        %v1448 = vsel %vm1440, %v1375, 0
        %v1451 = vsel %vm1440, %v1379, 0
        %1453 = vmatprep.subr.mxu0 0.0
        %1454 = vmatpush1.xpose.msra.mxu0 0.0
        %1455 = vmatprep.subr.mxu0 0.0
        %1456 = vmatpush1.xpose.msra.mxu0 0.0
        %1457 = vmatprep.subr.mxu0 0.0
        %1458 = vmatpush1.xpose.msra.mxu0 0.0
        %1459 = vmatprep.subr.mxu0 0.0
        %1460 = vmatpush1.xpose.msra.mxu0 0.0
        %1461 = vmatprep.subr.mxu0 0.0
        %1462 = vmatpush1.xpose.msra.mxu0 0.0
        %1463 = vmatprep.subr.mxu0 0.0
        %1464 = vmatpush1.xpose.msra.mxu0 0.0
        %1465 = vmatprep.subr.mxu0 0.0
        %1466 = vmatpush1.xpose.msra.mxu0 0.0
        %1467 = vmatprep.subr.mxu0 0.0
        %1468 = vmatpush1.xpose.msra.mxu0 0.0
        %1469 = vmatprep.subr.mxu0 0.0
        %1470 = vmatpush1.xpose.msra.mxu0 0.0
        %1471 = vmatprep.subr.mxu0 0.0
        %1472 = vmatpush1.xpose.msra.mxu0 0.0
        %1473 = vmatprep.subr.mxu0 0.0
        %1474 = vmatpush1.xpose.msra.mxu0 0.0
        %1475 = vmatprep.subr.mxu0 0.0
        %1476 = vmatpush1.xpose.msra.mxu0 0.0
        %1477 = vmatprep.subr.mxu0 0.0
        %1478 = vmatpush1.xpose.msra.mxu0 0.0
        %1479 = vmatprep.subr.mxu0 0.0
        %1480 = vmatpush1.xpose.msra.mxu0 0.0
        %1481 = vmatprep.subr.mxu0 0.0
        %1482 = vmatpush1.xpose.msra.mxu0 %v1451
        %1483 = vmatprep.subr.mxu0 0.0
        %1484 = vmatpush1.xpose.msra.mxu0 %v1448
        %1485 = vmatprep.subr.mxu0 0.0
        %1486 = vmatpush2.xpose.msra.mxu0 0.0
        %1487 = vmatprep.subr.mxu0 0.0
        %1488 = vmatpush2.xpose.msra.mxu0 0.0
        %1489 = vmatprep.subr.mxu0 0.0
        %1490 = vmatpush2.xpose.msra.mxu0 0.0
        %1491 = vmatprep.subr.mxu0 0.0
        %1492 = vmatpush2.xpose.msra.mxu0 0.0
        %1493 = vmatprep.subr.mxu0 0.0
        %1494 = vmatpush2.xpose.msra.mxu0 0.0
        %1495 = vmatprep.subr.mxu0 0.0
        %1496 = vmatpush2.xpose.msra.mxu0 0.0
        %1497 = vmatprep.subr.mxu0 0.0
        %1498 = vmatpush2.xpose.msra.mxu0 0.0
        %1499 = vmatprep.subr.mxu0 0.0
        %1500 = vmatpush2.xpose.msra.mxu0 0.0
        %1501 = vmatprep.subr.mxu0 0.0
        %1502 = vmatpush2.xpose.msra.mxu0 0.0
        %1503 = vmatprep.subr.mxu0 0.0
        %1504 = vmatpush2.xpose.msra.mxu0 0.0
        %1505 = vmatprep.subr.mxu0 0.0
        %1506 = vmatpush2.xpose.msra.mxu0 0.0
        %1507 = vmatprep.subr.mxu0 0.0
        %1508 = vmatpush2.xpose.msra.mxu0 0.0
        %1509 = vmatprep.subr.mxu0 0.0
        %1510 = vmatpush2.xpose.msra.mxu0 0.0
        %1511 = vmatprep.subr.mxu0 0.0
        %1512 = vmatpush2.xpose.msra.mxu0 0.0
        %1513 = vmatprep.subr.mxu0 0.0
        %1514 = vmatpush2.xpose.msra.mxu0 0.0
        %1515 = vmatprep.subr.mxu0 0.0
        %1516 = vmatpush2.xpose.msra.mxu0 0.0
        %1517 = vmatprep.mubr.f32.mxu0 0.0
        %1518 = vmatmul.mubr.f32.gmra.mxu0 %v1442
        %v1519 = vpop.f32.mrf.mxu0
        %v1520 = vadd.f32 %v1438, %v1519
        %v1521 = vpop.f32.mrf.mxu0
        %1522 = vmatprep.mubr.f32.mxu0 0.0
        %1523 = vmatmul.mubr.f32.gmra.mxu0 %v1445
        %v1524 = vpop.f32.mrf.mxu0
        %v1525 = vadd.f32 %v1439, %v1524
        %v1526 = vpop.f32.mrf.mxu0
        %1527 = vdwg.mxu0
        %vm1528 = vcmask 130048
        %v1529 = vsel %vm1528, %v1520, -inf
        %1530 = vmax.xlane.f32.xlu0 %v1529
        %v1531 = vpop.xlane.xlu0 %1530
        %v1532 = vsel %vm1528, %v1525, -inf
        %1533 = vmax.xlane.f32.xlu0 %v1532
        %v1534 = vpop.xlane.xlu0 %1533
        %v1535 = vsub.f32 %v1520, %v1531
        %v1536 = vsub.f32 %v1525, %v1534
        %v1537 = vmul.f32 %v1535, 1.442695
        %v1538 = vpow.pop %v1537
        %v1539 = vmul.f32 %v1536, 1.442695
        %v1540 = vpow.pop %v1539
        %v1541 = vsel %vm1528, %v1538, 0.0
        %1542 = vadd.xlane.f32.xlu0 %v1541
        %v1543 = vpop.xlane.xlu0 %1542
        %v1544 = vsel %vm1528, %v1540, 0.0
        %1545 = vadd.xlane.f32.xlu0 %v1544
        %v1546 = vpop.xlane.xlu0 %1545
        %v1547 = vrcp.pop %v1543
        %v1548 = vrcp.pop %v1546
        %v1549 = vmul.f32 %v1538, %v1547
        %v1550 = vmul.f32 %v1540, %v1548
        %v1551 = vpack.c.bf16 %v1550, %v1549
        %v1552 = vpack.c.bf16 %v1419, %v1416
        %v1554 = vsel %vm1528, %v1551, 0
        %1556 = vmatprep.subr.bf16.mxu0 0
        %1557 = vmatpush1.bf16.msra.mxu0 0
        %1558 = vmatprep.subr.bf16.mxu0 0
        %1559 = vmatpush1.bf16.msra.mxu0 0
        %1560 = vmatprep.subr.bf16.mxu0 0
        %1561 = vmatpush1.bf16.msra.mxu0 0
        %1562 = vmatprep.subr.bf16.mxu0 0
        %1563 = vmatpush1.bf16.msra.mxu0 0
        %1564 = vmatprep.subr.bf16.mxu0 0
        %1565 = vmatpush1.bf16.msra.mxu0 0
        %1566 = vmatprep.subr.bf16.mxu0 0
        %1567 = vmatpush1.bf16.msra.mxu0 0
        %1568 = vmatprep.subr.bf16.mxu0 0
        %1569 = vmatpush1.bf16.msra.mxu0 0
        %1570 = vmatprep.subr.bf16.mxu0 0
        %1571 = vmatpush1.bf16.msra.mxu0 %v1552
        %1572 = vmatprep.subr.bf16.mxu0 0
        %1573 = vmatpush2.bf16.msra.mxu0 0
        %1574 = vmatprep.subr.bf16.mxu0 0
        %1575 = vmatpush2.bf16.msra.mxu0 0
        %1576 = vmatprep.subr.bf16.mxu0 0
        %1577 = vmatpush2.bf16.msra.mxu0 0
        %1578 = vmatprep.subr.bf16.mxu0 0
        %1579 = vmatpush2.bf16.msra.mxu0 0
        %1580 = vmatprep.subr.bf16.mxu0 0
        %1581 = vmatpush2.bf16.msra.mxu0 0
        %1582 = vmatprep.subr.bf16.mxu0 0
        %1583 = vmatpush2.bf16.msra.mxu0 0
        %1584 = vmatprep.subr.bf16.mxu0 0
        %1585 = vmatpush2.bf16.msra.mxu0 0
        %1586 = vmatprep.subr.bf16.mxu0 0
        %1587 = vmatpush2.bf16.msra.mxu0 0
        %1588 = vmatprep.mubr.bf16.mxu0 0
        %1589 = vmatmul.mubr.bf16.gmra.mxu0 %v1554
        %v1590 = vpop.f32.mrf.mxu0
        %v1591 = vadd.f32 0.0, %v1590
        %v1592 = vpop.f32.mrf.mxu0
        %v1593 = vpop.f32.mrf.mxu0
        %v1594 = vadd.f32 0.0, %v1593
        %v1595 = vpop.f32.mrf.mxu0
        %1596 = vdwg.mxu0
        %1597 = vrot.lane.b32.xlu0 %v1373, 96
        %v1598 = vpop.permute.xlu0 %1597
        %1599 = vrot.lane.b32.xlu0 %v1377, 96
        %v1600 = vpop.permute.xlu0 %1599
        %1601 = vrot.lane.b32.xlu0 %v1375, 96
        %v1602 = vpop.permute.xlu0 %1601
        %1603 = vrot.lane.b32.xlu0 %v1379, 96
        %v1604 = vpop.permute.xlu0 %1603
        %v1605 = vsel %vm1440, %v1598, 0
        %v1607 = vsel %vm1440, %v1600, 0
        %v1609 = vsel %vm1440, %v1602, 0
        %v1611 = vsel %vm1440, %v1604, 0
        %1613 = vmatprep.subr.mxu0 0.0
        %1614 = vmatpush1.xpose.msra.mxu0 0.0
        %1615 = vmatprep.subr.mxu0 0.0
        %1616 = vmatpush1.xpose.msra.mxu0 0.0
        %1617 = vmatprep.subr.mxu0 0.0
        %1618 = vmatpush1.xpose.msra.mxu0 0.0
        %1619 = vmatprep.subr.mxu0 0.0
        %1620 = vmatpush1.xpose.msra.mxu0 0.0
        %1621 = vmatprep.subr.mxu0 0.0
        %1622 = vmatpush1.xpose.msra.mxu0 0.0
        %1623 = vmatprep.subr.mxu0 0.0
        %1624 = vmatpush1.xpose.msra.mxu0 0.0
        %1625 = vmatprep.subr.mxu0 0.0
        %1626 = vmatpush1.xpose.msra.mxu0 0.0
        %1627 = vmatprep.subr.mxu0 0.0
        %1628 = vmatpush1.xpose.msra.mxu0 0.0
        %1629 = vmatprep.subr.mxu0 0.0
        %1630 = vmatpush1.xpose.msra.mxu0 0.0
        %1631 = vmatprep.subr.mxu0 0.0
        %1632 = vmatpush1.xpose.msra.mxu0 0.0
        %1633 = vmatprep.subr.mxu0 0.0
        %1634 = vmatpush1.xpose.msra.mxu0 0.0
        %1635 = vmatprep.subr.mxu0 0.0
        %1636 = vmatpush1.xpose.msra.mxu0 0.0
        %1637 = vmatprep.subr.mxu0 0.0
        %1638 = vmatpush1.xpose.msra.mxu0 0.0
        %1639 = vmatprep.subr.mxu0 0.0
        %1640 = vmatpush1.xpose.msra.mxu0 0.0
        %1641 = vmatprep.subr.mxu0 0.0
        %1642 = vmatpush1.xpose.msra.mxu0 %v1611
        %1643 = vmatprep.subr.mxu0 0.0
        %1644 = vmatpush1.xpose.msra.mxu0 %v1609
        %1645 = vmatprep.subr.mxu0 0.0
        %1646 = vmatpush2.xpose.msra.mxu0 0.0
        %1647 = vmatprep.subr.mxu0 0.0
        %1648 = vmatpush2.xpose.msra.mxu0 0.0
        %1649 = vmatprep.subr.mxu0 0.0
        %1650 = vmatpush2.xpose.msra.mxu0 0.0
        %1651 = vmatprep.subr.mxu0 0.0
        %1652 = vmatpush2.xpose.msra.mxu0 0.0
        %1653 = vmatprep.subr.mxu0 0.0
        %1654 = vmatpush2.xpose.msra.mxu0 0.0
        %1655 = vmatprep.subr.mxu0 0.0
        %1656 = vmatpush2.xpose.msra.mxu0 0.0
        %1657 = vmatprep.subr.mxu0 0.0
        %1658 = vmatpush2.xpose.msra.mxu0 0.0
        %1659 = vmatprep.subr.mxu0 0.0
        %1660 = vmatpush2.xpose.msra.mxu0 0.0
        %1661 = vmatprep.subr.mxu0 0.0
        %1662 = vmatpush2.xpose.msra.mxu0 0.0
        %1663 = vmatprep.subr.mxu0 0.0
        %1664 = vmatpush2.xpose.msra.mxu0 0.0
        %1665 = vmatprep.subr.mxu0 0.0
        %1666 = vmatpush2.xpose.msra.mxu0 0.0
        %1667 = vmatprep.subr.mxu0 0.0
        %1668 = vmatpush2.xpose.msra.mxu0 0.0
        %1669 = vmatprep.subr.mxu0 0.0
        %1670 = vmatpush2.xpose.msra.mxu0 0.0
        %1671 = vmatprep.subr.mxu0 0.0
        %1672 = vmatpush2.xpose.msra.mxu0 0.0
        %1673 = vmatprep.subr.mxu0 0.0
        %1674 = vmatpush2.xpose.msra.mxu0 0.0
        %1675 = vmatprep.subr.mxu0 0.0
        %1676 = vmatpush2.xpose.msra.mxu0 0.0
        %1677 = vmatprep.mubr.f32.mxu0 0.0
        %1678 = vmatmul.mubr.f32.gmra.mxu0 %v1605
        %v1679 = vpop.f32.mrf.mxu0
        %v1680 = vadd.f32 %v1438, %v1679
        %v1681 = vpop.f32.mrf.mxu0
        %1682 = vmatprep.mubr.f32.mxu0 0.0
        %1683 = vmatmul.mubr.f32.gmra.mxu0 %v1607
        %v1684 = vpop.f32.mrf.mxu0
        %v1685 = vadd.f32 %v1439, %v1684
        %v1686 = vpop.f32.mrf.mxu0
        %1687 = vdwg.mxu0
        %v1688 = vsel %vm1528, %v1680, -inf
        %1689 = vmax.xlane.f32.xlu0 %v1688
        %v1690 = vpop.xlane.xlu0 %1689
        %v1691 = vsel %vm1528, %v1685, -inf
        %1692 = vmax.xlane.f32.xlu0 %v1691
        %v1693 = vpop.xlane.xlu0 %1692
        %v1694 = vsub.f32 %v1680, %v1690
        %v1695 = vsub.f32 %v1685, %v1693
        %v1696 = vmul.f32 %v1694, 1.442695
        %v1697 = vpow.pop %v1696
        %v1698 = vmul.f32 %v1695, 1.442695
        %v1699 = vpow.pop %v1698
        %v1700 = vsel %vm1528, %v1697, 0.0
        %1701 = vadd.xlane.f32.xlu0 %v1700
        %v1702 = vpop.xlane.xlu0 %1701
        %v1703 = vsel %vm1528, %v1699, 0.0
        %1704 = vadd.xlane.f32.xlu0 %v1703
        %v1705 = vpop.xlane.xlu0 %1704
        %v1706 = vrcp.pop %v1702
        %v1707 = vrcp.pop %v1705
        %v1708 = vmul.f32 %v1697, %v1706
        %v1709 = vmul.f32 %v1699, %v1707
        %v1710 = vpack.c.bf16 %v1709, %v1708
        %1712 = vrot.lane.b32.xlu0 %v1552, 96
        %v1713 = vpop.permute.xlu0 %1712
        %v1716 = vsel %vm1528, %v1710, 0
        %1718 = vmatprep.subr.bf16.mxu0 0
        %1719 = vmatpush1.bf16.msra.mxu0 0
        %1720 = vmatprep.subr.bf16.mxu0 0
        %1721 = vmatpush1.bf16.msra.mxu0 0
        %1722 = vmatprep.subr.bf16.mxu0 0
        %1723 = vmatpush1.bf16.msra.mxu0 0
        %1724 = vmatprep.subr.bf16.mxu0 0
        %1725 = vmatpush1.bf16.msra.mxu0 0
        %1726 = vmatprep.subr.bf16.mxu0 0
        %1727 = vmatpush1.bf16.msra.mxu0 0
        %1728 = vmatprep.subr.bf16.mxu0 0
        %1729 = vmatpush1.bf16.msra.mxu0 0
        %1730 = vmatprep.subr.bf16.mxu0 0
        %1731 = vmatpush1.bf16.msra.mxu0 0
        %1732 = vmatprep.subr.bf16.mxu0 0
        %1733 = vmatpush1.bf16.msra.mxu0 %v1713
        %1734 = vmatprep.subr.bf16.mxu0 0
        %1735 = vmatpush2.bf16.msra.mxu0 0
        %1736 = vmatprep.subr.bf16.mxu0 0
        %1737 = vmatpush2.bf16.msra.mxu0 0
        %1738 = vmatprep.subr.bf16.mxu0 0
        %1739 = vmatpush2.bf16.msra.mxu0 0
        %1740 = vmatprep.subr.bf16.mxu0 0
        %1741 = vmatpush2.bf16.msra.mxu0 0
        %1742 = vmatprep.subr.bf16.mxu0 0
        %1743 = vmatpush2.bf16.msra.mxu0 0
        %1744 = vmatprep.subr.bf16.mxu0 0
        %1745 = vmatpush2.bf16.msra.mxu0 0
        %1746 = vmatprep.subr.bf16.mxu0 0
        %1747 = vmatpush2.bf16.msra.mxu0 0
        %1748 = vmatprep.subr.bf16.mxu0 0
        %1749 = vmatpush2.bf16.msra.mxu0 0
        %1750 = vmatprep.mubr.bf16.mxu0 0
        %1751 = vmatmul.mubr.bf16.gmra.mxu0 %v1716
        %v1752 = vpop.f32.mrf.mxu0
        %v1753 = vadd.f32 0.0, %v1752
        %v1754 = vpop.f32.mrf.mxu0
        %v1755 = vpop.f32.mrf.mxu0
        %v1756 = vadd.f32 0.0, %v1755
        %v1757 = vpop.f32.mrf.mxu0
        %1758 = vdwg.mxu0
        %1759 = vrot.lane.b32.xlu0 %v1373, 64
        %v1760 = vpop.permute.xlu0 %1759
        %1761 = vrot.lane.b32.xlu0 %v1377, 64
        %v1762 = vpop.permute.xlu0 %1761
        %1763 = vrot.lane.b32.xlu0 %v1375, 64
        %v1764 = vpop.permute.xlu0 %1763
        %1765 = vrot.lane.b32.xlu0 %v1379, 64
        %v1766 = vpop.permute.xlu0 %1765
        %v1767 = vsel %vm1440, %v1760, 0
        %v1769 = vsel %vm1440, %v1762, 0
        %v1771 = vsel %vm1440, %v1764, 0
        %v1773 = vsel %vm1440, %v1766, 0
        %1775 = vmatprep.subr.mxu0 0.0
        %1776 = vmatpush1.xpose.msra.mxu0 0.0
        %1777 = vmatprep.subr.mxu0 0.0
        %1778 = vmatpush1.xpose.msra.mxu0 0.0
        %1779 = vmatprep.subr.mxu0 0.0
        %1780 = vmatpush1.xpose.msra.mxu0 0.0
        %1781 = vmatprep.subr.mxu0 0.0
        %1782 = vmatpush1.xpose.msra.mxu0 0.0
        %1783 = vmatprep.subr.mxu0 0.0
        %1784 = vmatpush1.xpose.msra.mxu0 0.0
        %1785 = vmatprep.subr.mxu0 0.0
        %1786 = vmatpush1.xpose.msra.mxu0 0.0
        %1787 = vmatprep.subr.mxu0 0.0
        %1788 = vmatpush1.xpose.msra.mxu0 0.0
        %1789 = vmatprep.subr.mxu0 0.0
        %1790 = vmatpush1.xpose.msra.mxu0 0.0
        %1791 = vmatprep.subr.mxu0 0.0
        %1792 = vmatpush1.xpose.msra.mxu0 0.0
        %1793 = vmatprep.subr.mxu0 0.0
        %1794 = vmatpush1.xpose.msra.mxu0 0.0
        %1795 = vmatprep.subr.mxu0 0.0
        %1796 = vmatpush1.xpose.msra.mxu0 0.0
        %1797 = vmatprep.subr.mxu0 0.0
        %1798 = vmatpush1.xpose.msra.mxu0 0.0
        %1799 = vmatprep.subr.mxu0 0.0
        %1800 = vmatpush1.xpose.msra.mxu0 0.0
        %1801 = vmatprep.subr.mxu0 0.0
        %1802 = vmatpush1.xpose.msra.mxu0 0.0
        %1803 = vmatprep.subr.mxu0 0.0
        %1804 = vmatpush1.xpose.msra.mxu0 %v1773
        %1805 = vmatprep.subr.mxu0 0.0
        %1806 = vmatpush1.xpose.msra.mxu0 %v1771
        %1807 = vmatprep.subr.mxu0 0.0
        %1808 = vmatpush2.xpose.msra.mxu0 0.0
        %1809 = vmatprep.subr.mxu0 0.0
        %1810 = vmatpush2.xpose.msra.mxu0 0.0
        %1811 = vmatprep.subr.mxu0 0.0
        %1812 = vmatpush2.xpose.msra.mxu0 0.0
        %1813 = vmatprep.subr.mxu0 0.0
        %1814 = vmatpush2.xpose.msra.mxu0 0.0
        %1815 = vmatprep.subr.mxu0 0.0
        %1816 = vmatpush2.xpose.msra.mxu0 0.0
        %1817 = vmatprep.subr.mxu0 0.0
        %1818 = vmatpush2.xpose.msra.mxu0 0.0
        %1819 = vmatprep.subr.mxu0 0.0
        %1820 = vmatpush2.xpose.msra.mxu0 0.0
        %1821 = vmatprep.subr.mxu0 0.0
        %1822 = vmatpush2.xpose.msra.mxu0 0.0
        %1823 = vmatprep.subr.mxu0 0.0
        %1824 = vmatpush2.xpose.msra.mxu0 0.0
        %1825 = vmatprep.subr.mxu0 0.0
        %1826 = vmatpush2.xpose.msra.mxu0 0.0
        %1827 = vmatprep.subr.mxu0 0.0
        %1828 = vmatpush2.xpose.msra.mxu0 0.0
        %1829 = vmatprep.subr.mxu0 0.0
        %1830 = vmatpush2.xpose.msra.mxu0 0.0
        %1831 = vmatprep.subr.mxu0 0.0
        %1832 = vmatpush2.xpose.msra.mxu0 0.0
        %1833 = vmatprep.subr.mxu0 0.0
        %1834 = vmatpush2.xpose.msra.mxu0 0.0
        %1835 = vmatprep.subr.mxu0 0.0
        %1836 = vmatpush2.xpose.msra.mxu0 0.0
        %1837 = vmatprep.subr.mxu0 0.0
        %1838 = vmatpush2.xpose.msra.mxu0 0.0
        %1839 = vmatprep.mubr.f32.mxu0 0.0
        %1840 = vmatmul.mubr.f32.gmra.mxu0 %v1767
        %v1841 = vpop.f32.mrf.mxu0
        %v1842 = vadd.f32 %v1438, %v1841
        %v1843 = vpop.f32.mrf.mxu0
        %1844 = vmatprep.mubr.f32.mxu0 0.0
        %1845 = vmatmul.mubr.f32.gmra.mxu0 %v1769
        %v1846 = vpop.f32.mrf.mxu0
        %v1847 = vadd.f32 %v1439, %v1846
        %v1848 = vpop.f32.mrf.mxu0
        %1849 = vdwg.mxu0
        %v1850 = vsel %vm1528, %v1842, -inf
        %1851 = vmax.xlane.f32.xlu0 %v1850
        %v1852 = vpop.xlane.xlu0 %1851
        %v1853 = vsel %vm1528, %v1847, -inf
        %1854 = vmax.xlane.f32.xlu0 %v1853
        %v1855 = vpop.xlane.xlu0 %1854
        %v1856 = vsub.f32 %v1842, %v1852
        %v1857 = vsub.f32 %v1847, %v1855
        %v1858 = vmul.f32 %v1856, 1.442695
        %v1859 = vpow.pop %v1858
        %v1860 = vmul.f32 %v1857, 1.442695
        %v1861 = vpow.pop %v1860
        %v1862 = vsel %vm1528, %v1859, 0.0
        %1863 = vadd.xlane.f32.xlu0 %v1862
        %v1864 = vpop.xlane.xlu0 %1863
        %v1865 = vsel %vm1528, %v1861, 0.0
        %1866 = vadd.xlane.f32.xlu0 %v1865
        %v1867 = vpop.xlane.xlu0 %1866
        %v1868 = vrcp.pop %v1864
        %v1869 = vrcp.pop %v1867
        %v1870 = vmul.f32 %v1859, %v1868
        %v1871 = vmul.f32 %v1861, %v1869
        %v1872 = vpack.c.bf16 %v1871, %v1870
        %1873 = vrot.lane.b32.xlu0 %v1552, 64
        %v1874 = vpop.permute.xlu0 %1873
        %v1877 = vsel %vm1528, %v1872, 0
        %1879 = vmatprep.subr.bf16.mxu0 0
        %1880 = vmatpush1.bf16.msra.mxu0 0
        %1881 = vmatprep.subr.bf16.mxu0 0
        %1882 = vmatpush1.bf16.msra.mxu0 0
        %1883 = vmatprep.subr.bf16.mxu0 0
        %1884 = vmatpush1.bf16.msra.mxu0 0
        %1885 = vmatprep.subr.bf16.mxu0 0
        %1886 = vmatpush1.bf16.msra.mxu0 0
        %1887 = vmatprep.subr.bf16.mxu0 0
        %1888 = vmatpush1.bf16.msra.mxu0 0
        %1889 = vmatprep.subr.bf16.mxu0 0
        %1890 = vmatpush1.bf16.msra.mxu0 0
        %1891 = vmatprep.subr.bf16.mxu0 0
        %1892 = vmatpush1.bf16.msra.mxu0 0
        %1893 = vmatprep.subr.bf16.mxu0 0
        %1894 = vmatpush1.bf16.msra.mxu0 %v1874
        %1895 = vmatprep.subr.bf16.mxu0 0
        %1896 = vmatpush2.bf16.msra.mxu0 0
        %1897 = vmatprep.subr.bf16.mxu0 0
        %1898 = vmatpush2.bf16.msra.mxu0 0
        %1899 = vmatprep.subr.bf16.mxu0 0
        %1900 = vmatpush2.bf16.msra.mxu0 0
        %1901 = vmatprep.subr.bf16.mxu0 0
        %1902 = vmatpush2.bf16.msra.mxu0 0
        %1903 = vmatprep.subr.bf16.mxu0 0
        %1904 = vmatpush2.bf16.msra.mxu0 0
        %1905 = vmatprep.subr.bf16.mxu0 0
        %1906 = vmatpush2.bf16.msra.mxu0 0
        %1907 = vmatprep.subr.bf16.mxu0 0
        %1908 = vmatpush2.bf16.msra.mxu0 0
        %1909 = vmatprep.subr.bf16.mxu0 0
        %1910 = vmatpush2.bf16.msra.mxu0 0
        %1911 = vmatprep.mubr.bf16.mxu0 0
        %1912 = vmatmul.mubr.bf16.gmra.mxu0 %v1877
        %v1913 = vpop.f32.mrf.mxu0
        %v1914 = vadd.f32 0.0, %v1913
        %v1915 = vpop.f32.mrf.mxu0
        %v1916 = vpop.f32.mrf.mxu0
        %v1917 = vadd.f32 0.0, %v1916
        %v1918 = vpop.f32.mrf.mxu0
        %1919 = vdwg.mxu0
        %1920 = vrot.lane.b32.xlu0 %v1373, 32
        %v1921 = vpop.permute.xlu0 %1920
        %1922 = vrot.lane.b32.xlu0 %v1377, 32
        %v1923 = vpop.permute.xlu0 %1922
        %1924 = vrot.lane.b32.xlu0 %v1375, 32
        %v1925 = vpop.permute.xlu0 %1924
        %1926 = vrot.lane.b32.xlu0 %v1379, 32
        %v1927 = vpop.permute.xlu0 %1926
        %v1928 = vsel %vm1440, %v1921, 0
        %v1930 = vsel %vm1440, %v1923, 0
        %v1932 = vsel %vm1440, %v1925, 0
        %v1934 = vsel %vm1440, %v1927, 0
        %1936 = vmatprep.subr.mxu0 0.0
        %1937 = vmatpush1.xpose.msra.mxu0 0.0
        %1938 = vmatprep.subr.mxu0 0.0
        %1939 = vmatpush1.xpose.msra.mxu0 0.0
        %1940 = vmatprep.subr.mxu0 0.0
        %1941 = vmatpush1.xpose.msra.mxu0 0.0
        %1942 = vmatprep.subr.mxu0 0.0
        %1943 = vmatpush1.xpose.msra.mxu0 0.0
        %1944 = vmatprep.subr.mxu0 0.0
        %1945 = vmatpush1.xpose.msra.mxu0 0.0
        %1946 = vmatprep.subr.mxu0 0.0
        %1947 = vmatpush1.xpose.msra.mxu0 0.0
        %1948 = vmatprep.subr.mxu0 0.0
        %1949 = vmatpush1.xpose.msra.mxu0 0.0
        %1950 = vmatprep.subr.mxu0 0.0
        %1951 = vmatpush1.xpose.msra.mxu0 0.0
        %1952 = vmatprep.subr.mxu0 0.0
        %1953 = vmatpush1.xpose.msra.mxu0 0.0
        %1954 = vmatprep.subr.mxu0 0.0
        %1955 = vmatpush1.xpose.msra.mxu0 0.0
        %1956 = vmatprep.subr.mxu0 0.0
        %1957 = vmatpush1.xpose.msra.mxu0 0.0
        %1958 = vmatprep.subr.mxu0 0.0
        %1959 = vmatpush1.xpose.msra.mxu0 0.0
        %1960 = vmatprep.subr.mxu0 0.0
        %1961 = vmatpush1.xpose.msra.mxu0 0.0
        %1962 = vmatprep.subr.mxu0 0.0
        %1963 = vmatpush1.xpose.msra.mxu0 0.0
        %1964 = vmatprep.subr.mxu0 0.0
        %1965 = vmatpush1.xpose.msra.mxu0 %v1934
        %1966 = vmatprep.subr.mxu0 0.0
        %1967 = vmatpush1.xpose.msra.mxu0 %v1932
        %1968 = vmatprep.subr.mxu0 0.0
        %1969 = vmatpush2.xpose.msra.mxu0 0.0
        %1970 = vmatprep.subr.mxu0 0.0
        %1971 = vmatpush2.xpose.msra.mxu0 0.0
        %1972 = vmatprep.subr.mxu0 0.0
        %1973 = vmatpush2.xpose.msra.mxu0 0.0
        %1974 = vmatprep.subr.mxu0 0.0
        %1975 = vmatpush2.xpose.msra.mxu0 0.0
        %1976 = vmatprep.subr.mxu0 0.0
        %1977 = vmatpush2.xpose.msra.mxu0 0.0
        %1978 = vmatprep.subr.mxu0 0.0
        %1979 = vmatpush2.xpose.msra.mxu0 0.0
        %1980 = vmatprep.subr.mxu0 0.0
        %1981 = vmatpush2.xpose.msra.mxu0 0.0
        %1982 = vmatprep.subr.mxu0 0.0
        %1983 = vmatpush2.xpose.msra.mxu0 0.0
        %1984 = vmatprep.subr.mxu0 0.0
        %1985 = vmatpush2.xpose.msra.mxu0 0.0
        %1986 = vmatprep.subr.mxu0 0.0
        %1987 = vmatpush2.xpose.msra.mxu0 0.0
        %1988 = vmatprep.subr.mxu0 0.0
        %1989 = vmatpush2.xpose.msra.mxu0 0.0
        %1990 = vmatprep.subr.mxu0 0.0
        %1991 = vmatpush2.xpose.msra.mxu0 0.0
        %1992 = vmatprep.subr.mxu0 0.0
        %1993 = vmatpush2.xpose.msra.mxu0 0.0
        %1994 = vmatprep.subr.mxu0 0.0
        %1995 = vmatpush2.xpose.msra.mxu0 0.0
        %1996 = vmatprep.subr.mxu0 0.0
        %1997 = vmatpush2.xpose.msra.mxu0 0.0
        %1998 = vmatprep.subr.mxu0 0.0
        %1999 = vmatpush2.xpose.msra.mxu0 0.0
        %2000 = vmatprep.mubr.f32.mxu0 0.0
        %2001 = vmatmul.mubr.f32.gmra.mxu0 %v1928
        %v2002 = vpop.f32.mrf.mxu0
        %v2003 = vadd.f32 %v1438, %v2002
        %v2004 = vpop.f32.mrf.mxu0
        %2005 = vmatprep.mubr.f32.mxu0 0.0
        %2006 = vmatmul.mubr.f32.gmra.mxu0 %v1930
        %v2007 = vpop.f32.mrf.mxu0
        %v2008 = vadd.f32 %v1439, %v2007
        %v2009 = vpop.f32.mrf.mxu0
        %2010 = vdwg.mxu0
        %v2011 = vsel %vm1528, %v2003, -inf
        %2012 = vmax.xlane.f32.xlu0 %v2011
        %v2013 = vpop.xlane.xlu0 %2012
        %v2014 = vsel %vm1528, %v2008, -inf
        %2015 = vmax.xlane.f32.xlu0 %v2014
        %v2016 = vpop.xlane.xlu0 %2015
        %v2017 = vsub.f32 %v2003, %v2013
        %v2018 = vsub.f32 %v2008, %v2016
        %v2019 = vmul.f32 %v2017, 1.442695
        %v2020 = vpow.pop %v2019
        %v2021 = vmul.f32 %v2018, 1.442695
        %v2022 = vpow.pop %v2021
        %v2023 = vsel %vm1528, %v2020, 0.0
        %2024 = vadd.xlane.f32.xlu0 %v2023
        %v2025 = vpop.xlane.xlu0 %2024
        %v2026 = vsel %vm1528, %v2022, 0.0
        %2027 = vadd.xlane.f32.xlu0 %v2026
        %v2028 = vpop.xlane.xlu0 %2027
        %v2029 = vrcp.pop %v2025
        %v2030 = vrcp.pop %v2028
        %v2031 = vmul.f32 %v2020, %v2029
        %v2032 = vmul.f32 %v2022, %v2030
        %v2033 = vpack.c.bf16 %v2032, %v2031
        %2034 = vrot.lane.b32.xlu0 %v1552, 32
        %v2035 = vpop.permute.xlu0 %2034
        %v2038 = vsel %vm1528, %v2033, 0
        %2040 = vmatprep.subr.bf16.mxu0 0
        %2041 = vmatpush1.bf16.msra.mxu0 0
        %2042 = vmatprep.subr.bf16.mxu0 0
        %2043 = vmatpush1.bf16.msra.mxu0 0
        %2044 = vmatprep.subr.bf16.mxu0 0
        %2045 = vmatpush1.bf16.msra.mxu0 0
        %2046 = vmatprep.subr.bf16.mxu0 0
        %2047 = vmatpush1.bf16.msra.mxu0 0
        %2048 = vmatprep.subr.bf16.mxu0 0
        %2049 = vmatpush1.bf16.msra.mxu0 0
        %2050 = vmatprep.subr.bf16.mxu0 0
        %2051 = vmatpush1.bf16.msra.mxu0 0
        %2052 = vmatprep.subr.bf16.mxu0 0
        %2053 = vmatpush1.bf16.msra.mxu0 0
        %2054 = vmatprep.subr.bf16.mxu0 0
        %2055 = vmatpush1.bf16.msra.mxu0 %v2035
        %2056 = vmatprep.subr.bf16.mxu0 0
        %2057 = vmatpush2.bf16.msra.mxu0 0
        %2058 = vmatprep.subr.bf16.mxu0 0
        %2059 = vmatpush2.bf16.msra.mxu0 0
        %2060 = vmatprep.subr.bf16.mxu0 0
        %2061 = vmatpush2.bf16.msra.mxu0 0
        %2062 = vmatprep.subr.bf16.mxu0 0
        %2063 = vmatpush2.bf16.msra.mxu0 0
        %2064 = vmatprep.subr.bf16.mxu0 0
        %2065 = vmatpush2.bf16.msra.mxu0 0
        %2066 = vmatprep.subr.bf16.mxu0 0
        %2067 = vmatpush2.bf16.msra.mxu0 0
        %2068 = vmatprep.subr.bf16.mxu0 0
        %2069 = vmatpush2.bf16.msra.mxu0 0
        %2070 = vmatprep.subr.bf16.mxu0 0
        %2071 = vmatpush2.bf16.msra.mxu0 0
        %2072 = vmatprep.mubr.bf16.mxu0 0
        %2073 = vmatmul.mubr.bf16.gmra.mxu0 %v2038
        %v2074 = vpop.f32.mrf.mxu0
        %v2075 = vadd.f32 0.0, %v2074
        %v2076 = vpop.f32.mrf.mxu0
        %v2077 = vpop.f32.mrf.mxu0
        %v2078 = vadd.f32 0.0, %v2077
        %v2079 = vpop.f32.mrf.mxu0
        %2080 = vdwg.mxu0
        %2083 = vrot.lane.b32.xlu0 %v1753, 32
        %v2084 = vpop.permute.xlu0 %2083
        %2085 = vrot.lane.b32.xlu0 %v1756, 32
        %v2086 = vpop.permute.xlu0 %2085
        %2091 = vrot.lane.b32.xlu0 %v1914, 64
        %v2092 = vpop.permute.xlu0 %2091
        %2093 = vrot.lane.b32.xlu0 %v1917, 64
        %v2094 = vpop.permute.xlu0 %2093
        %2099 = vrot.lane.b32.xlu0 %v2075, 96
        %v2100 = vpop.permute.xlu0 %2099
        %2101 = vrot.lane.b32.xlu0 %v2078, 96
        %v2102 = vpop.permute.xlu0 %2101
        %v2105 = vsel %vm1440, %v1591, %v2084
        %v2106 = vsel %vm1440, %v1594, %v2086
        %vm2107 = vcmask 523264
        %v2108 = vsel %vm2107, %v2105, %v2092
        %v2109 = vsel %vm2107, %v2106, %v2094
        %vm2110 = vcmask 785408
        %v2111 = vsel %vm2110, %v2108, %v2100
        %v2112 = vsel %vm2110, %v2109, %v2102
        %v2113 = vpack.c.bf16 %v2112, %v2111
        %v2130 = vunpack.c.l.b16 %v1422
        %v2131 = vunpack.c.l.b16 %v1423
        %v2132 = vunpack.c.l.b16 %v1424
        %v2133 = vunpack.c.l.b16 %v1425
        %v2134 = vunpack.c.l.b16 %v1426
        %v2135 = vunpack.c.l.b16 %v1427
        %v2136 = vunpack.c.l.b16 %v1428
        %v2137 = vunpack.c.l.b16 %v1429
        %v2138 = vunpack.c.l.b16 %v1430
        %v2139 = vunpack.c.l.b16 %v1431
        %v2140 = vunpack.c.l.b16 %v1432
        %v2141 = vunpack.c.l.b16 %v1433
        %v2142 = vunpack.c.l.b16 %v1434
        %v2143 = vunpack.c.l.b16 %v1435
        %v2144 = vunpack.c.l.b16 %v1436
        %v2145 = vunpack.c.l.b16 %v1437
        %v2146 = vpack.c.b16 %v2131, %v2130
        %v2147 = vpack.c.b16 %v2133, %v2132
        %v2148 = vpack.c.b16 %v2135, %v2134
        %v2149 = vpack.c.b16 %v2137, %v2136
        %v2150 = vpack.c.b16 %v2139, %v2138
        %v2151 = vpack.c.b16 %v2141, %v2140
        %v2152 = vpack.c.b16 %v2143, %v2142
        %v2153 = vpack.c.b16 %v2145, %v2144
        %2162 = vmatprep.subr.bf16.mxu0 0
        %2163 = vmatpush1.bf16.msra.mxu0 %v2153
        %2164 = vmatprep.subr.bf16.mxu0 0
        %2165 = vmatpush1.bf16.msra.mxu0 %v2152
        %2166 = vmatprep.subr.bf16.mxu0 0
        %2167 = vmatpush1.bf16.msra.mxu0 %v2151
        %2168 = vmatprep.subr.bf16.mxu0 0
        %2169 = vmatpush1.bf16.msra.mxu0 %v2150
        %2170 = vmatprep.subr.bf16.mxu0 0
        %2171 = vmatpush1.bf16.msra.mxu0 %v2149
        %2172 = vmatprep.subr.bf16.mxu0 0
        %2173 = vmatpush1.bf16.msra.mxu0 %v2148
        %2174 = vmatprep.subr.bf16.mxu0 0
        %2175 = vmatpush1.bf16.msra.mxu0 %v2147
        %2176 = vmatprep.subr.bf16.mxu0 0
        %2177 = vmatpush1.bf16.msra.mxu0 %v2146
        %2178 = vmatprep.subr.bf16.mxu0 0
        %2179 = vmatpush2.bf16.msra.mxu0 0
        %2180 = vmatprep.subr.bf16.mxu0 0
        %2181 = vmatpush2.bf16.msra.mxu0 0
        %2182 = vmatprep.subr.bf16.mxu0 0
        %2183 = vmatpush2.bf16.msra.mxu0 0
        %2184 = vmatprep.subr.bf16.mxu0 0
        %2185 = vmatpush2.bf16.msra.mxu0 0
        %2186 = vmatprep.subr.bf16.mxu0 0
        %2187 = vmatpush2.bf16.msra.mxu0 0
        %2188 = vmatprep.subr.bf16.mxu0 0
        %2189 = vmatpush2.bf16.msra.mxu0 0
        %2190 = vmatprep.subr.bf16.mxu0 0
        %2191 = vmatpush2.bf16.msra.mxu0 0
        %2192 = vmatprep.subr.bf16.mxu0 0
        %2193 = vmatpush2.bf16.msra.mxu0 0
        %2194 = vmatprep.mubr.bf16.mxu0 0
        %2195 = vmatmul.mubr.bf16.gmra.mxu0 %v2113
        %v2196 = vpop.f32.mrf.mxu0
        %v2197 = vadd.f32 0.0, %v2196
        %v2198 = vpop.f32.mrf.mxu0
        %v2199 = vpop.f32.mrf.mxu0
        %v2200 = vadd.f32 0.0, %v2199
        %v2201 = vpop.f32.mrf.mxu0
        %2202 = vdwg.mxu0
        %v2203 = vadd.f32 %v1155, %v2197
        %v2204 = vadd.f32 %v1156, %v2200
        %v2205 = vld [vmem:[%s1100] sm:$0x1]
        %v2207 = vlaneseq
        %v2208 = vshrl.u32 %v2207, 7
        %v2209 = vsub.s32 0, %v2208
        %v2210 = vrot.slane %v2205, %v2209
        %v2212 = vadd.f32 %v2203, %v2210
        %v2213 = vadd.f32 %v2204, %v2210
        %v2214 = vld [vmem:[%s1103] sm:$0x1]
        %v2215 = vld [vmem:[%s1106] sm:$0x1]
        %2216 = vadd.xlane.f32.xlu0 %v2212
        %v2217 = vpop.xlane.xlu0 %2216
        %2218 = vadd.xlane.f32.xlu0 %v2213
        %v2219 = vpop.xlane.xlu0 %2218
        %v2220 = vrcp.pop 128.0
        %v2221 = vmul.f32 %v2217, %v2220
        %v2222 = vmul.f32 %v2219, %v2220
        %v2223 = vsub.f32 %v2212, %v2221
        %v2224 = vsub.f32 %v2213, %v2222
        %v2225 = vmul.f32 %v2223, %v2223
        %v2226 = vmul.f32 %v2224, %v2224
        %2227 = vadd.xlane.f32.xlu0 %v2225
        %v2228 = vpop.xlane.xlu0 %2227
        %2229 = vadd.xlane.f32.xlu0 %v2226
        %v2230 = vpop.xlane.xlu0 %2229
        %v2231 = vmul.f32 %v2228, %v2220
        %v2232 = vmul.f32 %v2230, %v2220
        %v2233 = vadd.f32 %v2231, 1e-05
        %v2234 = vadd.f32 %v2232, 1e-05
        %v2235 = vrsqrt.pop %v2233
        %v2236 = vrsqrt.pop %v2234
        %v2237 = vmul.f32 %v2223, %v2235
        %v2238 = vmul.f32 %v2224, %v2236
        %v2240 = vlaneseq
        %v2241 = vshrl.u32 %v2240, 7
        %v2242 = vsub.s32 0, %v2241
        %v2243 = vrot.slane %v2214, %v2242
        %v2245 = vmul.f32 %v2237, %v2243
        %v2246 = vmul.f32 %v2238, %v2243
        %v2248 = vlaneseq
        %v2249 = vshrl.u32 %v2248, 7
        %v2250 = vsub.s32 0, %v2249
        %v2251 = vrot.slane %v2215, %v2250
        %v2253 = vadd.f32 %v2245, %v2251
        %v2254 = vadd.f32 %v2246, %v2251
        %v2255 = vpack.c.bf16 %v2254, %v2253
        %v2256 = vld [vmem:[%s930] sm:$0xf]
        %v2257 = vld [vmem:[%s930 + $0x4] sm:$0xf]
        %v2258 = vld [vmem:[%s930 + $0x8] sm:$0xf]
        %v2259 = vld [vmem:[%s930 + $0xc] sm:$0xf]
        %v2260 = vld [vmem:[%s930 + $0x10] sm:$0xf]
        %v2261 = vld [vmem:[%s930 + $0x14] sm:$0xf]
        %v2262 = vld [vmem:[%s930 + $0x18] sm:$0xf]
        %v2263 = vld [vmem:[%s930 + $0x1c] sm:$0xf]
        %v2264 = vld [vmem:[%s930 + $0x20] sm:$0xf]
        %v2265 = vld [vmem:[%s930 + $0x24] sm:$0xf]
        %v2266 = vld [vmem:[%s930 + $0x28] sm:$0xf]
        %v2267 = vld [vmem:[%s930 + $0x2c] sm:$0xf]
        %v2268 = vld [vmem:[%s930 + $0x30] sm:$0xf]
        %v2269 = vld [vmem:[%s930 + $0x34] sm:$0xf]
        %v2270 = vld [vmem:[%s930 + $0x38] sm:$0xf]
        %v2271 = vld [vmem:[%s930 + $0x3c] sm:$0xf]
        %v2272 = vld [vmem:[%s1109] sm:$0x1]
        %v2274 = vlaneseq
        %v2275 = vshrl.u32 %v2274, 7
        %v2276 = vsub.s32 0, %v2275
        %v2277 = vrot.slane %v2272, %v2276
        %v2295 = vunpack.c.l.b16 %v2256
        %v2296 = vunpack.c.l.b16 %v2257
        %v2297 = vunpack.c.l.b16 %v2258
        %v2298 = vunpack.c.l.b16 %v2259
        %v2299 = vunpack.c.l.b16 %v2260
        %v2300 = vunpack.c.l.b16 %v2261
        %v2301 = vunpack.c.l.b16 %v2262
        %v2302 = vunpack.c.l.b16 %v2263
        %v2303 = vunpack.c.l.b16 %v2264
        %v2304 = vunpack.c.l.b16 %v2265
        %v2305 = vunpack.c.l.b16 %v2266
        %v2306 = vunpack.c.l.b16 %v2267
        %v2307 = vunpack.c.l.b16 %v2268
        %v2308 = vunpack.c.l.b16 %v2269
        %v2309 = vunpack.c.l.b16 %v2270
        %v2310 = vunpack.c.l.b16 %v2271
        %v2311 = vpack.c.b16 %v2296, %v2295
        %v2312 = vpack.c.b16 %v2298, %v2297
        %v2313 = vpack.c.b16 %v2300, %v2299
        %v2314 = vpack.c.b16 %v2302, %v2301
        %v2315 = vpack.c.b16 %v2304, %v2303
        %v2316 = vpack.c.b16 %v2306, %v2305
        %v2317 = vpack.c.b16 %v2308, %v2307
        %v2318 = vpack.c.b16 %v2310, %v2309
        %2327 = vmatprep.subr.bf16.mxu0 0
        %2328 = vmatpush1.bf16.msra.mxu0 %v2318
        %2329 = vmatprep.subr.bf16.mxu0 0
        %2330 = vmatpush1.bf16.msra.mxu0 %v2317
        %2331 = vmatprep.subr.bf16.mxu0 0
        %2332 = vmatpush1.bf16.msra.mxu0 %v2316
        %2333 = vmatprep.subr.bf16.mxu0 0
        %2334 = vmatpush1.bf16.msra.mxu0 %v2315
        %2335 = vmatprep.subr.bf16.mxu0 0
        %2336 = vmatpush1.bf16.msra.mxu0 %v2314
        %2337 = vmatprep.subr.bf16.mxu0 0
        %2338 = vmatpush1.bf16.msra.mxu0 %v2313
        %2339 = vmatprep.subr.bf16.mxu0 0
        %2340 = vmatpush1.bf16.msra.mxu0 %v2312
        %2341 = vmatprep.subr.bf16.mxu0 0
        %2342 = vmatpush1.bf16.msra.mxu0 %v2311
        %2343 = vmatprep.subr.bf16.mxu0 0
        %2344 = vmatpush2.bf16.msra.mxu0 0
        %2345 = vmatprep.subr.bf16.mxu0 0
        %2346 = vmatpush2.bf16.msra.mxu0 0
        %2347 = vmatprep.subr.bf16.mxu0 0
        %2348 = vmatpush2.bf16.msra.mxu0 0
        %2349 = vmatprep.subr.bf16.mxu0 0
        %2350 = vmatpush2.bf16.msra.mxu0 0
        %2351 = vmatprep.subr.bf16.mxu0 0
        %2352 = vmatpush2.bf16.msra.mxu0 0
        %2353 = vmatprep.subr.bf16.mxu0 0
        %2354 = vmatpush2.bf16.msra.mxu0 0
        %2355 = vmatprep.subr.bf16.mxu0 0
        %2356 = vmatpush2.bf16.msra.mxu0 0
        %2357 = vmatprep.subr.bf16.mxu0 0
        %2358 = vmatpush2.bf16.msra.mxu0 0
        %2359 = vmatprep.mubr.bf16.mxu0 0
        %2360 = vmatmul.mubr.bf16.gmra.mxu0 %v2255
        %v2361 = vpop.f32.mrf.mxu0
        %v2362 = vadd.f32 %v2277, %v2361
        %v2363 = vpop.f32.mrf.mxu0
        %v2364 = vpop.f32.mrf.mxu0
        %v2365 = vadd.f32 %v2277, %v2364
        %v2366 = vpop.f32.mrf.mxu0
        %2367 = vdwg.mxu0
        %v2368 = vld [vmem:[%s1114] sm:$0xff]
        %v2369 = vld [vmem:[%s1114 + $0x8] sm:$0xff]
        %v2370 = vld [vmem:[%s1114 + $0x10] sm:$0xff]
        %v2371 = vld [vmem:[%s1114 + $0x18] sm:$0xff]
        %v2372 = vld [vmem:[%s1114 + $0x20] sm:$0xff]
        %v2373 = vld [vmem:[%s1114 + $0x28] sm:$0xff]
        %v2374 = vld [vmem:[%s1114 + $0x30] sm:$0xff]
        %v2375 = vld [vmem:[%s1114 + $0x38] sm:$0xff]
        %v2376 = vld [vmem:[%s1114 + $0x40] sm:$0xff]
        %v2377 = vld [vmem:[%s1114 + $0x48] sm:$0xff]
        %v2378 = vld [vmem:[%s1114 + $0x50] sm:$0xff]
        %v2379 = vld [vmem:[%s1114 + $0x58] sm:$0xff]
        %v2380 = vld [vmem:[%s1114 + $0x60] sm:$0xff]
        %v2381 = vld [vmem:[%s1114 + $0x68] sm:$0xff]
        %v2382 = vld [vmem:[%s1114 + $0x70] sm:$0xff]
        %v2383 = vld [vmem:[%s1114 + $0x78] sm:$0xff]
        %v2384 = vld [vmem:[%s1118] sm:$0x3]
        %v2386 = vlaneseq
        %v2387 = vshrl.u32 %v2386, 7
        %v2388 = vsub.s32 0, %v2387
        %v2389 = vrot.slane %v2384, %v2388
        %v2390 = vlaneseq
        %v2391 = vshrl.u32 %v2390, 7
        %v2392 = vsub.s32 1, %v2391
        %v2393 = vrot.slane %v2384, %v2392
        %v2399 = vunpack.c.l.b16 %v1157
        %v2400 = vunpack.c.l.b16 %v1158
        %v2401 = vunpack.c.l.b16 %v1159
        %v2402 = vpack.c.b16 %v2400, %v2399
        %v2403 = vpack.c.b16 %v2401, %v2401
        %v2422 = vunpack.c.l.b16 %v2368
        %v2423 = vunpack.c.h.b16 %v2368
        %v2424 = vunpack.c.l.b16 %v2369
        %v2425 = vunpack.c.h.b16 %v2369
        %v2426 = vunpack.c.l.b16 %v2370
        %v2427 = vunpack.c.h.b16 %v2370
        %v2428 = vunpack.c.l.b16 %v2371
        %v2429 = vunpack.c.h.b16 %v2371
        %v2430 = vunpack.c.l.b16 %v2372
        %v2431 = vunpack.c.h.b16 %v2372
        %v2432 = vunpack.c.l.b16 %v2373
        %v2433 = vunpack.c.h.b16 %v2373
        %v2434 = vunpack.c.l.b16 %v2374
        %v2435 = vunpack.c.h.b16 %v2374
        %v2436 = vunpack.c.l.b16 %v2375
        %v2437 = vunpack.c.h.b16 %v2375
        %v2438 = vunpack.c.l.b16 %v2376
        %v2439 = vunpack.c.h.b16 %v2376
        %v2440 = vunpack.c.l.b16 %v2377
        %v2441 = vunpack.c.h.b16 %v2377
        %v2442 = vunpack.c.l.b16 %v2378
        %v2443 = vunpack.c.h.b16 %v2378
        %v2444 = vunpack.c.l.b16 %v2379
        %v2445 = vunpack.c.h.b16 %v2379
        %v2446 = vunpack.c.l.b16 %v2380
        %v2447 = vunpack.c.h.b16 %v2380
        %v2448 = vunpack.c.l.b16 %v2381
        %v2449 = vunpack.c.h.b16 %v2381
        %v2450 = vunpack.c.l.b16 %v2382
        %v2451 = vunpack.c.h.b16 %v2382
        %v2452 = vunpack.c.l.b16 %v2383
        %v2453 = vunpack.c.h.b16 %v2383
        %v2454 = vpack.c.b16 %v2424, %v2422
        %v2455 = vpack.c.b16 %v2425, %v2423
        %v2456 = vpack.c.b16 %v2428, %v2426
        %v2457 = vpack.c.b16 %v2429, %v2427
        %v2458 = vpack.c.b16 %v2432, %v2430
        %v2459 = vpack.c.b16 %v2433, %v2431
        %v2460 = vpack.c.b16 %v2436, %v2434
        %v2461 = vpack.c.b16 %v2437, %v2435
        %v2462 = vpack.c.b16 %v2440, %v2438
        %v2463 = vpack.c.b16 %v2441, %v2439
        %v2464 = vpack.c.b16 %v2444, %v2442
        %v2465 = vpack.c.b16 %v2445, %v2443
        %v2466 = vpack.c.b16 %v2448, %v2446
        %v2467 = vpack.c.b16 %v2449, %v2447
        %v2468 = vpack.c.b16 %v2452, %v2450
        %v2469 = vpack.c.b16 %v2453, %v2451
        %2486 = vmatprep.subr.bf16.mxu0 %v2469
        %2487 = vmatpush1.bf16.msra.mxu0 %v2468
        %2488 = vmatprep.subr.bf16.mxu0 %v2467
        %2489 = vmatpush1.bf16.msra.mxu0 %v2466
        %2490 = vmatprep.subr.bf16.mxu0 %v2465
        %2491 = vmatpush1.bf16.msra.mxu0 %v2464
        %2492 = vmatprep.subr.bf16.mxu0 %v2463
        %2493 = vmatpush1.bf16.msra.mxu0 %v2462
        %2494 = vmatprep.subr.bf16.mxu0 %v2461
        %2495 = vmatpush1.bf16.msra.mxu0 %v2460
        %2496 = vmatprep.subr.bf16.mxu0 %v2459
        %2497 = vmatpush1.bf16.msra.mxu0 %v2458
        %2498 = vmatprep.subr.bf16.mxu0 %v2457
        %2499 = vmatpush1.bf16.msra.mxu0 %v2456
        %2500 = vmatprep.subr.bf16.mxu0 %v2455
        %2501 = vmatpush1.bf16.msra.mxu0 %v2454
        %2502 = vmatprep.subr.bf16.mxu0 0
        %2503 = vmatpush2.bf16.msra.mxu0 0
        %2504 = vmatprep.subr.bf16.mxu0 0
        %2505 = vmatpush2.bf16.msra.mxu0 0
        %2506 = vmatprep.subr.bf16.mxu0 0
        %2507 = vmatpush2.bf16.msra.mxu0 0
        %2508 = vmatprep.subr.bf16.mxu0 0
        %2509 = vmatpush2.bf16.msra.mxu0 0
        %2510 = vmatprep.subr.bf16.mxu0 0
        %2511 = vmatpush2.bf16.msra.mxu0 0
        %2512 = vmatprep.subr.bf16.mxu0 0
        %2513 = vmatpush2.bf16.msra.mxu0 0
        %2514 = vmatprep.subr.bf16.mxu0 0
        %2515 = vmatpush2.bf16.msra.mxu0 0
        %2516 = vmatprep.subr.bf16.mxu0 0
        %2517 = vmatpush2.bf16.msra.mxu0 0
        %2518 = vmatprep.mubr.bf16.mxu0 0
        %2519 = vmatmul.mubr.bf16.gmra.mxu0 %v2402
        %v2520 = vpop.f32.mrf.mxu0
        %v2521 = vadd.f32 %v2389, %v2520
        %v2522 = vpop.f32.mrf.mxu0
        %v2523 = vadd.f32 %v2393, %v2522
        %v2524 = vpop.f32.mrf.mxu0
        %v2525 = vadd.f32 %v2389, %v2524
        %v2526 = vpop.f32.mrf.mxu0
        %v2527 = vadd.f32 %v2393, %v2526
        %2528 = vmatprep.mubr.bf16.mxu0 0
        %2529 = vmatmul.mubr.bf16.gmra.mxu0 %v2403
        %v2530 = vpop.f32.mrf.mxu0
        %v2531 = vadd.f32 %v2389, %v2530
        %v2532 = vpop.f32.mrf.mxu0
        %v2533 = vadd.f32 %v2393, %v2532
        %v2534 = vpop.f32.mrf.mxu0
        %v2535 = vpop.f32.mrf.mxu0
        %2536 = vdwg.mxu0
        %v2537 = vld [vmem:[%s939] sm:$0xf]
        %v2538 = vld [vmem:[%s939 + $0x4] sm:$0xf]
        %v2539 = vld [vmem:[%s939 + $0x8] sm:$0xf]
        %v2540 = vld [vmem:[%s939 + $0xc] sm:$0xf]
        %v2541 = vld [vmem:[%s939 + $0x10] sm:$0xf]
        %v2542 = vld [vmem:[%s939 + $0x14] sm:$0xf]
        %v2543 = vld [vmem:[%s939 + $0x18] sm:$0xf]
        %v2544 = vld [vmem:[%s939 + $0x1c] sm:$0xf]
        %v2545 = vld [vmem:[%s939 + $0x20] sm:$0xf]
        %v2546 = vld [vmem:[%s939 + $0x24] sm:$0xf]
        %v2547 = vld [vmem:[%s939 + $0x28] sm:$0xf]
        %v2548 = vld [vmem:[%s939 + $0x2c] sm:$0xf]
        %v2549 = vld [vmem:[%s939 + $0x30] sm:$0xf]
        %v2550 = vld [vmem:[%s939 + $0x34] sm:$0xf]
        %v2551 = vld [vmem:[%s939 + $0x38] sm:$0xf]
        %v2552 = vld [vmem:[%s939 + $0x3c] sm:$0xf]
        %v2553 = vld [vmem:[%s3] sm:$0xff]
        %v2554 = vld [vmem:[%s3 + $0x8] sm:$0xff]
        %v2556 = vsel %vm1440, %v2362, 0
        %v2559 = vsel %vm1440, %v2365, 0
        %v2562 = vsel %vm1440, %v2521, 0
        %v2565 = vsel %vm1440, %v2525, 0
        %v2568 = vsel %vm1440, %v2531, 0
        %2570 = vmatprep.subr.mxu0 0.0
        %2571 = vmatpush1.xpose.msra.mxu0 0.0
        %2572 = vmatprep.subr.mxu0 0.0
        %2573 = vmatpush1.xpose.msra.mxu0 0.0
        %2574 = vmatprep.subr.mxu0 0.0
        %2575 = vmatpush1.xpose.msra.mxu0 0.0
        %2576 = vmatprep.subr.mxu0 0.0
        %2577 = vmatpush1.xpose.msra.mxu0 0.0
        %2578 = vmatprep.subr.mxu0 0.0
        %2579 = vmatpush1.xpose.msra.mxu0 0.0
        %2580 = vmatprep.subr.mxu0 0.0
        %2581 = vmatpush1.xpose.msra.mxu0 0.0
        %2582 = vmatprep.subr.mxu0 0.0
        %2583 = vmatpush1.xpose.msra.mxu0 0.0
        %2584 = vmatprep.subr.mxu0 0.0
        %2585 = vmatpush1.xpose.msra.mxu0 0.0
        %2586 = vmatprep.subr.mxu0 0.0
        %2587 = vmatpush1.xpose.msra.mxu0 0.0
        %2588 = vmatprep.subr.mxu0 0.0
        %2589 = vmatpush1.xpose.msra.mxu0 0.0
        %2590 = vmatprep.subr.mxu0 0.0
        %2591 = vmatpush1.xpose.msra.mxu0 0.0
        %2592 = vmatprep.subr.mxu0 0.0
        %2593 = vmatpush1.xpose.msra.mxu0 0.0
        %2594 = vmatprep.subr.mxu0 0.0
        %2595 = vmatpush1.xpose.msra.mxu0 0.0
        %2596 = vmatprep.subr.mxu0 0.0
        %2597 = vmatpush1.xpose.msra.mxu0 %v2568
        %2598 = vmatprep.subr.mxu0 0.0
        %2599 = vmatpush1.xpose.msra.mxu0 %v2565
        %2600 = vmatprep.subr.mxu0 0.0
        %2601 = vmatpush1.xpose.msra.mxu0 %v2562
        %2602 = vmatprep.subr.mxu0 0.0
        %2603 = vmatpush2.xpose.msra.mxu0 0.0
        %2604 = vmatprep.subr.mxu0 0.0
        %2605 = vmatpush2.xpose.msra.mxu0 0.0
        %2606 = vmatprep.subr.mxu0 0.0
        %2607 = vmatpush2.xpose.msra.mxu0 0.0
        %2608 = vmatprep.subr.mxu0 0.0
        %2609 = vmatpush2.xpose.msra.mxu0 0.0
        %2610 = vmatprep.subr.mxu0 0.0
        %2611 = vmatpush2.xpose.msra.mxu0 0.0
        %2612 = vmatprep.subr.mxu0 0.0
        %2613 = vmatpush2.xpose.msra.mxu0 0.0
        %2614 = vmatprep.subr.mxu0 0.0
        %2615 = vmatpush2.xpose.msra.mxu0 0.0
        %2616 = vmatprep.subr.mxu0 0.0
        %2617 = vmatpush2.xpose.msra.mxu0 0.0
        %2618 = vmatprep.subr.mxu0 0.0
        %2619 = vmatpush2.xpose.msra.mxu0 0.0
        %2620 = vmatprep.subr.mxu0 0.0
        %2621 = vmatpush2.xpose.msra.mxu0 0.0
        %2622 = vmatprep.subr.mxu0 0.0
        %2623 = vmatpush2.xpose.msra.mxu0 0.0
        %2624 = vmatprep.subr.mxu0 0.0
        %2625 = vmatpush2.xpose.msra.mxu0 0.0
        %2626 = vmatprep.subr.mxu0 0.0
        %2627 = vmatpush2.xpose.msra.mxu0 0.0
        %2628 = vmatprep.subr.mxu0 0.0
        %2629 = vmatpush2.xpose.msra.mxu0 0.0
        %2630 = vmatprep.subr.mxu0 0.0
        %2631 = vmatpush2.xpose.msra.mxu0 0.0
        %2632 = vmatprep.subr.mxu0 0.0
        %2633 = vmatpush2.xpose.msra.mxu0 0.0
        %2634 = vmatprep.mubr.f32.mxu0 0.0
        %2635 = vmatmul.mubr.f32.gmra.mxu0 %v2556
        %v2636 = vpop.f32.mrf.mxu0
        %v2637 = vadd.f32 %v2553, %v2636
        %v2638 = vpop.f32.mrf.mxu0
        %2639 = vmatprep.mubr.f32.mxu0 0.0
        %2640 = vmatmul.mubr.f32.gmra.mxu0 %v2559
        %v2641 = vpop.f32.mrf.mxu0
        %v2642 = vadd.f32 %v2554, %v2641
        %v2643 = vpop.f32.mrf.mxu0
        %2644 = vdwg.mxu0
        %vm2645 = vcmask 162816
        %v2646 = vsel %vm2645, %v2637, -inf
        %2647 = vmax.xlane.f32.xlu0 %v2646
        %v2648 = vpop.xlane.xlu0 %2647
        %v2649 = vsel %vm2645, %v2642, -inf
        %2650 = vmax.xlane.f32.xlu0 %v2649
        %v2651 = vpop.xlane.xlu0 %2650
        %v2652 = vsub.f32 %v2637, %v2648
        %v2653 = vsub.f32 %v2642, %v2651
        %v2654 = vmul.f32 %v2652, 1.442695
        %v2655 = vpow.pop %v2654
        %v2656 = vmul.f32 %v2653, 1.442695
        %v2657 = vpow.pop %v2656
        %v2658 = vsel %vm2645, %v2655, 0.0
        %2659 = vadd.xlane.f32.xlu0 %v2658
        %v2660 = vpop.xlane.xlu0 %2659
        %v2661 = vsel %vm2645, %v2657, 0.0
        %2662 = vadd.xlane.f32.xlu0 %v2661
        %v2663 = vpop.xlane.xlu0 %2662
        %v2664 = vrcp.pop %v2660
        %v2665 = vrcp.pop %v2663
        %v2666 = vmul.f32 %v2655, %v2664
        %v2667 = vmul.f32 %v2657, %v2665
        %v2668 = vpack.c.bf16 %v2667, %v2666
        %v2669 = vpack.c.bf16 %v2527, %v2523
        %v2670 = vpack.c.bf16 %v2533, %v2533
        %v2672 = vsel %vm2645, %v2668, 0
        %vm2674 = vcmask 1041408
        %v2676 = vsel %vm2674, %v2670, 0
        %2678 = vmatprep.subr.bf16.mxu0 0
        %2679 = vmatpush1.bf16.msra.mxu0 0
        %2680 = vmatprep.subr.bf16.mxu0 0
        %2681 = vmatpush1.bf16.msra.mxu0 0
        %2682 = vmatprep.subr.bf16.mxu0 0
        %2683 = vmatpush1.bf16.msra.mxu0 0
        %2684 = vmatprep.subr.bf16.mxu0 0
        %2685 = vmatpush1.bf16.msra.mxu0 0
        %2686 = vmatprep.subr.bf16.mxu0 0
        %2687 = vmatpush1.bf16.msra.mxu0 0
        %2688 = vmatprep.subr.bf16.mxu0 0
        %2689 = vmatpush1.bf16.msra.mxu0 0
        %2690 = vmatprep.subr.bf16.mxu0 0
        %2691 = vmatpush1.bf16.msra.mxu0 %v2676
        %2692 = vmatprep.subr.bf16.mxu0 0
        %2693 = vmatpush1.bf16.msra.mxu0 %v2669
        %2694 = vmatprep.subr.bf16.mxu0 0
        %2695 = vmatpush2.bf16.msra.mxu0 0
        %2696 = vmatprep.subr.bf16.mxu0 0
        %2697 = vmatpush2.bf16.msra.mxu0 0
        %2698 = vmatprep.subr.bf16.mxu0 0
        %2699 = vmatpush2.bf16.msra.mxu0 0
        %2700 = vmatprep.subr.bf16.mxu0 0
        %2701 = vmatpush2.bf16.msra.mxu0 0
        %2702 = vmatprep.subr.bf16.mxu0 0
        %2703 = vmatpush2.bf16.msra.mxu0 0
        %2704 = vmatprep.subr.bf16.mxu0 0
        %2705 = vmatpush2.bf16.msra.mxu0 0
        %2706 = vmatprep.subr.bf16.mxu0 0
        %2707 = vmatpush2.bf16.msra.mxu0 0
        %2708 = vmatprep.subr.bf16.mxu0 0
        %2709 = vmatpush2.bf16.msra.mxu0 0
        %2710 = vmatprep.mubr.bf16.mxu0 0
        %2711 = vmatmul.mubr.bf16.gmra.mxu0 %v2672
        %v2712 = vpop.f32.mrf.mxu0
        %v2713 = vadd.f32 0.0, %v2712
        %v2714 = vpop.f32.mrf.mxu0
        %v2715 = vpop.f32.mrf.mxu0
        %v2716 = vadd.f32 0.0, %v2715
        %v2717 = vpop.f32.mrf.mxu0
        %2718 = vdwg.mxu0
        %2719 = vrot.lane.b32.xlu0 %v2362, 96
        %v2720 = vpop.permute.xlu0 %2719
        %2721 = vrot.lane.b32.xlu0 %v2365, 96
        %v2722 = vpop.permute.xlu0 %2721
        %2723 = vrot.lane.b32.xlu0 %v2521, 96
        %v2724 = vpop.permute.xlu0 %2723
        %2725 = vrot.lane.b32.xlu0 %v2525, 96
        %v2726 = vpop.permute.xlu0 %2725
        %2727 = vrot.lane.b32.xlu0 %v2531, 96
        %v2728 = vpop.permute.xlu0 %2727
        %v2729 = vsel %vm1440, %v2720, 0
        %v2731 = vsel %vm1440, %v2722, 0
        %v2733 = vsel %vm1440, %v2724, 0
        %v2735 = vsel %vm1440, %v2726, 0
        %v2737 = vsel %vm1440, %v2728, 0
        %2739 = vmatprep.subr.mxu0 0.0
        %2740 = vmatpush1.xpose.msra.mxu0 0.0
        %2741 = vmatprep.subr.mxu0 0.0
        %2742 = vmatpush1.xpose.msra.mxu0 0.0
        %2743 = vmatprep.subr.mxu0 0.0
        %2744 = vmatpush1.xpose.msra.mxu0 0.0
        %2745 = vmatprep.subr.mxu0 0.0
        %2746 = vmatpush1.xpose.msra.mxu0 0.0
        %2747 = vmatprep.subr.mxu0 0.0
        %2748 = vmatpush1.xpose.msra.mxu0 0.0
        %2749 = vmatprep.subr.mxu0 0.0
        %2750 = vmatpush1.xpose.msra.mxu0 0.0
        %2751 = vmatprep.subr.mxu0 0.0
        %2752 = vmatpush1.xpose.msra.mxu0 0.0
        %2753 = vmatprep.subr.mxu0 0.0
        %2754 = vmatpush1.xpose.msra.mxu0 0.0
        %2755 = vmatprep.subr.mxu0 0.0
        %2756 = vmatpush1.xpose.msra.mxu0 0.0
        %2757 = vmatprep.subr.mxu0 0.0
        %2758 = vmatpush1.xpose.msra.mxu0 0.0
        %2759 = vmatprep.subr.mxu0 0.0
        %2760 = vmatpush1.xpose.msra.mxu0 0.0
        %2761 = vmatprep.subr.mxu0 0.0
        %2762 = vmatpush1.xpose.msra.mxu0 0.0
        %2763 = vmatprep.subr.mxu0 0.0
        %2764 = vmatpush1.xpose.msra.mxu0 0.0
        %2765 = vmatprep.subr.mxu0 0.0
        %2766 = vmatpush1.xpose.msra.mxu0 %v2737
        %2767 = vmatprep.subr.mxu0 0.0
        %2768 = vmatpush1.xpose.msra.mxu0 %v2735
        %2769 = vmatprep.subr.mxu0 0.0
        %2770 = vmatpush1.xpose.msra.mxu0 %v2733
        %2771 = vmatprep.subr.mxu0 0.0
        %2772 = vmatpush2.xpose.msra.mxu0 0.0
        %2773 = vmatprep.subr.mxu0 0.0
        %2774 = vmatpush2.xpose.msra.mxu0 0.0
        %2775 = vmatprep.subr.mxu0 0.0
        %2776 = vmatpush2.xpose.msra.mxu0 0.0
        %2777 = vmatprep.subr.mxu0 0.0
        %2778 = vmatpush2.xpose.msra.mxu0 0.0
        %2779 = vmatprep.subr.mxu0 0.0
        %2780 = vmatpush2.xpose.msra.mxu0 0.0
        %2781 = vmatprep.subr.mxu0 0.0
        %2782 = vmatpush2.xpose.msra.mxu0 0.0
        %2783 = vmatprep.subr.mxu0 0.0
        %2784 = vmatpush2.xpose.msra.mxu0 0.0
        %2785 = vmatprep.subr.mxu0 0.0
        %2786 = vmatpush2.xpose.msra.mxu0 0.0
        %2787 = vmatprep.subr.mxu0 0.0
        %2788 = vmatpush2.xpose.msra.mxu0 0.0
        %2789 = vmatprep.subr.mxu0 0.0
        %2790 = vmatpush2.xpose.msra.mxu0 0.0
        %2791 = vmatprep.subr.mxu0 0.0
        %2792 = vmatpush2.xpose.msra.mxu0 0.0
        %2793 = vmatprep.subr.mxu0 0.0
        %2794 = vmatpush2.xpose.msra.mxu0 0.0
        %2795 = vmatprep.subr.mxu0 0.0
        %2796 = vmatpush2.xpose.msra.mxu0 0.0
        %2797 = vmatprep.subr.mxu0 0.0
        %2798 = vmatpush2.xpose.msra.mxu0 0.0
        %2799 = vmatprep.subr.mxu0 0.0
        %2800 = vmatpush2.xpose.msra.mxu0 0.0
        %2801 = vmatprep.subr.mxu0 0.0
        %2802 = vmatpush2.xpose.msra.mxu0 0.0
        %2803 = vmatprep.mubr.f32.mxu0 0.0
        %2804 = vmatmul.mubr.f32.gmra.mxu0 %v2729
        %v2805 = vpop.f32.mrf.mxu0
        %v2806 = vadd.f32 %v2553, %v2805
        %v2807 = vpop.f32.mrf.mxu0
        %2808 = vmatprep.mubr.f32.mxu0 0.0
        %2809 = vmatmul.mubr.f32.gmra.mxu0 %v2731
        %v2810 = vpop.f32.mrf.mxu0
        %v2811 = vadd.f32 %v2554, %v2810
        %v2812 = vpop.f32.mrf.mxu0
        %2813 = vdwg.mxu0
        %v2814 = vsel %vm2645, %v2806, -inf
        %2815 = vmax.xlane.f32.xlu0 %v2814
        %v2816 = vpop.xlane.xlu0 %2815
        %v2817 = vsel %vm2645, %v2811, -inf
        %2818 = vmax.xlane.f32.xlu0 %v2817
        %v2819 = vpop.xlane.xlu0 %2818
        %v2820 = vsub.f32 %v2806, %v2816
        %v2821 = vsub.f32 %v2811, %v2819
        %v2822 = vmul.f32 %v2820, 1.442695
        %v2823 = vpow.pop %v2822
        %v2824 = vmul.f32 %v2821, 1.442695
        %v2825 = vpow.pop %v2824
        %v2826 = vsel %vm2645, %v2823, 0.0
        %2827 = vadd.xlane.f32.xlu0 %v2826
        %v2828 = vpop.xlane.xlu0 %2827
        %v2829 = vsel %vm2645, %v2825, 0.0
        %2830 = vadd.xlane.f32.xlu0 %v2829
        %v2831 = vpop.xlane.xlu0 %2830
        %v2832 = vrcp.pop %v2828
        %v2833 = vrcp.pop %v2831
        %v2834 = vmul.f32 %v2823, %v2832
        %v2835 = vmul.f32 %v2825, %v2833
        %v2836 = vpack.c.bf16 %v2835, %v2834
        %2839 = vrot.lane.b32.xlu0 %v2669, 96
        %v2840 = vpop.permute.xlu0 %2839
        %2841 = vrot.lane.b32.xlu0 %v2670, 96
        %v2842 = vpop.permute.xlu0 %2841
        %v2845 = vsel %vm2645, %v2836, 0
        %v2848 = vsel %vm2674, %v2842, 0
        %2850 = vmatprep.subr.bf16.mxu0 0
        %2851 = vmatpush1.bf16.msra.mxu0 0
        %2852 = vmatprep.subr.bf16.mxu0 0
        %2853 = vmatpush1.bf16.msra.mxu0 0
        %2854 = vmatprep.subr.bf16.mxu0 0
        %2855 = vmatpush1.bf16.msra.mxu0 0
        %2856 = vmatprep.subr.bf16.mxu0 0
        %2857 = vmatpush1.bf16.msra.mxu0 0
        %2858 = vmatprep.subr.bf16.mxu0 0
        %2859 = vmatpush1.bf16.msra.mxu0 0
        %2860 = vmatprep.subr.bf16.mxu0 0
        %2861 = vmatpush1.bf16.msra.mxu0 0
        %2862 = vmatprep.subr.bf16.mxu0 0
        %2863 = vmatpush1.bf16.msra.mxu0 %v2848
        %2864 = vmatprep.subr.bf16.mxu0 0
        %2865 = vmatpush1.bf16.msra.mxu0 %v2840
        %2866 = vmatprep.subr.bf16.mxu0 0
        %2867 = vmatpush2.bf16.msra.mxu0 0
        %2868 = vmatprep.subr.bf16.mxu0 0
        %2869 = vmatpush2.bf16.msra.mxu0 0
        %2870 = vmatprep.subr.bf16.mxu0 0
        %2871 = vmatpush2.bf16.msra.mxu0 0
        %2872 = vmatprep.subr.bf16.mxu0 0
        %2873 = vmatpush2.bf16.msra.mxu0 0
        %2874 = vmatprep.subr.bf16.mxu0 0
        %2875 = vmatpush2.bf16.msra.mxu0 0
        %2876 = vmatprep.subr.bf16.mxu0 0
        %2877 = vmatpush2.bf16.msra.mxu0 0
        %2878 = vmatprep.subr.bf16.mxu0 0
        %2879 = vmatpush2.bf16.msra.mxu0 0
        %2880 = vmatprep.subr.bf16.mxu0 0
        %2881 = vmatpush2.bf16.msra.mxu0 0
        %2882 = vmatprep.mubr.bf16.mxu0 0
        %2883 = vmatmul.mubr.bf16.gmra.mxu0 %v2845
        %v2884 = vpop.f32.mrf.mxu0
        %v2885 = vadd.f32 0.0, %v2884
        %v2886 = vpop.f32.mrf.mxu0
        %v2887 = vpop.f32.mrf.mxu0
        %v2888 = vadd.f32 0.0, %v2887
        %v2889 = vpop.f32.mrf.mxu0
        %2890 = vdwg.mxu0
        %2891 = vrot.lane.b32.xlu0 %v2362, 64
        %v2892 = vpop.permute.xlu0 %2891
        %2893 = vrot.lane.b32.xlu0 %v2365, 64
        %v2894 = vpop.permute.xlu0 %2893
        %2895 = vrot.lane.b32.xlu0 %v2521, 64
        %v2896 = vpop.permute.xlu0 %2895
        %2897 = vrot.lane.b32.xlu0 %v2525, 64
        %v2898 = vpop.permute.xlu0 %2897
        %2899 = vrot.lane.b32.xlu0 %v2531, 64
        %v2900 = vpop.permute.xlu0 %2899
        %v2901 = vsel %vm1440, %v2892, 0
        %v2903 = vsel %vm1440, %v2894, 0
        %v2905 = vsel %vm1440, %v2896, 0
        %v2907 = vsel %vm1440, %v2898, 0
        %v2909 = vsel %vm1440, %v2900, 0
        %2911 = vmatprep.subr.mxu0 0.0
        %2912 = vmatpush1.xpose.msra.mxu0 0.0
        %2913 = vmatprep.subr.mxu0 0.0
        %2914 = vmatpush1.xpose.msra.mxu0 0.0
        %2915 = vmatprep.subr.mxu0 0.0
        %2916 = vmatpush1.xpose.msra.mxu0 0.0
        %2917 = vmatprep.subr.mxu0 0.0
        %2918 = vmatpush1.xpose.msra.mxu0 0.0
        %2919 = vmatprep.subr.mxu0 0.0
        %2920 = vmatpush1.xpose.msra.mxu0 0.0
        %2921 = vmatprep.subr.mxu0 0.0
        %2922 = vmatpush1.xpose.msra.mxu0 0.0
        %2923 = vmatprep.subr.mxu0 0.0
        %2924 = vmatpush1.xpose.msra.mxu0 0.0
        %2925 = vmatprep.subr.mxu0 0.0
        %2926 = vmatpush1.xpose.msra.mxu0 0.0
        %2927 = vmatprep.subr.mxu0 0.0
        %2928 = vmatpush1.xpose.msra.mxu0 0.0
        %2929 = vmatprep.subr.mxu0 0.0
        %2930 = vmatpush1.xpose.msra.mxu0 0.0
        %2931 = vmatprep.subr.mxu0 0.0
        %2932 = vmatpush1.xpose.msra.mxu0 0.0
        %2933 = vmatprep.subr.mxu0 0.0
        %2934 = vmatpush1.xpose.msra.mxu0 0.0
        %2935 = vmatprep.subr.mxu0 0.0
        %2936 = vmatpush1.xpose.msra.mxu0 0.0
        %2937 = vmatprep.subr.mxu0 0.0
        %2938 = vmatpush1.xpose.msra.mxu0 %v2909
        %2939 = vmatprep.subr.mxu0 0.0
        %2940 = vmatpush1.xpose.msra.mxu0 %v2907
        %2941 = vmatprep.subr.mxu0 0.0
        %2942 = vmatpush1.xpose.msra.mxu0 %v2905
        %2943 = vmatprep.subr.mxu0 0.0
        %2944 = vmatpush2.xpose.msra.mxu0 0.0
        %2945 = vmatprep.subr.mxu0 0.0
        %2946 = vmatpush2.xpose.msra.mxu0 0.0
        %2947 = vmatprep.subr.mxu0 0.0
        %2948 = vmatpush2.xpose.msra.mxu0 0.0
        %2949 = vmatprep.subr.mxu0 0.0
        %2950 = vmatpush2.xpose.msra.mxu0 0.0
        %2951 = vmatprep.subr.mxu0 0.0
        %2952 = vmatpush2.xpose.msra.mxu0 0.0
        %2953 = vmatprep.subr.mxu0 0.0
        %2954 = vmatpush2.xpose.msra.mxu0 0.0
        %2955 = vmatprep.subr.mxu0 0.0
        %2956 = vmatpush2.xpose.msra.mxu0 0.0
        %2957 = vmatprep.subr.mxu0 0.0
        %2958 = vmatpush2.xpose.msra.mxu0 0.0
        %2959 = vmatprep.subr.mxu0 0.0
        %2960 = vmatpush2.xpose.msra.mxu0 0.0
        %2961 = vmatprep.subr.mxu0 0.0
        %2962 = vmatpush2.xpose.msra.mxu0 0.0
        %2963 = vmatprep.subr.mxu0 0.0
        %2964 = vmatpush2.xpose.msra.mxu0 0.0
        %2965 = vmatprep.subr.mxu0 0.0
        %2966 = vmatpush2.xpose.msra.mxu0 0.0
        %2967 = vmatprep.subr.mxu0 0.0
        %2968 = vmatpush2.xpose.msra.mxu0 0.0
        %2969 = vmatprep.subr.mxu0 0.0
        %2970 = vmatpush2.xpose.msra.mxu0 0.0
        %2971 = vmatprep.subr.mxu0 0.0
        %2972 = vmatpush2.xpose.msra.mxu0 0.0
        %2973 = vmatprep.subr.mxu0 0.0
        %2974 = vmatpush2.xpose.msra.mxu0 0.0
        %2975 = vmatprep.mubr.f32.mxu0 0.0
        %2976 = vmatmul.mubr.f32.gmra.mxu0 %v2901
        %v2977 = vpop.f32.mrf.mxu0
        %v2978 = vadd.f32 %v2553, %v2977
        %v2979 = vpop.f32.mrf.mxu0
        %2980 = vmatprep.mubr.f32.mxu0 0.0
        %2981 = vmatmul.mubr.f32.gmra.mxu0 %v2903
        %v2982 = vpop.f32.mrf.mxu0
        %v2983 = vadd.f32 %v2554, %v2982
        %v2984 = vpop.f32.mrf.mxu0
        %2985 = vdwg.mxu0
        %v2986 = vsel %vm2645, %v2978, -inf
        %2987 = vmax.xlane.f32.xlu0 %v2986
        %v2988 = vpop.xlane.xlu0 %2987
        %v2989 = vsel %vm2645, %v2983, -inf
        %2990 = vmax.xlane.f32.xlu0 %v2989
        %v2991 = vpop.xlane.xlu0 %2990
        %v2992 = vsub.f32 %v2978, %v2988
        %v2993 = vsub.f32 %v2983, %v2991
        %v2994 = vmul.f32 %v2992, 1.442695
        %v2995 = vpow.pop %v2994
        %v2996 = vmul.f32 %v2993, 1.442695
        %v2997 = vpow.pop %v2996
        %v2998 = vsel %vm2645, %v2995, 0.0
        %2999 = vadd.xlane.f32.xlu0 %v2998
        %v3000 = vpop.xlane.xlu0 %2999
        %v3001 = vsel %vm2645, %v2997, 0.0
        %3002 = vadd.xlane.f32.xlu0 %v3001
        %v3003 = vpop.xlane.xlu0 %3002
        %v3004 = vrcp.pop %v3000
        %v3005 = vrcp.pop %v3003
        %v3006 = vmul.f32 %v2995, %v3004
        %v3007 = vmul.f32 %v2997, %v3005
        %v3008 = vpack.c.bf16 %v3007, %v3006
        %3009 = vrot.lane.b32.xlu0 %v2669, 64
        %v3010 = vpop.permute.xlu0 %3009
        %3011 = vrot.lane.b32.xlu0 %v2670, 64
        %v3012 = vpop.permute.xlu0 %3011
        %v3015 = vsel %vm2645, %v3008, 0
        %v3018 = vsel %vm2674, %v3012, 0
        %3020 = vmatprep.subr.bf16.mxu0 0
        %3021 = vmatpush1.bf16.msra.mxu0 0
        %3022 = vmatprep.subr.bf16.mxu0 0
        %3023 = vmatpush1.bf16.msra.mxu0 0
        %3024 = vmatprep.subr.bf16.mxu0 0
        %3025 = vmatpush1.bf16.msra.mxu0 0
        %3026 = vmatprep.subr.bf16.mxu0 0
        %3027 = vmatpush1.bf16.msra.mxu0 0
        %3028 = vmatprep.subr.bf16.mxu0 0
        %3029 = vmatpush1.bf16.msra.mxu0 0
        %3030 = vmatprep.subr.bf16.mxu0 0
        %3031 = vmatpush1.bf16.msra.mxu0 0
        %3032 = vmatprep.subr.bf16.mxu0 0
        %3033 = vmatpush1.bf16.msra.mxu0 %v3018
        %3034 = vmatprep.subr.bf16.mxu0 0
        %3035 = vmatpush1.bf16.msra.mxu0 %v3010
        %3036 = vmatprep.subr.bf16.mxu0 0
        %3037 = vmatpush2.bf16.msra.mxu0 0
        %3038 = vmatprep.subr.bf16.mxu0 0
        %3039 = vmatpush2.bf16.msra.mxu0 0
        %3040 = vmatprep.subr.bf16.mxu0 0
        %3041 = vmatpush2.bf16.msra.mxu0 0
        %3042 = vmatprep.subr.bf16.mxu0 0
        %3043 = vmatpush2.bf16.msra.mxu0 0
        %3044 = vmatprep.subr.bf16.mxu0 0
        %3045 = vmatpush2.bf16.msra.mxu0 0
        %3046 = vmatprep.subr.bf16.mxu0 0
        %3047 = vmatpush2.bf16.msra.mxu0 0
        %3048 = vmatprep.subr.bf16.mxu0 0
        %3049 = vmatpush2.bf16.msra.mxu0 0
        %3050 = vmatprep.subr.bf16.mxu0 0
        %3051 = vmatpush2.bf16.msra.mxu0 0
        %3052 = vmatprep.mubr.bf16.mxu0 0
        %3053 = vmatmul.mubr.bf16.gmra.mxu0 %v3015
        %v3054 = vpop.f32.mrf.mxu0
        %v3055 = vadd.f32 0.0, %v3054
        %v3056 = vpop.f32.mrf.mxu0
        %v3057 = vpop.f32.mrf.mxu0
        %v3058 = vadd.f32 0.0, %v3057
        %v3059 = vpop.f32.mrf.mxu0
        %3060 = vdwg.mxu0
        %3061 = vrot.lane.b32.xlu0 %v2362, 32
        %v3062 = vpop.permute.xlu0 %3061
        %3063 = vrot.lane.b32.xlu0 %v2365, 32
        %v3064 = vpop.permute.xlu0 %3063
        %3065 = vrot.lane.b32.xlu0 %v2521, 32
        %v3066 = vpop.permute.xlu0 %3065
        %3067 = vrot.lane.b32.xlu0 %v2525, 32
        %v3068 = vpop.permute.xlu0 %3067
        %3069 = vrot.lane.b32.xlu0 %v2531, 32
        %v3070 = vpop.permute.xlu0 %3069
        %v3071 = vsel %vm1440, %v3062, 0
        %v3073 = vsel %vm1440, %v3064, 0
        %v3075 = vsel %vm1440, %v3066, 0
        %v3077 = vsel %vm1440, %v3068, 0
        %v3079 = vsel %vm1440, %v3070, 0
        %3081 = vmatprep.subr.mxu0 0.0
        %3082 = vmatpush1.xpose.msra.mxu0 0.0
        %3083 = vmatprep.subr.mxu0 0.0
        %3084 = vmatpush1.xpose.msra.mxu0 0.0
        %3085 = vmatprep.subr.mxu0 0.0
        %3086 = vmatpush1.xpose.msra.mxu0 0.0
        %3087 = vmatprep.subr.mxu0 0.0
        %3088 = vmatpush1.xpose.msra.mxu0 0.0
        %3089 = vmatprep.subr.mxu0 0.0
        %3090 = vmatpush1.xpose.msra.mxu0 0.0
        %3091 = vmatprep.subr.mxu0 0.0
        %3092 = vmatpush1.xpose.msra.mxu0 0.0
        %3093 = vmatprep.subr.mxu0 0.0
        %3094 = vmatpush1.xpose.msra.mxu0 0.0
        %3095 = vmatprep.subr.mxu0 0.0
        %3096 = vmatpush1.xpose.msra.mxu0 0.0
        %3097 = vmatprep.subr.mxu0 0.0
        %3098 = vmatpush1.xpose.msra.mxu0 0.0
        %3099 = vmatprep.subr.mxu0 0.0
        %3100 = vmatpush1.xpose.msra.mxu0 0.0
        %3101 = vmatprep.subr.mxu0 0.0
        %3102 = vmatpush1.xpose.msra.mxu0 0.0
        %3103 = vmatprep.subr.mxu0 0.0
        %3104 = vmatpush1.xpose.msra.mxu0 0.0
        %3105 = vmatprep.subr.mxu0 0.0
        %3106 = vmatpush1.xpose.msra.mxu0 0.0
        %3107 = vmatprep.subr.mxu0 0.0
        %3108 = vmatpush1.xpose.msra.mxu0 %v3079
        %3109 = vmatprep.subr.mxu0 0.0
        %3110 = vmatpush1.xpose.msra.mxu0 %v3077
        %3111 = vmatprep.subr.mxu0 0.0
        %3112 = vmatpush1.xpose.msra.mxu0 %v3075
        %3113 = vmatprep.subr.mxu0 0.0
        %3114 = vmatpush2.xpose.msra.mxu0 0.0
        %3115 = vmatprep.subr.mxu0 0.0
        %3116 = vmatpush2.xpose.msra.mxu0 0.0
        %3117 = vmatprep.subr.mxu0 0.0
        %3118 = vmatpush2.xpose.msra.mxu0 0.0
        %3119 = vmatprep.subr.mxu0 0.0
        %3120 = vmatpush2.xpose.msra.mxu0 0.0
        %3121 = vmatprep.subr.mxu0 0.0
        %3122 = vmatpush2.xpose.msra.mxu0 0.0
        %3123 = vmatprep.subr.mxu0 0.0
        %3124 = vmatpush2.xpose.msra.mxu0 0.0
        %3125 = vmatprep.subr.mxu0 0.0
        %3126 = vmatpush2.xpose.msra.mxu0 0.0
        %3127 = vmatprep.subr.mxu0 0.0
        %3128 = vmatpush2.xpose.msra.mxu0 0.0
        %3129 = vmatprep.subr.mxu0 0.0
        %3130 = vmatpush2.xpose.msra.mxu0 0.0
        %3131 = vmatprep.subr.mxu0 0.0
        %3132 = vmatpush2.xpose.msra.mxu0 0.0
        %3133 = vmatprep.subr.mxu0 0.0
        %3134 = vmatpush2.xpose.msra.mxu0 0.0
        %3135 = vmatprep.subr.mxu0 0.0
        %3136 = vmatpush2.xpose.msra.mxu0 0.0
        %3137 = vmatprep.subr.mxu0 0.0
        %3138 = vmatpush2.xpose.msra.mxu0 0.0
        %3139 = vmatprep.subr.mxu0 0.0
        %3140 = vmatpush2.xpose.msra.mxu0 0.0
        %3141 = vmatprep.subr.mxu0 0.0
        %3142 = vmatpush2.xpose.msra.mxu0 0.0
        %3143 = vmatprep.subr.mxu0 0.0
        %3144 = vmatpush2.xpose.msra.mxu0 0.0
        %3145 = vmatprep.mubr.f32.mxu0 0.0
        %3146 = vmatmul.mubr.f32.gmra.mxu0 %v3071
        %v3147 = vpop.f32.mrf.mxu0
        %v3148 = vadd.f32 %v2553, %v3147
        %v3149 = vpop.f32.mrf.mxu0
        %3150 = vmatprep.mubr.f32.mxu0 0.0
        %3151 = vmatmul.mubr.f32.gmra.mxu0 %v3073
        %v3152 = vpop.f32.mrf.mxu0
        %v3153 = vadd.f32 %v2554, %v3152
        %v3154 = vpop.f32.mrf.mxu0
        %3155 = vdwg.mxu0
        %v3156 = vsel %vm2645, %v3148, -inf
        %3157 = vmax.xlane.f32.xlu0 %v3156
        %v3158 = vpop.xlane.xlu0 %3157
        %v3159 = vsel %vm2645, %v3153, -inf
        %3160 = vmax.xlane.f32.xlu0 %v3159
        %v3161 = vpop.xlane.xlu0 %3160
        %v3162 = vsub.f32 %v3148, %v3158
        %v3163 = vsub.f32 %v3153, %v3161
        %v3164 = vmul.f32 %v3162, 1.442695
        %v3165 = vpow.pop %v3164
        %v3166 = vmul.f32 %v3163, 1.442695
        %v3167 = vpow.pop %v3166
        %v3168 = vsel %vm2645, %v3165, 0.0
        %3169 = vadd.xlane.f32.xlu0 %v3168
        %v3170 = vpop.xlane.xlu0 %3169
        %v3171 = vsel %vm2645, %v3167, 0.0
        %3172 = vadd.xlane.f32.xlu0 %v3171
        %v3173 = vpop.xlane.xlu0 %3172
        %v3174 = vrcp.pop %v3170
        %v3175 = vrcp.pop %v3173
        %v3176 = vmul.f32 %v3165, %v3174
        %v3177 = vmul.f32 %v3167, %v3175
        %v3178 = vpack.c.bf16 %v3177, %v3176
        %3179 = vrot.lane.b32.xlu0 %v2669, 32
        %v3180 = vpop.permute.xlu0 %3179
        %3181 = vrot.lane.b32.xlu0 %v2670, 32
        %v3182 = vpop.permute.xlu0 %3181
        %v3185 = vsel %vm2645, %v3178, 0
        %v3188 = vsel %vm2674, %v3182, 0
        %3190 = vmatprep.subr.bf16.mxu0 0
        %3191 = vmatpush1.bf16.msra.mxu0 0
        %3192 = vmatprep.subr.bf16.mxu0 0
        %3193 = vmatpush1.bf16.msra.mxu0 0
        %3194 = vmatprep.subr.bf16.mxu0 0
        %3195 = vmatpush1.bf16.msra.mxu0 0
        %3196 = vmatprep.subr.bf16.mxu0 0
        %3197 = vmatpush1.bf16.msra.mxu0 0
        %3198 = vmatprep.subr.bf16.mxu0 0
        %3199 = vmatpush1.bf16.msra.mxu0 0
        %3200 = vmatprep.subr.bf16.mxu0 0
        %3201 = vmatpush1.bf16.msra.mxu0 0
        %3202 = vmatprep.subr.bf16.mxu0 0
        %3203 = vmatpush1.bf16.msra.mxu0 %v3188
        %3204 = vmatprep.subr.bf16.mxu0 0
        %3205 = vmatpush1.bf16.msra.mxu0 %v3180
        %3206 = vmatprep.subr.bf16.mxu0 0
        %3207 = vmatpush2.bf16.msra.mxu0 0
        %3208 = vmatprep.subr.bf16.mxu0 0
        %3209 = vmatpush2.bf16.msra.mxu0 0
        %3210 = vmatprep.subr.bf16.mxu0 0
        %3211 = vmatpush2.bf16.msra.mxu0 0
        %3212 = vmatprep.subr.bf16.mxu0 0
        %3213 = vmatpush2.bf16.msra.mxu0 0
        %3214 = vmatprep.subr.bf16.mxu0 0
        %3215 = vmatpush2.bf16.msra.mxu0 0
        %3216 = vmatprep.subr.bf16.mxu0 0
        %3217 = vmatpush2.bf16.msra.mxu0 0
        %3218 = vmatprep.subr.bf16.mxu0 0
        %3219 = vmatpush2.bf16.msra.mxu0 0
        %3220 = vmatprep.subr.bf16.mxu0 0
        %3221 = vmatpush2.bf16.msra.mxu0 0
        %3222 = vmatprep.mubr.bf16.mxu0 0
        %3223 = vmatmul.mubr.bf16.gmra.mxu0 %v3185
        %v3224 = vpop.f32.mrf.mxu0
        %v3225 = vadd.f32 0.0, %v3224
        %v3226 = vpop.f32.mrf.mxu0
        %v3227 = vpop.f32.mrf.mxu0
        %v3228 = vadd.f32 0.0, %v3227
        %v3229 = vpop.f32.mrf.mxu0
        %3230 = vdwg.mxu0
        %3233 = vrot.lane.b32.xlu0 %v2885, 32
        %v3234 = vpop.permute.xlu0 %3233
        %3235 = vrot.lane.b32.xlu0 %v2888, 32
        %v3236 = vpop.permute.xlu0 %3235
        %3241 = vrot.lane.b32.xlu0 %v3055, 64
        %v3242 = vpop.permute.xlu0 %3241
        %3243 = vrot.lane.b32.xlu0 %v3058, 64
        %v3244 = vpop.permute.xlu0 %3243
        %3249 = vrot.lane.b32.xlu0 %v3225, 96
        %v3250 = vpop.permute.xlu0 %3249
        %3251 = vrot.lane.b32.xlu0 %v3228, 96
        %v3252 = vpop.permute.xlu0 %3251
        %v3255 = vsel %vm1440, %v2713, %v3234
        %v3256 = vsel %vm1440, %v2716, %v3236
        %v3257 = vsel %vm2107, %v3255, %v3242
        %v3258 = vsel %vm2107, %v3256, %v3244
        %v3259 = vsel %vm2110, %v3257, %v3250
        %v3260 = vsel %vm2110, %v3258, %v3252
        %v3261 = vpack.c.bf16 %v3260, %v3259
        %v3278 = vunpack.c.l.b16 %v2537
        %v3279 = vunpack.c.l.b16 %v2538
        %v3280 = vunpack.c.l.b16 %v2539
        %v3281 = vunpack.c.l.b16 %v2540
        %v3282 = vunpack.c.l.b16 %v2541
        %v3283 = vunpack.c.l.b16 %v2542
        %v3284 = vunpack.c.l.b16 %v2543
        %v3285 = vunpack.c.l.b16 %v2544
        %v3286 = vunpack.c.l.b16 %v2545
        %v3287 = vunpack.c.l.b16 %v2546
        %v3288 = vunpack.c.l.b16 %v2547
        %v3289 = vunpack.c.l.b16 %v2548
        %v3290 = vunpack.c.l.b16 %v2549
        %v3291 = vunpack.c.l.b16 %v2550
        %v3292 = vunpack.c.l.b16 %v2551
        %v3293 = vunpack.c.l.b16 %v2552
        %v3294 = vpack.c.b16 %v3279, %v3278
        %v3295 = vpack.c.b16 %v3281, %v3280
        %v3296 = vpack.c.b16 %v3283, %v3282
        %v3297 = vpack.c.b16 %v3285, %v3284
        %v3298 = vpack.c.b16 %v3287, %v3286
        %v3299 = vpack.c.b16 %v3289, %v3288
        %v3300 = vpack.c.b16 %v3291, %v3290
        %v3301 = vpack.c.b16 %v3293, %v3292
        %3310 = vmatprep.subr.bf16.mxu0 0
        %3311 = vmatpush1.bf16.msra.mxu0 %v3301
        %3312 = vmatprep.subr.bf16.mxu0 0
        %3313 = vmatpush1.bf16.msra.mxu0 %v3300
        %3314 = vmatprep.subr.bf16.mxu0 0
        %3315 = vmatpush1.bf16.msra.mxu0 %v3299
        %3316 = vmatprep.subr.bf16.mxu0 0
        %3317 = vmatpush1.bf16.msra.mxu0 %v3298
        %3318 = vmatprep.subr.bf16.mxu0 0
        %3319 = vmatpush1.bf16.msra.mxu0 %v3297
        %3320 = vmatprep.subr.bf16.mxu0 0
        %3321 = vmatpush1.bf16.msra.mxu0 %v3296
        %3322 = vmatprep.subr.bf16.mxu0 0
        %3323 = vmatpush1.bf16.msra.mxu0 %v3295
        %3324 = vmatprep.subr.bf16.mxu0 0
        %3325 = vmatpush1.bf16.msra.mxu0 %v3294
        %3326 = vmatprep.subr.bf16.mxu0 0
        %3327 = vmatpush2.bf16.msra.mxu0 0
        %3328 = vmatprep.subr.bf16.mxu0 0
        %3329 = vmatpush2.bf16.msra.mxu0 0
        %3330 = vmatprep.subr.bf16.mxu0 0
        %3331 = vmatpush2.bf16.msra.mxu0 0
        %3332 = vmatprep.subr.bf16.mxu0 0
        %3333 = vmatpush2.bf16.msra.mxu0 0
        %3334 = vmatprep.subr.bf16.mxu0 0
        %3335 = vmatpush2.bf16.msra.mxu0 0
        %3336 = vmatprep.subr.bf16.mxu0 0
        %3337 = vmatpush2.bf16.msra.mxu0 0
        %3338 = vmatprep.subr.bf16.mxu0 0
        %3339 = vmatpush2.bf16.msra.mxu0 0
        %3340 = vmatprep.subr.bf16.mxu0 0
        %3341 = vmatpush2.bf16.msra.mxu0 0
        %3342 = vmatprep.mubr.bf16.mxu0 0
        %3343 = vmatmul.mubr.bf16.gmra.mxu0 %v3261
        %v3344 = vpop.f32.mrf.mxu0
        %v3345 = vadd.f32 0.0, %v3344
        %v3346 = vpop.f32.mrf.mxu0
        %v3347 = vpop.f32.mrf.mxu0
        %v3348 = vadd.f32 0.0, %v3347
        %v3349 = vpop.f32.mrf.mxu0
        %3350 = vdwg.mxu0
        %v3351 = vadd.f32 %v2253, %v3345
        %v3352 = vadd.f32 %v2254, %v3348
        %v3353 = vld [vmem:[%s1121] sm:$0x1]
        %v3355 = vlaneseq
        %v3356 = vshrl.u32 %v3355, 7
        %v3357 = vsub.s32 0, %v3356
        %v3358 = vrot.slane %v3353, %v3357
        %v3360 = vadd.f32 %v3351, %v3358
        %v3361 = vadd.f32 %v3352, %v3358
        %v3362 = vld [vmem:[%s1124] sm:$0x1]
        %v3363 = vld [vmem:[%s1127] sm:$0x1]
        %3364 = vadd.xlane.f32.xlu0 %v3360
        %v3365 = vpop.xlane.xlu0 %3364
        %3366 = vadd.xlane.f32.xlu0 %v3361
        %v3367 = vpop.xlane.xlu0 %3366
        %v3368 = vmul.f32 %v3365, %v2220
        %v3369 = vmul.f32 %v3367, %v2220
        %v3370 = vsub.f32 %v3360, %v3368
        %v3371 = vsub.f32 %v3361, %v3369
        %v3372 = vmul.f32 %v3370, %v3370
        %v3373 = vmul.f32 %v3371, %v3371
        %3374 = vadd.xlane.f32.xlu0 %v3372
        %v3375 = vpop.xlane.xlu0 %3374
        %3376 = vadd.xlane.f32.xlu0 %v3373
        %v3377 = vpop.xlane.xlu0 %3376
        %v3378 = vmul.f32 %v3375, %v2220
        %v3379 = vmul.f32 %v3377, %v2220
        %v3380 = vadd.f32 %v3378, 1e-05
        %v3381 = vadd.f32 %v3379, 1e-05
        %v3382 = vrsqrt.pop %v3380
        %v3383 = vrsqrt.pop %v3381
        %v3384 = vmul.f32 %v3370, %v3382
        %v3385 = vmul.f32 %v3371, %v3383
        %v3387 = vlaneseq
        %v3388 = vshrl.u32 %v3387, 7
        %v3389 = vsub.s32 0, %v3388
        %v3390 = vrot.slane %v3362, %v3389
        %v3392 = vmul.f32 %v3384, %v3390
        %v3393 = vmul.f32 %v3385, %v3390
        %v3395 = vlaneseq
        %v3396 = vshrl.u32 %v3395, 7
        %v3397 = vsub.s32 0, %v3396
        %v3398 = vrot.slane %v3363, %v3397
        %v3400 = vadd.f32 %v3392, %v3398
        %v3401 = vadd.f32 %v3393, %v3398
        %v3402 = vpack.c.bf16 %v3401, %v3400
        %v3403 = vld [vmem:[%s1132] sm:$0xff]
        %v3404 = vld [vmem:[%s1132 + $0x8] sm:$0xff]
        %v3405 = vld [vmem:[%s1132 + $0x10] sm:$0xff]
        %v3406 = vld [vmem:[%s1132 + $0x18] sm:$0xff]
        %v3407 = vld [vmem:[%s1132 + $0x20] sm:$0xff]
        %v3408 = vld [vmem:[%s1132 + $0x28] sm:$0xff]
        %v3409 = vld [vmem:[%s1132 + $0x30] sm:$0xff]
        %v3410 = vld [vmem:[%s1132 + $0x38] sm:$0xff]
        %v3411 = vld [vmem:[%s1132 + $0x40] sm:$0xff]
        %v3412 = vld [vmem:[%s1132 + $0x48] sm:$0xff]
        %v3413 = vld [vmem:[%s1132 + $0x50] sm:$0xff]
        %v3414 = vld [vmem:[%s1132 + $0x58] sm:$0xff]
        %v3415 = vld [vmem:[%s1132 + $0x60] sm:$0xff]
        %v3416 = vld [vmem:[%s1132 + $0x68] sm:$0xff]
        %v3417 = vld [vmem:[%s1132 + $0x70] sm:$0xff]
        %v3418 = vld [vmem:[%s1132 + $0x78] sm:$0xff]
        %v3419 = vld [vmem:[%s1136] sm:$0x3]
        %v3421 = vlaneseq
        %v3422 = vshrl.u32 %v3421, 7
        %v3423 = vsub.s32 0, %v3422
        %v3424 = vrot.slane %v3419, %v3423
        %v3425 = vlaneseq
        %v3426 = vshrl.u32 %v3425, 7
        %v3427 = vsub.s32 1, %v3426
        %v3428 = vrot.slane %v3419, %v3427
        %v3447 = vunpack.c.l.b16 %v3403
        %v3448 = vunpack.c.h.b16 %v3403
        %v3449 = vunpack.c.l.b16 %v3404
        %v3450 = vunpack.c.h.b16 %v3404
        %v3451 = vunpack.c.l.b16 %v3405
        %v3452 = vunpack.c.h.b16 %v3405
        %v3453 = vunpack.c.l.b16 %v3406
        %v3454 = vunpack.c.h.b16 %v3406
        %v3455 = vunpack.c.l.b16 %v3407
        %v3456 = vunpack.c.h.b16 %v3407
        %v3457 = vunpack.c.l.b16 %v3408
        %v3458 = vunpack.c.h.b16 %v3408
        %v3459 = vunpack.c.l.b16 %v3409
        %v3460 = vunpack.c.h.b16 %v3409
        %v3461 = vunpack.c.l.b16 %v3410
        %v3462 = vunpack.c.h.b16 %v3410
        %v3463 = vunpack.c.l.b16 %v3411
        %v3464 = vunpack.c.h.b16 %v3411
        %v3465 = vunpack.c.l.b16 %v3412
        %v3466 = vunpack.c.h.b16 %v3412
        %v3467 = vunpack.c.l.b16 %v3413
        %v3468 = vunpack.c.h.b16 %v3413
        %v3469 = vunpack.c.l.b16 %v3414
        %v3470 = vunpack.c.h.b16 %v3414
        %v3471 = vunpack.c.l.b16 %v3415
        %v3472 = vunpack.c.h.b16 %v3415
        %v3473 = vunpack.c.l.b16 %v3416
        %v3474 = vunpack.c.h.b16 %v3416
        %v3475 = vunpack.c.l.b16 %v3417
        %v3476 = vunpack.c.h.b16 %v3417
        %v3477 = vunpack.c.l.b16 %v3418
        %v3478 = vunpack.c.h.b16 %v3418
        %v3479 = vpack.c.b16 %v3449, %v3447
        %v3480 = vpack.c.b16 %v3450, %v3448
        %v3481 = vpack.c.b16 %v3453, %v3451
        %v3482 = vpack.c.b16 %v3454, %v3452
        %v3483 = vpack.c.b16 %v3457, %v3455
        %v3484 = vpack.c.b16 %v3458, %v3456
        %v3485 = vpack.c.b16 %v3461, %v3459
        %v3486 = vpack.c.b16 %v3462, %v3460
        %v3487 = vpack.c.b16 %v3465, %v3463
        %v3488 = vpack.c.b16 %v3466, %v3464
        %v3489 = vpack.c.b16 %v3469, %v3467
        %v3490 = vpack.c.b16 %v3470, %v3468
        %v3491 = vpack.c.b16 %v3473, %v3471
        %v3492 = vpack.c.b16 %v3474, %v3472
        %v3493 = vpack.c.b16 %v3477, %v3475
        %v3494 = vpack.c.b16 %v3478, %v3476
        %3511 = vmatprep.subr.bf16.mxu0 %v3494
        %3512 = vmatpush1.bf16.msra.mxu0 %v3493
        %3513 = vmatprep.subr.bf16.mxu0 %v3492
        %3514 = vmatpush1.bf16.msra.mxu0 %v3491
        %3515 = vmatprep.subr.bf16.mxu0 %v3490
        %3516 = vmatpush1.bf16.msra.mxu0 %v3489
        %3517 = vmatprep.subr.bf16.mxu0 %v3488
        %3518 = vmatpush1.bf16.msra.mxu0 %v3487
        %3519 = vmatprep.subr.bf16.mxu0 %v3486
        %3520 = vmatpush1.bf16.msra.mxu0 %v3485
        %3521 = vmatprep.subr.bf16.mxu0 %v3484
        %3522 = vmatpush1.bf16.msra.mxu0 %v3483
        %3523 = vmatprep.subr.bf16.mxu0 %v3482
        %3524 = vmatpush1.bf16.msra.mxu0 %v3481
        %3525 = vmatprep.subr.bf16.mxu0 %v3480
        %3526 = vmatpush1.bf16.msra.mxu0 %v3479
        %3527 = vmatprep.subr.bf16.mxu0 0
        %3528 = vmatpush2.bf16.msra.mxu0 0
        %3529 = vmatprep.subr.bf16.mxu0 0
        %3530 = vmatpush2.bf16.msra.mxu0 0
        %3531 = vmatprep.subr.bf16.mxu0 0
        %3532 = vmatpush2.bf16.msra.mxu0 0
        %3533 = vmatprep.subr.bf16.mxu0 0
        %3534 = vmatpush2.bf16.msra.mxu0 0
        %3535 = vmatprep.subr.bf16.mxu0 0
        %3536 = vmatpush2.bf16.msra.mxu0 0
        %3537 = vmatprep.subr.bf16.mxu0 0
        %3538 = vmatpush2.bf16.msra.mxu0 0
        %3539 = vmatprep.subr.bf16.mxu0 0
        %3540 = vmatpush2.bf16.msra.mxu0 0
        %3541 = vmatprep.subr.bf16.mxu0 0
        %3542 = vmatpush2.bf16.msra.mxu0 0
        %3543 = vmatprep.mubr.bf16.mxu0 0
        %3544 = vmatmul.mubr.bf16.gmra.mxu0 %v3402
        %v3545 = vpop.f32.mrf.mxu0
        %v3546 = vadd.f32 %v3424, %v3545
        %v3547 = vpop.f32.mrf.mxu0
        %v3548 = vadd.f32 %v3428, %v3547
        %v3549 = vpop.f32.mrf.mxu0
        %v3550 = vadd.f32 %v3424, %v3549
        %v3551 = vpop.f32.mrf.mxu0
        %v3552 = vadd.f32 %v3428, %v3551
        %3553 = vdwg.mxu0
        %v3554 = vmax.f32 %v3546, 0.0
        %v3555 = vmax.f32 %v3548, 0.0
        %v3556 = vmax.f32 %v3550, 0.0
        %v3557 = vmax.f32 %v3552, 0.0
        %v3558 = vpack.c.bf16 %v3556, %v3554
        %v3559 = vpack.c.bf16 %v3557, %v3555
        %v3560 = vld [vmem:[%s948] sm:$0xf]
        %v3561 = vld [vmem:[%s948 + $0x4] sm:$0xf]
        %v3562 = vld [vmem:[%s948 + $0x8] sm:$0xf]
        %v3563 = vld [vmem:[%s948 + $0xc] sm:$0xf]
        %v3564 = vld [vmem:[%s948 + $0x10] sm:$0xf]
        %v3565 = vld [vmem:[%s948 + $0x14] sm:$0xf]
        %v3566 = vld [vmem:[%s948 + $0x18] sm:$0xf]
        %v3567 = vld [vmem:[%s948 + $0x1c] sm:$0xf]
        %v3568 = vld [vmem:[%s948 + $0x20] sm:$0xf]
        %v3569 = vld [vmem:[%s948 + $0x24] sm:$0xf]
        %v3570 = vld [vmem:[%s948 + $0x28] sm:$0xf]
        %v3571 = vld [vmem:[%s948 + $0x2c] sm:$0xf]
        %v3572 = vld [vmem:[%s948 + $0x30] sm:$0xf]
        %v3573 = vld [vmem:[%s948 + $0x34] sm:$0xf]
        %v3574 = vld [vmem:[%s948 + $0x38] sm:$0xf]
        %v3575 = vld [vmem:[%s948 + $0x3c] sm:$0xf]
        %v3576 = vld [vmem:[%s948 + $0x40] sm:$0xf]
        %v3577 = vld [vmem:[%s948 + $0x44] sm:$0xf]
        %v3578 = vld [vmem:[%s948 + $0x48] sm:$0xf]
        %v3579 = vld [vmem:[%s948 + $0x4c] sm:$0xf]
        %v3580 = vld [vmem:[%s948 + $0x50] sm:$0xf]
        %v3581 = vld [vmem:[%s948 + $0x54] sm:$0xf]
        %v3582 = vld [vmem:[%s948 + $0x58] sm:$0xf]
        %v3583 = vld [vmem:[%s948 + $0x5c] sm:$0xf]
        %v3584 = vld [vmem:[%s948 + $0x60] sm:$0xf]
        %v3585 = vld [vmem:[%s948 + $0x64] sm:$0xf]
        %v3586 = vld [vmem:[%s948 + $0x68] sm:$0xf]
        %v3587 = vld [vmem:[%s948 + $0x6c] sm:$0xf]
        %v3588 = vld [vmem:[%s948 + $0x70] sm:$0xf]
        %v3589 = vld [vmem:[%s948 + $0x74] sm:$0xf]
        %v3590 = vld [vmem:[%s948 + $0x78] sm:$0xf]
        %v3591 = vld [vmem:[%s948 + $0x7c] sm:$0xf]
        %v3592 = vld [vmem:[%s1139] sm:$0x1]
        %v3594 = vlaneseq
        %v3595 = vshrl.u32 %v3594, 7
        %v3596 = vsub.s32 0, %v3595
        %v3597 = vrot.slane %v3592, %v3596
        %v3631 = vunpack.c.l.b16 %v3560
        %v3632 = vunpack.c.l.b16 %v3561
        %v3633 = vunpack.c.l.b16 %v3562
        %v3634 = vunpack.c.l.b16 %v3563
        %v3635 = vunpack.c.l.b16 %v3564
        %v3636 = vunpack.c.l.b16 %v3565
        %v3637 = vunpack.c.l.b16 %v3566
        %v3638 = vunpack.c.l.b16 %v3567
        %v3639 = vunpack.c.l.b16 %v3568
        %v3640 = vunpack.c.l.b16 %v3569
        %v3641 = vunpack.c.l.b16 %v3570
        %v3642 = vunpack.c.l.b16 %v3571
        %v3643 = vunpack.c.l.b16 %v3572
        %v3644 = vunpack.c.l.b16 %v3573
        %v3645 = vunpack.c.l.b16 %v3574
        %v3646 = vunpack.c.l.b16 %v3575
        %v3647 = vunpack.c.l.b16 %v3576
        %v3648 = vunpack.c.l.b16 %v3577
        %v3649 = vunpack.c.l.b16 %v3578
        %v3650 = vunpack.c.l.b16 %v3579
        %v3651 = vunpack.c.l.b16 %v3580
        %v3652 = vunpack.c.l.b16 %v3581
        %v3653 = vunpack.c.l.b16 %v3582
        %v3654 = vunpack.c.l.b16 %v3583
        %v3655 = vunpack.c.l.b16 %v3584
        %v3656 = vunpack.c.l.b16 %v3585
        %v3657 = vunpack.c.l.b16 %v3586
        %v3658 = vunpack.c.l.b16 %v3587
        %v3659 = vunpack.c.l.b16 %v3588
        %v3660 = vunpack.c.l.b16 %v3589
        %v3661 = vunpack.c.l.b16 %v3590
        %v3662 = vunpack.c.l.b16 %v3591
        %v3663 = vpack.c.b16 %v3632, %v3631
        %v3664 = vpack.c.b16 %v3634, %v3633
        %v3665 = vpack.c.b16 %v3636, %v3635
        %v3666 = vpack.c.b16 %v3638, %v3637
        %v3667 = vpack.c.b16 %v3640, %v3639
        %v3668 = vpack.c.b16 %v3642, %v3641
        %v3669 = vpack.c.b16 %v3644, %v3643
        %v3670 = vpack.c.b16 %v3646, %v3645
        %v3671 = vpack.c.b16 %v3648, %v3647
        %v3672 = vpack.c.b16 %v3650, %v3649
        %v3673 = vpack.c.b16 %v3652, %v3651
        %v3674 = vpack.c.b16 %v3654, %v3653
        %v3675 = vpack.c.b16 %v3656, %v3655
        %v3676 = vpack.c.b16 %v3658, %v3657
        %v3677 = vpack.c.b16 %v3660, %v3659
        %v3678 = vpack.c.b16 %v3662, %v3661
        %3695 = vmatprep.subr.bf16.mxu0 0
        %3696 = vmatpush1.bf16.msra.mxu0 %v3670
        %3697 = vmatprep.subr.bf16.mxu0 0
        %3698 = vmatpush1.bf16.msra.mxu0 %v3669
        %3699 = vmatprep.subr.bf16.mxu0 0
        %3700 = vmatpush1.bf16.msra.mxu0 %v3668
        %3701 = vmatprep.subr.bf16.mxu0 0
        %3702 = vmatpush1.bf16.msra.mxu0 %v3667
        %3703 = vmatprep.subr.bf16.mxu0 0
        %3704 = vmatpush1.bf16.msra.mxu0 %v3666
        %3705 = vmatprep.subr.bf16.mxu0 0
        %3706 = vmatpush1.bf16.msra.mxu0 %v3665
        %3707 = vmatprep.subr.bf16.mxu0 0
        %3708 = vmatpush1.bf16.msra.mxu0 %v3664
        %3709 = vmatprep.subr.bf16.mxu0 0
        %3710 = vmatpush1.bf16.msra.mxu0 %v3663
        %3711 = vmatprep.subr.bf16.mxu0 0
        %3712 = vmatpush2.bf16.msra.mxu0 %v3678
        %3713 = vmatprep.subr.bf16.mxu0 0
        %3714 = vmatpush2.bf16.msra.mxu0 %v3677
        %3715 = vmatprep.subr.bf16.mxu0 0
        %3716 = vmatpush2.bf16.msra.mxu0 %v3676
        %3717 = vmatprep.subr.bf16.mxu0 0
        %3718 = vmatpush2.bf16.msra.mxu0 %v3675
        %3719 = vmatprep.subr.bf16.mxu0 0
        %3720 = vmatpush2.bf16.msra.mxu0 %v3674
        %3721 = vmatprep.subr.bf16.mxu0 0
        %3722 = vmatpush2.bf16.msra.mxu0 %v3673
        %3723 = vmatprep.subr.bf16.mxu0 0
        %3724 = vmatpush2.bf16.msra.mxu0 %v3672
        %3725 = vmatprep.subr.bf16.mxu0 0
        %3726 = vmatpush2.bf16.msra.mxu0 %v3671
        %3727 = vmatprep.mubr.bf16.mxu0 %v3559
        %3728 = vmatmul.mubr.bf16.gmra.mxu0 %v3558
        %v3729 = vpop.f32.mrf.mxu0
        %v3730 = vadd.f32 %v3597, %v3729
        %v3731 = vpop.f32.mrf.mxu0
        %v3732 = vpop.f32.mrf.mxu0
        %v3733 = vadd.f32 %v3597, %v3732
        %v3734 = vpop.f32.mrf.mxu0
        %3735 = vdwg.mxu0
        %v3736 = vadd.f32 %v3400, %v3730
        %v3737 = vadd.f32 %v3401, %v3733
        %v3738 = vld [vmem:[%s1142] sm:$0x1]
        %v3739 = vld [vmem:[%s1145] sm:$0x1]
        %3740 = vadd.xlane.f32.xlu0 %v3736
        %v3741 = vpop.xlane.xlu0 %3740
        %3742 = vadd.xlane.f32.xlu0 %v3737
        %v3743 = vpop.xlane.xlu0 %3742
        %v3744 = vmul.f32 %v3741, %v2220
        %v3745 = vmul.f32 %v3743, %v2220
        %v3746 = vsub.f32 %v3736, %v3744
        %v3747 = vsub.f32 %v3737, %v3745
        %v3748 = vmul.f32 %v3746, %v3746
        %v3749 = vmul.f32 %v3747, %v3747
        %3750 = vadd.xlane.f32.xlu0 %v3748
        %v3751 = vpop.xlane.xlu0 %3750
        %3752 = vadd.xlane.f32.xlu0 %v3749
        %v3753 = vpop.xlane.xlu0 %3752
        %v3754 = vmul.f32 %v3751, %v2220
        %v3755 = vmul.f32 %v3753, %v2220
        %v3756 = vadd.f32 %v3754, 1e-05
        %v3757 = vadd.f32 %v3755, 1e-05
        %v3758 = vrsqrt.pop %v3756
        %v3759 = vrsqrt.pop %v3757
        %v3760 = vmul.f32 %v3746, %v3758
        %v3761 = vmul.f32 %v3747, %v3759
        %v3763 = vlaneseq
        %v3764 = vshrl.u32 %v3763, 7
        %v3765 = vsub.s32 0, %v3764
        %v3766 = vrot.slane %v3738, %v3765
        %v3768 = vmul.f32 %v3760, %v3766
        %v3769 = vmul.f32 %v3761, %v3766
        %v3771 = vlaneseq
        %v3772 = vshrl.u32 %v3771, 7
        %v3773 = vsub.s32 0, %v3772
        %v3774 = vrot.slane %v3739, %v3773
        %v3776 = vadd.f32 %v3768, %v3774
        %v3777 = vadd.f32 %v3769, %v3774
        %3778 = vst [vmem:[#allocation2] sm:$0xff] %v3776
        %3779 = vst [vmem:[#allocation2 + $0x8] sm:$0xff] %v3777
        %p3780 = scmp.eq.s32.totalorder %s44, 3
        // Predicated region
        $region141: #{translation_forward.3} parent=123 // pred_check
          %p3781 = pneg %p3780
        $region142: #{translation_forward.3} parent=123 // pred_check_branch
          %3783 = sbr.rel (%p3781) target = $region144
        $region143: #{translation_forward.3} parent=123 // pred_region
          %v3784 = vld [vmem:[%s24] sm:$0x1]
          %v3785 = vld [vmem:[%s25] sm:$0x1]
          %3786 = vadd.xlane.f32.xlu0 %v3776
          %v3787 = vpop.xlane.xlu0 %3786
          %3788 = vadd.xlane.f32.xlu0 %v3777
          %v3789 = vpop.xlane.xlu0 %3788
          %v3790 = vmul.f32 %v3787, %v2220
          %v3791 = vmul.f32 %v3789, %v2220
          %v3792 = vsub.f32 %v3776, %v3790
          %v3793 = vsub.f32 %v3777, %v3791
          %v3794 = vmul.f32 %v3792, %v3792
          %v3795 = vmul.f32 %v3793, %v3793
          %3796 = vadd.xlane.f32.xlu0 %v3794
          %v3797 = vpop.xlane.xlu0 %3796
          %3798 = vadd.xlane.f32.xlu0 %v3795
          %v3799 = vpop.xlane.xlu0 %3798
          %v3800 = vmul.f32 %v3797, %v2220
          %v3801 = vmul.f32 %v3799, %v2220
          %v3802 = vadd.f32 %v3800, 1e-05
          %v3803 = vadd.f32 %v3801, 1e-05
          %v3804 = vrsqrt.pop %v3802
          %v3805 = vrsqrt.pop %v3803
          %v3806 = vmul.f32 %v3792, %v3804
          %v3807 = vmul.f32 %v3793, %v3805
          %v3809 = vlaneseq
          %v3810 = vshrl.u32 %v3809, 7
          %v3811 = vsub.s32 0, %v3810
          %v3812 = vrot.slane %v3784, %v3811
          %v3814 = vmul.f32 %v3806, %v3812
          %v3815 = vmul.f32 %v3807, %v3812
          %v3817 = vlaneseq
          %v3818 = vshrl.u32 %v3817, 7
          %v3819 = vsub.s32 0, %v3818
          %v3820 = vrot.slane %v3785, %v3819
          %v3822 = vadd.f32 %v3814, %v3820
          %v3823 = vadd.f32 %v3815, %v3820
          %3824 = vst [vmem:[#allocation9] sm:$0xff] %v3822
          %3825 = vst [vmem:[#allocation9 + $0x8] sm:$0xff] %v3823
        $region144: #{translation_forward.3} parent=123 // pred_fallthru
          _
        // Predicated region
        $region145: #{translation_forward.3} parent=123 // pred_check
          %p3826 = pneg %p703
        $region146: #{translation_forward.3} parent=123 // pred_check_branch
          %3828 = sbr.rel (%p3826) target = $region148
        $region147: #{translation_forward.3} parent=123 // pred_region
          %s3830 = ssub.s32 256, 256
          %3831 = vsyncadd [#allocation5], %s3830
          %s3832 = sshll.u32 [#allocation9], 4
          %s3833 = int_to_ptr.vmem [resolvable:$true] %s3832
          %3838 = dma.vmem_to_hbm [thread:$0]  %s3833, 256, %s26, [#allocation5], 128, 128, 8
        $region148: #{translation_forward.3} parent=123 // pred_fallthru
          _
        // Predicated region
        $region149: #{translation_forward.3} parent=123 // pred_check
          %p3839 = pneg %p703
        $region150: #{translation_forward.3} parent=123 // pred_check_branch
          %3841 = sbr.rel (%p3839) target = $region152
        $region151: #{translation_forward.3} parent=123 // pred_region
          %3842 = dma.done [#allocation5], 256
        $region152: #{translation_forward.3} parent=123 // pred_fallthru
          _
      $region124: #{translation_forward.3} parent=5 // pred_fallthru
        _
      %p3843 = scmp.le.s32.totalorder 2, %s39
      // Predicated region
      $region153: #{translation_forward.3} parent=5 // pred_check
        %p3844 = pneg %p3843
      $region154: #{translation_forward.3} parent=5 // pred_check_branch
        %3846 = sbr.rel (%p3844) target = $region156
      $region155: #{translation_forward.3} parent=5 // pred_region
        %s3847 = ssub.s32 %s39, 2
      $region156: #{translation_forward.3} parent=5 // pred_fallthru
        _
    $region6: #{translation_forward.3} parent=1 // loop_footer
      %s43 = sadd.s32 1, %s39
    $region7: #{translation_forward.3} parent=1 // loop_footer_branch
      %38 = sbr.rel target = $region3
    $region8: #{translation_forward.3} parent=1 // loop_exit
      _
    %3848 = vsyncpa [#allocation4], 1
    %s3849 = scalar_lea.sflag [#allocation4], 1
    %3850 = vsyncpa %s3849, 1
    %3851 = vsyncpa [#allocation7], 1
    %s3852 = scalar_lea.sflag [#allocation7], 1
    %3853 = vsyncpa %s3852, 1
    %3854 = vsyncpa [#allocation5], 1
    %s3855 = scalar_lea.sflag [#allocation5], 1
    %3856 = vsyncpa %s3855, 1

</llo_original>
